<compile_context>
chip_gen: v7x
topology: tpu7x:2x2x1
jax: 0.10.0
libtpu: 0.0.40
codegen_flags: <defaults>
</compile_context>

<pallas_src>
import functools

import jax
import jax.numpy as jnp
from jax.experimental import pallas as pl
from jax.experimental.pallas import tpu as pltpu

_NSEM = 8          # max in-flight embedding-row gather DMAs
_OUTP = 128        # lane-dense padded logit width (true logits = first 2)


def _rnn_kernel(ids_ref, emb_hbm, wih_ref, whh_ref, b_ref, wlin_ref, blin_ref,
                out_ref, x_ref, sem, *, T, B):
    """Fused embedding-gather + RNN + Linear forward, single invocation.

    ids_ref:  (B*T,)    int32 token ids, row-major (b, t), in SMEM
    emb_hbm:  (V, D)    f32 embedding table left in HBM (manual DMA gather)
    wih_ref:  (D, H)    bf16 W_ih^T
    whh_ref:  (H, H)    bf16 W_hh^T
    b_ref:    (1, H)    f32  b_ih + b_hh
    wlin_ref: (H, 128)  bf16 W_linear^T zero-padded to 128 output lanes
    blin_ref: (1, 128)  f32  b_linear zero-padded
    out_ref:  (B, 128)  f32  logits slab (only [:, :2] meaningful)
    x_ref:    (T*B, D)  f32  VMEM scratch: time-major gathered embeddings
    sem:      (NSEM,)   DMA semaphores for the gather ring
    """
    TB = T * B
    D = x_ref.shape[1]

    def row_copy(i):
        # x row i holds x_t[b] with t = i // B, b = i % B (time-major).
        t, b = divmod(i, B)
        return pltpu.make_async_copy(
            emb_hbm.at[pl.ds(ids_ref[b * T + t], 1), :],   # dynamic HBM row
            x_ref.at[pl.ds(i, 1), :],
            sem.at[i % _NSEM])

    # Gather all T*B embedding rows with at most _NSEM copies in flight.
    copies = [None] * TB
    for i in range(TB):
        if i >= _NSEM:
            copies[i - _NSEM].wait()        # free this semaphore slot
        copies[i] = row_copy(i)
        copies[i].start()
    for i in range(max(0, TB - _NSEM), TB):
        copies[i].wait()

    # All time steps' input projections (+ fused bias) in one MXU pass:
    # (T*B, D) @ (D, H); bf16 operands, f32 accumulation.
    xw = (jnp.dot(x_ref[...].astype(jnp.bfloat16), wih_ref[...],
                  preferred_element_type=jnp.float32)
          + b_ref[...])                                    # (T*B, H) f32

    whh = whh_ref[...]                                     # (H, H) bf16

    # Sequential recurrence, fully unrolled (T tiny & static); h lives in
    # vregs, xw slices are sublane-aligned (B % 8 == 0).  h0 == 0 so step 0
    # needs no recurrent matmul.
    # TODO(synk): for T >= ~16-32, keep xw in a VMEM scratch and run the
    # recurrence as lax.fori_loop (bounded live ranges / compile time), and
    # latch W_hh once via pltpu.matmul_push_rhs / matmul_acc_lhs to make the
    # serial chain weight-stationary.
    h = jnp.tanh(xw[0:B])
    for t in range(1, T):
        rec = jnp.dot(h.astype(jnp.bfloat16), whh,
                      preferred_element_type=jnp.float32)
        h = jnp.tanh(xw[t * B:(t + 1) * B] + rec)

    # Final Linear fused into the kernel; lane-dense (B, 128) store.
    out_ref[...] = (jnp.dot(h.astype(jnp.bfloat16), wlin_ref[...],
                            preferred_element_type=jnp.float32)
                    + blin_ref[...])


def prepare_params(params):
    """One-time kernel-ready parameter packing (hoisted out of the forward)."""
    H = params["w_hh"].shape[0]
    wlin_T = jnp.zeros((H, _OUTP), jnp.bfloat16)
    wlin_T = wlin_T.at[:, :2].set(params["w_lin"].T.astype(jnp.bfloat16))
    blin = jnp.zeros((1, _OUTP), jnp.float32).at[:, :2].set(params["b_lin"])
    return {
        "emb":    params["emb"].astype(jnp.float32),                # (V, D)
        "wih_T":  params["w_ih"].T.astype(jnp.bfloat16),            # (D, H)
        "whh_T":  params["w_hh"].T.astype(jnp.bfloat16),            # (H, H)
        "bias":   (params["b_ih"] + params["b_hh"]).reshape(1, H),  # (1, H)
        "wlin_T": wlin_T,                                           # (H, 128)
        "blin":   blin,                                             # (1, 128)
    }


@jax.jit
def rnn_forward(token_ids, prepped):
    """token_ids: (B, T) int32.  Returns logits (B, 2) float32."""
    B, T = token_ids.shape
    V, D = prepped["emb"].shape
    H = prepped["whh_T"].shape[0]
    B_pad = max(8, ((B + 7) // 8) * 8)      # pad batch to f32 sublane count

    ids = token_ids
    if B_pad != B:
        ids = jnp.pad(token_ids, ((0, B_pad - B), (0, 0)))   # pad token = 0
    ids_flat = ids.reshape(-1).astype(jnp.int32)             # row-major (b, t)

    # VMEM budget: weights ~80 KB (bf16) + x scratch T*B_pad*D*4 B.
    # TODO(synk): for large T*B_pad (v5e 16 MiB scoped / v7x 32 MiB scoped
    # defaults), tile T with a grid ("arbitrary" axis, h in scratch) or raise
    # vmem_limit_bytes; for batched serving add a batch-chunk "parallel" grid
    # axis so v7x's two TensorCores split the sequences.
    vmem = pl.BlockSpec(memory_space=pltpu.MemorySpace.VMEM)
    out = pl.pallas_call(
        functools.partial(_rnn_kernel, T=T, B=B_pad),
        out_shape=jax.ShapeDtypeStruct((B_pad, _OUTP), jnp.float32),
        in_specs=[
            pl.BlockSpec(memory_space=pltpu.MemorySpace.SMEM),   # token ids
            pl.BlockSpec(memory_space=pl.ANY),                   # emb table
            vmem, vmem, vmem, vmem, vmem,
        ],
        out_specs=vmem,
        scratch_shapes=[
            pltpu.VMEM((T * B_pad, D), jnp.float32),             # gathered x
            pltpu.SemaphoreType.DMA((_NSEM,)),                   # gather ring
        ],
    )(ids_flat, prepped["emb"], prepped["wih_T"], prepped["whh_T"],
      prepped["bias"], prepped["wlin_T"], prepped["blin"])

    return out[:B, :2]


def _reference(token_ids, params):
    """Pure-JAX f32 reference of the PyTorch forward (for sanity check)."""
    emb = jnp.take(params["emb"], token_ids, axis=0)     # (B, T, D)
    B = emb.shape[0]
    H = params["w_hh"].shape[0]
    h0 = jnp.zeros((B, H), jnp.float32)

    def step(h, x_t):
        h_new = jnp.tanh(x_t @ params["w_ih"].T + params["b_ih"]
                         + h @ params["w_hh"].T + params["b_hh"])
        return h_new, None

    h_final, _ = jax.lax.scan(step, h0, jnp.transpose(emb, (1, 0, 2)))
    return h_final @ params["w_lin"].T + params["b_lin"]


def init_params(key):
    V, D, H = 4411, 64, 128
    ks = jax.random.split(key, 7)
    s = 1.0 / jnp.sqrt(H)
    return {
        "emb":   jax.random.normal(ks[0], (V, D), jnp.float32),
        "w_ih":  jax.random.uniform(ks[1], (H, D), jnp.float32, -s, s),
        "w_hh":  jax.random.uniform(ks[2], (H, H), jnp.float32, -s, s),
        "b_ih":  jax.random.uniform(ks[3], (H,), jnp.float32, -s, s),
        "b_hh":  jax.random.uniform(ks[4], (H,), jnp.float32, -s, s),
        "w_lin": jax.random.uniform(ks[5], (2, H), jnp.float32, -s, s),
        "b_lin": jax.random.uniform(ks[6], (2,), jnp.float32, -s, s),
    }


if __name__ == "__main__":
    key = jax.random.PRNGKey(0)
    pkey, ikey = jax.random.split(key)
    params = init_params(pkey)
    prepped = prepare_params(params)        # one-time weight prep

    B, T = 2, 8
    token_ids = jax.random.randint(ikey, (B, T), 0, 4411, dtype=jnp.int32)

    out = rnn_forward(token_ids, prepped)
    out = jax.block_until_ready(out)

    ref = _reference(token_ids, params)
    assert out.shape == (B, 2)
    # Relaxed tolerance: matmul operands are bf16 (f32 accumulation), as
    # recommended by the perf review; expected deviation is ~1e-3-1e-2.
    assert jnp.allclose(out, ref, atol=2e-2, rtol=2e-2), (out, ref)

    print("KERNEL_OK")
</pallas_src>

<mosaic_0001>
module attributes {stable_mosaic.version = 11 : i64} {
  func.func @_rnn_kernel(%arg0: memref<64xi32, #tpu.memory_space<smem>>, %arg1: memref<4411x64xf32, #tpu.memory_space<any>>, %arg2: memref<64x128xbf16, #tpu.memory_space<vmem>>, %arg3: memref<128x128xbf16, #tpu.memory_space<vmem>>, %arg4: memref<1x128xf32, #tpu.memory_space<vmem>>, %arg5: memref<128x128xbf16, #tpu.memory_space<vmem>>, %arg6: memref<1x128xf32, #tpu.memory_space<vmem>>, %arg7: memref<8x128xf32, #tpu.memory_space<vmem>>, %arg8: memref<64x64xf32, #tpu.memory_space<vmem>>, %arg9: memref<8x!tpu.dma_semaphore, #tpu.memory_space<semaphore_mem>>) attributes {dimension_semantics = [], scalar_prefetch = 0 : i64, scratch_operands = 2 : i64, tpu.core_type = #tpu.core_type<tc>} {
    %c0 = arith.constant 0 : index
    %0 = memref.load %arg0[%c0] : memref<64xi32, #tpu.memory_space<smem>>
    %c0_i32 = arith.constant 0 : i32
    %c0_i32_0 = arith.constant 0 : i32
    %1 = tpu.memref_slice %arg1[%0, %c0_i32_0] : memref<4411x64xf32, #tpu.memory_space<any>> -> memref<1x64xf32, #tpu.memory_space<any>>
    %c0_i32_1 = arith.constant 0 : i32
    %c0_i32_2 = arith.constant 0 : i32
    %2 = tpu.memref_slice %arg8[%c0_i32_1, %c0_i32_2] : memref<64x64xf32, #tpu.memory_space<vmem>> -> memref<1x64xf32, #tpu.memory_space<vmem>>
    %3 = tpu.memref_slice %arg9[%c0_i32] : memref<8x!tpu.dma_semaphore, #tpu.memory_space<semaphore_mem>> -> memref<1x!tpu.dma_semaphore, #tpu.memory_space<semaphore_mem>>
    %4 = tpu.memref_squeeze %3 : memref<1x!tpu.dma_semaphore, #tpu.memory_space<semaphore_mem>> -> memref<!tpu.dma_semaphore, #tpu.memory_space<semaphore_mem>>
    tpu.enqueue_dma source(%1 : memref<1x64xf32, #tpu.memory_space<any>>) target(%2 : memref<1x64xf32, #tpu.memory_space<vmem>>) target_semaphore(%4 : memref<!tpu.dma_semaphore, #tpu.memory_space<semaphore_mem>>)
    %c8 = arith.constant 8 : index
    %5 = memref.load %arg0[%c8] : memref<64xi32, #tpu.memory_space<smem>>
    %c1_i32 = arith.constant 1 : i32
    %c0_i32_3 = arith.constant 0 : i32
    %6 = tpu.memref_slice %arg1[%5, %c0_i32_3] : memref<4411x64xf32, #tpu.memory_space<any>> -> memref<1x64xf32, #tpu.memory_space<any>>
    %c1_i32_4 = arith.constant 1 : i32
    %c0_i32_5 = arith.constant 0 : i32
    %7 = tpu.memref_slice %arg8[%c1_i32_4, %c0_i32_5] : memref<64x64xf32, #tpu.memory_space<vmem>> -> memref<1x64xf32, #tpu.memory_space<vmem>>
    %8 = tpu.memref_slice %arg9[%c1_i32] : memref<8x!tpu.dma_semaphore, #tpu.memory_space<semaphore_mem>> -> memref<1x!tpu.dma_semaphore, #tpu.memory_space<semaphore_mem>>
    %9 = tpu.memref_squeeze %8 : memref<1x!tpu.dma_semaphore, #tpu.memory_space<semaphore_mem>> -> memref<!tpu.dma_semaphore, #tpu.memory_space<semaphore_mem>>
    tpu.enqueue_dma source(%6 : memref<1x64xf32, #tpu.memory_space<any>>) target(%7 : memref<1x64xf32, #tpu.memory_space<vmem>>) target_semaphore(%9 : memref<!tpu.dma_semaphore, #tpu.memory_space<semaphore_mem>>)
    %c16 = arith.constant 16 : index
    %10 = memref.load %arg0[%c16] : memref<64xi32, #tpu.memory_space<smem>>
    %c2_i32 = arith.constant 2 : i32
    %c0_i32_6 = arith.constant 0 : i32
    %11 = tpu.memref_slice %arg1[%10, %c0_i32_6] : memref<4411x64xf32, #tpu.memory_space<any>> -> memref<1x64xf32, #tpu.memory_space<any>>
    %c2_i32_7 = arith.constant 2 : i32
    %c0_i32_8 = arith.constant 0 : i32
    %12 = tpu.memref_slice %arg8[%c2_i32_7, %c0_i32_8] : memref<64x64xf32, #tpu.memory_space<vmem>> -> memref<1x64xf32, #tpu.memory_space<vmem>>
    %13 = tpu.memref_slice %arg9[%c2_i32] : memref<8x!tpu.dma_semaphore, #tpu.memory_space<semaphore_mem>> -> memref<1x!tpu.dma_semaphore, #tpu.memory_space<semaphore_mem>>
    %14 = tpu.memref_squeeze %13 : memref<1x!tpu.dma_semaphore, #tpu.memory_space<semaphore_mem>> -> memref<!tpu.dma_semaphore, #tpu.memory_space<semaphore_mem>>
    tpu.enqueue_dma source(%11 : memref<1x64xf32, #tpu.memory_space<any>>) target(%12 : memref<1x64xf32, #tpu.memory_space<vmem>>) target_semaphore(%14 : memref<!tpu.dma_semaphore, #tpu.memory_space<semaphore_mem>>)
    %c24 = arith.constant 24 : index
    %15 = memref.load %arg0[%c24] : memref<64xi32, #tpu.memory_space<smem>>
    %c3_i32 = arith.constant 3 : i32
    %c0_i32_9 = arith.constant 0 : i32
    %16 = tpu.memref_slice %arg1[%15, %c0_i32_9] : memref<4411x64xf32, #tpu.memory_space<any>> -> memref<1x64xf32, #tpu.memory_space<any>>
    %c3_i32_10 = arith.constant 3 : i32
    %c0_i32_11 = arith.constant 0 : i32
    %17 = tpu.memref_slice %arg8[%c3_i32_10, %c0_i32_11] : memref<64x64xf32, #tpu.memory_space<vmem>> -> memref<1x64xf32, #tpu.memory_space<vmem>>
    %18 = tpu.memref_slice %arg9[%c3_i32] : memref<8x!tpu.dma_semaphore, #tpu.memory_space<semaphore_mem>> -> memref<1x!tpu.dma_semaphore, #tpu.memory_space<semaphore_mem>>
    %19 = tpu.memref_squeeze %18 : memref<1x!tpu.dma_semaphore, #tpu.memory_space<semaphore_mem>> -> memref<!tpu.dma_semaphore, #tpu.memory_space<semaphore_mem>>
    tpu.enqueue_dma source(%16 : memref<1x64xf32, #tpu.memory_space<any>>) target(%17 : memref<1x64xf32, #tpu.memory_space<vmem>>) target_semaphore(%19 : memref<!tpu.dma_semaphore, #tpu.memory_space<semaphore_mem>>)
    %c32 = arith.constant 32 : index
    %20 = memref.load %arg0[%c32] : memref<64xi32, #tpu.memory_space<smem>>
    %c4_i32 = arith.constant 4 : i32
    %c0_i32_12 = arith.constant 0 : i32
    %21 = tpu.memref_slice %arg1[%20, %c0_i32_12] : memref<4411x64xf32, #tpu.memory_space<any>> -> memref<1x64xf32, #tpu.memory_space<any>>
    %c4_i32_13 = arith.constant 4 : i32
    %c0_i32_14 = arith.constant 0 : i32
    %22 = tpu.memref_slice %arg8[%c4_i32_13, %c0_i32_14] : memref<64x64xf32, #tpu.memory_space<vmem>> -> memref<1x64xf32, #tpu.memory_space<vmem>>
    %23 = tpu.memref_slice %arg9[%c4_i32] : memref<8x!tpu.dma_semaphore, #tpu.memory_space<semaphore_mem>> -> memref<1x!tpu.dma_semaphore, #tpu.memory_space<semaphore_mem>>
    %24 = tpu.memref_squeeze %23 : memref<1x!tpu.dma_semaphore, #tpu.memory_space<semaphore_mem>> -> memref<!tpu.dma_semaphore, #tpu.memory_space<semaphore_mem>>
    tpu.enqueue_dma source(%21 : memref<1x64xf32, #tpu.memory_space<any>>) target(%22 : memref<1x64xf32, #tpu.memory_space<vmem>>) target_semaphore(%24 : memref<!tpu.dma_semaphore, #tpu.memory_space<semaphore_mem>>)
    %c40 = arith.constant 40 : index
    %25 = memref.load %arg0[%c40] : memref<64xi32, #tpu.memory_space<smem>>
    %c5_i32 = arith.constant 5 : i32
    %c0_i32_15 = arith.constant 0 : i32
    %26 = tpu.memref_slice %arg1[%25, %c0_i32_15] : memref<4411x64xf32, #tpu.memory_space<any>> -> memref<1x64xf32, #tpu.memory_space<any>>
    %c5_i32_16 = arith.constant 5 : i32
    %c0_i32_17 = arith.constant 0 : i32
    %27 = tpu.memref_slice %arg8[%c5_i32_16, %c0_i32_17] : memref<64x64xf32, #tpu.memory_space<vmem>> -> memref<1x64xf32, #tpu.memory_space<vmem>>
    %28 = tpu.memref_slice %arg9[%c5_i32] : memref<8x!tpu.dma_semaphore, #tpu.memory_space<semaphore_mem>> -> memref<1x!tpu.dma_semaphore, #tpu.memory_space<semaphore_mem>>
    %29 = tpu.memref_squeeze %28 : memref<1x!tpu.dma_semaphore, #tpu.memory_space<semaphore_mem>> -> memref<!tpu.dma_semaphore, #tpu.memory_space<semaphore_mem>>
    tpu.enqueue_dma source(%26 : memref<1x64xf32, #tpu.memory_space<any>>) target(%27 : memref<1x64xf32, #tpu.memory_space<vmem>>) target_semaphore(%29 : memref<!tpu.dma_semaphore, #tpu.memory_space<semaphore_mem>>)
    %c48 = arith.constant 48 : index
    %30 = memref.load %arg0[%c48] : memref<64xi32, #tpu.memory_space<smem>>
    %c6_i32 = arith.constant 6 : i32
    %c0_i32_18 = arith.constant 0 : i32
    %31 = tpu.memref_slice %arg1[%30, %c0_i32_18] : memref<4411x64xf32, #tpu.memory_space<any>> -> memref<1x64xf32, #tpu.memory_space<any>>
    %c6_i32_19 = arith.constant 6 : i32
    %c0_i32_20 = arith.constant 0 : i32
    %32 = tpu.memref_slice %arg8[%c6_i32_19, %c0_i32_20] : memref<64x64xf32, #tpu.memory_space<vmem>> -> memref<1x64xf32, #tpu.memory_space<vmem>>
    %33 = tpu.memref_slice %arg9[%c6_i32] : memref<8x!tpu.dma_semaphore, #tpu.memory_space<semaphore_mem>> -> memref<1x!tpu.dma_semaphore, #tpu.memory_space<semaphore_mem>>
    %34 = tpu.memref_squeeze %33 : memref<1x!tpu.dma_semaphore, #tpu.memory_space<semaphore_mem>> -> memref<!tpu.dma_semaphore, #tpu.memory_space<semaphore_mem>>
    tpu.enqueue_dma source(%31 : memref<1x64xf32, #tpu.memory_space<any>>) target(%32 : memref<1x64xf32, #tpu.memory_space<vmem>>) target_semaphore(%34 : memref<!tpu.dma_semaphore, #tpu.memory_space<semaphore_mem>>)
    %c56 = arith.constant 56 : index
    %35 = memref.load %arg0[%c56] : memref<64xi32, #tpu.memory_space<smem>>
    %c7_i32 = arith.constant 7 : i32
    %c0_i32_21 = arith.constant 0 : i32
    %36 = tpu.memref_slice %arg1[%35, %c0_i32_21] : memref<4411x64xf32, #tpu.memory_space<any>> -> memref<1x64xf32, #tpu.memory_space<any>>
    %c7_i32_22 = arith.constant 7 : i32
    %c0_i32_23 = arith.constant 0 : i32
    %37 = tpu.memref_slice %arg8[%c7_i32_22, %c0_i32_23] : memref<64x64xf32, #tpu.memory_space<vmem>> -> memref<1x64xf32, #tpu.memory_space<vmem>>
    %38 = tpu.memref_slice %arg9[%c7_i32] : memref<8x!tpu.dma_semaphore, #tpu.memory_space<semaphore_mem>> -> memref<1x!tpu.dma_semaphore, #tpu.memory_space<semaphore_mem>>
    %39 = tpu.memref_squeeze %38 : memref<1x!tpu.dma_semaphore, #tpu.memory_space<semaphore_mem>> -> memref<!tpu.dma_semaphore, #tpu.memory_space<semaphore_mem>>
    tpu.enqueue_dma source(%36 : memref<1x64xf32, #tpu.memory_space<any>>) target(%37 : memref<1x64xf32, #tpu.memory_space<vmem>>) target_semaphore(%39 : memref<!tpu.dma_semaphore, #tpu.memory_space<semaphore_mem>>)
    %c0_i32_24 = arith.constant 0 : i32
    %c0_i32_25 = arith.constant 0 : i32
    %40 = tpu.memref_slice %arg1[%0, %c0_i32_25] : memref<4411x64xf32, #tpu.memory_space<any>> -> memref<1x64xf32, #tpu.memory_space<any>>
    %c0_i32_26 = arith.constant 0 : i32
    %c0_i32_27 = arith.constant 0 : i32
    %41 = tpu.memref_slice %arg8[%c0_i32_26, %c0_i32_27] : memref<64x64xf32, #tpu.memory_space<vmem>> -> memref<1x64xf32, #tpu.memory_space<vmem>>
    %42 = tpu.memref_slice %arg9[%c0_i32_24] : memref<8x!tpu.dma_semaphore, #tpu.memory_space<semaphore_mem>> -> memref<1x!tpu.dma_semaphore, #tpu.memory_space<semaphore_mem>>
    %43 = tpu.memref_squeeze %42 : memref<1x!tpu.dma_semaphore, #tpu.memory_space<semaphore_mem>> -> memref<!tpu.dma_semaphore, #tpu.memory_space<semaphore_mem>>
    tpu.wait_dma2 semaphore(%43 : memref<!tpu.dma_semaphore, #tpu.memory_space<semaphore_mem>>) src(%40 : memref<1x64xf32, #tpu.memory_space<any>>) dst(%41 : memref<1x64xf32, #tpu.memory_space<vmem>>)
    %c1 = arith.constant 1 : index
    %44 = memref.load %arg0[%c1] : memref<64xi32, #tpu.memory_space<smem>>
    %c0_i32_28 = arith.constant 0 : i32
    %c0_i32_29 = arith.constant 0 : i32
    %45 = tpu.memref_slice %arg1[%44, %c0_i32_29] : memref<4411x64xf32, #tpu.memory_space<any>> -> memref<1x64xf32, #tpu.memory_space<any>>
    %c8_i32 = arith.constant 8 : i32
    %c0_i32_30 = arith.constant 0 : i32
    %46 = tpu.memref_slice %arg8[%c8_i32, %c0_i32_30] : memref<64x64xf32, #tpu.memory_space<vmem>> -> memref<1x64xf32, #tpu.memory_space<vmem>>
    %47 = tpu.memref_slice %arg9[%c0_i32_28] : memref<8x!tpu.dma_semaphore, #tpu.memory_space<semaphore_mem>> -> memref<1x!tpu.dma_semaphore, #tpu.memory_space<semaphore_mem>>
    %48 = tpu.memref_squeeze %47 : memref<1x!tpu.dma_semaphore, #tpu.memory_space<semaphore_mem>> -> memref<!tpu.dma_semaphore, #tpu.memory_space<semaphore_mem>>
    tpu.enqueue_dma source(%45 : memref<1x64xf32, #tpu.memory_space<any>>) target(%46 : memref<1x64xf32, #tpu.memory_space<vmem>>) target_semaphore(%48 : memref<!tpu.dma_semaphore, #tpu.memory_space<semaphore_mem>>)
    %c1_i32_31 = arith.constant 1 : i32
    %c0_i32_32 = arith.constant 0 : i32
    %49 = tpu.memref_slice %arg1[%5, %c0_i32_32] : memref<4411x64xf32, #tpu.memory_space<any>> -> memref<1x64xf32, #tpu.memory_space<any>>
    %c1_i32_33 = arith.constant 1 : i32
    %c0_i32_34 = arith.constant 0 : i32
    %50 = tpu.memref_slice %arg8[%c1_i32_33, %c0_i32_34] : memref<64x64xf32, #tpu.memory_space<vmem>> -> memref<1x64xf32, #tpu.memory_space<vmem>>
    %51 = tpu.memref_slice %arg9[%c1_i32_31] : memref<8x!tpu.dma_semaphore, #tpu.memory_space<semaphore_mem>> -> memref<1x!tpu.dma_semaphore, #tpu.memory_space<semaphore_mem>>
    %52 = tpu.memref_squeeze %51 : memref<1x!tpu.dma_semaphore, #tpu.memory_space<semaphore_mem>> -> memref<!tpu.dma_semaphore, #tpu.memory_space<semaphore_mem>>
    tpu.wait_dma2 semaphore(%52 : memref<!tpu.dma_semaphore, #tpu.memory_space<semaphore_mem>>) src(%49 : memref<1x64xf32, #tpu.memory_space<any>>) dst(%50 : memref<1x64xf32, #tpu.memory_space<vmem>>)
    %c9 = arith.constant 9 : index
    %53 = memref.load %arg0[%c9] : memref<64xi32, #tpu.memory_space<smem>>
    %c1_i32_35 = arith.constant 1 : i32
    %c0_i32_36 = arith.constant 0 : i32
    %54 = tpu.memref_slice %arg1[%53, %c0_i32_36] : memref<4411x64xf32, #tpu.memory_space<any>> -> memref<1x64xf32, #tpu.memory_space<any>>
    %c9_i32 = arith.constant 9 : i32
    %c0_i32_37 = arith.constant 0 : i32
    %55 = tpu.memref_slice %arg8[%c9_i32, %c0_i32_37] : memref<64x64xf32, #tpu.memory_space<vmem>> -> memref<1x64xf32, #tpu.memory_space<vmem>>
    %56 = tpu.memref_slice %arg9[%c1_i32_35] : memref<8x!tpu.dma_semaphore, #tpu.memory_space<semaphore_mem>> -> memref<1x!tpu.dma_semaphore, #tpu.memory_space<semaphore_mem>>
    %57 = tpu.memref_squeeze %56 : memref<1x!tpu.dma_semaphore, #tpu.memory_space<semaphore_mem>> -> memref<!tpu.dma_semaphore, #tpu.memory_space<semaphore_mem>>
    tpu.enqueue_dma source(%54 : memref<1x64xf32, #tpu.memory_space<any>>) target(%55 : memref<1x64xf32, #tpu.memory_space<vmem>>) target_semaphore(%57 : memref<!tpu.dma_semaphore, #tpu.memory_space<semaphore_mem>>)
    %c2_i32_38 = arith.constant 2 : i32
    %c0_i32_39 = arith.constant 0 : i32
    %58 = tpu.memref_slice %arg1[%10, %c0_i32_39] : memref<4411x64xf32, #tpu.memory_space<any>> -> memref<1x64xf32, #tpu.memory_space<any>>
    %c2_i32_40 = arith.constant 2 : i32
    %c0_i32_41 = arith.constant 0 : i32
    %59 = tpu.memref_slice %arg8[%c2_i32_40, %c0_i32_41] : memref<64x64xf32, #tpu.memory_space<vmem>> -> memref<1x64xf32, #tpu.memory_space<vmem>>
    %60 = tpu.memref_slice %arg9[%c2_i32_38] : memref<8x!tpu.dma_semaphore, #tpu.memory_space<semaphore_mem>> -> memref<1x!tpu.dma_semaphore, #tpu.memory_space<semaphore_mem>>
    %61 = tpu.memref_squeeze %60 : memref<1x!tpu.dma_semaphore, #tpu.memory_space<semaphore_mem>> -> memref<!tpu.dma_semaphore, #tpu.memory_space<semaphore_mem>>
    tpu.wait_dma2 semaphore(%61 : memref<!tpu.dma_semaphore, #tpu.memory_space<semaphore_mem>>) src(%58 : memref<1x64xf32, #tpu.memory_space<any>>) dst(%59 : memref<1x64xf32, #tpu.memory_space<vmem>>)
    %c17 = arith.constant 17 : index
    %62 = memref.load %arg0[%c17] : memref<64xi32, #tpu.memory_space<smem>>
    %c2_i32_42 = arith.constant 2 : i32
    %c0_i32_43 = arith.constant 0 : i32
    %63 = tpu.memref_slice %arg1[%62, %c0_i32_43] : memref<4411x64xf32, #tpu.memory_space<any>> -> memref<1x64xf32, #tpu.memory_space<any>>
    %c10_i32 = arith.constant 10 : i32
    %c0_i32_44 = arith.constant 0 : i32
    %64 = tpu.memref_slice %arg8[%c10_i32, %c0_i32_44] : memref<64x64xf32, #tpu.memory_space<vmem>> -> memref<1x64xf32, #tpu.memory_space<vmem>>
    %65 = tpu.memref_slice %arg9[%c2_i32_42] : memref<8x!tpu.dma_semaphore, #tpu.memory_space<semaphore_mem>> -> memref<1x!tpu.dma_semaphore, #tpu.memory_space<semaphore_mem>>
    %66 = tpu.memref_squeeze %65 : memref<1x!tpu.dma_semaphore, #tpu.memory_space<semaphore_mem>> -> memref<!tpu.dma_semaphore, #tpu.memory_space<semaphore_mem>>
    tpu.enqueue_dma source(%63 : memref<1x64xf32, #tpu.memory_space<any>>) target(%64 : memref<1x64xf32, #tpu.memory_space<vmem>>) target_semaphore(%66 : memref<!tpu.dma_semaphore, #tpu.memory_space<semaphore_mem>>)
    %c3_i32_45 = arith.constant 3 : i32
    %c0_i32_46 = arith.constant 0 : i32
    %67 = tpu.memref_slice %arg1[%15, %c0_i32_46] : memref<4411x64xf32, #tpu.memory_space<any>> -> memref<1x64xf32, #tpu.memory_space<any>>
    %c3_i32_47 = arith.constant 3 : i32
    %c0_i32_48 = arith.constant 0 : i32
    %68 = tpu.memref_slice %arg8[%c3_i32_47, %c0_i32_48] : memref<64x64xf32, #tpu.memory_space<vmem>> -> memref<1x64xf32, #tpu.memory_space<vmem>>
    %69 = tpu.memref_slice %arg9[%c3_i32_45] : memref<8x!tpu.dma_semaphore, #tpu.memory_space<semaphore_mem>> -> memref<1x!tpu.dma_semaphore, #tpu.memory_space<semaphore_mem>>
    %70 = tpu.memref_squeeze %69 : memref<1x!tpu.dma_semaphore, #tpu.memory_space<semaphore_mem>> -> memref<!tpu.dma_semaphore, #tpu.memory_space<semaphore_mem>>
    tpu.wait_dma2 semaphore(%70 : memref<!tpu.dma_semaphore, #tpu.memory_space<semaphore_mem>>) src(%67 : memref<1x64xf32, #tpu.memory_space<any>>) dst(%68 : memref<1x64xf32, #tpu.memory_space<vmem>>)
    %c25 = arith.constant 25 : index
    %71 = memref.load %arg0[%c25] : memref<64xi32, #tpu.memory_space<smem>>
    %c3_i32_49 = arith.constant 3 : i32
    %c0_i32_50 = arith.constant 0 : i32
    %72 = tpu.memref_slice %arg1[%71, %c0_i32_50] : memref<4411x64xf32, #tpu.memory_space<any>> -> memref<1x64xf32, #tpu.memory_space<any>>
    %c11_i32 = arith.constant 11 : i32
    %c0_i32_51 = arith.constant 0 : i32
    %73 = tpu.memref_slice %arg8[%c11_i32, %c0_i32_51] : memref<64x64xf32, #tpu.memory_space<vmem>> -> memref<1x64xf32, #tpu.memory_space<vmem>>
    %74 = tpu.memref_slice %arg9[%c3_i32_49] : memref<8x!tpu.dma_semaphore, #tpu.memory_space<semaphore_mem>> -> memref<1x!tpu.dma_semaphore, #tpu.memory_space<semaphore_mem>>
    %75 = tpu.memref_squeeze %74 : memref<1x!tpu.dma_semaphore, #tpu.memory_space<semaphore_mem>> -> memref<!tpu.dma_semaphore, #tpu.memory_space<semaphore_mem>>
    tpu.enqueue_dma source(%72 : memref<1x64xf32, #tpu.memory_space<any>>) target(%73 : memref<1x64xf32, #tpu.memory_space<vmem>>) target_semaphore(%75 : memref<!tpu.dma_semaphore, #tpu.memory_space<semaphore_mem>>)
    %c4_i32_52 = arith.constant 4 : i32
    %c0_i32_53 = arith.constant 0 : i32
    %76 = tpu.memref_slice %arg1[%20, %c0_i32_53] : memref<4411x64xf32, #tpu.memory_space<any>> -> memref<1x64xf32, #tpu.memory_space<any>>
    %c4_i32_54 = arith.constant 4 : i32
    %c0_i32_55 = arith.constant 0 : i32
    %77 = tpu.memref_slice %arg8[%c4_i32_54, %c0_i32_55] : memref<64x64xf32, #tpu.memory_space<vmem>> -> memref<1x64xf32, #tpu.memory_space<vmem>>
    %78 = tpu.memref_slice %arg9[%c4_i32_52] : memref<8x!tpu.dma_semaphore, #tpu.memory_space<semaphore_mem>> -> memref<1x!tpu.dma_semaphore, #tpu.memory_space<semaphore_mem>>
    %79 = tpu.memref_squeeze %78 : memref<1x!tpu.dma_semaphore, #tpu.memory_space<semaphore_mem>> -> memref<!tpu.dma_semaphore, #tpu.memory_space<semaphore_mem>>
    tpu.wait_dma2 semaphore(%79 : memref<!tpu.dma_semaphore, #tpu.memory_space<semaphore_mem>>) src(%76 : memref<1x64xf32, #tpu.memory_space<any>>) dst(%77 : memref<1x64xf32, #tpu.memory_space<vmem>>)
    %c33 = arith.constant 33 : index
    %80 = memref.load %arg0[%c33] : memref<64xi32, #tpu.memory_space<smem>>
    %c4_i32_56 = arith.constant 4 : i32
    %c0_i32_57 = arith.constant 0 : i32
    %81 = tpu.memref_slice %arg1[%80, %c0_i32_57] : memref<4411x64xf32, #tpu.memory_space<any>> -> memref<1x64xf32, #tpu.memory_space<any>>
    %c12_i32 = arith.constant 12 : i32
    %c0_i32_58 = arith.constant 0 : i32
    %82 = tpu.memref_slice %arg8[%c12_i32, %c0_i32_58] : memref<64x64xf32, #tpu.memory_space<vmem>> -> memref<1x64xf32, #tpu.memory_space<vmem>>
    %83 = tpu.memref_slice %arg9[%c4_i32_56] : memref<8x!tpu.dma_semaphore, #tpu.memory_space<semaphore_mem>> -> memref<1x!tpu.dma_semaphore, #tpu.memory_space<semaphore_mem>>
    %84 = tpu.memref_squeeze %83 : memref<1x!tpu.dma_semaphore, #tpu.memory_space<semaphore_mem>> -> memref<!tpu.dma_semaphore, #tpu.memory_space<semaphore_mem>>
    tpu.enqueue_dma source(%81 : memref<1x64xf32, #tpu.memory_space<any>>) target(%82 : memref<1x64xf32, #tpu.memory_space<vmem>>) target_semaphore(%84 : memref<!tpu.dma_semaphore, #tpu.memory_space<semaphore_mem>>)
    %c5_i32_59 = arith.constant 5 : i32
    %c0_i32_60 = arith.constant 0 : i32
    %85 = tpu.memref_slice %arg1[%25, %c0_i32_60] : memref<4411x64xf32, #tpu.memory_space<any>> -> memref<1x64xf32, #tpu.memory_space<any>>
    %c5_i32_61 = arith.constant 5 : i32
    %c0_i32_62 = arith.constant 0 : i32
    %86 = tpu.memref_slice %arg8[%c5_i32_61, %c0_i32_62] : memref<64x64xf32, #tpu.memory_space<vmem>> -> memref<1x64xf32, #tpu.memory_space<vmem>>
    %87 = tpu.memref_slice %arg9[%c5_i32_59] : memref<8x!tpu.dma_semaphore, #tpu.memory_space<semaphore_mem>> -> memref<1x!tpu.dma_semaphore, #tpu.memory_space<semaphore_mem>>
    %88 = tpu.memref_squeeze %87 : memref<1x!tpu.dma_semaphore, #tpu.memory_space<semaphore_mem>> -> memref<!tpu.dma_semaphore, #tpu.memory_space<semaphore_mem>>
    tpu.wait_dma2 semaphore(%88 : memref<!tpu.dma_semaphore, #tpu.memory_space<semaphore_mem>>) src(%85 : memref<1x64xf32, #tpu.memory_space<any>>) dst(%86 : memref<1x64xf32, #tpu.memory_space<vmem>>)
    %c41 = arith.constant 41 : index
    %89 = memref.load %arg0[%c41] : memref<64xi32, #tpu.memory_space<smem>>
    %c5_i32_63 = arith.constant 5 : i32
    %c0_i32_64 = arith.constant 0 : i32
    %90 = tpu.memref_slice %arg1[%89, %c0_i32_64] : memref<4411x64xf32, #tpu.memory_space<any>> -> memref<1x64xf32, #tpu.memory_space<any>>
    %c13_i32 = arith.constant 13 : i32
    %c0_i32_65 = arith.constant 0 : i32
    %91 = tpu.memref_slice %arg8[%c13_i32, %c0_i32_65] : memref<64x64xf32, #tpu.memory_space<vmem>> -> memref<1x64xf32, #tpu.memory_space<vmem>>
    %92 = tpu.memref_slice %arg9[%c5_i32_63] : memref<8x!tpu.dma_semaphore, #tpu.memory_space<semaphore_mem>> -> memref<1x!tpu.dma_semaphore, #tpu.memory_space<semaphore_mem>>
    %93 = tpu.memref_squeeze %92 : memref<1x!tpu.dma_semaphore, #tpu.memory_space<semaphore_mem>> -> memref<!tpu.dma_semaphore, #tpu.memory_space<semaphore_mem>>
    tpu.enqueue_dma source(%90 : memref<1x64xf32, #tpu.memory_space<any>>) target(%91 : memref<1x64xf32, #tpu.memory_space<vmem>>) target_semaphore(%93 : memref<!tpu.dma_semaphore, #tpu.memory_space<semaphore_mem>>)
    %c6_i32_66 = arith.constant 6 : i32
    %c0_i32_67 = arith.constant 0 : i32
    %94 = tpu.memref_slice %arg1[%30, %c0_i32_67] : memref<4411x64xf32, #tpu.memory_space<any>> -> memref<1x64xf32, #tpu.memory_space<any>>
    %c6_i32_68 = arith.constant 6 : i32
    %c0_i32_69 = arith.constant 0 : i32
    %95 = tpu.memref_slice %arg8[%c6_i32_68, %c0_i32_69] : memref<64x64xf32, #tpu.memory_space<vmem>> -> memref<1x64xf32, #tpu.memory_space<vmem>>
    %96 = tpu.memref_slice %arg9[%c6_i32_66] : memref<8x!tpu.dma_semaphore, #tpu.memory_space<semaphore_mem>> -> memref<1x!tpu.dma_semaphore, #tpu.memory_space<semaphore_mem>>
    %97 = tpu.memref_squeeze %96 : memref<1x!tpu.dma_semaphore, #tpu.memory_space<semaphore_mem>> -> memref<!tpu.dma_semaphore, #tpu.memory_space<semaphore_mem>>
    tpu.wait_dma2 semaphore(%97 : memref<!tpu.dma_semaphore, #tpu.memory_space<semaphore_mem>>) src(%94 : memref<1x64xf32, #tpu.memory_space<any>>) dst(%95 : memref<1x64xf32, #tpu.memory_space<vmem>>)
    %c49 = arith.constant 49 : index
    %98 = memref.load %arg0[%c49] : memref<64xi32, #tpu.memory_space<smem>>
    %c6_i32_70 = arith.constant 6 : i32
    %c0_i32_71 = arith.constant 0 : i32
    %99 = tpu.memref_slice %arg1[%98, %c0_i32_71] : memref<4411x64xf32, #tpu.memory_space<any>> -> memref<1x64xf32, #tpu.memory_space<any>>
    %c14_i32 = arith.constant 14 : i32
    %c0_i32_72 = arith.constant 0 : i32
    %100 = tpu.memref_slice %arg8[%c14_i32, %c0_i32_72] : memref<64x64xf32, #tpu.memory_space<vmem>> -> memref<1x64xf32, #tpu.memory_space<vmem>>
    %101 = tpu.memref_slice %arg9[%c6_i32_70] : memref<8x!tpu.dma_semaphore, #tpu.memory_space<semaphore_mem>> -> memref<1x!tpu.dma_semaphore, #tpu.memory_space<semaphore_mem>>
    %102 = tpu.memref_squeeze %101 : memref<1x!tpu.dma_semaphore, #tpu.memory_space<semaphore_mem>> -> memref<!tpu.dma_semaphore, #tpu.memory_space<semaphore_mem>>
    tpu.enqueue_dma source(%99 : memref<1x64xf32, #tpu.memory_space<any>>) target(%100 : memref<1x64xf32, #tpu.memory_space<vmem>>) target_semaphore(%102 : memref<!tpu.dma_semaphore, #tpu.memory_space<semaphore_mem>>)
    %c7_i32_73 = arith.constant 7 : i32
    %c0_i32_74 = arith.constant 0 : i32
    %103 = tpu.memref_slice %arg1[%35, %c0_i32_74] : memref<4411x64xf32, #tpu.memory_space<any>> -> memref<1x64xf32, #tpu.memory_space<any>>
    %c7_i32_75 = arith.constant 7 : i32
    %c0_i32_76 = arith.constant 0 : i32
    %104 = tpu.memref_slice %arg8[%c7_i32_75, %c0_i32_76] : memref<64x64xf32, #tpu.memory_space<vmem>> -> memref<1x64xf32, #tpu.memory_space<vmem>>
    %105 = tpu.memref_slice %arg9[%c7_i32_73] : memref<8x!tpu.dma_semaphore, #tpu.memory_space<semaphore_mem>> -> memref<1x!tpu.dma_semaphore, #tpu.memory_space<semaphore_mem>>
    %106 = tpu.memref_squeeze %105 : memref<1x!tpu.dma_semaphore, #tpu.memory_space<semaphore_mem>> -> memref<!tpu.dma_semaphore, #tpu.memory_space<semaphore_mem>>
    tpu.wait_dma2 semaphore(%106 : memref<!tpu.dma_semaphore, #tpu.memory_space<semaphore_mem>>) src(%103 : memref<1x64xf32, #tpu.memory_space<any>>) dst(%104 : memref<1x64xf32, #tpu.memory_space<vmem>>)
    %c57 = arith.constant 57 : index
    %107 = memref.load %arg0[%c57] : memref<64xi32, #tpu.memory_space<smem>>
    %c7_i32_77 = arith.constant 7 : i32
    %c0_i32_78 = arith.constant 0 : i32
    %108 = tpu.memref_slice %arg1[%107, %c0_i32_78] : memref<4411x64xf32, #tpu.memory_space<any>> -> memref<1x64xf32, #tpu.memory_space<any>>
    %c15_i32 = arith.constant 15 : i32
    %c0_i32_79 = arith.constant 0 : i32
    %109 = tpu.memref_slice %arg8[%c15_i32, %c0_i32_79] : memref<64x64xf32, #tpu.memory_space<vmem>> -> memref<1x64xf32, #tpu.memory_space<vmem>>
    %110 = tpu.memref_slice %arg9[%c7_i32_77] : memref<8x!tpu.dma_semaphore, #tpu.memory_space<semaphore_mem>> -> memref<1x!tpu.dma_semaphore, #tpu.memory_space<semaphore_mem>>
    %111 = tpu.memref_squeeze %110 : memref<1x!tpu.dma_semaphore, #tpu.memory_space<semaphore_mem>> -> memref<!tpu.dma_semaphore, #tpu.memory_space<semaphore_mem>>
    tpu.enqueue_dma source(%108 : memref<1x64xf32, #tpu.memory_space<any>>) target(%109 : memref<1x64xf32, #tpu.memory_space<vmem>>) target_semaphore(%111 : memref<!tpu.dma_semaphore, #tpu.memory_space<semaphore_mem>>)
    %c0_i32_80 = arith.constant 0 : i32
    %c0_i32_81 = arith.constant 0 : i32
    %112 = tpu.memref_slice %arg1[%44, %c0_i32_81] : memref<4411x64xf32, #tpu.memory_space<any>> -> memref<1x64xf32, #tpu.memory_space<any>>
    %c8_i32_82 = arith.constant 8 : i32
    %c0_i32_83 = arith.constant 0 : i32
    %113 = tpu.memref_slice %arg8[%c8_i32_82, %c0_i32_83] : memref<64x64xf32, #tpu.memory_space<vmem>> -> memref<1x64xf32, #tpu.memory_space<vmem>>
    %114 = tpu.memref_slice %arg9[%c0_i32_80] : memref<8x!tpu.dma_semaphore, #tpu.memory_space<semaphore_mem>> -> memref<1x!tpu.dma_semaphore, #tpu.memory_space<semaphore_mem>>
    %115 = tpu.memref_squeeze %114 : memref<1x!tpu.dma_semaphore, #tpu.memory_space<semaphore_mem>> -> memref<!tpu.dma_semaphore, #tpu.memory_space<semaphore_mem>>
    tpu.wait_dma2 semaphore(%115 : memref<!tpu.dma_semaphore, #tpu.memory_space<semaphore_mem>>) src(%112 : memref<1x64xf32, #tpu.memory_space<any>>) dst(%113 : memref<1x64xf32, #tpu.memory_space<vmem>>)
    %c2 = arith.constant 2 : index
    %116 = memref.load %arg0[%c2] : memref<64xi32, #tpu.memory_space<smem>>
    %c0_i32_84 = arith.constant 0 : i32
    %c0_i32_85 = arith.constant 0 : i32
    %117 = tpu.memref_slice %arg1[%116, %c0_i32_85] : memref<4411x64xf32, #tpu.memory_space<any>> -> memref<1x64xf32, #tpu.memory_space<any>>
    %c16_i32 = arith.constant 16 : i32
    %c0_i32_86 = arith.constant 0 : i32
    %118 = tpu.memref_slice %arg8[%c16_i32, %c0_i32_86] : memref<64x64xf32, #tpu.memory_space<vmem>> -> memref<1x64xf32, #tpu.memory_space<vmem>>
    %119 = tpu.memref_slice %arg9[%c0_i32_84] : memref<8x!tpu.dma_semaphore, #tpu.memory_space<semaphore_mem>> -> memref<1x!tpu.dma_semaphore, #tpu.memory_space<semaphore_mem>>
    %120 = tpu.memref_squeeze %119 : memref<1x!tpu.dma_semaphore, #tpu.memory_space<semaphore_mem>> -> memref<!tpu.dma_semaphore, #tpu.memory_space<semaphore_mem>>
    tpu.enqueue_dma source(%117 : memref<1x64xf32, #tpu.memory_space<any>>) target(%118 : memref<1x64xf32, #tpu.memory_space<vmem>>) target_semaphore(%120 : memref<!tpu.dma_semaphore, #tpu.memory_space<semaphore_mem>>)
    %c1_i32_87 = arith.constant 1 : i32
    %c0_i32_88 = arith.constant 0 : i32
    %121 = tpu.memref_slice %arg1[%53, %c0_i32_88] : memref<4411x64xf32, #tpu.memory_space<any>> -> memref<1x64xf32, #tpu.memory_space<any>>
    %c9_i32_89 = arith.constant 9 : i32
    %c0_i32_90 = arith.constant 0 : i32
    %122 = tpu.memref_slice %arg8[%c9_i32_89, %c0_i32_90] : memref<64x64xf32, #tpu.memory_space<vmem>> -> memref<1x64xf32, #tpu.memory_space<vmem>>
    %123 = tpu.memref_slice %arg9[%c1_i32_87] : memref<8x!tpu.dma_semaphore, #tpu.memory_space<semaphore_mem>> -> memref<1x!tpu.dma_semaphore, #tpu.memory_space<semaphore_mem>>
    %124 = tpu.memref_squeeze %123 : memref<1x!tpu.dma_semaphore, #tpu.memory_space<semaphore_mem>> -> memref<!tpu.dma_semaphore, #tpu.memory_space<semaphore_mem>>
    tpu.wait_dma2 semaphore(%124 : memref<!tpu.dma_semaphore, #tpu.memory_space<semaphore_mem>>) src(%121 : memref<1x64xf32, #tpu.memory_space<any>>) dst(%122 : memref<1x64xf32, #tpu.memory_space<vmem>>)
    %c10 = arith.constant 10 : index
    %125 = memref.load %arg0[%c10] : memref<64xi32, #tpu.memory_space<smem>>
    %c1_i32_91 = arith.constant 1 : i32
    %c0_i32_92 = arith.constant 0 : i32
    %126 = tpu.memref_slice %arg1[%125, %c0_i32_92] : memref<4411x64xf32, #tpu.memory_space<any>> -> memref<1x64xf32, #tpu.memory_space<any>>
    %c17_i32 = arith.constant 17 : i32
    %c0_i32_93 = arith.constant 0 : i32
    %127 = tpu.memref_slice %arg8[%c17_i32, %c0_i32_93] : memref<64x64xf32, #tpu.memory_space<vmem>> -> memref<1x64xf32, #tpu.memory_space<vmem>>
    %128 = tpu.memref_slice %arg9[%c1_i32_91] : memref<8x!tpu.dma_semaphore, #tpu.memory_space<semaphore_mem>> -> memref<1x!tpu.dma_semaphore, #tpu.memory_space<semaphore_mem>>
    %129 = tpu.memref_squeeze %128 : memref<1x!tpu.dma_semaphore, #tpu.memory_space<semaphore_mem>> -> memref<!tpu.dma_semaphore, #tpu.memory_space<semaphore_mem>>
    tpu.enqueue_dma source(%126 : memref<1x64xf32, #tpu.memory_space<any>>) target(%127 : memref<1x64xf32, #tpu.memory_space<vmem>>) target_semaphore(%129 : memref<!tpu.dma_semaphore, #tpu.memory_space<semaphore_mem>>)
    %c2_i32_94 = arith.constant 2 : i32
    %c0_i32_95 = arith.constant 0 : i32
    %130 = tpu.memref_slice %arg1[%62, %c0_i32_95] : memref<4411x64xf32, #tpu.memory_space<any>> -> memref<1x64xf32, #tpu.memory_space<any>>
    %c10_i32_96 = arith.constant 10 : i32
    %c0_i32_97 = arith.constant 0 : i32
    %131 = tpu.memref_slice %arg8[%c10_i32_96, %c0_i32_97] : memref<64x64xf32, #tpu.memory_space<vmem>> -> memref<1x64xf32, #tpu.memory_space<vmem>>
    %132 = tpu.memref_slice %arg9[%c2_i32_94] : memref<8x!tpu.dma_semaphore, #tpu.memory_space<semaphore_mem>> -> memref<1x!tpu.dma_semaphore, #tpu.memory_space<semaphore_mem>>
    %133 = tpu.memref_squeeze %132 : memref<1x!tpu.dma_semaphore, #tpu.memory_space<semaphore_mem>> -> memref<!tpu.dma_semaphore, #tpu.memory_space<semaphore_mem>>
    tpu.wait_dma2 semaphore(%133 : memref<!tpu.dma_semaphore, #tpu.memory_space<semaphore_mem>>) src(%130 : memref<1x64xf32, #tpu.memory_space<any>>) dst(%131 : memref<1x64xf32, #tpu.memory_space<vmem>>)
    %c18 = arith.constant 18 : index
    %134 = memref.load %arg0[%c18] : memref<64xi32, #tpu.memory_space<smem>>
    %c2_i32_98 = arith.constant 2 : i32
    %c0_i32_99 = arith.constant 0 : i32
    %135 = tpu.memref_slice %arg1[%134, %c0_i32_99] : memref<4411x64xf32, #tpu.memory_space<any>> -> memref<1x64xf32, #tpu.memory_space<any>>
    %c18_i32 = arith.constant 18 : i32
    %c0_i32_100 = arith.constant 0 : i32
    %136 = tpu.memref_slice %arg8[%c18_i32, %c0_i32_100] : memref<64x64xf32, #tpu.memory_space<vmem>> -> memref<1x64xf32, #tpu.memory_space<vmem>>
    %137 = tpu.memref_slice %arg9[%c2_i32_98] : memref<8x!tpu.dma_semaphore, #tpu.memory_space<semaphore_mem>> -> memref<1x!tpu.dma_semaphore, #tpu.memory_space<semaphore_mem>>
    %138 = tpu.memref_squeeze %137 : memref<1x!tpu.dma_semaphore, #tpu.memory_space<semaphore_mem>> -> memref<!tpu.dma_semaphore, #tpu.memory_space<semaphore_mem>>
    tpu.enqueue_dma source(%135 : memref<1x64xf32, #tpu.memory_space<any>>) target(%136 : memref<1x64xf32, #tpu.memory_space<vmem>>) target_semaphore(%138 : memref<!tpu.dma_semaphore, #tpu.memory_space<semaphore_mem>>)
    %c3_i32_101 = arith.constant 3 : i32
    %c0_i32_102 = arith.constant 0 : i32
    %139 = tpu.memref_slice %arg1[%71, %c0_i32_102] : memref<4411x64xf32, #tpu.memory_space<any>> -> memref<1x64xf32, #tpu.memory_space<any>>
    %c11_i32_103 = arith.constant 11 : i32
    %c0_i32_104 = arith.constant 0 : i32
    %140 = tpu.memref_slice %arg8[%c11_i32_103, %c0_i32_104] : memref<64x64xf32, #tpu.memory_space<vmem>> -> memref<1x64xf32, #tpu.memory_space<vmem>>
    %141 = tpu.memref_slice %arg9[%c3_i32_101] : memref<8x!tpu.dma_semaphore, #tpu.memory_space<semaphore_mem>> -> memref<1x!tpu.dma_semaphore, #tpu.memory_space<semaphore_mem>>
    %142 = tpu.memref_squeeze %141 : memref<1x!tpu.dma_semaphore, #tpu.memory_space<semaphore_mem>> -> memref<!tpu.dma_semaphore, #tpu.memory_space<semaphore_mem>>
    tpu.wait_dma2 semaphore(%142 : memref<!tpu.dma_semaphore, #tpu.memory_space<semaphore_mem>>) src(%139 : memref<1x64xf32, #tpu.memory_space<any>>) dst(%140 : memref<1x64xf32, #tpu.memory_space<vmem>>)
    %c26 = arith.constant 26 : index
    %143 = memref.load %arg0[%c26] : memref<64xi32, #tpu.memory_space<smem>>
    %c3_i32_105 = arith.constant 3 : i32
    %c0_i32_106 = arith.constant 0 : i32
    %144 = tpu.memref_slice %arg1[%143, %c0_i32_106] : memref<4411x64xf32, #tpu.memory_space<any>> -> memref<1x64xf32, #tpu.memory_space<any>>
    %c19_i32 = arith.constant 19 : i32
    %c0_i32_107 = arith.constant 0 : i32
    %145 = tpu.memref_slice %arg8[%c19_i32, %c0_i32_107] : memref<64x64xf32, #tpu.memory_space<vmem>> -> memref<1x64xf32, #tpu.memory_space<vmem>>
    %146 = tpu.memref_slice %arg9[%c3_i32_105] : memref<8x!tpu.dma_semaphore, #tpu.memory_space<semaphore_mem>> -> memref<1x!tpu.dma_semaphore, #tpu.memory_space<semaphore_mem>>
    %147 = tpu.memref_squeeze %146 : memref<1x!tpu.dma_semaphore, #tpu.memory_space<semaphore_mem>> -> memref<!tpu.dma_semaphore, #tpu.memory_space<semaphore_mem>>
    tpu.enqueue_dma source(%144 : memref<1x64xf32, #tpu.memory_space<any>>) target(%145 : memref<1x64xf32, #tpu.memory_space<vmem>>) target_semaphore(%147 : memref<!tpu.dma_semaphore, #tpu.memory_space<semaphore_mem>>)
    %c4_i32_108 = arith.constant 4 : i32
    %c0_i32_109 = arith.constant 0 : i32
    %148 = tpu.memref_slice %arg1[%80, %c0_i32_109] : memref<4411x64xf32, #tpu.memory_space<any>> -> memref<1x64xf32, #tpu.memory_space<any>>
    %c12_i32_110 = arith.constant 12 : i32
    %c0_i32_111 = arith.constant 0 : i32
    %149 = tpu.memref_slice %arg8[%c12_i32_110, %c0_i32_111] : memref<64x64xf32, #tpu.memory_space<vmem>> -> memref<1x64xf32, #tpu.memory_space<vmem>>
    %150 = tpu.memref_slice %arg9[%c4_i32_108] : memref<8x!tpu.dma_semaphore, #tpu.memory_space<semaphore_mem>> -> memref<1x!tpu.dma_semaphore, #tpu.memory_space<semaphore_mem>>
    %151 = tpu.memref_squeeze %150 : memref<1x!tpu.dma_semaphore, #tpu.memory_space<semaphore_mem>> -> memref<!tpu.dma_semaphore, #tpu.memory_space<semaphore_mem>>
    tpu.wait_dma2 semaphore(%151 : memref<!tpu.dma_semaphore, #tpu.memory_space<semaphore_mem>>) src(%148 : memref<1x64xf32, #tpu.memory_space<any>>) dst(%149 : memref<1x64xf32, #tpu.memory_space<vmem>>)
    %c34 = arith.constant 34 : index
    %152 = memref.load %arg0[%c34] : memref<64xi32, #tpu.memory_space<smem>>
    %c4_i32_112 = arith.constant 4 : i32
    %c0_i32_113 = arith.constant 0 : i32
    %153 = tpu.memref_slice %arg1[%152, %c0_i32_113] : memref<4411x64xf32, #tpu.memory_space<any>> -> memref<1x64xf32, #tpu.memory_space<any>>
    %c20_i32 = arith.constant 20 : i32
    %c0_i32_114 = arith.constant 0 : i32
    %154 = tpu.memref_slice %arg8[%c20_i32, %c0_i32_114] : memref<64x64xf32, #tpu.memory_space<vmem>> -> memref<1x64xf32, #tpu.memory_space<vmem>>
    %155 = tpu.memref_slice %arg9[%c4_i32_112] : memref<8x!tpu.dma_semaphore, #tpu.memory_space<semaphore_mem>> -> memref<1x!tpu.dma_semaphore, #tpu.memory_space<semaphore_mem>>
    %156 = tpu.memref_squeeze %155 : memref<1x!tpu.dma_semaphore, #tpu.memory_space<semaphore_mem>> -> memref<!tpu.dma_semaphore, #tpu.memory_space<semaphore_mem>>
    tpu.enqueue_dma source(%153 : memref<1x64xf32, #tpu.memory_space<any>>) target(%154 : memref<1x64xf32, #tpu.memory_space<vmem>>) target_semaphore(%156 : memref<!tpu.dma_semaphore, #tpu.memory_space<semaphore_mem>>)
    %c5_i32_115 = arith.constant 5 : i32
    %c0_i32_116 = arith.constant 0 : i32
    %157 = tpu.memref_slice %arg1[%89, %c0_i32_116] : memref<4411x64xf32, #tpu.memory_space<any>> -> memref<1x64xf32, #tpu.memory_space<any>>
    %c13_i32_117 = arith.constant 13 : i32
    %c0_i32_118 = arith.constant 0 : i32
    %158 = tpu.memref_slice %arg8[%c13_i32_117, %c0_i32_118] : memref<64x64xf32, #tpu.memory_space<vmem>> -> memref<1x64xf32, #tpu.memory_space<vmem>>
    %159 = tpu.memref_slice %arg9[%c5_i32_115] : memref<8x!tpu.dma_semaphore, #tpu.memory_space<semaphore_mem>> -> memref<1x!tpu.dma_semaphore, #tpu.memory_space<semaphore_mem>>
    %160 = tpu.memref_squeeze %159 : memref<1x!tpu.dma_semaphore, #tpu.memory_space<semaphore_mem>> -> memref<!tpu.dma_semaphore, #tpu.memory_space<semaphore_mem>>
    tpu.wait_dma2 semaphore(%160 : memref<!tpu.dma_semaphore, #tpu.memory_space<semaphore_mem>>) src(%157 : memref<1x64xf32, #tpu.memory_space<any>>) dst(%158 : memref<1x64xf32, #tpu.memory_space<vmem>>)
    %c42 = arith.constant 42 : index
    %161 = memref.load %arg0[%c42] : memref<64xi32, #tpu.memory_space<smem>>
    %c5_i32_119 = arith.constant 5 : i32
    %c0_i32_120 = arith.constant 0 : i32
    %162 = tpu.memref_slice %arg1[%161, %c0_i32_120] : memref<4411x64xf32, #tpu.memory_space<any>> -> memref<1x64xf32, #tpu.memory_space<any>>
    %c21_i32 = arith.constant 21 : i32
    %c0_i32_121 = arith.constant 0 : i32
    %163 = tpu.memref_slice %arg8[%c21_i32, %c0_i32_121] : memref<64x64xf32, #tpu.memory_space<vmem>> -> memref<1x64xf32, #tpu.memory_space<vmem>>
    %164 = tpu.memref_slice %arg9[%c5_i32_119] : memref<8x!tpu.dma_semaphore, #tpu.memory_space<semaphore_mem>> -> memref<1x!tpu.dma_semaphore, #tpu.memory_space<semaphore_mem>>
    %165 = tpu.memref_squeeze %164 : memref<1x!tpu.dma_semaphore, #tpu.memory_space<semaphore_mem>> -> memref<!tpu.dma_semaphore, #tpu.memory_space<semaphore_mem>>
    tpu.enqueue_dma source(%162 : memref<1x64xf32, #tpu.memory_space<any>>) target(%163 : memref<1x64xf32, #tpu.memory_space<vmem>>) target_semaphore(%165 : memref<!tpu.dma_semaphore, #tpu.memory_space<semaphore_mem>>)
    %c6_i32_122 = arith.constant 6 : i32
    %c0_i32_123 = arith.constant 0 : i32
    %166 = tpu.memref_slice %arg1[%98, %c0_i32_123] : memref<4411x64xf32, #tpu.memory_space<any>> -> memref<1x64xf32, #tpu.memory_space<any>>
    %c14_i32_124 = arith.constant 14 : i32
    %c0_i32_125 = arith.constant 0 : i32
    %167 = tpu.memref_slice %arg8[%c14_i32_124, %c0_i32_125] : memref<64x64xf32, #tpu.memory_space<vmem>> -> memref<1x64xf32, #tpu.memory_space<vmem>>
    %168 = tpu.memref_slice %arg9[%c6_i32_122] : memref<8x!tpu.dma_semaphore, #tpu.memory_space<semaphore_mem>> -> memref<1x!tpu.dma_semaphore, #tpu.memory_space<semaphore_mem>>
    %169 = tpu.memref_squeeze %168 : memref<1x!tpu.dma_semaphore, #tpu.memory_space<semaphore_mem>> -> memref<!tpu.dma_semaphore, #tpu.memory_space<semaphore_mem>>
    tpu.wait_dma2 semaphore(%169 : memref<!tpu.dma_semaphore, #tpu.memory_space<semaphore_mem>>) src(%166 : memref<1x64xf32, #tpu.memory_space<any>>) dst(%167 : memref<1x64xf32, #tpu.memory_space<vmem>>)
    %c50 = arith.constant 50 : index
    %170 = memref.load %arg0[%c50] : memref<64xi32, #tpu.memory_space<smem>>
    %c6_i32_126 = arith.constant 6 : i32
    %c0_i32_127 = arith.constant 0 : i32
    %171 = tpu.memref_slice %arg1[%170, %c0_i32_127] : memref<4411x64xf32, #tpu.memory_space<any>> -> memref<1x64xf32, #tpu.memory_space<any>>
    %c22_i32 = arith.constant 22 : i32
    %c0_i32_128 = arith.constant 0 : i32
    %172 = tpu.memref_slice %arg8[%c22_i32, %c0_i32_128] : memref<64x64xf32, #tpu.memory_space<vmem>> -> memref<1x64xf32, #tpu.memory_space<vmem>>
    %173 = tpu.memref_slice %arg9[%c6_i32_126] : memref<8x!tpu.dma_semaphore, #tpu.memory_space<semaphore_mem>> -> memref<1x!tpu.dma_semaphore, #tpu.memory_space<semaphore_mem>>
    %174 = tpu.memref_squeeze %173 : memref<1x!tpu.dma_semaphore, #tpu.memory_space<semaphore_mem>> -> memref<!tpu.dma_semaphore, #tpu.memory_space<semaphore_mem>>
    tpu.enqueue_dma source(%171 : memref<1x64xf32, #tpu.memory_space<any>>) target(%172 : memref<1x64xf32, #tpu.memory_space<vmem>>) target_semaphore(%174 : memref<!tpu.dma_semaphore, #tpu.memory_space<semaphore_mem>>)
    %c7_i32_129 = arith.constant 7 : i32
    %c0_i32_130 = arith.constant 0 : i32
    %175 = tpu.memref_slice %arg1[%107, %c0_i32_130] : memref<4411x64xf32, #tpu.memory_space<any>> -> memref<1x64xf32, #tpu.memory_space<any>>
    %c15_i32_131 = arith.constant 15 : i32
    %c0_i32_132 = arith.constant 0 : i32
    %176 = tpu.memref_slice %arg8[%c15_i32_131, %c0_i32_132] : memref<64x64xf32, #tpu.memory_space<vmem>> -> memref<1x64xf32, #tpu.memory_space<vmem>>
    %177 = tpu.memref_slice %arg9[%c7_i32_129] : memref<8x!tpu.dma_semaphore, #tpu.memory_space<semaphore_mem>> -> memref<1x!tpu.dma_semaphore, #tpu.memory_space<semaphore_mem>>
    %178 = tpu.memref_squeeze %177 : memref<1x!tpu.dma_semaphore, #tpu.memory_space<semaphore_mem>> -> memref<!tpu.dma_semaphore, #tpu.memory_space<semaphore_mem>>
    tpu.wait_dma2 semaphore(%178 : memref<!tpu.dma_semaphore, #tpu.memory_space<semaphore_mem>>) src(%175 : memref<1x64xf32, #tpu.memory_space<any>>) dst(%176 : memref<1x64xf32, #tpu.memory_space<vmem>>)
    %c58 = arith.constant 58 : index
    %179 = memref.load %arg0[%c58] : memref<64xi32, #tpu.memory_space<smem>>
    %c7_i32_133 = arith.constant 7 : i32
    %c0_i32_134 = arith.constant 0 : i32
    %180 = tpu.memref_slice %arg1[%179, %c0_i32_134] : memref<4411x64xf32, #tpu.memory_space<any>> -> memref<1x64xf32, #tpu.memory_space<any>>
    %c23_i32 = arith.constant 23 : i32
    %c0_i32_135 = arith.constant 0 : i32
    %181 = tpu.memref_slice %arg8[%c23_i32, %c0_i32_135] : memref<64x64xf32, #tpu.memory_space<vmem>> -> memref<1x64xf32, #tpu.memory_space<vmem>>
    %182 = tpu.memref_slice %arg9[%c7_i32_133] : memref<8x!tpu.dma_semaphore, #tpu.memory_space<semaphore_mem>> -> memref<1x!tpu.dma_semaphore, #tpu.memory_space<semaphore_mem>>
    %183 = tpu.memref_squeeze %182 : memref<1x!tpu.dma_semaphore, #tpu.memory_space<semaphore_mem>> -> memref<!tpu.dma_semaphore, #tpu.memory_space<semaphore_mem>>
    tpu.enqueue_dma source(%180 : memref<1x64xf32, #tpu.memory_space<any>>) target(%181 : memref<1x64xf32, #tpu.memory_space<vmem>>) target_semaphore(%183 : memref<!tpu.dma_semaphore, #tpu.memory_space<semaphore_mem>>)
    %c0_i32_136 = arith.constant 0 : i32
    %c0_i32_137 = arith.constant 0 : i32
    %184 = tpu.memref_slice %arg1[%116, %c0_i32_137] : memref<4411x64xf32, #tpu.memory_space<any>> -> memref<1x64xf32, #tpu.memory_space<any>>
    %c16_i32_138 = arith.constant 16 : i32
    %c0_i32_139 = arith.constant 0 : i32
    %185 = tpu.memref_slice %arg8[%c16_i32_138, %c0_i32_139] : memref<64x64xf32, #tpu.memory_space<vmem>> -> memref<1x64xf32, #tpu.memory_space<vmem>>
    %186 = tpu.memref_slice %arg9[%c0_i32_136] : memref<8x!tpu.dma_semaphore, #tpu.memory_space<semaphore_mem>> -> memref<1x!tpu.dma_semaphore, #tpu.memory_space<semaphore_mem>>
    %187 = tpu.memref_squeeze %186 : memref<1x!tpu.dma_semaphore, #tpu.memory_space<semaphore_mem>> -> memref<!tpu.dma_semaphore, #tpu.memory_space<semaphore_mem>>
    tpu.wait_dma2 semaphore(%187 : memref<!tpu.dma_semaphore, #tpu.memory_space<semaphore_mem>>) src(%184 : memref<1x64xf32, #tpu.memory_space<any>>) dst(%185 : memref<1x64xf32, #tpu.memory_space<vmem>>)
    %c3 = arith.constant 3 : index
    %188 = memref.load %arg0[%c3] : memref<64xi32, #tpu.memory_space<smem>>
    %c0_i32_140 = arith.constant 0 : i32
    %c0_i32_141 = arith.constant 0 : i32
    %189 = tpu.memref_slice %arg1[%188, %c0_i32_141] : memref<4411x64xf32, #tpu.memory_space<any>> -> memref<1x64xf32, #tpu.memory_space<any>>
    %c24_i32 = arith.constant 24 : i32
    %c0_i32_142 = arith.constant 0 : i32
    %190 = tpu.memref_slice %arg8[%c24_i32, %c0_i32_142] : memref<64x64xf32, #tpu.memory_space<vmem>> -> memref<1x64xf32, #tpu.memory_space<vmem>>
    %191 = tpu.memref_slice %arg9[%c0_i32_140] : memref<8x!tpu.dma_semaphore, #tpu.memory_space<semaphore_mem>> -> memref<1x!tpu.dma_semaphore, #tpu.memory_space<semaphore_mem>>
    %192 = tpu.memref_squeeze %191 : memref<1x!tpu.dma_semaphore, #tpu.memory_space<semaphore_mem>> -> memref<!tpu.dma_semaphore, #tpu.memory_space<semaphore_mem>>
    tpu.enqueue_dma source(%189 : memref<1x64xf32, #tpu.memory_space<any>>) target(%190 : memref<1x64xf32, #tpu.memory_space<vmem>>) target_semaphore(%192 : memref<!tpu.dma_semaphore, #tpu.memory_space<semaphore_mem>>)
    %c1_i32_143 = arith.constant 1 : i32
    %c0_i32_144 = arith.constant 0 : i32
    %193 = tpu.memref_slice %arg1[%125, %c0_i32_144] : memref<4411x64xf32, #tpu.memory_space<any>> -> memref<1x64xf32, #tpu.memory_space<any>>
    %c17_i32_145 = arith.constant 17 : i32
    %c0_i32_146 = arith.constant 0 : i32
    %194 = tpu.memref_slice %arg8[%c17_i32_145, %c0_i32_146] : memref<64x64xf32, #tpu.memory_space<vmem>> -> memref<1x64xf32, #tpu.memory_space<vmem>>
    %195 = tpu.memref_slice %arg9[%c1_i32_143] : memref<8x!tpu.dma_semaphore, #tpu.memory_space<semaphore_mem>> -> memref<1x!tpu.dma_semaphore, #tpu.memory_space<semaphore_mem>>
    %196 = tpu.memref_squeeze %195 : memref<1x!tpu.dma_semaphore, #tpu.memory_space<semaphore_mem>> -> memref<!tpu.dma_semaphore, #tpu.memory_space<semaphore_mem>>
    tpu.wait_dma2 semaphore(%196 : memref<!tpu.dma_semaphore, #tpu.memory_space<semaphore_mem>>) src(%193 : memref<1x64xf32, #tpu.memory_space<any>>) dst(%194 : memref<1x64xf32, #tpu.memory_space<vmem>>)
    %c11 = arith.constant 11 : index
    %197 = memref.load %arg0[%c11] : memref<64xi32, #tpu.memory_space<smem>>
    %c1_i32_147 = arith.constant 1 : i32
    %c0_i32_148 = arith.constant 0 : i32
    %198 = tpu.memref_slice %arg1[%197, %c0_i32_148] : memref<4411x64xf32, #tpu.memory_space<any>> -> memref<1x64xf32, #tpu.memory_space<any>>
    %c25_i32 = arith.constant 25 : i32
    %c0_i32_149 = arith.constant 0 : i32
    %199 = tpu.memref_slice %arg8[%c25_i32, %c0_i32_149] : memref<64x64xf32, #tpu.memory_space<vmem>> -> memref<1x64xf32, #tpu.memory_space<vmem>>
    %200 = tpu.memref_slice %arg9[%c1_i32_147] : memref<8x!tpu.dma_semaphore, #tpu.memory_space<semaphore_mem>> -> memref<1x!tpu.dma_semaphore, #tpu.memory_space<semaphore_mem>>
    %201 = tpu.memref_squeeze %200 : memref<1x!tpu.dma_semaphore, #tpu.memory_space<semaphore_mem>> -> memref<!tpu.dma_semaphore, #tpu.memory_space<semaphore_mem>>
    tpu.enqueue_dma source(%198 : memref<1x64xf32, #tpu.memory_space<any>>) target(%199 : memref<1x64xf32, #tpu.memory_space<vmem>>) target_semaphore(%201 : memref<!tpu.dma_semaphore, #tpu.memory_space<semaphore_mem>>)
    %c2_i32_150 = arith.constant 2 : i32
    %c0_i32_151 = arith.constant 0 : i32
    %202 = tpu.memref_slice %arg1[%134, %c0_i32_151] : memref<4411x64xf32, #tpu.memory_space<any>> -> memref<1x64xf32, #tpu.memory_space<any>>
    %c18_i32_152 = arith.constant 18 : i32
    %c0_i32_153 = arith.constant 0 : i32
    %203 = tpu.memref_slice %arg8[%c18_i32_152, %c0_i32_153] : memref<64x64xf32, #tpu.memory_space<vmem>> -> memref<1x64xf32, #tpu.memory_space<vmem>>
    %204 = tpu.memref_slice %arg9[%c2_i32_150] : memref<8x!tpu.dma_semaphore, #tpu.memory_space<semaphore_mem>> -> memref<1x!tpu.dma_semaphore, #tpu.memory_space<semaphore_mem>>
    %205 = tpu.memref_squeeze %204 : memref<1x!tpu.dma_semaphore, #tpu.memory_space<semaphore_mem>> -> memref<!tpu.dma_semaphore, #tpu.memory_space<semaphore_mem>>
    tpu.wait_dma2 semaphore(%205 : memref<!tpu.dma_semaphore, #tpu.memory_space<semaphore_mem>>) src(%202 : memref<1x64xf32, #tpu.memory_space<any>>) dst(%203 : memref<1x64xf32, #tpu.memory_space<vmem>>)
    %c19 = arith.constant 19 : index
    %206 = memref.load %arg0[%c19] : memref<64xi32, #tpu.memory_space<smem>>
    %c2_i32_154 = arith.constant 2 : i32
    %c0_i32_155 = arith.constant 0 : i32
    %207 = tpu.memref_slice %arg1[%206, %c0_i32_155] : memref<4411x64xf32, #tpu.memory_space<any>> -> memref<1x64xf32, #tpu.memory_space<any>>
    %c26_i32 = arith.constant 26 : i32
    %c0_i32_156 = arith.constant 0 : i32
    %208 = tpu.memref_slice %arg8[%c26_i32, %c0_i32_156] : memref<64x64xf32, #tpu.memory_space<vmem>> -> memref<1x64xf32, #tpu.memory_space<vmem>>
    %209 = tpu.memref_slice %arg9[%c2_i32_154] : memref<8x!tpu.dma_semaphore, #tpu.memory_space<semaphore_mem>> -> memref<1x!tpu.dma_semaphore, #tpu.memory_space<semaphore_mem>>
    %210 = tpu.memref_squeeze %209 : memref<1x!tpu.dma_semaphore, #tpu.memory_space<semaphore_mem>> -> memref<!tpu.dma_semaphore, #tpu.memory_space<semaphore_mem>>
    tpu.enqueue_dma source(%207 : memref<1x64xf32, #tpu.memory_space<any>>) target(%208 : memref<1x64xf32, #tpu.memory_space<vmem>>) target_semaphore(%210 : memref<!tpu.dma_semaphore, #tpu.memory_space<semaphore_mem>>)
    %c3_i32_157 = arith.constant 3 : i32
    %c0_i32_158 = arith.constant 0 : i32
    %211 = tpu.memref_slice %arg1[%143, %c0_i32_158] : memref<4411x64xf32, #tpu.memory_space<any>> -> memref<1x64xf32, #tpu.memory_space<any>>
    %c19_i32_159 = arith.constant 19 : i32
    %c0_i32_160 = arith.constant 0 : i32
    %212 = tpu.memref_slice %arg8[%c19_i32_159, %c0_i32_160] : memref<64x64xf32, #tpu.memory_space<vmem>> -> memref<1x64xf32, #tpu.memory_space<vmem>>
    %213 = tpu.memref_slice %arg9[%c3_i32_157] : memref<8x!tpu.dma_semaphore, #tpu.memory_space<semaphore_mem>> -> memref<1x!tpu.dma_semaphore, #tpu.memory_space<semaphore_mem>>
    %214 = tpu.memref_squeeze %213 : memref<1x!tpu.dma_semaphore, #tpu.memory_space<semaphore_mem>> -> memref<!tpu.dma_semaphore, #tpu.memory_space<semaphore_mem>>
    tpu.wait_dma2 semaphore(%214 : memref<!tpu.dma_semaphore, #tpu.memory_space<semaphore_mem>>) src(%211 : memref<1x64xf32, #tpu.memory_space<any>>) dst(%212 : memref<1x64xf32, #tpu.memory_space<vmem>>)
    %c27 = arith.constant 27 : index
    %215 = memref.load %arg0[%c27] : memref<64xi32, #tpu.memory_space<smem>>
    %c3_i32_161 = arith.constant 3 : i32
    %c0_i32_162 = arith.constant 0 : i32
    %216 = tpu.memref_slice %arg1[%215, %c0_i32_162] : memref<4411x64xf32, #tpu.memory_space<any>> -> memref<1x64xf32, #tpu.memory_space<any>>
    %c27_i32 = arith.constant 27 : i32
    %c0_i32_163 = arith.constant 0 : i32
    %217 = tpu.memref_slice %arg8[%c27_i32, %c0_i32_163] : memref<64x64xf32, #tpu.memory_space<vmem>> -> memref<1x64xf32, #tpu.memory_space<vmem>>
    %218 = tpu.memref_slice %arg9[%c3_i32_161] : memref<8x!tpu.dma_semaphore, #tpu.memory_space<semaphore_mem>> -> memref<1x!tpu.dma_semaphore, #tpu.memory_space<semaphore_mem>>
    %219 = tpu.memref_squeeze %218 : memref<1x!tpu.dma_semaphore, #tpu.memory_space<semaphore_mem>> -> memref<!tpu.dma_semaphore, #tpu.memory_space<semaphore_mem>>
    tpu.enqueue_dma source(%216 : memref<1x64xf32, #tpu.memory_space<any>>) target(%217 : memref<1x64xf32, #tpu.memory_space<vmem>>) target_semaphore(%219 : memref<!tpu.dma_semaphore, #tpu.memory_space<semaphore_mem>>)
    %c4_i32_164 = arith.constant 4 : i32
    %c0_i32_165 = arith.constant 0 : i32
    %220 = tpu.memref_slice %arg1[%152, %c0_i32_165] : memref<4411x64xf32, #tpu.memory_space<any>> -> memref<1x64xf32, #tpu.memory_space<any>>
    %c20_i32_166 = arith.constant 20 : i32
    %c0_i32_167 = arith.constant 0 : i32
    %221 = tpu.memref_slice %arg8[%c20_i32_166, %c0_i32_167] : memref<64x64xf32, #tpu.memory_space<vmem>> -> memref<1x64xf32, #tpu.memory_space<vmem>>
    %222 = tpu.memref_slice %arg9[%c4_i32_164] : memref<8x!tpu.dma_semaphore, #tpu.memory_space<semaphore_mem>> -> memref<1x!tpu.dma_semaphore, #tpu.memory_space<semaphore_mem>>
    %223 = tpu.memref_squeeze %222 : memref<1x!tpu.dma_semaphore, #tpu.memory_space<semaphore_mem>> -> memref<!tpu.dma_semaphore, #tpu.memory_space<semaphore_mem>>
    tpu.wait_dma2 semaphore(%223 : memref<!tpu.dma_semaphore, #tpu.memory_space<semaphore_mem>>) src(%220 : memref<1x64xf32, #tpu.memory_space<any>>) dst(%221 : memref<1x64xf32, #tpu.memory_space<vmem>>)
    %c35 = arith.constant 35 : index
    %224 = memref.load %arg0[%c35] : memref<64xi32, #tpu.memory_space<smem>>
    %c4_i32_168 = arith.constant 4 : i32
    %c0_i32_169 = arith.constant 0 : i32
    %225 = tpu.memref_slice %arg1[%224, %c0_i32_169] : memref<4411x64xf32, #tpu.memory_space<any>> -> memref<1x64xf32, #tpu.memory_space<any>>
    %c28_i32 = arith.constant 28 : i32
    %c0_i32_170 = arith.constant 0 : i32
    %226 = tpu.memref_slice %arg8[%c28_i32, %c0_i32_170] : memref<64x64xf32, #tpu.memory_space<vmem>> -> memref<1x64xf32, #tpu.memory_space<vmem>>
    %227 = tpu.memref_slice %arg9[%c4_i32_168] : memref<8x!tpu.dma_semaphore, #tpu.memory_space<semaphore_mem>> -> memref<1x!tpu.dma_semaphore, #tpu.memory_space<semaphore_mem>>
    %228 = tpu.memref_squeeze %227 : memref<1x!tpu.dma_semaphore, #tpu.memory_space<semaphore_mem>> -> memref<!tpu.dma_semaphore, #tpu.memory_space<semaphore_mem>>
    tpu.enqueue_dma source(%225 : memref<1x64xf32, #tpu.memory_space<any>>) target(%226 : memref<1x64xf32, #tpu.memory_space<vmem>>) target_semaphore(%228 : memref<!tpu.dma_semaphore, #tpu.memory_space<semaphore_mem>>)
    %c5_i32_171 = arith.constant 5 : i32
    %c0_i32_172 = arith.constant 0 : i32
    %229 = tpu.memref_slice %arg1[%161, %c0_i32_172] : memref<4411x64xf32, #tpu.memory_space<any>> -> memref<1x64xf32, #tpu.memory_space<any>>
    %c21_i32_173 = arith.constant 21 : i32
    %c0_i32_174 = arith.constant 0 : i32
    %230 = tpu.memref_slice %arg8[%c21_i32_173, %c0_i32_174] : memref<64x64xf32, #tpu.memory_space<vmem>> -> memref<1x64xf32, #tpu.memory_space<vmem>>
    %231 = tpu.memref_slice %arg9[%c5_i32_171] : memref<8x!tpu.dma_semaphore, #tpu.memory_space<semaphore_mem>> -> memref<1x!tpu.dma_semaphore, #tpu.memory_space<semaphore_mem>>
    %232 = tpu.memref_squeeze %231 : memref<1x!tpu.dma_semaphore, #tpu.memory_space<semaphore_mem>> -> memref<!tpu.dma_semaphore, #tpu.memory_space<semaphore_mem>>
    tpu.wait_dma2 semaphore(%232 : memref<!tpu.dma_semaphore, #tpu.memory_space<semaphore_mem>>) src(%229 : memref<1x64xf32, #tpu.memory_space<any>>) dst(%230 : memref<1x64xf32, #tpu.memory_space<vmem>>)
    %c43 = arith.constant 43 : index
    %233 = memref.load %arg0[%c43] : memref<64xi32, #tpu.memory_space<smem>>
    %c5_i32_175 = arith.constant 5 : i32
    %c0_i32_176 = arith.constant 0 : i32
    %234 = tpu.memref_slice %arg1[%233, %c0_i32_176] : memref<4411x64xf32, #tpu.memory_space<any>> -> memref<1x64xf32, #tpu.memory_space<any>>
    %c29_i32 = arith.constant 29 : i32
    %c0_i32_177 = arith.constant 0 : i32
    %235 = tpu.memref_slice %arg8[%c29_i32, %c0_i32_177] : memref<64x64xf32, #tpu.memory_space<vmem>> -> memref<1x64xf32, #tpu.memory_space<vmem>>
    %236 = tpu.memref_slice %arg9[%c5_i32_175] : memref<8x!tpu.dma_semaphore, #tpu.memory_space<semaphore_mem>> -> memref<1x!tpu.dma_semaphore, #tpu.memory_space<semaphore_mem>>
    %237 = tpu.memref_squeeze %236 : memref<1x!tpu.dma_semaphore, #tpu.memory_space<semaphore_mem>> -> memref<!tpu.dma_semaphore, #tpu.memory_space<semaphore_mem>>
    tpu.enqueue_dma source(%234 : memref<1x64xf32, #tpu.memory_space<any>>) target(%235 : memref<1x64xf32, #tpu.memory_space<vmem>>) target_semaphore(%237 : memref<!tpu.dma_semaphore, #tpu.memory_space<semaphore_mem>>)
    %c6_i32_178 = arith.constant 6 : i32
    %c0_i32_179 = arith.constant 0 : i32
    %238 = tpu.memref_slice %arg1[%170, %c0_i32_179] : memref<4411x64xf32, #tpu.memory_space<any>> -> memref<1x64xf32, #tpu.memory_space<any>>
    %c22_i32_180 = arith.constant 22 : i32
    %c0_i32_181 = arith.constant 0 : i32
    %239 = tpu.memref_slice %arg8[%c22_i32_180, %c0_i32_181] : memref<64x64xf32, #tpu.memory_space<vmem>> -> memref<1x64xf32, #tpu.memory_space<vmem>>
    %240 = tpu.memref_slice %arg9[%c6_i32_178] : memref<8x!tpu.dma_semaphore, #tpu.memory_space<semaphore_mem>> -> memref<1x!tpu.dma_semaphore, #tpu.memory_space<semaphore_mem>>
    %241 = tpu.memref_squeeze %240 : memref<1x!tpu.dma_semaphore, #tpu.memory_space<semaphore_mem>> -> memref<!tpu.dma_semaphore, #tpu.memory_space<semaphore_mem>>
    tpu.wait_dma2 semaphore(%241 : memref<!tpu.dma_semaphore, #tpu.memory_space<semaphore_mem>>) src(%238 : memref<1x64xf32, #tpu.memory_space<any>>) dst(%239 : memref<1x64xf32, #tpu.memory_space<vmem>>)
    %c51 = arith.constant 51 : index
    %242 = memref.load %arg0[%c51] : memref<64xi32, #tpu.memory_space<smem>>
    %c6_i32_182 = arith.constant 6 : i32
    %c0_i32_183 = arith.constant 0 : i32
    %243 = tpu.memref_slice %arg1[%242, %c0_i32_183] : memref<4411x64xf32, #tpu.memory_space<any>> -> memref<1x64xf32, #tpu.memory_space<any>>
    %c30_i32 = arith.constant 30 : i32
    %c0_i32_184 = arith.constant 0 : i32
    %244 = tpu.memref_slice %arg8[%c30_i32, %c0_i32_184] : memref<64x64xf32, #tpu.memory_space<vmem>> -> memref<1x64xf32, #tpu.memory_space<vmem>>
    %245 = tpu.memref_slice %arg9[%c6_i32_182] : memref<8x!tpu.dma_semaphore, #tpu.memory_space<semaphore_mem>> -> memref<1x!tpu.dma_semaphore, #tpu.memory_space<semaphore_mem>>
    %246 = tpu.memref_squeeze %245 : memref<1x!tpu.dma_semaphore, #tpu.memory_space<semaphore_mem>> -> memref<!tpu.dma_semaphore, #tpu.memory_space<semaphore_mem>>
    tpu.enqueue_dma source(%243 : memref<1x64xf32, #tpu.memory_space<any>>) target(%244 : memref<1x64xf32, #tpu.memory_space<vmem>>) target_semaphore(%246 : memref<!tpu.dma_semaphore, #tpu.memory_space<semaphore_mem>>)
    %c7_i32_185 = arith.constant 7 : i32
    %c0_i32_186 = arith.constant 0 : i32
    %247 = tpu.memref_slice %arg1[%179, %c0_i32_186] : memref<4411x64xf32, #tpu.memory_space<any>> -> memref<1x64xf32, #tpu.memory_space<any>>
    %c23_i32_187 = arith.constant 23 : i32
    %c0_i32_188 = arith.constant 0 : i32
    %248 = tpu.memref_slice %arg8[%c23_i32_187, %c0_i32_188] : memref<64x64xf32, #tpu.memory_space<vmem>> -> memref<1x64xf32, #tpu.memory_space<vmem>>
    %249 = tpu.memref_slice %arg9[%c7_i32_185] : memref<8x!tpu.dma_semaphore, #tpu.memory_space<semaphore_mem>> -> memref<1x!tpu.dma_semaphore, #tpu.memory_space<semaphore_mem>>
    %250 = tpu.memref_squeeze %249 : memref<1x!tpu.dma_semaphore, #tpu.memory_space<semaphore_mem>> -> memref<!tpu.dma_semaphore, #tpu.memory_space<semaphore_mem>>
    tpu.wait_dma2 semaphore(%250 : memref<!tpu.dma_semaphore, #tpu.memory_space<semaphore_mem>>) src(%247 : memref<1x64xf32, #tpu.memory_space<any>>) dst(%248 : memref<1x64xf32, #tpu.memory_space<vmem>>)
    %c59 = arith.constant 59 : index
    %251 = memref.load %arg0[%c59] : memref<64xi32, #tpu.memory_space<smem>>
    %c7_i32_189 = arith.constant 7 : i32
    %c0_i32_190 = arith.constant 0 : i32
    %252 = tpu.memref_slice %arg1[%251, %c0_i32_190] : memref<4411x64xf32, #tpu.memory_space<any>> -> memref<1x64xf32, #tpu.memory_space<any>>
    %c31_i32 = arith.constant 31 : i32
    %c0_i32_191 = arith.constant 0 : i32
    %253 = tpu.memref_slice %arg8[%c31_i32, %c0_i32_191] : memref<64x64xf32, #tpu.memory_space<vmem>> -> memref<1x64xf32, #tpu.memory_space<vmem>>
    %254 = tpu.memref_slice %arg9[%c7_i32_189] : memref<8x!tpu.dma_semaphore, #tpu.memory_space<semaphore_mem>> -> memref<1x!tpu.dma_semaphore, #tpu.memory_space<semaphore_mem>>
    %255 = tpu.memref_squeeze %254 : memref<1x!tpu.dma_semaphore, #tpu.memory_space<semaphore_mem>> -> memref<!tpu.dma_semaphore, #tpu.memory_space<semaphore_mem>>
    tpu.enqueue_dma source(%252 : memref<1x64xf32, #tpu.memory_space<any>>) target(%253 : memref<1x64xf32, #tpu.memory_space<vmem>>) target_semaphore(%255 : memref<!tpu.dma_semaphore, #tpu.memory_space<semaphore_mem>>)
    %c0_i32_192 = arith.constant 0 : i32
    %c0_i32_193 = arith.constant 0 : i32
    %256 = tpu.memref_slice %arg1[%188, %c0_i32_193] : memref<4411x64xf32, #tpu.memory_space<any>> -> memref<1x64xf32, #tpu.memory_space<any>>
    %c24_i32_194 = arith.constant 24 : i32
    %c0_i32_195 = arith.constant 0 : i32
    %257 = tpu.memref_slice %arg8[%c24_i32_194, %c0_i32_195] : memref<64x64xf32, #tpu.memory_space<vmem>> -> memref<1x64xf32, #tpu.memory_space<vmem>>
    %258 = tpu.memref_slice %arg9[%c0_i32_192] : memref<8x!tpu.dma_semaphore, #tpu.memory_space<semaphore_mem>> -> memref<1x!tpu.dma_semaphore, #tpu.memory_space<semaphore_mem>>
    %259 = tpu.memref_squeeze %258 : memref<1x!tpu.dma_semaphore, #tpu.memory_space<semaphore_mem>> -> memref<!tpu.dma_semaphore, #tpu.memory_space<semaphore_mem>>
    tpu.wait_dma2 semaphore(%259 : memref<!tpu.dma_semaphore, #tpu.memory_space<semaphore_mem>>) src(%256 : memref<1x64xf32, #tpu.memory_space<any>>) dst(%257 : memref<1x64xf32, #tpu.memory_space<vmem>>)
    %c4 = arith.constant 4 : index
    %260 = memref.load %arg0[%c4] : memref<64xi32, #tpu.memory_space<smem>>
    %c0_i32_196 = arith.constant 0 : i32
    %c0_i32_197 = arith.constant 0 : i32
    %261 = tpu.memref_slice %arg1[%260, %c0_i32_197] : memref<4411x64xf32, #tpu.memory_space<any>> -> memref<1x64xf32, #tpu.memory_space<any>>
    %c32_i32 = arith.constant 32 : i32
    %c0_i32_198 = arith.constant 0 : i32
    %262 = tpu.memref_slice %arg8[%c32_i32, %c0_i32_198] : memref<64x64xf32, #tpu.memory_space<vmem>> -> memref<1x64xf32, #tpu.memory_space<vmem>>
    %263 = tpu.memref_slice %arg9[%c0_i32_196] : memref<8x!tpu.dma_semaphore, #tpu.memory_space<semaphore_mem>> -> memref<1x!tpu.dma_semaphore, #tpu.memory_space<semaphore_mem>>
    %264 = tpu.memref_squeeze %263 : memref<1x!tpu.dma_semaphore, #tpu.memory_space<semaphore_mem>> -> memref<!tpu.dma_semaphore, #tpu.memory_space<semaphore_mem>>
    tpu.enqueue_dma source(%261 : memref<1x64xf32, #tpu.memory_space<any>>) target(%262 : memref<1x64xf32, #tpu.memory_space<vmem>>) target_semaphore(%264 : memref<!tpu.dma_semaphore, #tpu.memory_space<semaphore_mem>>)
    %c1_i32_199 = arith.constant 1 : i32
    %c0_i32_200 = arith.constant 0 : i32
    %265 = tpu.memref_slice %arg1[%197, %c0_i32_200] : memref<4411x64xf32, #tpu.memory_space<any>> -> memref<1x64xf32, #tpu.memory_space<any>>
    %c25_i32_201 = arith.constant 25 : i32
    %c0_i32_202 = arith.constant 0 : i32
    %266 = tpu.memref_slice %arg8[%c25_i32_201, %c0_i32_202] : memref<64x64xf32, #tpu.memory_space<vmem>> -> memref<1x64xf32, #tpu.memory_space<vmem>>
    %267 = tpu.memref_slice %arg9[%c1_i32_199] : memref<8x!tpu.dma_semaphore, #tpu.memory_space<semaphore_mem>> -> memref<1x!tpu.dma_semaphore, #tpu.memory_space<semaphore_mem>>
    %268 = tpu.memref_squeeze %267 : memref<1x!tpu.dma_semaphore, #tpu.memory_space<semaphore_mem>> -> memref<!tpu.dma_semaphore, #tpu.memory_space<semaphore_mem>>
    tpu.wait_dma2 semaphore(%268 : memref<!tpu.dma_semaphore, #tpu.memory_space<semaphore_mem>>) src(%265 : memref<1x64xf32, #tpu.memory_space<any>>) dst(%266 : memref<1x64xf32, #tpu.memory_space<vmem>>)
    %c12 = arith.constant 12 : index
    %269 = memref.load %arg0[%c12] : memref<64xi32, #tpu.memory_space<smem>>
    %c1_i32_203 = arith.constant 1 : i32
    %c0_i32_204 = arith.constant 0 : i32
    %270 = tpu.memref_slice %arg1[%269, %c0_i32_204] : memref<4411x64xf32, #tpu.memory_space<any>> -> memref<1x64xf32, #tpu.memory_space<any>>
    %c33_i32 = arith.constant 33 : i32
    %c0_i32_205 = arith.constant 0 : i32
    %271 = tpu.memref_slice %arg8[%c33_i32, %c0_i32_205] : memref<64x64xf32, #tpu.memory_space<vmem>> -> memref<1x64xf32, #tpu.memory_space<vmem>>
    %272 = tpu.memref_slice %arg9[%c1_i32_203] : memref<8x!tpu.dma_semaphore, #tpu.memory_space<semaphore_mem>> -> memref<1x!tpu.dma_semaphore, #tpu.memory_space<semaphore_mem>>
    %273 = tpu.memref_squeeze %272 : memref<1x!tpu.dma_semaphore, #tpu.memory_space<semaphore_mem>> -> memref<!tpu.dma_semaphore, #tpu.memory_space<semaphore_mem>>
    tpu.enqueue_dma source(%270 : memref<1x64xf32, #tpu.memory_space<any>>) target(%271 : memref<1x64xf32, #tpu.memory_space<vmem>>) target_semaphore(%273 : memref<!tpu.dma_semaphore, #tpu.memory_space<semaphore_mem>>)
    %c2_i32_206 = arith.constant 2 : i32
    %c0_i32_207 = arith.constant 0 : i32
    %274 = tpu.memref_slice %arg1[%206, %c0_i32_207] : memref<4411x64xf32, #tpu.memory_space<any>> -> memref<1x64xf32, #tpu.memory_space<any>>
    %c26_i32_208 = arith.constant 26 : i32
    %c0_i32_209 = arith.constant 0 : i32
    %275 = tpu.memref_slice %arg8[%c26_i32_208, %c0_i32_209] : memref<64x64xf32, #tpu.memory_space<vmem>> -> memref<1x64xf32, #tpu.memory_space<vmem>>
    %276 = tpu.memref_slice %arg9[%c2_i32_206] : memref<8x!tpu.dma_semaphore, #tpu.memory_space<semaphore_mem>> -> memref<1x!tpu.dma_semaphore, #tpu.memory_space<semaphore_mem>>
    %277 = tpu.memref_squeeze %276 : memref<1x!tpu.dma_semaphore, #tpu.memory_space<semaphore_mem>> -> memref<!tpu.dma_semaphore, #tpu.memory_space<semaphore_mem>>
    tpu.wait_dma2 semaphore(%277 : memref<!tpu.dma_semaphore, #tpu.memory_space<semaphore_mem>>) src(%274 : memref<1x64xf32, #tpu.memory_space<any>>) dst(%275 : memref<1x64xf32, #tpu.memory_space<vmem>>)
    %c20 = arith.constant 20 : index
    %278 = memref.load %arg0[%c20] : memref<64xi32, #tpu.memory_space<smem>>
    %c2_i32_210 = arith.constant 2 : i32
    %c0_i32_211 = arith.constant 0 : i32
    %279 = tpu.memref_slice %arg1[%278, %c0_i32_211] : memref<4411x64xf32, #tpu.memory_space<any>> -> memref<1x64xf32, #tpu.memory_space<any>>
    %c34_i32 = arith.constant 34 : i32
    %c0_i32_212 = arith.constant 0 : i32
    %280 = tpu.memref_slice %arg8[%c34_i32, %c0_i32_212] : memref<64x64xf32, #tpu.memory_space<vmem>> -> memref<1x64xf32, #tpu.memory_space<vmem>>
    %281 = tpu.memref_slice %arg9[%c2_i32_210] : memref<8x!tpu.dma_semaphore, #tpu.memory_space<semaphore_mem>> -> memref<1x!tpu.dma_semaphore, #tpu.memory_space<semaphore_mem>>
    %282 = tpu.memref_squeeze %281 : memref<1x!tpu.dma_semaphore, #tpu.memory_space<semaphore_mem>> -> memref<!tpu.dma_semaphore, #tpu.memory_space<semaphore_mem>>
    tpu.enqueue_dma source(%279 : memref<1x64xf32, #tpu.memory_space<any>>) target(%280 : memref<1x64xf32, #tpu.memory_space<vmem>>) target_semaphore(%282 : memref<!tpu.dma_semaphore, #tpu.memory_space<semaphore_mem>>)
    %c3_i32_213 = arith.constant 3 : i32
    %c0_i32_214 = arith.constant 0 : i32
    %283 = tpu.memref_slice %arg1[%215, %c0_i32_214] : memref<4411x64xf32, #tpu.memory_space<any>> -> memref<1x64xf32, #tpu.memory_space<any>>
    %c27_i32_215 = arith.constant 27 : i32
    %c0_i32_216 = arith.constant 0 : i32
    %284 = tpu.memref_slice %arg8[%c27_i32_215, %c0_i32_216] : memref<64x64xf32, #tpu.memory_space<vmem>> -> memref<1x64xf32, #tpu.memory_space<vmem>>
    %285 = tpu.memref_slice %arg9[%c3_i32_213] : memref<8x!tpu.dma_semaphore, #tpu.memory_space<semaphore_mem>> -> memref<1x!tpu.dma_semaphore, #tpu.memory_space<semaphore_mem>>
    %286 = tpu.memref_squeeze %285 : memref<1x!tpu.dma_semaphore, #tpu.memory_space<semaphore_mem>> -> memref<!tpu.dma_semaphore, #tpu.memory_space<semaphore_mem>>
    tpu.wait_dma2 semaphore(%286 : memref<!tpu.dma_semaphore, #tpu.memory_space<semaphore_mem>>) src(%283 : memref<1x64xf32, #tpu.memory_space<any>>) dst(%284 : memref<1x64xf32, #tpu.memory_space<vmem>>)
    %c28 = arith.constant 28 : index
    %287 = memref.load %arg0[%c28] : memref<64xi32, #tpu.memory_space<smem>>
    %c3_i32_217 = arith.constant 3 : i32
    %c0_i32_218 = arith.constant 0 : i32
    %288 = tpu.memref_slice %arg1[%287, %c0_i32_218] : memref<4411x64xf32, #tpu.memory_space<any>> -> memref<1x64xf32, #tpu.memory_space<any>>
    %c35_i32 = arith.constant 35 : i32
    %c0_i32_219 = arith.constant 0 : i32
    %289 = tpu.memref_slice %arg8[%c35_i32, %c0_i32_219] : memref<64x64xf32, #tpu.memory_space<vmem>> -> memref<1x64xf32, #tpu.memory_space<vmem>>
    %290 = tpu.memref_slice %arg9[%c3_i32_217] : memref<8x!tpu.dma_semaphore, #tpu.memory_space<semaphore_mem>> -> memref<1x!tpu.dma_semaphore, #tpu.memory_space<semaphore_mem>>
    %291 = tpu.memref_squeeze %290 : memref<1x!tpu.dma_semaphore, #tpu.memory_space<semaphore_mem>> -> memref<!tpu.dma_semaphore, #tpu.memory_space<semaphore_mem>>
    tpu.enqueue_dma source(%288 : memref<1x64xf32, #tpu.memory_space<any>>) target(%289 : memref<1x64xf32, #tpu.memory_space<vmem>>) target_semaphore(%291 : memref<!tpu.dma_semaphore, #tpu.memory_space<semaphore_mem>>)
    %c4_i32_220 = arith.constant 4 : i32
    %c0_i32_221 = arith.constant 0 : i32
    %292 = tpu.memref_slice %arg1[%224, %c0_i32_221] : memref<4411x64xf32, #tpu.memory_space<any>> -> memref<1x64xf32, #tpu.memory_space<any>>
    %c28_i32_222 = arith.constant 28 : i32
    %c0_i32_223 = arith.constant 0 : i32
    %293 = tpu.memref_slice %arg8[%c28_i32_222, %c0_i32_223] : memref<64x64xf32, #tpu.memory_space<vmem>> -> memref<1x64xf32, #tpu.memory_space<vmem>>
    %294 = tpu.memref_slice %arg9[%c4_i32_220] : memref<8x!tpu.dma_semaphore, #tpu.memory_space<semaphore_mem>> -> memref<1x!tpu.dma_semaphore, #tpu.memory_space<semaphore_mem>>
    %295 = tpu.memref_squeeze %294 : memref<1x!tpu.dma_semaphore, #tpu.memory_space<semaphore_mem>> -> memref<!tpu.dma_semaphore, #tpu.memory_space<semaphore_mem>>
    tpu.wait_dma2 semaphore(%295 : memref<!tpu.dma_semaphore, #tpu.memory_space<semaphore_mem>>) src(%292 : memref<1x64xf32, #tpu.memory_space<any>>) dst(%293 : memref<1x64xf32, #tpu.memory_space<vmem>>)
    %c36 = arith.constant 36 : index
    %296 = memref.load %arg0[%c36] : memref<64xi32, #tpu.memory_space<smem>>
    %c4_i32_224 = arith.constant 4 : i32
    %c0_i32_225 = arith.constant 0 : i32
    %297 = tpu.memref_slice %arg1[%296, %c0_i32_225] : memref<4411x64xf32, #tpu.memory_space<any>> -> memref<1x64xf32, #tpu.memory_space<any>>
    %c36_i32 = arith.constant 36 : i32
    %c0_i32_226 = arith.constant 0 : i32
    %298 = tpu.memref_slice %arg8[%c36_i32, %c0_i32_226] : memref<64x64xf32, #tpu.memory_space<vmem>> -> memref<1x64xf32, #tpu.memory_space<vmem>>
    %299 = tpu.memref_slice %arg9[%c4_i32_224] : memref<8x!tpu.dma_semaphore, #tpu.memory_space<semaphore_mem>> -> memref<1x!tpu.dma_semaphore, #tpu.memory_space<semaphore_mem>>
    %300 = tpu.memref_squeeze %299 : memref<1x!tpu.dma_semaphore, #tpu.memory_space<semaphore_mem>> -> memref<!tpu.dma_semaphore, #tpu.memory_space<semaphore_mem>>
    tpu.enqueue_dma source(%297 : memref<1x64xf32, #tpu.memory_space<any>>) target(%298 : memref<1x64xf32, #tpu.memory_space<vmem>>) target_semaphore(%300 : memref<!tpu.dma_semaphore, #tpu.memory_space<semaphore_mem>>)
    %c5_i32_227 = arith.constant 5 : i32
    %c0_i32_228 = arith.constant 0 : i32
    %301 = tpu.memref_slice %arg1[%233, %c0_i32_228] : memref<4411x64xf32, #tpu.memory_space<any>> -> memref<1x64xf32, #tpu.memory_space<any>>
    %c29_i32_229 = arith.constant 29 : i32
    %c0_i32_230 = arith.constant 0 : i32
    %302 = tpu.memref_slice %arg8[%c29_i32_229, %c0_i32_230] : memref<64x64xf32, #tpu.memory_space<vmem>> -> memref<1x64xf32, #tpu.memory_space<vmem>>
    %303 = tpu.memref_slice %arg9[%c5_i32_227] : memref<8x!tpu.dma_semaphore, #tpu.memory_space<semaphore_mem>> -> memref<1x!tpu.dma_semaphore, #tpu.memory_space<semaphore_mem>>
    %304 = tpu.memref_squeeze %303 : memref<1x!tpu.dma_semaphore, #tpu.memory_space<semaphore_mem>> -> memref<!tpu.dma_semaphore, #tpu.memory_space<semaphore_mem>>
    tpu.wait_dma2 semaphore(%304 : memref<!tpu.dma_semaphore, #tpu.memory_space<semaphore_mem>>) src(%301 : memref<1x64xf32, #tpu.memory_space<any>>) dst(%302 : memref<1x64xf32, #tpu.memory_space<vmem>>)
    %c44 = arith.constant 44 : index
    %305 = memref.load %arg0[%c44] : memref<64xi32, #tpu.memory_space<smem>>
    %c5_i32_231 = arith.constant 5 : i32
    %c0_i32_232 = arith.constant 0 : i32
    %306 = tpu.memref_slice %arg1[%305, %c0_i32_232] : memref<4411x64xf32, #tpu.memory_space<any>> -> memref<1x64xf32, #tpu.memory_space<any>>
    %c37_i32 = arith.constant 37 : i32
    %c0_i32_233 = arith.constant 0 : i32
    %307 = tpu.memref_slice %arg8[%c37_i32, %c0_i32_233] : memref<64x64xf32, #tpu.memory_space<vmem>> -> memref<1x64xf32, #tpu.memory_space<vmem>>
    %308 = tpu.memref_slice %arg9[%c5_i32_231] : memref<8x!tpu.dma_semaphore, #tpu.memory_space<semaphore_mem>> -> memref<1x!tpu.dma_semaphore, #tpu.memory_space<semaphore_mem>>
    %309 = tpu.memref_squeeze %308 : memref<1x!tpu.dma_semaphore, #tpu.memory_space<semaphore_mem>> -> memref<!tpu.dma_semaphore, #tpu.memory_space<semaphore_mem>>
    tpu.enqueue_dma source(%306 : memref<1x64xf32, #tpu.memory_space<any>>) target(%307 : memref<1x64xf32, #tpu.memory_space<vmem>>) target_semaphore(%309 : memref<!tpu.dma_semaphore, #tpu.memory_space<semaphore_mem>>)
    %c6_i32_234 = arith.constant 6 : i32
    %c0_i32_235 = arith.constant 0 : i32
    %310 = tpu.memref_slice %arg1[%242, %c0_i32_235] : memref<4411x64xf32, #tpu.memory_space<any>> -> memref<1x64xf32, #tpu.memory_space<any>>
    %c30_i32_236 = arith.constant 30 : i32
    %c0_i32_237 = arith.constant 0 : i32
    %311 = tpu.memref_slice %arg8[%c30_i32_236, %c0_i32_237] : memref<64x64xf32, #tpu.memory_space<vmem>> -> memref<1x64xf32, #tpu.memory_space<vmem>>
    %312 = tpu.memref_slice %arg9[%c6_i32_234] : memref<8x!tpu.dma_semaphore, #tpu.memory_space<semaphore_mem>> -> memref<1x!tpu.dma_semaphore, #tpu.memory_space<semaphore_mem>>
    %313 = tpu.memref_squeeze %312 : memref<1x!tpu.dma_semaphore, #tpu.memory_space<semaphore_mem>> -> memref<!tpu.dma_semaphore, #tpu.memory_space<semaphore_mem>>
    tpu.wait_dma2 semaphore(%313 : memref<!tpu.dma_semaphore, #tpu.memory_space<semaphore_mem>>) src(%310 : memref<1x64xf32, #tpu.memory_space<any>>) dst(%311 : memref<1x64xf32, #tpu.memory_space<vmem>>)
    %c52 = arith.constant 52 : index
    %314 = memref.load %arg0[%c52] : memref<64xi32, #tpu.memory_space<smem>>
    %c6_i32_238 = arith.constant 6 : i32
    %c0_i32_239 = arith.constant 0 : i32
    %315 = tpu.memref_slice %arg1[%314, %c0_i32_239] : memref<4411x64xf32, #tpu.memory_space<any>> -> memref<1x64xf32, #tpu.memory_space<any>>
    %c38_i32 = arith.constant 38 : i32
    %c0_i32_240 = arith.constant 0 : i32
    %316 = tpu.memref_slice %arg8[%c38_i32, %c0_i32_240] : memref<64x64xf32, #tpu.memory_space<vmem>> -> memref<1x64xf32, #tpu.memory_space<vmem>>
    %317 = tpu.memref_slice %arg9[%c6_i32_238] : memref<8x!tpu.dma_semaphore, #tpu.memory_space<semaphore_mem>> -> memref<1x!tpu.dma_semaphore, #tpu.memory_space<semaphore_mem>>
    %318 = tpu.memref_squeeze %317 : memref<1x!tpu.dma_semaphore, #tpu.memory_space<semaphore_mem>> -> memref<!tpu.dma_semaphore, #tpu.memory_space<semaphore_mem>>
    tpu.enqueue_dma source(%315 : memref<1x64xf32, #tpu.memory_space<any>>) target(%316 : memref<1x64xf32, #tpu.memory_space<vmem>>) target_semaphore(%318 : memref<!tpu.dma_semaphore, #tpu.memory_space<semaphore_mem>>)
    %c7_i32_241 = arith.constant 7 : i32
    %c0_i32_242 = arith.constant 0 : i32
    %319 = tpu.memref_slice %arg1[%251, %c0_i32_242] : memref<4411x64xf32, #tpu.memory_space<any>> -> memref<1x64xf32, #tpu.memory_space<any>>
    %c31_i32_243 = arith.constant 31 : i32
    %c0_i32_244 = arith.constant 0 : i32
    %320 = tpu.memref_slice %arg8[%c31_i32_243, %c0_i32_244] : memref<64x64xf32, #tpu.memory_space<vmem>> -> memref<1x64xf32, #tpu.memory_space<vmem>>
    %321 = tpu.memref_slice %arg9[%c7_i32_241] : memref<8x!tpu.dma_semaphore, #tpu.memory_space<semaphore_mem>> -> memref<1x!tpu.dma_semaphore, #tpu.memory_space<semaphore_mem>>
    %322 = tpu.memref_squeeze %321 : memref<1x!tpu.dma_semaphore, #tpu.memory_space<semaphore_mem>> -> memref<!tpu.dma_semaphore, #tpu.memory_space<semaphore_mem>>
    tpu.wait_dma2 semaphore(%322 : memref<!tpu.dma_semaphore, #tpu.memory_space<semaphore_mem>>) src(%319 : memref<1x64xf32, #tpu.memory_space<any>>) dst(%320 : memref<1x64xf32, #tpu.memory_space<vmem>>)
    %c60 = arith.constant 60 : index
    %323 = memref.load %arg0[%c60] : memref<64xi32, #tpu.memory_space<smem>>
    %c7_i32_245 = arith.constant 7 : i32
    %c0_i32_246 = arith.constant 0 : i32
    %324 = tpu.memref_slice %arg1[%323, %c0_i32_246] : memref<4411x64xf32, #tpu.memory_space<any>> -> memref<1x64xf32, #tpu.memory_space<any>>
    %c39_i32 = arith.constant 39 : i32
    %c0_i32_247 = arith.constant 0 : i32
    %325 = tpu.memref_slice %arg8[%c39_i32, %c0_i32_247] : memref<64x64xf32, #tpu.memory_space<vmem>> -> memref<1x64xf32, #tpu.memory_space<vmem>>
    %326 = tpu.memref_slice %arg9[%c7_i32_245] : memref<8x!tpu.dma_semaphore, #tpu.memory_space<semaphore_mem>> -> memref<1x!tpu.dma_semaphore, #tpu.memory_space<semaphore_mem>>
    %327 = tpu.memref_squeeze %326 : memref<1x!tpu.dma_semaphore, #tpu.memory_space<semaphore_mem>> -> memref<!tpu.dma_semaphore, #tpu.memory_space<semaphore_mem>>
    tpu.enqueue_dma source(%324 : memref<1x64xf32, #tpu.memory_space<any>>) target(%325 : memref<1x64xf32, #tpu.memory_space<vmem>>) target_semaphore(%327 : memref<!tpu.dma_semaphore, #tpu.memory_space<semaphore_mem>>)
    %c0_i32_248 = arith.constant 0 : i32
    %c0_i32_249 = arith.constant 0 : i32
    %328 = tpu.memref_slice %arg1[%260, %c0_i32_249] : memref<4411x64xf32, #tpu.memory_space<any>> -> memref<1x64xf32, #tpu.memory_space<any>>
    %c32_i32_250 = arith.constant 32 : i32
    %c0_i32_251 = arith.constant 0 : i32
    %329 = tpu.memref_slice %arg8[%c32_i32_250, %c0_i32_251] : memref<64x64xf32, #tpu.memory_space<vmem>> -> memref<1x64xf32, #tpu.memory_space<vmem>>
    %330 = tpu.memref_slice %arg9[%c0_i32_248] : memref<8x!tpu.dma_semaphore, #tpu.memory_space<semaphore_mem>> -> memref<1x!tpu.dma_semaphore, #tpu.memory_space<semaphore_mem>>
    %331 = tpu.memref_squeeze %330 : memref<1x!tpu.dma_semaphore, #tpu.memory_space<semaphore_mem>> -> memref<!tpu.dma_semaphore, #tpu.memory_space<semaphore_mem>>
    tpu.wait_dma2 semaphore(%331 : memref<!tpu.dma_semaphore, #tpu.memory_space<semaphore_mem>>) src(%328 : memref<1x64xf32, #tpu.memory_space<any>>) dst(%329 : memref<1x64xf32, #tpu.memory_space<vmem>>)
    %c5 = arith.constant 5 : index
    %332 = memref.load %arg0[%c5] : memref<64xi32, #tpu.memory_space<smem>>
    %c0_i32_252 = arith.constant 0 : i32
    %c0_i32_253 = arith.constant 0 : i32
    %333 = tpu.memref_slice %arg1[%332, %c0_i32_253] : memref<4411x64xf32, #tpu.memory_space<any>> -> memref<1x64xf32, #tpu.memory_space<any>>
    %c40_i32 = arith.constant 40 : i32
    %c0_i32_254 = arith.constant 0 : i32
    %334 = tpu.memref_slice %arg8[%c40_i32, %c0_i32_254] : memref<64x64xf32, #tpu.memory_space<vmem>> -> memref<1x64xf32, #tpu.memory_space<vmem>>
    %335 = tpu.memref_slice %arg9[%c0_i32_252] : memref<8x!tpu.dma_semaphore, #tpu.memory_space<semaphore_mem>> -> memref<1x!tpu.dma_semaphore, #tpu.memory_space<semaphore_mem>>
    %336 = tpu.memref_squeeze %335 : memref<1x!tpu.dma_semaphore, #tpu.memory_space<semaphore_mem>> -> memref<!tpu.dma_semaphore, #tpu.memory_space<semaphore_mem>>
    tpu.enqueue_dma source(%333 : memref<1x64xf32, #tpu.memory_space<any>>) target(%334 : memref<1x64xf32, #tpu.memory_space<vmem>>) target_semaphore(%336 : memref<!tpu.dma_semaphore, #tpu.memory_space<semaphore_mem>>)
    %c1_i32_255 = arith.constant 1 : i32
    %c0_i32_256 = arith.constant 0 : i32
    %337 = tpu.memref_slice %arg1[%269, %c0_i32_256] : memref<4411x64xf32, #tpu.memory_space<any>> -> memref<1x64xf32, #tpu.memory_space<any>>
    %c33_i32_257 = arith.constant 33 : i32
    %c0_i32_258 = arith.constant 0 : i32
    %338 = tpu.memref_slice %arg8[%c33_i32_257, %c0_i32_258] : memref<64x64xf32, #tpu.memory_space<vmem>> -> memref<1x64xf32, #tpu.memory_space<vmem>>
    %339 = tpu.memref_slice %arg9[%c1_i32_255] : memref<8x!tpu.dma_semaphore, #tpu.memory_space<semaphore_mem>> -> memref<1x!tpu.dma_semaphore, #tpu.memory_space<semaphore_mem>>
    %340 = tpu.memref_squeeze %339 : memref<1x!tpu.dma_semaphore, #tpu.memory_space<semaphore_mem>> -> memref<!tpu.dma_semaphore, #tpu.memory_space<semaphore_mem>>
    tpu.wait_dma2 semaphore(%340 : memref<!tpu.dma_semaphore, #tpu.memory_space<semaphore_mem>>) src(%337 : memref<1x64xf32, #tpu.memory_space<any>>) dst(%338 : memref<1x64xf32, #tpu.memory_space<vmem>>)
    %c13 = arith.constant 13 : index
    %341 = memref.load %arg0[%c13] : memref<64xi32, #tpu.memory_space<smem>>
    %c1_i32_259 = arith.constant 1 : i32
    %c0_i32_260 = arith.constant 0 : i32
    %342 = tpu.memref_slice %arg1[%341, %c0_i32_260] : memref<4411x64xf32, #tpu.memory_space<any>> -> memref<1x64xf32, #tpu.memory_space<any>>
    %c41_i32 = arith.constant 41 : i32
    %c0_i32_261 = arith.constant 0 : i32
    %343 = tpu.memref_slice %arg8[%c41_i32, %c0_i32_261] : memref<64x64xf32, #tpu.memory_space<vmem>> -> memref<1x64xf32, #tpu.memory_space<vmem>>
    %344 = tpu.memref_slice %arg9[%c1_i32_259] : memref<8x!tpu.dma_semaphore, #tpu.memory_space<semaphore_mem>> -> memref<1x!tpu.dma_semaphore, #tpu.memory_space<semaphore_mem>>
    %345 = tpu.memref_squeeze %344 : memref<1x!tpu.dma_semaphore, #tpu.memory_space<semaphore_mem>> -> memref<!tpu.dma_semaphore, #tpu.memory_space<semaphore_mem>>
    tpu.enqueue_dma source(%342 : memref<1x64xf32, #tpu.memory_space<any>>) target(%343 : memref<1x64xf32, #tpu.memory_space<vmem>>) target_semaphore(%345 : memref<!tpu.dma_semaphore, #tpu.memory_space<semaphore_mem>>)
    %c2_i32_262 = arith.constant 2 : i32
    %c0_i32_263 = arith.constant 0 : i32
    %346 = tpu.memref_slice %arg1[%278, %c0_i32_263] : memref<4411x64xf32, #tpu.memory_space<any>> -> memref<1x64xf32, #tpu.memory_space<any>>
    %c34_i32_264 = arith.constant 34 : i32
    %c0_i32_265 = arith.constant 0 : i32
    %347 = tpu.memref_slice %arg8[%c34_i32_264, %c0_i32_265] : memref<64x64xf32, #tpu.memory_space<vmem>> -> memref<1x64xf32, #tpu.memory_space<vmem>>
    %348 = tpu.memref_slice %arg9[%c2_i32_262] : memref<8x!tpu.dma_semaphore, #tpu.memory_space<semaphore_mem>> -> memref<1x!tpu.dma_semaphore, #tpu.memory_space<semaphore_mem>>
    %349 = tpu.memref_squeeze %348 : memref<1x!tpu.dma_semaphore, #tpu.memory_space<semaphore_mem>> -> memref<!tpu.dma_semaphore, #tpu.memory_space<semaphore_mem>>
    tpu.wait_dma2 semaphore(%349 : memref<!tpu.dma_semaphore, #tpu.memory_space<semaphore_mem>>) src(%346 : memref<1x64xf32, #tpu.memory_space<any>>) dst(%347 : memref<1x64xf32, #tpu.memory_space<vmem>>)
    %c21 = arith.constant 21 : index
    %350 = memref.load %arg0[%c21] : memref<64xi32, #tpu.memory_space<smem>>
    %c2_i32_266 = arith.constant 2 : i32
    %c0_i32_267 = arith.constant 0 : i32
    %351 = tpu.memref_slice %arg1[%350, %c0_i32_267] : memref<4411x64xf32, #tpu.memory_space<any>> -> memref<1x64xf32, #tpu.memory_space<any>>
    %c42_i32 = arith.constant 42 : i32
    %c0_i32_268 = arith.constant 0 : i32
    %352 = tpu.memref_slice %arg8[%c42_i32, %c0_i32_268] : memref<64x64xf32, #tpu.memory_space<vmem>> -> memref<1x64xf32, #tpu.memory_space<vmem>>
    %353 = tpu.memref_slice %arg9[%c2_i32_266] : memref<8x!tpu.dma_semaphore, #tpu.memory_space<semaphore_mem>> -> memref<1x!tpu.dma_semaphore, #tpu.memory_space<semaphore_mem>>
    %354 = tpu.memref_squeeze %353 : memref<1x!tpu.dma_semaphore, #tpu.memory_space<semaphore_mem>> -> memref<!tpu.dma_semaphore, #tpu.memory_space<semaphore_mem>>
    tpu.enqueue_dma source(%351 : memref<1x64xf32, #tpu.memory_space<any>>) target(%352 : memref<1x64xf32, #tpu.memory_space<vmem>>) target_semaphore(%354 : memref<!tpu.dma_semaphore, #tpu.memory_space<semaphore_mem>>)
    %c3_i32_269 = arith.constant 3 : i32
    %c0_i32_270 = arith.constant 0 : i32
    %355 = tpu.memref_slice %arg1[%287, %c0_i32_270] : memref<4411x64xf32, #tpu.memory_space<any>> -> memref<1x64xf32, #tpu.memory_space<any>>
    %c35_i32_271 = arith.constant 35 : i32
    %c0_i32_272 = arith.constant 0 : i32
    %356 = tpu.memref_slice %arg8[%c35_i32_271, %c0_i32_272] : memref<64x64xf32, #tpu.memory_space<vmem>> -> memref<1x64xf32, #tpu.memory_space<vmem>>
    %357 = tpu.memref_slice %arg9[%c3_i32_269] : memref<8x!tpu.dma_semaphore, #tpu.memory_space<semaphore_mem>> -> memref<1x!tpu.dma_semaphore, #tpu.memory_space<semaphore_mem>>
    %358 = tpu.memref_squeeze %357 : memref<1x!tpu.dma_semaphore, #tpu.memory_space<semaphore_mem>> -> memref<!tpu.dma_semaphore, #tpu.memory_space<semaphore_mem>>
    tpu.wait_dma2 semaphore(%358 : memref<!tpu.dma_semaphore, #tpu.memory_space<semaphore_mem>>) src(%355 : memref<1x64xf32, #tpu.memory_space<any>>) dst(%356 : memref<1x64xf32, #tpu.memory_space<vmem>>)
    %c29 = arith.constant 29 : index
    %359 = memref.load %arg0[%c29] : memref<64xi32, #tpu.memory_space<smem>>
    %c3_i32_273 = arith.constant 3 : i32
    %c0_i32_274 = arith.constant 0 : i32
    %360 = tpu.memref_slice %arg1[%359, %c0_i32_274] : memref<4411x64xf32, #tpu.memory_space<any>> -> memref<1x64xf32, #tpu.memory_space<any>>
    %c43_i32 = arith.constant 43 : i32
    %c0_i32_275 = arith.constant 0 : i32
    %361 = tpu.memref_slice %arg8[%c43_i32, %c0_i32_275] : memref<64x64xf32, #tpu.memory_space<vmem>> -> memref<1x64xf32, #tpu.memory_space<vmem>>
    %362 = tpu.memref_slice %arg9[%c3_i32_273] : memref<8x!tpu.dma_semaphore, #tpu.memory_space<semaphore_mem>> -> memref<1x!tpu.dma_semaphore, #tpu.memory_space<semaphore_mem>>
    %363 = tpu.memref_squeeze %362 : memref<1x!tpu.dma_semaphore, #tpu.memory_space<semaphore_mem>> -> memref<!tpu.dma_semaphore, #tpu.memory_space<semaphore_mem>>
    tpu.enqueue_dma source(%360 : memref<1x64xf32, #tpu.memory_space<any>>) target(%361 : memref<1x64xf32, #tpu.memory_space<vmem>>) target_semaphore(%363 : memref<!tpu.dma_semaphore, #tpu.memory_space<semaphore_mem>>)
    %c4_i32_276 = arith.constant 4 : i32
    %c0_i32_277 = arith.constant 0 : i32
    %364 = tpu.memref_slice %arg1[%296, %c0_i32_277] : memref<4411x64xf32, #tpu.memory_space<any>> -> memref<1x64xf32, #tpu.memory_space<any>>
    %c36_i32_278 = arith.constant 36 : i32
    %c0_i32_279 = arith.constant 0 : i32
    %365 = tpu.memref_slice %arg8[%c36_i32_278, %c0_i32_279] : memref<64x64xf32, #tpu.memory_space<vmem>> -> memref<1x64xf32, #tpu.memory_space<vmem>>
    %366 = tpu.memref_slice %arg9[%c4_i32_276] : memref<8x!tpu.dma_semaphore, #tpu.memory_space<semaphore_mem>> -> memref<1x!tpu.dma_semaphore, #tpu.memory_space<semaphore_mem>>
    %367 = tpu.memref_squeeze %366 : memref<1x!tpu.dma_semaphore, #tpu.memory_space<semaphore_mem>> -> memref<!tpu.dma_semaphore, #tpu.memory_space<semaphore_mem>>
    tpu.wait_dma2 semaphore(%367 : memref<!tpu.dma_semaphore, #tpu.memory_space<semaphore_mem>>) src(%364 : memref<1x64xf32, #tpu.memory_space<any>>) dst(%365 : memref<1x64xf32, #tpu.memory_space<vmem>>)
    %c37 = arith.constant 37 : index
    %368 = memref.load %arg0[%c37] : memref<64xi32, #tpu.memory_space<smem>>
    %c4_i32_280 = arith.constant 4 : i32
    %c0_i32_281 = arith.constant 0 : i32
    %369 = tpu.memref_slice %arg1[%368, %c0_i32_281] : memref<4411x64xf32, #tpu.memory_space<any>> -> memref<1x64xf32, #tpu.memory_space<any>>
    %c44_i32 = arith.constant 44 : i32
    %c0_i32_282 = arith.constant 0 : i32
    %370 = tpu.memref_slice %arg8[%c44_i32, %c0_i32_282] : memref<64x64xf32, #tpu.memory_space<vmem>> -> memref<1x64xf32, #tpu.memory_space<vmem>>
    %371 = tpu.memref_slice %arg9[%c4_i32_280] : memref<8x!tpu.dma_semaphore, #tpu.memory_space<semaphore_mem>> -> memref<1x!tpu.dma_semaphore, #tpu.memory_space<semaphore_mem>>
    %372 = tpu.memref_squeeze %371 : memref<1x!tpu.dma_semaphore, #tpu.memory_space<semaphore_mem>> -> memref<!tpu.dma_semaphore, #tpu.memory_space<semaphore_mem>>
    tpu.enqueue_dma source(%369 : memref<1x64xf32, #tpu.memory_space<any>>) target(%370 : memref<1x64xf32, #tpu.memory_space<vmem>>) target_semaphore(%372 : memref<!tpu.dma_semaphore, #tpu.memory_space<semaphore_mem>>)
    %c5_i32_283 = arith.constant 5 : i32
    %c0_i32_284 = arith.constant 0 : i32
    %373 = tpu.memref_slice %arg1[%305, %c0_i32_284] : memref<4411x64xf32, #tpu.memory_space<any>> -> memref<1x64xf32, #tpu.memory_space<any>>
    %c37_i32_285 = arith.constant 37 : i32
    %c0_i32_286 = arith.constant 0 : i32
    %374 = tpu.memref_slice %arg8[%c37_i32_285, %c0_i32_286] : memref<64x64xf32, #tpu.memory_space<vmem>> -> memref<1x64xf32, #tpu.memory_space<vmem>>
    %375 = tpu.memref_slice %arg9[%c5_i32_283] : memref<8x!tpu.dma_semaphore, #tpu.memory_space<semaphore_mem>> -> memref<1x!tpu.dma_semaphore, #tpu.memory_space<semaphore_mem>>
    %376 = tpu.memref_squeeze %375 : memref<1x!tpu.dma_semaphore, #tpu.memory_space<semaphore_mem>> -> memref<!tpu.dma_semaphore, #tpu.memory_space<semaphore_mem>>
    tpu.wait_dma2 semaphore(%376 : memref<!tpu.dma_semaphore, #tpu.memory_space<semaphore_mem>>) src(%373 : memref<1x64xf32, #tpu.memory_space<any>>) dst(%374 : memref<1x64xf32, #tpu.memory_space<vmem>>)
    %c45 = arith.constant 45 : index
    %377 = memref.load %arg0[%c45] : memref<64xi32, #tpu.memory_space<smem>>
    %c5_i32_287 = arith.constant 5 : i32
    %c0_i32_288 = arith.constant 0 : i32
    %378 = tpu.memref_slice %arg1[%377, %c0_i32_288] : memref<4411x64xf32, #tpu.memory_space<any>> -> memref<1x64xf32, #tpu.memory_space<any>>
    %c45_i32 = arith.constant 45 : i32
    %c0_i32_289 = arith.constant 0 : i32
    %379 = tpu.memref_slice %arg8[%c45_i32, %c0_i32_289] : memref<64x64xf32, #tpu.memory_space<vmem>> -> memref<1x64xf32, #tpu.memory_space<vmem>>
    %380 = tpu.memref_slice %arg9[%c5_i32_287] : memref<8x!tpu.dma_semaphore, #tpu.memory_space<semaphore_mem>> -> memref<1x!tpu.dma_semaphore, #tpu.memory_space<semaphore_mem>>
    %381 = tpu.memref_squeeze %380 : memref<1x!tpu.dma_semaphore, #tpu.memory_space<semaphore_mem>> -> memref<!tpu.dma_semaphore, #tpu.memory_space<semaphore_mem>>
    tpu.enqueue_dma source(%378 : memref<1x64xf32, #tpu.memory_space<any>>) target(%379 : memref<1x64xf32, #tpu.memory_space<vmem>>) target_semaphore(%381 : memref<!tpu.dma_semaphore, #tpu.memory_space<semaphore_mem>>)
    %c6_i32_290 = arith.constant 6 : i32
    %c0_i32_291 = arith.constant 0 : i32
    %382 = tpu.memref_slice %arg1[%314, %c0_i32_291] : memref<4411x64xf32, #tpu.memory_space<any>> -> memref<1x64xf32, #tpu.memory_space<any>>
    %c38_i32_292 = arith.constant 38 : i32
    %c0_i32_293 = arith.constant 0 : i32
    %383 = tpu.memref_slice %arg8[%c38_i32_292, %c0_i32_293] : memref<64x64xf32, #tpu.memory_space<vmem>> -> memref<1x64xf32, #tpu.memory_space<vmem>>
    %384 = tpu.memref_slice %arg9[%c6_i32_290] : memref<8x!tpu.dma_semaphore, #tpu.memory_space<semaphore_mem>> -> memref<1x!tpu.dma_semaphore, #tpu.memory_space<semaphore_mem>>
    %385 = tpu.memref_squeeze %384 : memref<1x!tpu.dma_semaphore, #tpu.memory_space<semaphore_mem>> -> memref<!tpu.dma_semaphore, #tpu.memory_space<semaphore_mem>>
    tpu.wait_dma2 semaphore(%385 : memref<!tpu.dma_semaphore, #tpu.memory_space<semaphore_mem>>) src(%382 : memref<1x64xf32, #tpu.memory_space<any>>) dst(%383 : memref<1x64xf32, #tpu.memory_space<vmem>>)
    %c53 = arith.constant 53 : index
    %386 = memref.load %arg0[%c53] : memref<64xi32, #tpu.memory_space<smem>>
    %c6_i32_294 = arith.constant 6 : i32
    %c0_i32_295 = arith.constant 0 : i32
    %387 = tpu.memref_slice %arg1[%386, %c0_i32_295] : memref<4411x64xf32, #tpu.memory_space<any>> -> memref<1x64xf32, #tpu.memory_space<any>>
    %c46_i32 = arith.constant 46 : i32
    %c0_i32_296 = arith.constant 0 : i32
    %388 = tpu.memref_slice %arg8[%c46_i32, %c0_i32_296] : memref<64x64xf32, #tpu.memory_space<vmem>> -> memref<1x64xf32, #tpu.memory_space<vmem>>
    %389 = tpu.memref_slice %arg9[%c6_i32_294] : memref<8x!tpu.dma_semaphore, #tpu.memory_space<semaphore_mem>> -> memref<1x!tpu.dma_semaphore, #tpu.memory_space<semaphore_mem>>
    %390 = tpu.memref_squeeze %389 : memref<1x!tpu.dma_semaphore, #tpu.memory_space<semaphore_mem>> -> memref<!tpu.dma_semaphore, #tpu.memory_space<semaphore_mem>>
    tpu.enqueue_dma source(%387 : memref<1x64xf32, #tpu.memory_space<any>>) target(%388 : memref<1x64xf32, #tpu.memory_space<vmem>>) target_semaphore(%390 : memref<!tpu.dma_semaphore, #tpu.memory_space<semaphore_mem>>)
    %c7_i32_297 = arith.constant 7 : i32
    %c0_i32_298 = arith.constant 0 : i32
    %391 = tpu.memref_slice %arg1[%323, %c0_i32_298] : memref<4411x64xf32, #tpu.memory_space<any>> -> memref<1x64xf32, #tpu.memory_space<any>>
    %c39_i32_299 = arith.constant 39 : i32
    %c0_i32_300 = arith.constant 0 : i32
    %392 = tpu.memref_slice %arg8[%c39_i32_299, %c0_i32_300] : memref<64x64xf32, #tpu.memory_space<vmem>> -> memref<1x64xf32, #tpu.memory_space<vmem>>
    %393 = tpu.memref_slice %arg9[%c7_i32_297] : memref<8x!tpu.dma_semaphore, #tpu.memory_space<semaphore_mem>> -> memref<1x!tpu.dma_semaphore, #tpu.memory_space<semaphore_mem>>
    %394 = tpu.memref_squeeze %393 : memref<1x!tpu.dma_semaphore, #tpu.memory_space<semaphore_mem>> -> memref<!tpu.dma_semaphore, #tpu.memory_space<semaphore_mem>>
    tpu.wait_dma2 semaphore(%394 : memref<!tpu.dma_semaphore, #tpu.memory_space<semaphore_mem>>) src(%391 : memref<1x64xf32, #tpu.memory_space<any>>) dst(%392 : memref<1x64xf32, #tpu.memory_space<vmem>>)
    %c61 = arith.constant 61 : index
    %395 = memref.load %arg0[%c61] : memref<64xi32, #tpu.memory_space<smem>>
    %c7_i32_301 = arith.constant 7 : i32
    %c0_i32_302 = arith.constant 0 : i32
    %396 = tpu.memref_slice %arg1[%395, %c0_i32_302] : memref<4411x64xf32, #tpu.memory_space<any>> -> memref<1x64xf32, #tpu.memory_space<any>>
    %c47_i32 = arith.constant 47 : i32
    %c0_i32_303 = arith.constant 0 : i32
    %397 = tpu.memref_slice %arg8[%c47_i32, %c0_i32_303] : memref<64x64xf32, #tpu.memory_space<vmem>> -> memref<1x64xf32, #tpu.memory_space<vmem>>
    %398 = tpu.memref_slice %arg9[%c7_i32_301] : memref<8x!tpu.dma_semaphore, #tpu.memory_space<semaphore_mem>> -> memref<1x!tpu.dma_semaphore, #tpu.memory_space<semaphore_mem>>
    %399 = tpu.memref_squeeze %398 : memref<1x!tpu.dma_semaphore, #tpu.memory_space<semaphore_mem>> -> memref<!tpu.dma_semaphore, #tpu.memory_space<semaphore_mem>>
    tpu.enqueue_dma source(%396 : memref<1x64xf32, #tpu.memory_space<any>>) target(%397 : memref<1x64xf32, #tpu.memory_space<vmem>>) target_semaphore(%399 : memref<!tpu.dma_semaphore, #tpu.memory_space<semaphore_mem>>)
    %c0_i32_304 = arith.constant 0 : i32
    %c0_i32_305 = arith.constant 0 : i32
    %400 = tpu.memref_slice %arg1[%332, %c0_i32_305] : memref<4411x64xf32, #tpu.memory_space<any>> -> memref<1x64xf32, #tpu.memory_space<any>>
    %c40_i32_306 = arith.constant 40 : i32
    %c0_i32_307 = arith.constant 0 : i32
    %401 = tpu.memref_slice %arg8[%c40_i32_306, %c0_i32_307] : memref<64x64xf32, #tpu.memory_space<vmem>> -> memref<1x64xf32, #tpu.memory_space<vmem>>
    %402 = tpu.memref_slice %arg9[%c0_i32_304] : memref<8x!tpu.dma_semaphore, #tpu.memory_space<semaphore_mem>> -> memref<1x!tpu.dma_semaphore, #tpu.memory_space<semaphore_mem>>
    %403 = tpu.memref_squeeze %402 : memref<1x!tpu.dma_semaphore, #tpu.memory_space<semaphore_mem>> -> memref<!tpu.dma_semaphore, #tpu.memory_space<semaphore_mem>>
    tpu.wait_dma2 semaphore(%403 : memref<!tpu.dma_semaphore, #tpu.memory_space<semaphore_mem>>) src(%400 : memref<1x64xf32, #tpu.memory_space<any>>) dst(%401 : memref<1x64xf32, #tpu.memory_space<vmem>>)
    %c6 = arith.constant 6 : index
    %404 = memref.load %arg0[%c6] : memref<64xi32, #tpu.memory_space<smem>>
    %c0_i32_308 = arith.constant 0 : i32
    %c0_i32_309 = arith.constant 0 : i32
    %405 = tpu.memref_slice %arg1[%404, %c0_i32_309] : memref<4411x64xf32, #tpu.memory_space<any>> -> memref<1x64xf32, #tpu.memory_space<any>>
    %c48_i32 = arith.constant 48 : i32
    %c0_i32_310 = arith.constant 0 : i32
    %406 = tpu.memref_slice %arg8[%c48_i32, %c0_i32_310] : memref<64x64xf32, #tpu.memory_space<vmem>> -> memref<1x64xf32, #tpu.memory_space<vmem>>
    %407 = tpu.memref_slice %arg9[%c0_i32_308] : memref<8x!tpu.dma_semaphore, #tpu.memory_space<semaphore_mem>> -> memref<1x!tpu.dma_semaphore, #tpu.memory_space<semaphore_mem>>
    %408 = tpu.memref_squeeze %407 : memref<1x!tpu.dma_semaphore, #tpu.memory_space<semaphore_mem>> -> memref<!tpu.dma_semaphore, #tpu.memory_space<semaphore_mem>>
    tpu.enqueue_dma source(%405 : memref<1x64xf32, #tpu.memory_space<any>>) target(%406 : memref<1x64xf32, #tpu.memory_space<vmem>>) target_semaphore(%408 : memref<!tpu.dma_semaphore, #tpu.memory_space<semaphore_mem>>)
    %c1_i32_311 = arith.constant 1 : i32
    %c0_i32_312 = arith.constant 0 : i32
    %409 = tpu.memref_slice %arg1[%341, %c0_i32_312] : memref<4411x64xf32, #tpu.memory_space<any>> -> memref<1x64xf32, #tpu.memory_space<any>>
    %c41_i32_313 = arith.constant 41 : i32
    %c0_i32_314 = arith.constant 0 : i32
    %410 = tpu.memref_slice %arg8[%c41_i32_313, %c0_i32_314] : memref<64x64xf32, #tpu.memory_space<vmem>> -> memref<1x64xf32, #tpu.memory_space<vmem>>
    %411 = tpu.memref_slice %arg9[%c1_i32_311] : memref<8x!tpu.dma_semaphore, #tpu.memory_space<semaphore_mem>> -> memref<1x!tpu.dma_semaphore, #tpu.memory_space<semaphore_mem>>
    %412 = tpu.memref_squeeze %411 : memref<1x!tpu.dma_semaphore, #tpu.memory_space<semaphore_mem>> -> memref<!tpu.dma_semaphore, #tpu.memory_space<semaphore_mem>>
    tpu.wait_dma2 semaphore(%412 : memref<!tpu.dma_semaphore, #tpu.memory_space<semaphore_mem>>) src(%409 : memref<1x64xf32, #tpu.memory_space<any>>) dst(%410 : memref<1x64xf32, #tpu.memory_space<vmem>>)
    %c14 = arith.constant 14 : index
    %413 = memref.load %arg0[%c14] : memref<64xi32, #tpu.memory_space<smem>>
    %c1_i32_315 = arith.constant 1 : i32
    %c0_i32_316 = arith.constant 0 : i32
    %414 = tpu.memref_slice %arg1[%413, %c0_i32_316] : memref<4411x64xf32, #tpu.memory_space<any>> -> memref<1x64xf32, #tpu.memory_space<any>>
    %c49_i32 = arith.constant 49 : i32
    %c0_i32_317 = arith.constant 0 : i32
    %415 = tpu.memref_slice %arg8[%c49_i32, %c0_i32_317] : memref<64x64xf32, #tpu.memory_space<vmem>> -> memref<1x64xf32, #tpu.memory_space<vmem>>
    %416 = tpu.memref_slice %arg9[%c1_i32_315] : memref<8x!tpu.dma_semaphore, #tpu.memory_space<semaphore_mem>> -> memref<1x!tpu.dma_semaphore, #tpu.memory_space<semaphore_mem>>
    %417 = tpu.memref_squeeze %416 : memref<1x!tpu.dma_semaphore, #tpu.memory_space<semaphore_mem>> -> memref<!tpu.dma_semaphore, #tpu.memory_space<semaphore_mem>>
    tpu.enqueue_dma source(%414 : memref<1x64xf32, #tpu.memory_space<any>>) target(%415 : memref<1x64xf32, #tpu.memory_space<vmem>>) target_semaphore(%417 : memref<!tpu.dma_semaphore, #tpu.memory_space<semaphore_mem>>)
    %c2_i32_318 = arith.constant 2 : i32
    %c0_i32_319 = arith.constant 0 : i32
    %418 = tpu.memref_slice %arg1[%350, %c0_i32_319] : memref<4411x64xf32, #tpu.memory_space<any>> -> memref<1x64xf32, #tpu.memory_space<any>>
    %c42_i32_320 = arith.constant 42 : i32
    %c0_i32_321 = arith.constant 0 : i32
    %419 = tpu.memref_slice %arg8[%c42_i32_320, %c0_i32_321] : memref<64x64xf32, #tpu.memory_space<vmem>> -> memref<1x64xf32, #tpu.memory_space<vmem>>
    %420 = tpu.memref_slice %arg9[%c2_i32_318] : memref<8x!tpu.dma_semaphore, #tpu.memory_space<semaphore_mem>> -> memref<1x!tpu.dma_semaphore, #tpu.memory_space<semaphore_mem>>
    %421 = tpu.memref_squeeze %420 : memref<1x!tpu.dma_semaphore, #tpu.memory_space<semaphore_mem>> -> memref<!tpu.dma_semaphore, #tpu.memory_space<semaphore_mem>>
    tpu.wait_dma2 semaphore(%421 : memref<!tpu.dma_semaphore, #tpu.memory_space<semaphore_mem>>) src(%418 : memref<1x64xf32, #tpu.memory_space<any>>) dst(%419 : memref<1x64xf32, #tpu.memory_space<vmem>>)
    %c22 = arith.constant 22 : index
    %422 = memref.load %arg0[%c22] : memref<64xi32, #tpu.memory_space<smem>>
    %c2_i32_322 = arith.constant 2 : i32
    %c0_i32_323 = arith.constant 0 : i32
    %423 = tpu.memref_slice %arg1[%422, %c0_i32_323] : memref<4411x64xf32, #tpu.memory_space<any>> -> memref<1x64xf32, #tpu.memory_space<any>>
    %c50_i32 = arith.constant 50 : i32
    %c0_i32_324 = arith.constant 0 : i32
    %424 = tpu.memref_slice %arg8[%c50_i32, %c0_i32_324] : memref<64x64xf32, #tpu.memory_space<vmem>> -> memref<1x64xf32, #tpu.memory_space<vmem>>
    %425 = tpu.memref_slice %arg9[%c2_i32_322] : memref<8x!tpu.dma_semaphore, #tpu.memory_space<semaphore_mem>> -> memref<1x!tpu.dma_semaphore, #tpu.memory_space<semaphore_mem>>
    %426 = tpu.memref_squeeze %425 : memref<1x!tpu.dma_semaphore, #tpu.memory_space<semaphore_mem>> -> memref<!tpu.dma_semaphore, #tpu.memory_space<semaphore_mem>>
    tpu.enqueue_dma source(%423 : memref<1x64xf32, #tpu.memory_space<any>>) target(%424 : memref<1x64xf32, #tpu.memory_space<vmem>>) target_semaphore(%426 : memref<!tpu.dma_semaphore, #tpu.memory_space<semaphore_mem>>)
    %c3_i32_325 = arith.constant 3 : i32
    %c0_i32_326 = arith.constant 0 : i32
    %427 = tpu.memref_slice %arg1[%359, %c0_i32_326] : memref<4411x64xf32, #tpu.memory_space<any>> -> memref<1x64xf32, #tpu.memory_space<any>>
    %c43_i32_327 = arith.constant 43 : i32
    %c0_i32_328 = arith.constant 0 : i32
    %428 = tpu.memref_slice %arg8[%c43_i32_327, %c0_i32_328] : memref<64x64xf32, #tpu.memory_space<vmem>> -> memref<1x64xf32, #tpu.memory_space<vmem>>
    %429 = tpu.memref_slice %arg9[%c3_i32_325] : memref<8x!tpu.dma_semaphore, #tpu.memory_space<semaphore_mem>> -> memref<1x!tpu.dma_semaphore, #tpu.memory_space<semaphore_mem>>
    %430 = tpu.memref_squeeze %429 : memref<1x!tpu.dma_semaphore, #tpu.memory_space<semaphore_mem>> -> memref<!tpu.dma_semaphore, #tpu.memory_space<semaphore_mem>>
    tpu.wait_dma2 semaphore(%430 : memref<!tpu.dma_semaphore, #tpu.memory_space<semaphore_mem>>) src(%427 : memref<1x64xf32, #tpu.memory_space<any>>) dst(%428 : memref<1x64xf32, #tpu.memory_space<vmem>>)
    %c30 = arith.constant 30 : index
    %431 = memref.load %arg0[%c30] : memref<64xi32, #tpu.memory_space<smem>>
    %c3_i32_329 = arith.constant 3 : i32
    %c0_i32_330 = arith.constant 0 : i32
    %432 = tpu.memref_slice %arg1[%431, %c0_i32_330] : memref<4411x64xf32, #tpu.memory_space<any>> -> memref<1x64xf32, #tpu.memory_space<any>>
    %c51_i32 = arith.constant 51 : i32
    %c0_i32_331 = arith.constant 0 : i32
    %433 = tpu.memref_slice %arg8[%c51_i32, %c0_i32_331] : memref<64x64xf32, #tpu.memory_space<vmem>> -> memref<1x64xf32, #tpu.memory_space<vmem>>
    %434 = tpu.memref_slice %arg9[%c3_i32_329] : memref<8x!tpu.dma_semaphore, #tpu.memory_space<semaphore_mem>> -> memref<1x!tpu.dma_semaphore, #tpu.memory_space<semaphore_mem>>
    %435 = tpu.memref_squeeze %434 : memref<1x!tpu.dma_semaphore, #tpu.memory_space<semaphore_mem>> -> memref<!tpu.dma_semaphore, #tpu.memory_space<semaphore_mem>>
    tpu.enqueue_dma source(%432 : memref<1x64xf32, #tpu.memory_space<any>>) target(%433 : memref<1x64xf32, #tpu.memory_space<vmem>>) target_semaphore(%435 : memref<!tpu.dma_semaphore, #tpu.memory_space<semaphore_mem>>)
    %c4_i32_332 = arith.constant 4 : i32
    %c0_i32_333 = arith.constant 0 : i32
    %436 = tpu.memref_slice %arg1[%368, %c0_i32_333] : memref<4411x64xf32, #tpu.memory_space<any>> -> memref<1x64xf32, #tpu.memory_space<any>>
    %c44_i32_334 = arith.constant 44 : i32
    %c0_i32_335 = arith.constant 0 : i32
    %437 = tpu.memref_slice %arg8[%c44_i32_334, %c0_i32_335] : memref<64x64xf32, #tpu.memory_space<vmem>> -> memref<1x64xf32, #tpu.memory_space<vmem>>
    %438 = tpu.memref_slice %arg9[%c4_i32_332] : memref<8x!tpu.dma_semaphore, #tpu.memory_space<semaphore_mem>> -> memref<1x!tpu.dma_semaphore, #tpu.memory_space<semaphore_mem>>
    %439 = tpu.memref_squeeze %438 : memref<1x!tpu.dma_semaphore, #tpu.memory_space<semaphore_mem>> -> memref<!tpu.dma_semaphore, #tpu.memory_space<semaphore_mem>>
    tpu.wait_dma2 semaphore(%439 : memref<!tpu.dma_semaphore, #tpu.memory_space<semaphore_mem>>) src(%436 : memref<1x64xf32, #tpu.memory_space<any>>) dst(%437 : memref<1x64xf32, #tpu.memory_space<vmem>>)
    %c38 = arith.constant 38 : index
    %440 = memref.load %arg0[%c38] : memref<64xi32, #tpu.memory_space<smem>>
    %c4_i32_336 = arith.constant 4 : i32
    %c0_i32_337 = arith.constant 0 : i32
    %441 = tpu.memref_slice %arg1[%440, %c0_i32_337] : memref<4411x64xf32, #tpu.memory_space<any>> -> memref<1x64xf32, #tpu.memory_space<any>>
    %c52_i32 = arith.constant 52 : i32
    %c0_i32_338 = arith.constant 0 : i32
    %442 = tpu.memref_slice %arg8[%c52_i32, %c0_i32_338] : memref<64x64xf32, #tpu.memory_space<vmem>> -> memref<1x64xf32, #tpu.memory_space<vmem>>
    %443 = tpu.memref_slice %arg9[%c4_i32_336] : memref<8x!tpu.dma_semaphore, #tpu.memory_space<semaphore_mem>> -> memref<1x!tpu.dma_semaphore, #tpu.memory_space<semaphore_mem>>
    %444 = tpu.memref_squeeze %443 : memref<1x!tpu.dma_semaphore, #tpu.memory_space<semaphore_mem>> -> memref<!tpu.dma_semaphore, #tpu.memory_space<semaphore_mem>>
    tpu.enqueue_dma source(%441 : memref<1x64xf32, #tpu.memory_space<any>>) target(%442 : memref<1x64xf32, #tpu.memory_space<vmem>>) target_semaphore(%444 : memref<!tpu.dma_semaphore, #tpu.memory_space<semaphore_mem>>)
    %c5_i32_339 = arith.constant 5 : i32
    %c0_i32_340 = arith.constant 0 : i32
    %445 = tpu.memref_slice %arg1[%377, %c0_i32_340] : memref<4411x64xf32, #tpu.memory_space<any>> -> memref<1x64xf32, #tpu.memory_space<any>>
    %c45_i32_341 = arith.constant 45 : i32
    %c0_i32_342 = arith.constant 0 : i32
    %446 = tpu.memref_slice %arg8[%c45_i32_341, %c0_i32_342] : memref<64x64xf32, #tpu.memory_space<vmem>> -> memref<1x64xf32, #tpu.memory_space<vmem>>
    %447 = tpu.memref_slice %arg9[%c5_i32_339] : memref<8x!tpu.dma_semaphore, #tpu.memory_space<semaphore_mem>> -> memref<1x!tpu.dma_semaphore, #tpu.memory_space<semaphore_mem>>
    %448 = tpu.memref_squeeze %447 : memref<1x!tpu.dma_semaphore, #tpu.memory_space<semaphore_mem>> -> memref<!tpu.dma_semaphore, #tpu.memory_space<semaphore_mem>>
    tpu.wait_dma2 semaphore(%448 : memref<!tpu.dma_semaphore, #tpu.memory_space<semaphore_mem>>) src(%445 : memref<1x64xf32, #tpu.memory_space<any>>) dst(%446 : memref<1x64xf32, #tpu.memory_space<vmem>>)
    %c46 = arith.constant 46 : index
    %449 = memref.load %arg0[%c46] : memref<64xi32, #tpu.memory_space<smem>>
    %c5_i32_343 = arith.constant 5 : i32
    %c0_i32_344 = arith.constant 0 : i32
    %450 = tpu.memref_slice %arg1[%449, %c0_i32_344] : memref<4411x64xf32, #tpu.memory_space<any>> -> memref<1x64xf32, #tpu.memory_space<any>>
    %c53_i32 = arith.constant 53 : i32
    %c0_i32_345 = arith.constant 0 : i32
    %451 = tpu.memref_slice %arg8[%c53_i32, %c0_i32_345] : memref<64x64xf32, #tpu.memory_space<vmem>> -> memref<1x64xf32, #tpu.memory_space<vmem>>
    %452 = tpu.memref_slice %arg9[%c5_i32_343] : memref<8x!tpu.dma_semaphore, #tpu.memory_space<semaphore_mem>> -> memref<1x!tpu.dma_semaphore, #tpu.memory_space<semaphore_mem>>
    %453 = tpu.memref_squeeze %452 : memref<1x!tpu.dma_semaphore, #tpu.memory_space<semaphore_mem>> -> memref<!tpu.dma_semaphore, #tpu.memory_space<semaphore_mem>>
    tpu.enqueue_dma source(%450 : memref<1x64xf32, #tpu.memory_space<any>>) target(%451 : memref<1x64xf32, #tpu.memory_space<vmem>>) target_semaphore(%453 : memref<!tpu.dma_semaphore, #tpu.memory_space<semaphore_mem>>)
    %c6_i32_346 = arith.constant 6 : i32
    %c0_i32_347 = arith.constant 0 : i32
    %454 = tpu.memref_slice %arg1[%386, %c0_i32_347] : memref<4411x64xf32, #tpu.memory_space<any>> -> memref<1x64xf32, #tpu.memory_space<any>>
    %c46_i32_348 = arith.constant 46 : i32
    %c0_i32_349 = arith.constant 0 : i32
    %455 = tpu.memref_slice %arg8[%c46_i32_348, %c0_i32_349] : memref<64x64xf32, #tpu.memory_space<vmem>> -> memref<1x64xf32, #tpu.memory_space<vmem>>
    %456 = tpu.memref_slice %arg9[%c6_i32_346] : memref<8x!tpu.dma_semaphore, #tpu.memory_space<semaphore_mem>> -> memref<1x!tpu.dma_semaphore, #tpu.memory_space<semaphore_mem>>
    %457 = tpu.memref_squeeze %456 : memref<1x!tpu.dma_semaphore, #tpu.memory_space<semaphore_mem>> -> memref<!tpu.dma_semaphore, #tpu.memory_space<semaphore_mem>>
    tpu.wait_dma2 semaphore(%457 : memref<!tpu.dma_semaphore, #tpu.memory_space<semaphore_mem>>) src(%454 : memref<1x64xf32, #tpu.memory_space<any>>) dst(%455 : memref<1x64xf32, #tpu.memory_space<vmem>>)
    %c54 = arith.constant 54 : index
    %458 = memref.load %arg0[%c54] : memref<64xi32, #tpu.memory_space<smem>>
    %c6_i32_350 = arith.constant 6 : i32
    %c0_i32_351 = arith.constant 0 : i32
    %459 = tpu.memref_slice %arg1[%458, %c0_i32_351] : memref<4411x64xf32, #tpu.memory_space<any>> -> memref<1x64xf32, #tpu.memory_space<any>>
    %c54_i32 = arith.constant 54 : i32
    %c0_i32_352 = arith.constant 0 : i32
    %460 = tpu.memref_slice %arg8[%c54_i32, %c0_i32_352] : memref<64x64xf32, #tpu.memory_space<vmem>> -> memref<1x64xf32, #tpu.memory_space<vmem>>
    %461 = tpu.memref_slice %arg9[%c6_i32_350] : memref<8x!tpu.dma_semaphore, #tpu.memory_space<semaphore_mem>> -> memref<1x!tpu.dma_semaphore, #tpu.memory_space<semaphore_mem>>
    %462 = tpu.memref_squeeze %461 : memref<1x!tpu.dma_semaphore, #tpu.memory_space<semaphore_mem>> -> memref<!tpu.dma_semaphore, #tpu.memory_space<semaphore_mem>>
    tpu.enqueue_dma source(%459 : memref<1x64xf32, #tpu.memory_space<any>>) target(%460 : memref<1x64xf32, #tpu.memory_space<vmem>>) target_semaphore(%462 : memref<!tpu.dma_semaphore, #tpu.memory_space<semaphore_mem>>)
    %c7_i32_353 = arith.constant 7 : i32
    %c0_i32_354 = arith.constant 0 : i32
    %463 = tpu.memref_slice %arg1[%395, %c0_i32_354] : memref<4411x64xf32, #tpu.memory_space<any>> -> memref<1x64xf32, #tpu.memory_space<any>>
    %c47_i32_355 = arith.constant 47 : i32
    %c0_i32_356 = arith.constant 0 : i32
    %464 = tpu.memref_slice %arg8[%c47_i32_355, %c0_i32_356] : memref<64x64xf32, #tpu.memory_space<vmem>> -> memref<1x64xf32, #tpu.memory_space<vmem>>
    %465 = tpu.memref_slice %arg9[%c7_i32_353] : memref<8x!tpu.dma_semaphore, #tpu.memory_space<semaphore_mem>> -> memref<1x!tpu.dma_semaphore, #tpu.memory_space<semaphore_mem>>
    %466 = tpu.memref_squeeze %465 : memref<1x!tpu.dma_semaphore, #tpu.memory_space<semaphore_mem>> -> memref<!tpu.dma_semaphore, #tpu.memory_space<semaphore_mem>>
    tpu.wait_dma2 semaphore(%466 : memref<!tpu.dma_semaphore, #tpu.memory_space<semaphore_mem>>) src(%463 : memref<1x64xf32, #tpu.memory_space<any>>) dst(%464 : memref<1x64xf32, #tpu.memory_space<vmem>>)
    %c62 = arith.constant 62 : index
    %467 = memref.load %arg0[%c62] : memref<64xi32, #tpu.memory_space<smem>>
    %c7_i32_357 = arith.constant 7 : i32
    %c0_i32_358 = arith.constant 0 : i32
    %468 = tpu.memref_slice %arg1[%467, %c0_i32_358] : memref<4411x64xf32, #tpu.memory_space<any>> -> memref<1x64xf32, #tpu.memory_space<any>>
    %c55_i32 = arith.constant 55 : i32
    %c0_i32_359 = arith.constant 0 : i32
    %469 = tpu.memref_slice %arg8[%c55_i32, %c0_i32_359] : memref<64x64xf32, #tpu.memory_space<vmem>> -> memref<1x64xf32, #tpu.memory_space<vmem>>
    %470 = tpu.memref_slice %arg9[%c7_i32_357] : memref<8x!tpu.dma_semaphore, #tpu.memory_space<semaphore_mem>> -> memref<1x!tpu.dma_semaphore, #tpu.memory_space<semaphore_mem>>
    %471 = tpu.memref_squeeze %470 : memref<1x!tpu.dma_semaphore, #tpu.memory_space<semaphore_mem>> -> memref<!tpu.dma_semaphore, #tpu.memory_space<semaphore_mem>>
    tpu.enqueue_dma source(%468 : memref<1x64xf32, #tpu.memory_space<any>>) target(%469 : memref<1x64xf32, #tpu.memory_space<vmem>>) target_semaphore(%471 : memref<!tpu.dma_semaphore, #tpu.memory_space<semaphore_mem>>)
    %c0_i32_360 = arith.constant 0 : i32
    %c0_i32_361 = arith.constant 0 : i32
    %472 = tpu.memref_slice %arg1[%404, %c0_i32_361] : memref<4411x64xf32, #tpu.memory_space<any>> -> memref<1x64xf32, #tpu.memory_space<any>>
    %c48_i32_362 = arith.constant 48 : i32
    %c0_i32_363 = arith.constant 0 : i32
    %473 = tpu.memref_slice %arg8[%c48_i32_362, %c0_i32_363] : memref<64x64xf32, #tpu.memory_space<vmem>> -> memref<1x64xf32, #tpu.memory_space<vmem>>
    %474 = tpu.memref_slice %arg9[%c0_i32_360] : memref<8x!tpu.dma_semaphore, #tpu.memory_space<semaphore_mem>> -> memref<1x!tpu.dma_semaphore, #tpu.memory_space<semaphore_mem>>
    %475 = tpu.memref_squeeze %474 : memref<1x!tpu.dma_semaphore, #tpu.memory_space<semaphore_mem>> -> memref<!tpu.dma_semaphore, #tpu.memory_space<semaphore_mem>>
    tpu.wait_dma2 semaphore(%475 : memref<!tpu.dma_semaphore, #tpu.memory_space<semaphore_mem>>) src(%472 : memref<1x64xf32, #tpu.memory_space<any>>) dst(%473 : memref<1x64xf32, #tpu.memory_space<vmem>>)
    %c7 = arith.constant 7 : index
    %476 = memref.load %arg0[%c7] : memref<64xi32, #tpu.memory_space<smem>>
    %c0_i32_364 = arith.constant 0 : i32
    %c0_i32_365 = arith.constant 0 : i32
    %477 = tpu.memref_slice %arg1[%476, %c0_i32_365] : memref<4411x64xf32, #tpu.memory_space<any>> -> memref<1x64xf32, #tpu.memory_space<any>>
    %c56_i32 = arith.constant 56 : i32
    %c0_i32_366 = arith.constant 0 : i32
    %478 = tpu.memref_slice %arg8[%c56_i32, %c0_i32_366] : memref<64x64xf32, #tpu.memory_space<vmem>> -> memref<1x64xf32, #tpu.memory_space<vmem>>
    %479 = tpu.memref_slice %arg9[%c0_i32_364] : memref<8x!tpu.dma_semaphore, #tpu.memory_space<semaphore_mem>> -> memref<1x!tpu.dma_semaphore, #tpu.memory_space<semaphore_mem>>
    %480 = tpu.memref_squeeze %479 : memref<1x!tpu.dma_semaphore, #tpu.memory_space<semaphore_mem>> -> memref<!tpu.dma_semaphore, #tpu.memory_space<semaphore_mem>>
    tpu.enqueue_dma source(%477 : memref<1x64xf32, #tpu.memory_space<any>>) target(%478 : memref<1x64xf32, #tpu.memory_space<vmem>>) target_semaphore(%480 : memref<!tpu.dma_semaphore, #tpu.memory_space<semaphore_mem>>)
    %c1_i32_367 = arith.constant 1 : i32
    %c0_i32_368 = arith.constant 0 : i32
    %481 = tpu.memref_slice %arg1[%413, %c0_i32_368] : memref<4411x64xf32, #tpu.memory_space<any>> -> memref<1x64xf32, #tpu.memory_space<any>>
    %c49_i32_369 = arith.constant 49 : i32
    %c0_i32_370 = arith.constant 0 : i32
    %482 = tpu.memref_slice %arg8[%c49_i32_369, %c0_i32_370] : memref<64x64xf32, #tpu.memory_space<vmem>> -> memref<1x64xf32, #tpu.memory_space<vmem>>
    %483 = tpu.memref_slice %arg9[%c1_i32_367] : memref<8x!tpu.dma_semaphore, #tpu.memory_space<semaphore_mem>> -> memref<1x!tpu.dma_semaphore, #tpu.memory_space<semaphore_mem>>
    %484 = tpu.memref_squeeze %483 : memref<1x!tpu.dma_semaphore, #tpu.memory_space<semaphore_mem>> -> memref<!tpu.dma_semaphore, #tpu.memory_space<semaphore_mem>>
    tpu.wait_dma2 semaphore(%484 : memref<!tpu.dma_semaphore, #tpu.memory_space<semaphore_mem>>) src(%481 : memref<1x64xf32, #tpu.memory_space<any>>) dst(%482 : memref<1x64xf32, #tpu.memory_space<vmem>>)
    %c15 = arith.constant 15 : index
    %485 = memref.load %arg0[%c15] : memref<64xi32, #tpu.memory_space<smem>>
    %c1_i32_371 = arith.constant 1 : i32
    %c0_i32_372 = arith.constant 0 : i32
    %486 = tpu.memref_slice %arg1[%485, %c0_i32_372] : memref<4411x64xf32, #tpu.memory_space<any>> -> memref<1x64xf32, #tpu.memory_space<any>>
    %c57_i32 = arith.constant 57 : i32
    %c0_i32_373 = arith.constant 0 : i32
    %487 = tpu.memref_slice %arg8[%c57_i32, %c0_i32_373] : memref<64x64xf32, #tpu.memory_space<vmem>> -> memref<1x64xf32, #tpu.memory_space<vmem>>
    %488 = tpu.memref_slice %arg9[%c1_i32_371] : memref<8x!tpu.dma_semaphore, #tpu.memory_space<semaphore_mem>> -> memref<1x!tpu.dma_semaphore, #tpu.memory_space<semaphore_mem>>
    %489 = tpu.memref_squeeze %488 : memref<1x!tpu.dma_semaphore, #tpu.memory_space<semaphore_mem>> -> memref<!tpu.dma_semaphore, #tpu.memory_space<semaphore_mem>>
    tpu.enqueue_dma source(%486 : memref<1x64xf32, #tpu.memory_space<any>>) target(%487 : memref<1x64xf32, #tpu.memory_space<vmem>>) target_semaphore(%489 : memref<!tpu.dma_semaphore, #tpu.memory_space<semaphore_mem>>)
    %c2_i32_374 = arith.constant 2 : i32
    %c0_i32_375 = arith.constant 0 : i32
    %490 = tpu.memref_slice %arg1[%422, %c0_i32_375] : memref<4411x64xf32, #tpu.memory_space<any>> -> memref<1x64xf32, #tpu.memory_space<any>>
    %c50_i32_376 = arith.constant 50 : i32
    %c0_i32_377 = arith.constant 0 : i32
    %491 = tpu.memref_slice %arg8[%c50_i32_376, %c0_i32_377] : memref<64x64xf32, #tpu.memory_space<vmem>> -> memref<1x64xf32, #tpu.memory_space<vmem>>
    %492 = tpu.memref_slice %arg9[%c2_i32_374] : memref<8x!tpu.dma_semaphore, #tpu.memory_space<semaphore_mem>> -> memref<1x!tpu.dma_semaphore, #tpu.memory_space<semaphore_mem>>
    %493 = tpu.memref_squeeze %492 : memref<1x!tpu.dma_semaphore, #tpu.memory_space<semaphore_mem>> -> memref<!tpu.dma_semaphore, #tpu.memory_space<semaphore_mem>>
    tpu.wait_dma2 semaphore(%493 : memref<!tpu.dma_semaphore, #tpu.memory_space<semaphore_mem>>) src(%490 : memref<1x64xf32, #tpu.memory_space<any>>) dst(%491 : memref<1x64xf32, #tpu.memory_space<vmem>>)
    %c23 = arith.constant 23 : index
    %494 = memref.load %arg0[%c23] : memref<64xi32, #tpu.memory_space<smem>>
    %c2_i32_378 = arith.constant 2 : i32
    %c0_i32_379 = arith.constant 0 : i32
    %495 = tpu.memref_slice %arg1[%494, %c0_i32_379] : memref<4411x64xf32, #tpu.memory_space<any>> -> memref<1x64xf32, #tpu.memory_space<any>>
    %c58_i32 = arith.constant 58 : i32
    %c0_i32_380 = arith.constant 0 : i32
    %496 = tpu.memref_slice %arg8[%c58_i32, %c0_i32_380] : memref<64x64xf32, #tpu.memory_space<vmem>> -> memref<1x64xf32, #tpu.memory_space<vmem>>
    %497 = tpu.memref_slice %arg9[%c2_i32_378] : memref<8x!tpu.dma_semaphore, #tpu.memory_space<semaphore_mem>> -> memref<1x!tpu.dma_semaphore, #tpu.memory_space<semaphore_mem>>
    %498 = tpu.memref_squeeze %497 : memref<1x!tpu.dma_semaphore, #tpu.memory_space<semaphore_mem>> -> memref<!tpu.dma_semaphore, #tpu.memory_space<semaphore_mem>>
    tpu.enqueue_dma source(%495 : memref<1x64xf32, #tpu.memory_space<any>>) target(%496 : memref<1x64xf32, #tpu.memory_space<vmem>>) target_semaphore(%498 : memref<!tpu.dma_semaphore, #tpu.memory_space<semaphore_mem>>)
    %c3_i32_381 = arith.constant 3 : i32
    %c0_i32_382 = arith.constant 0 : i32
    %499 = tpu.memref_slice %arg1[%431, %c0_i32_382] : memref<4411x64xf32, #tpu.memory_space<any>> -> memref<1x64xf32, #tpu.memory_space<any>>
    %c51_i32_383 = arith.constant 51 : i32
    %c0_i32_384 = arith.constant 0 : i32
    %500 = tpu.memref_slice %arg8[%c51_i32_383, %c0_i32_384] : memref<64x64xf32, #tpu.memory_space<vmem>> -> memref<1x64xf32, #tpu.memory_space<vmem>>
    %501 = tpu.memref_slice %arg9[%c3_i32_381] : memref<8x!tpu.dma_semaphore, #tpu.memory_space<semaphore_mem>> -> memref<1x!tpu.dma_semaphore, #tpu.memory_space<semaphore_mem>>
    %502 = tpu.memref_squeeze %501 : memref<1x!tpu.dma_semaphore, #tpu.memory_space<semaphore_mem>> -> memref<!tpu.dma_semaphore, #tpu.memory_space<semaphore_mem>>
    tpu.wait_dma2 semaphore(%502 : memref<!tpu.dma_semaphore, #tpu.memory_space<semaphore_mem>>) src(%499 : memref<1x64xf32, #tpu.memory_space<any>>) dst(%500 : memref<1x64xf32, #tpu.memory_space<vmem>>)
    %c31 = arith.constant 31 : index
    %503 = memref.load %arg0[%c31] : memref<64xi32, #tpu.memory_space<smem>>
    %c3_i32_385 = arith.constant 3 : i32
    %c0_i32_386 = arith.constant 0 : i32
    %504 = tpu.memref_slice %arg1[%503, %c0_i32_386] : memref<4411x64xf32, #tpu.memory_space<any>> -> memref<1x64xf32, #tpu.memory_space<any>>
    %c59_i32 = arith.constant 59 : i32
    %c0_i32_387 = arith.constant 0 : i32
    %505 = tpu.memref_slice %arg8[%c59_i32, %c0_i32_387] : memref<64x64xf32, #tpu.memory_space<vmem>> -> memref<1x64xf32, #tpu.memory_space<vmem>>
    %506 = tpu.memref_slice %arg9[%c3_i32_385] : memref<8x!tpu.dma_semaphore, #tpu.memory_space<semaphore_mem>> -> memref<1x!tpu.dma_semaphore, #tpu.memory_space<semaphore_mem>>
    %507 = tpu.memref_squeeze %506 : memref<1x!tpu.dma_semaphore, #tpu.memory_space<semaphore_mem>> -> memref<!tpu.dma_semaphore, #tpu.memory_space<semaphore_mem>>
    tpu.enqueue_dma source(%504 : memref<1x64xf32, #tpu.memory_space<any>>) target(%505 : memref<1x64xf32, #tpu.memory_space<vmem>>) target_semaphore(%507 : memref<!tpu.dma_semaphore, #tpu.memory_space<semaphore_mem>>)
    %c4_i32_388 = arith.constant 4 : i32
    %c0_i32_389 = arith.constant 0 : i32
    %508 = tpu.memref_slice %arg1[%440, %c0_i32_389] : memref<4411x64xf32, #tpu.memory_space<any>> -> memref<1x64xf32, #tpu.memory_space<any>>
    %c52_i32_390 = arith.constant 52 : i32
    %c0_i32_391 = arith.constant 0 : i32
    %509 = tpu.memref_slice %arg8[%c52_i32_390, %c0_i32_391] : memref<64x64xf32, #tpu.memory_space<vmem>> -> memref<1x64xf32, #tpu.memory_space<vmem>>
    %510 = tpu.memref_slice %arg9[%c4_i32_388] : memref<8x!tpu.dma_semaphore, #tpu.memory_space<semaphore_mem>> -> memref<1x!tpu.dma_semaphore, #tpu.memory_space<semaphore_mem>>
    %511 = tpu.memref_squeeze %510 : memref<1x!tpu.dma_semaphore, #tpu.memory_space<semaphore_mem>> -> memref<!tpu.dma_semaphore, #tpu.memory_space<semaphore_mem>>
    tpu.wait_dma2 semaphore(%511 : memref<!tpu.dma_semaphore, #tpu.memory_space<semaphore_mem>>) src(%508 : memref<1x64xf32, #tpu.memory_space<any>>) dst(%509 : memref<1x64xf32, #tpu.memory_space<vmem>>)
    %c39 = arith.constant 39 : index
    %512 = memref.load %arg0[%c39] : memref<64xi32, #tpu.memory_space<smem>>
    %c4_i32_392 = arith.constant 4 : i32
    %c0_i32_393 = arith.constant 0 : i32
    %513 = tpu.memref_slice %arg1[%512, %c0_i32_393] : memref<4411x64xf32, #tpu.memory_space<any>> -> memref<1x64xf32, #tpu.memory_space<any>>
    %c60_i32 = arith.constant 60 : i32
    %c0_i32_394 = arith.constant 0 : i32
    %514 = tpu.memref_slice %arg8[%c60_i32, %c0_i32_394] : memref<64x64xf32, #tpu.memory_space<vmem>> -> memref<1x64xf32, #tpu.memory_space<vmem>>
    %515 = tpu.memref_slice %arg9[%c4_i32_392] : memref<8x!tpu.dma_semaphore, #tpu.memory_space<semaphore_mem>> -> memref<1x!tpu.dma_semaphore, #tpu.memory_space<semaphore_mem>>
    %516 = tpu.memref_squeeze %515 : memref<1x!tpu.dma_semaphore, #tpu.memory_space<semaphore_mem>> -> memref<!tpu.dma_semaphore, #tpu.memory_space<semaphore_mem>>
    tpu.enqueue_dma source(%513 : memref<1x64xf32, #tpu.memory_space<any>>) target(%514 : memref<1x64xf32, #tpu.memory_space<vmem>>) target_semaphore(%516 : memref<!tpu.dma_semaphore, #tpu.memory_space<semaphore_mem>>)
    %c5_i32_395 = arith.constant 5 : i32
    %c0_i32_396 = arith.constant 0 : i32
    %517 = tpu.memref_slice %arg1[%449, %c0_i32_396] : memref<4411x64xf32, #tpu.memory_space<any>> -> memref<1x64xf32, #tpu.memory_space<any>>
    %c53_i32_397 = arith.constant 53 : i32
    %c0_i32_398 = arith.constant 0 : i32
    %518 = tpu.memref_slice %arg8[%c53_i32_397, %c0_i32_398] : memref<64x64xf32, #tpu.memory_space<vmem>> -> memref<1x64xf32, #tpu.memory_space<vmem>>
    %519 = tpu.memref_slice %arg9[%c5_i32_395] : memref<8x!tpu.dma_semaphore, #tpu.memory_space<semaphore_mem>> -> memref<1x!tpu.dma_semaphore, #tpu.memory_space<semaphore_mem>>
    %520 = tpu.memref_squeeze %519 : memref<1x!tpu.dma_semaphore, #tpu.memory_space<semaphore_mem>> -> memref<!tpu.dma_semaphore, #tpu.memory_space<semaphore_mem>>
    tpu.wait_dma2 semaphore(%520 : memref<!tpu.dma_semaphore, #tpu.memory_space<semaphore_mem>>) src(%517 : memref<1x64xf32, #tpu.memory_space<any>>) dst(%518 : memref<1x64xf32, #tpu.memory_space<vmem>>)
    %c47 = arith.constant 47 : index
    %521 = memref.load %arg0[%c47] : memref<64xi32, #tpu.memory_space<smem>>
    %c5_i32_399 = arith.constant 5 : i32
    %c0_i32_400 = arith.constant 0 : i32
    %522 = tpu.memref_slice %arg1[%521, %c0_i32_400] : memref<4411x64xf32, #tpu.memory_space<any>> -> memref<1x64xf32, #tpu.memory_space<any>>
    %c61_i32 = arith.constant 61 : i32
    %c0_i32_401 = arith.constant 0 : i32
    %523 = tpu.memref_slice %arg8[%c61_i32, %c0_i32_401] : memref<64x64xf32, #tpu.memory_space<vmem>> -> memref<1x64xf32, #tpu.memory_space<vmem>>
    %524 = tpu.memref_slice %arg9[%c5_i32_399] : memref<8x!tpu.dma_semaphore, #tpu.memory_space<semaphore_mem>> -> memref<1x!tpu.dma_semaphore, #tpu.memory_space<semaphore_mem>>
    %525 = tpu.memref_squeeze %524 : memref<1x!tpu.dma_semaphore, #tpu.memory_space<semaphore_mem>> -> memref<!tpu.dma_semaphore, #tpu.memory_space<semaphore_mem>>
    tpu.enqueue_dma source(%522 : memref<1x64xf32, #tpu.memory_space<any>>) target(%523 : memref<1x64xf32, #tpu.memory_space<vmem>>) target_semaphore(%525 : memref<!tpu.dma_semaphore, #tpu.memory_space<semaphore_mem>>)
    %c6_i32_402 = arith.constant 6 : i32
    %c0_i32_403 = arith.constant 0 : i32
    %526 = tpu.memref_slice %arg1[%458, %c0_i32_403] : memref<4411x64xf32, #tpu.memory_space<any>> -> memref<1x64xf32, #tpu.memory_space<any>>
    %c54_i32_404 = arith.constant 54 : i32
    %c0_i32_405 = arith.constant 0 : i32
    %527 = tpu.memref_slice %arg8[%c54_i32_404, %c0_i32_405] : memref<64x64xf32, #tpu.memory_space<vmem>> -> memref<1x64xf32, #tpu.memory_space<vmem>>
    %528 = tpu.memref_slice %arg9[%c6_i32_402] : memref<8x!tpu.dma_semaphore, #tpu.memory_space<semaphore_mem>> -> memref<1x!tpu.dma_semaphore, #tpu.memory_space<semaphore_mem>>
    %529 = tpu.memref_squeeze %528 : memref<1x!tpu.dma_semaphore, #tpu.memory_space<semaphore_mem>> -> memref<!tpu.dma_semaphore, #tpu.memory_space<semaphore_mem>>
    tpu.wait_dma2 semaphore(%529 : memref<!tpu.dma_semaphore, #tpu.memory_space<semaphore_mem>>) src(%526 : memref<1x64xf32, #tpu.memory_space<any>>) dst(%527 : memref<1x64xf32, #tpu.memory_space<vmem>>)
    %c55 = arith.constant 55 : index
    %530 = memref.load %arg0[%c55] : memref<64xi32, #tpu.memory_space<smem>>
    %c6_i32_406 = arith.constant 6 : i32
    %c0_i32_407 = arith.constant 0 : i32
    %531 = tpu.memref_slice %arg1[%530, %c0_i32_407] : memref<4411x64xf32, #tpu.memory_space<any>> -> memref<1x64xf32, #tpu.memory_space<any>>
    %c62_i32 = arith.constant 62 : i32
    %c0_i32_408 = arith.constant 0 : i32
    %532 = tpu.memref_slice %arg8[%c62_i32, %c0_i32_408] : memref<64x64xf32, #tpu.memory_space<vmem>> -> memref<1x64xf32, #tpu.memory_space<vmem>>
    %533 = tpu.memref_slice %arg9[%c6_i32_406] : memref<8x!tpu.dma_semaphore, #tpu.memory_space<semaphore_mem>> -> memref<1x!tpu.dma_semaphore, #tpu.memory_space<semaphore_mem>>
    %534 = tpu.memref_squeeze %533 : memref<1x!tpu.dma_semaphore, #tpu.memory_space<semaphore_mem>> -> memref<!tpu.dma_semaphore, #tpu.memory_space<semaphore_mem>>
    tpu.enqueue_dma source(%531 : memref<1x64xf32, #tpu.memory_space<any>>) target(%532 : memref<1x64xf32, #tpu.memory_space<vmem>>) target_semaphore(%534 : memref<!tpu.dma_semaphore, #tpu.memory_space<semaphore_mem>>)
    %c7_i32_409 = arith.constant 7 : i32
    %c0_i32_410 = arith.constant 0 : i32
    %535 = tpu.memref_slice %arg1[%467, %c0_i32_410] : memref<4411x64xf32, #tpu.memory_space<any>> -> memref<1x64xf32, #tpu.memory_space<any>>
    %c55_i32_411 = arith.constant 55 : i32
    %c0_i32_412 = arith.constant 0 : i32
    %536 = tpu.memref_slice %arg8[%c55_i32_411, %c0_i32_412] : memref<64x64xf32, #tpu.memory_space<vmem>> -> memref<1x64xf32, #tpu.memory_space<vmem>>
    %537 = tpu.memref_slice %arg9[%c7_i32_409] : memref<8x!tpu.dma_semaphore, #tpu.memory_space<semaphore_mem>> -> memref<1x!tpu.dma_semaphore, #tpu.memory_space<semaphore_mem>>
    %538 = tpu.memref_squeeze %537 : memref<1x!tpu.dma_semaphore, #tpu.memory_space<semaphore_mem>> -> memref<!tpu.dma_semaphore, #tpu.memory_space<semaphore_mem>>
    tpu.wait_dma2 semaphore(%538 : memref<!tpu.dma_semaphore, #tpu.memory_space<semaphore_mem>>) src(%535 : memref<1x64xf32, #tpu.memory_space<any>>) dst(%536 : memref<1x64xf32, #tpu.memory_space<vmem>>)
    %c63 = arith.constant 63 : index
    %539 = memref.load %arg0[%c63] : memref<64xi32, #tpu.memory_space<smem>>
    %c7_i32_413 = arith.constant 7 : i32
    %c0_i32_414 = arith.constant 0 : i32
    %540 = tpu.memref_slice %arg1[%539, %c0_i32_414] : memref<4411x64xf32, #tpu.memory_space<any>> -> memref<1x64xf32, #tpu.memory_space<any>>
    %c63_i32 = arith.constant 63 : i32
    %c0_i32_415 = arith.constant 0 : i32
    %541 = tpu.memref_slice %arg8[%c63_i32, %c0_i32_415] : memref<64x64xf32, #tpu.memory_space<vmem>> -> memref<1x64xf32, #tpu.memory_space<vmem>>
    %542 = tpu.memref_slice %arg9[%c7_i32_413] : memref<8x!tpu.dma_semaphore, #tpu.memory_space<semaphore_mem>> -> memref<1x!tpu.dma_semaphore, #tpu.memory_space<semaphore_mem>>
    %543 = tpu.memref_squeeze %542 : memref<1x!tpu.dma_semaphore, #tpu.memory_space<semaphore_mem>> -> memref<!tpu.dma_semaphore, #tpu.memory_space<semaphore_mem>>
    tpu.enqueue_dma source(%540 : memref<1x64xf32, #tpu.memory_space<any>>) target(%541 : memref<1x64xf32, #tpu.memory_space<vmem>>) target_semaphore(%543 : memref<!tpu.dma_semaphore, #tpu.memory_space<semaphore_mem>>)
    %c0_i32_416 = arith.constant 0 : i32
    %c0_i32_417 = arith.constant 0 : i32
    %544 = tpu.memref_slice %arg1[%476, %c0_i32_417] : memref<4411x64xf32, #tpu.memory_space<any>> -> memref<1x64xf32, #tpu.memory_space<any>>
    %c56_i32_418 = arith.constant 56 : i32
    %c0_i32_419 = arith.constant 0 : i32
    %545 = tpu.memref_slice %arg8[%c56_i32_418, %c0_i32_419] : memref<64x64xf32, #tpu.memory_space<vmem>> -> memref<1x64xf32, #tpu.memory_space<vmem>>
    %546 = tpu.memref_slice %arg9[%c0_i32_416] : memref<8x!tpu.dma_semaphore, #tpu.memory_space<semaphore_mem>> -> memref<1x!tpu.dma_semaphore, #tpu.memory_space<semaphore_mem>>
    %547 = tpu.memref_squeeze %546 : memref<1x!tpu.dma_semaphore, #tpu.memory_space<semaphore_mem>> -> memref<!tpu.dma_semaphore, #tpu.memory_space<semaphore_mem>>
    tpu.wait_dma2 semaphore(%547 : memref<!tpu.dma_semaphore, #tpu.memory_space<semaphore_mem>>) src(%544 : memref<1x64xf32, #tpu.memory_space<any>>) dst(%545 : memref<1x64xf32, #tpu.memory_space<vmem>>)
    %c1_i32_420 = arith.constant 1 : i32
    %c0_i32_421 = arith.constant 0 : i32
    %548 = tpu.memref_slice %arg1[%485, %c0_i32_421] : memref<4411x64xf32, #tpu.memory_space<any>> -> memref<1x64xf32, #tpu.memory_space<any>>
    %c57_i32_422 = arith.constant 57 : i32
    %c0_i32_423 = arith.constant 0 : i32
    %549 = tpu.memref_slice %arg8[%c57_i32_422, %c0_i32_423] : memref<64x64xf32, #tpu.memory_space<vmem>> -> memref<1x64xf32, #tpu.memory_space<vmem>>
    %550 = tpu.memref_slice %arg9[%c1_i32_420] : memref<8x!tpu.dma_semaphore, #tpu.memory_space<semaphore_mem>> -> memref<1x!tpu.dma_semaphore, #tpu.memory_space<semaphore_mem>>
    %551 = tpu.memref_squeeze %550 : memref<1x!tpu.dma_semaphore, #tpu.memory_space<semaphore_mem>> -> memref<!tpu.dma_semaphore, #tpu.memory_space<semaphore_mem>>
    tpu.wait_dma2 semaphore(%551 : memref<!tpu.dma_semaphore, #tpu.memory_space<semaphore_mem>>) src(%548 : memref<1x64xf32, #tpu.memory_space<any>>) dst(%549 : memref<1x64xf32, #tpu.memory_space<vmem>>)
    %c2_i32_424 = arith.constant 2 : i32
    %c0_i32_425 = arith.constant 0 : i32
    %552 = tpu.memref_slice %arg1[%494, %c0_i32_425] : memref<4411x64xf32, #tpu.memory_space<any>> -> memref<1x64xf32, #tpu.memory_space<any>>
    %c58_i32_426 = arith.constant 58 : i32
    %c0_i32_427 = arith.constant 0 : i32
    %553 = tpu.memref_slice %arg8[%c58_i32_426, %c0_i32_427] : memref<64x64xf32, #tpu.memory_space<vmem>> -> memref<1x64xf32, #tpu.memory_space<vmem>>
    %554 = tpu.memref_slice %arg9[%c2_i32_424] : memref<8x!tpu.dma_semaphore, #tpu.memory_space<semaphore_mem>> -> memref<1x!tpu.dma_semaphore, #tpu.memory_space<semaphore_mem>>
    %555 = tpu.memref_squeeze %554 : memref<1x!tpu.dma_semaphore, #tpu.memory_space<semaphore_mem>> -> memref<!tpu.dma_semaphore, #tpu.memory_space<semaphore_mem>>
    tpu.wait_dma2 semaphore(%555 : memref<!tpu.dma_semaphore, #tpu.memory_space<semaphore_mem>>) src(%552 : memref<1x64xf32, #tpu.memory_space<any>>) dst(%553 : memref<1x64xf32, #tpu.memory_space<vmem>>)
    %c3_i32_428 = arith.constant 3 : i32
    %c0_i32_429 = arith.constant 0 : i32
    %556 = tpu.memref_slice %arg1[%503, %c0_i32_429] : memref<4411x64xf32, #tpu.memory_space<any>> -> memref<1x64xf32, #tpu.memory_space<any>>
    %c59_i32_430 = arith.constant 59 : i32
    %c0_i32_431 = arith.constant 0 : i32
    %557 = tpu.memref_slice %arg8[%c59_i32_430, %c0_i32_431] : memref<64x64xf32, #tpu.memory_space<vmem>> -> memref<1x64xf32, #tpu.memory_space<vmem>>
    %558 = tpu.memref_slice %arg9[%c3_i32_428] : memref<8x!tpu.dma_semaphore, #tpu.memory_space<semaphore_mem>> -> memref<1x!tpu.dma_semaphore, #tpu.memory_space<semaphore_mem>>
    %559 = tpu.memref_squeeze %558 : memref<1x!tpu.dma_semaphore, #tpu.memory_space<semaphore_mem>> -> memref<!tpu.dma_semaphore, #tpu.memory_space<semaphore_mem>>
    tpu.wait_dma2 semaphore(%559 : memref<!tpu.dma_semaphore, #tpu.memory_space<semaphore_mem>>) src(%556 : memref<1x64xf32, #tpu.memory_space<any>>) dst(%557 : memref<1x64xf32, #tpu.memory_space<vmem>>)
    %c4_i32_432 = arith.constant 4 : i32
    %c0_i32_433 = arith.constant 0 : i32
    %560 = tpu.memref_slice %arg1[%512, %c0_i32_433] : memref<4411x64xf32, #tpu.memory_space<any>> -> memref<1x64xf32, #tpu.memory_space<any>>
    %c60_i32_434 = arith.constant 60 : i32
    %c0_i32_435 = arith.constant 0 : i32
    %561 = tpu.memref_slice %arg8[%c60_i32_434, %c0_i32_435] : memref<64x64xf32, #tpu.memory_space<vmem>> -> memref<1x64xf32, #tpu.memory_space<vmem>>
    %562 = tpu.memref_slice %arg9[%c4_i32_432] : memref<8x!tpu.dma_semaphore, #tpu.memory_space<semaphore_mem>> -> memref<1x!tpu.dma_semaphore, #tpu.memory_space<semaphore_mem>>
    %563 = tpu.memref_squeeze %562 : memref<1x!tpu.dma_semaphore, #tpu.memory_space<semaphore_mem>> -> memref<!tpu.dma_semaphore, #tpu.memory_space<semaphore_mem>>
    tpu.wait_dma2 semaphore(%563 : memref<!tpu.dma_semaphore, #tpu.memory_space<semaphore_mem>>) src(%560 : memref<1x64xf32, #tpu.memory_space<any>>) dst(%561 : memref<1x64xf32, #tpu.memory_space<vmem>>)
    %c5_i32_436 = arith.constant 5 : i32
    %c0_i32_437 = arith.constant 0 : i32
    %564 = tpu.memref_slice %arg1[%521, %c0_i32_437] : memref<4411x64xf32, #tpu.memory_space<any>> -> memref<1x64xf32, #tpu.memory_space<any>>
    %c61_i32_438 = arith.constant 61 : i32
    %c0_i32_439 = arith.constant 0 : i32
    %565 = tpu.memref_slice %arg8[%c61_i32_438, %c0_i32_439] : memref<64x64xf32, #tpu.memory_space<vmem>> -> memref<1x64xf32, #tpu.memory_space<vmem>>
    %566 = tpu.memref_slice %arg9[%c5_i32_436] : memref<8x!tpu.dma_semaphore, #tpu.memory_space<semaphore_mem>> -> memref<1x!tpu.dma_semaphore, #tpu.memory_space<semaphore_mem>>
    %567 = tpu.memref_squeeze %566 : memref<1x!tpu.dma_semaphore, #tpu.memory_space<semaphore_mem>> -> memref<!tpu.dma_semaphore, #tpu.memory_space<semaphore_mem>>
    tpu.wait_dma2 semaphore(%567 : memref<!tpu.dma_semaphore, #tpu.memory_space<semaphore_mem>>) src(%564 : memref<1x64xf32, #tpu.memory_space<any>>) dst(%565 : memref<1x64xf32, #tpu.memory_space<vmem>>)
    %c6_i32_440 = arith.constant 6 : i32
    %c0_i32_441 = arith.constant 0 : i32
    %568 = tpu.memref_slice %arg1[%530, %c0_i32_441] : memref<4411x64xf32, #tpu.memory_space<any>> -> memref<1x64xf32, #tpu.memory_space<any>>
    %c62_i32_442 = arith.constant 62 : i32
    %c0_i32_443 = arith.constant 0 : i32
    %569 = tpu.memref_slice %arg8[%c62_i32_442, %c0_i32_443] : memref<64x64xf32, #tpu.memory_space<vmem>> -> memref<1x64xf32, #tpu.memory_space<vmem>>
    %570 = tpu.memref_slice %arg9[%c6_i32_440] : memref<8x!tpu.dma_semaphore, #tpu.memory_space<semaphore_mem>> -> memref<1x!tpu.dma_semaphore, #tpu.memory_space<semaphore_mem>>
    %571 = tpu.memref_squeeze %570 : memref<1x!tpu.dma_semaphore, #tpu.memory_space<semaphore_mem>> -> memref<!tpu.dma_semaphore, #tpu.memory_space<semaphore_mem>>
    tpu.wait_dma2 semaphore(%571 : memref<!tpu.dma_semaphore, #tpu.memory_space<semaphore_mem>>) src(%568 : memref<1x64xf32, #tpu.memory_space<any>>) dst(%569 : memref<1x64xf32, #tpu.memory_space<vmem>>)
    %c7_i32_444 = arith.constant 7 : i32
    %c0_i32_445 = arith.constant 0 : i32
    %572 = tpu.memref_slice %arg1[%539, %c0_i32_445] : memref<4411x64xf32, #tpu.memory_space<any>> -> memref<1x64xf32, #tpu.memory_space<any>>
    %c63_i32_446 = arith.constant 63 : i32
    %c0_i32_447 = arith.constant 0 : i32
    %573 = tpu.memref_slice %arg8[%c63_i32_446, %c0_i32_447] : memref<64x64xf32, #tpu.memory_space<vmem>> -> memref<1x64xf32, #tpu.memory_space<vmem>>
    %574 = tpu.memref_slice %arg9[%c7_i32_444] : memref<8x!tpu.dma_semaphore, #tpu.memory_space<semaphore_mem>> -> memref<1x!tpu.dma_semaphore, #tpu.memory_space<semaphore_mem>>
    %575 = tpu.memref_squeeze %574 : memref<1x!tpu.dma_semaphore, #tpu.memory_space<semaphore_mem>> -> memref<!tpu.dma_semaphore, #tpu.memory_space<semaphore_mem>>
    tpu.wait_dma2 semaphore(%575 : memref<!tpu.dma_semaphore, #tpu.memory_space<semaphore_mem>>) src(%572 : memref<1x64xf32, #tpu.memory_space<any>>) dst(%573 : memref<1x64xf32, #tpu.memory_space<vmem>>)
    %c0_448 = arith.constant 0 : index
    %c0_449 = arith.constant 0 : index
    %576 = vector.load %arg8[%c0_448, %c0_449] : memref<64x64xf32, #tpu.memory_space<vmem>>, vector<64x64xf32>
    %577 = arith.truncf %576 : vector<64x64xf32> to vector<64x64xbf16>
    %c0_450 = arith.constant 0 : index
    %c0_451 = arith.constant 0 : index
    %578 = vector.load %arg2[%c0_450, %c0_451] : memref<64x128xbf16, #tpu.memory_space<vmem>>, vector<64x128xbf16>
    %cst = arith.constant dense<0.000000e+00> : vector<64x128xf32>
    %579 = tpu.matmul %577, %578, %cst {dimension_numbers = #tpu.dot_dimension_numbers<[1], [0], [0], [1], [0, 0, 1, 1], [], []>} : vector<64x64xbf16>, vector<64x128xbf16>, vector<64x128xf32> -> vector<64x128xf32>
    %c0_452 = arith.constant 0 : index
    %c0_453 = arith.constant 0 : index
    %580 = vector.load %arg4[%c0_452, %c0_453] : memref<1x128xf32, #tpu.memory_space<vmem>>, vector<1x128xf32>
    %581 = vector.broadcast %580 : vector<1x128xf32> to vector<64x128xf32>
    %582 = arith.addf %579, %581 : vector<64x128xf32>
    %c0_454 = arith.constant 0 : index
    %c0_455 = arith.constant 0 : index
    %583 = vector.load %arg3[%c0_454, %c0_455] : memref<128x128xbf16, #tpu.memory_space<vmem>>, vector<128x128xbf16>
    %584 = vector.extract_strided_slice %582 {offsets = [0, 0], sizes = [8, 128], strides = [1, 1]} : vector<64x128xf32> to vector<8x128xf32>
    %585 = math.tanh %584 : vector<8x128xf32>
    %586 = arith.truncf %585 : vector<8x128xf32> to vector<8x128xbf16>
    %cst_456 = arith.constant dense<0.000000e+00> : vector<8x128xf32>
    %587 = tpu.matmul %586, %583, %cst_456 {dimension_numbers = #tpu.dot_dimension_numbers<[1], [0], [0], [1], [0, 0, 1, 1], [], []>} : vector<8x128xbf16>, vector<128x128xbf16>, vector<8x128xf32> -> vector<8x128xf32>
    %588 = vector.extract_strided_slice %582 {offsets = [8, 0], sizes = [8, 128], strides = [1, 1]} : vector<64x128xf32> to vector<8x128xf32>
    %589 = arith.addf %588, %587 : vector<8x128xf32>
    %590 = math.tanh %589 : vector<8x128xf32>
    %591 = arith.truncf %590 : vector<8x128xf32> to vector<8x128xbf16>
    %cst_457 = arith.constant dense<0.000000e+00> : vector<8x128xf32>
    %592 = tpu.matmul %591, %583, %cst_457 {dimension_numbers = #tpu.dot_dimension_numbers<[1], [0], [0], [1], [0, 0, 1, 1], [], []>} : vector<8x128xbf16>, vector<128x128xbf16>, vector<8x128xf32> -> vector<8x128xf32>
    %593 = vector.extract_strided_slice %582 {offsets = [16, 0], sizes = [8, 128], strides = [1, 1]} : vector<64x128xf32> to vector<8x128xf32>
    %594 = arith.addf %593, %592 : vector<8x128xf32>
    %595 = math.tanh %594 : vector<8x128xf32>
    %596 = arith.truncf %595 : vector<8x128xf32> to vector<8x128xbf16>
    %cst_458 = arith.constant dense<0.000000e+00> : vector<8x128xf32>
    %597 = tpu.matmul %596, %583, %cst_458 {dimension_numbers = #tpu.dot_dimension_numbers<[1], [0], [0], [1], [0, 0, 1, 1], [], []>} : vector<8x128xbf16>, vector<128x128xbf16>, vector<8x128xf32> -> vector<8x128xf32>
    %598 = vector.extract_strided_slice %582 {offsets = [24, 0], sizes = [8, 128], strides = [1, 1]} : vector<64x128xf32> to vector<8x128xf32>
    %599 = arith.addf %598, %597 : vector<8x128xf32>
    %600 = math.tanh %599 : vector<8x128xf32>
    %601 = arith.truncf %600 : vector<8x128xf32> to vector<8x128xbf16>
    %cst_459 = arith.constant dense<0.000000e+00> : vector<8x128xf32>
    %602 = tpu.matmul %601, %583, %cst_459 {dimension_numbers = #tpu.dot_dimension_numbers<[1], [0], [0], [1], [0, 0, 1, 1], [], []>} : vector<8x128xbf16>, vector<128x128xbf16>, vector<8x128xf32> -> vector<8x128xf32>
    %603 = vector.extract_strided_slice %582 {offsets = [32, 0], sizes = [8, 128], strides = [1, 1]} : vector<64x128xf32> to vector<8x128xf32>
    %604 = arith.addf %603, %602 : vector<8x128xf32>
    %605 = math.tanh %604 : vector<8x128xf32>
    %606 = arith.truncf %605 : vector<8x128xf32> to vector<8x128xbf16>
    %cst_460 = arith.constant dense<0.000000e+00> : vector<8x128xf32>
    %607 = tpu.matmul %606, %583, %cst_460 {dimension_numbers = #tpu.dot_dimension_numbers<[1], [0], [0], [1], [0, 0, 1, 1], [], []>} : vector<8x128xbf16>, vector<128x128xbf16>, vector<8x128xf32> -> vector<8x128xf32>
    %608 = vector.extract_strided_slice %582 {offsets = [40, 0], sizes = [8, 128], strides = [1, 1]} : vector<64x128xf32> to vector<8x128xf32>
    %609 = arith.addf %608, %607 : vector<8x128xf32>
    %610 = math.tanh %609 : vector<8x128xf32>
    %611 = arith.truncf %610 : vector<8x128xf32> to vector<8x128xbf16>
    %cst_461 = arith.constant dense<0.000000e+00> : vector<8x128xf32>
    %612 = tpu.matmul %611, %583, %cst_461 {dimension_numbers = #tpu.dot_dimension_numbers<[1], [0], [0], [1], [0, 0, 1, 1], [], []>} : vector<8x128xbf16>, vector<128x128xbf16>, vector<8x128xf32> -> vector<8x128xf32>
    %613 = vector.extract_strided_slice %582 {offsets = [48, 0], sizes = [8, 128], strides = [1, 1]} : vector<64x128xf32> to vector<8x128xf32>
    %614 = arith.addf %613, %612 : vector<8x128xf32>
    %615 = math.tanh %614 : vector<8x128xf32>
    %616 = arith.truncf %615 : vector<8x128xf32> to vector<8x128xbf16>
    %cst_462 = arith.constant dense<0.000000e+00> : vector<8x128xf32>
    %617 = tpu.matmul %616, %583, %cst_462 {dimension_numbers = #tpu.dot_dimension_numbers<[1], [0], [0], [1], [0, 0, 1, 1], [], []>} : vector<8x128xbf16>, vector<128x128xbf16>, vector<8x128xf32> -> vector<8x128xf32>
    %618 = vector.extract_strided_slice %582 {offsets = [56, 0], sizes = [8, 128], strides = [1, 1]} : vector<64x128xf32> to vector<8x128xf32>
    %619 = arith.addf %618, %617 : vector<8x128xf32>
    %620 = math.tanh %619 : vector<8x128xf32>
    %621 = arith.truncf %620 : vector<8x128xf32> to vector<8x128xbf16>
    %c0_463 = arith.constant 0 : index
    %c0_464 = arith.constant 0 : index
    %622 = vector.load %arg5[%c0_463, %c0_464] : memref<128x128xbf16, #tpu.memory_space<vmem>>, vector<128x128xbf16>
    %cst_465 = arith.constant dense<0.000000e+00> : vector<8x128xf32>
    %623 = tpu.matmul %621, %622, %cst_465 {dimension_numbers = #tpu.dot_dimension_numbers<[1], [0], [0], [1], [0, 0, 1, 1], [], []>} : vector<8x128xbf16>, vector<128x128xbf16>, vector<8x128xf32> -> vector<8x128xf32>
    %c0_466 = arith.constant 0 : index
    %c0_467 = arith.constant 0 : index
    %624 = vector.load %arg6[%c0_466, %c0_467] : memref<1x128xf32, #tpu.memory_space<vmem>>, vector<1x128xf32>
    %625 = vector.broadcast %624 : vector<1x128xf32> to vector<8x128xf32>
    %626 = arith.addf %623, %625 : vector<8x128xf32>
    %c0_468 = arith.constant 0 : index
    %c0_469 = arith.constant 0 : index
    %627 = vector.load %arg7[%c0_468, %c0_469] : memref<8x128xf32, #tpu.memory_space<vmem>>, vector<8x128xf32>
    tpu.vector_store %arg7[%c0_468, %c0_469], %626 {strides = array<i32>} : memref<8x128xf32, #tpu.memory_space<vmem>>, vector<8x128xf32>,
    return
  }
}

</mosaic_0001>

<llo_original>
// kernel: rnn_forward.1
$region0: #{rnn_forward.1}
  #allocation0 [shape = 'u32[]', space=smem, size = 0x4, offset = 0x4, fixed_abs, tag = 'smem constant byte address 0x4 - core index']
  #allocation1 [shape = 'u32[144,128]{1,0:T(1,128)}', space=vmem, size = 0x12000, scoped, tag = 'internal scratch']
  #allocation2 [shape = 'f32[64,64]{1,0:T(8,128)}', space=vmem, size = 0x8000, scoped, tag = 'scratch operand']
  #allocation3 [shape = 's32[8]{0}', space=sflag, size = 0x20, scoped, tag = 'scratch operand']
  #allocation6 [shape = 's32[]', space=sflag, size = 0x4, offset = 0, fixed_abs, tag = 'sflag constant byte address 0x0 - dummy sync flag']
  #allocation7 [shape = 's32[]', space=sflag, size = 0x4, offset = 0, fixed_abs, tag = 'sflag constant byte address 0x0 - dummy sync flag']
  #allocation8 [shape = 's32[]', space=sflag, size = 0x4, offset = 0, fixed_abs, tag = 'sflag constant byte address 0x0 - dummy sync flag']
  #allocation9 [shape = 's32[]', space=sflag, size = 0x4, offset = 0, fixed_abs, tag = 'sflag constant byte address 0x0 - dummy sync flag']
  #allocation10 [shape = 's32[]', space=sflag, size = 0x4, offset = 0, fixed_abs, tag = 'sflag constant byte address 0x0 - dummy sync flag']
  #allocation11 [shape = 's32[]', space=sflag, size = 0x4, offset = 0, fixed_abs, tag = 'sflag constant byte address 0x0 - dummy sync flag']
  #allocation12 [shape = 's32[]', space=sflag, size = 0x4, offset = 0, fixed_abs, tag = 'sflag constant byte address 0x0 - dummy sync flag']
  #allocation13 [shape = 's32[]', space=sflag, size = 0x4, offset = 0, fixed_abs, tag = 'sflag constant byte address 0x0 - dummy sync flag']
  #allocation14 [shape = 's32[]', space=sflag, size = 0x4, offset = 0, fixed_abs, tag = 'sflag constant byte address 0x0 - dummy sync flag']
  #allocation15 [shape = 's32[]', space=sflag, size = 0x4, offset = 0, fixed_abs, tag = 'sflag constant byte address 0x0 - dummy sync flag']
  #allocation16 [shape = 's32[]', space=sflag, size = 0x4, offset = 0, fixed_abs, tag = 'sflag constant byte address 0x0 - dummy sync flag']
  #allocation17 [shape = 's32[]', space=sflag, size = 0x4, offset = 0, fixed_abs, tag = 'sflag constant byte address 0x0 - dummy sync flag']
  #allocation18 [shape = 's32[]', space=sflag, size = 0x4, offset = 0, fixed_abs, tag = 'sflag constant byte address 0x0 - dummy sync flag']
  #allocation19 [shape = 's32[]', space=sflag, size = 0x4, offset = 0, fixed_abs, tag = 'sflag constant byte address 0x0 - dummy sync flag']
  #allocation20 [shape = 's32[]', space=sflag, size = 0x4, offset = 0, fixed_abs, tag = 'sflag constant byte address 0x0 - dummy sync flag']
  #allocation21 [shape = 's32[]', space=sflag, size = 0x4, offset = 0, fixed_abs, tag = 'sflag constant byte address 0x0 - dummy sync flag']
  #allocation22 [shape = 's32[]', space=sflag, size = 0x4, offset = 0, fixed_abs, tag = 'sflag constant byte address 0x0 - dummy sync flag']
  #allocation23 [shape = 's32[]', space=sflag, size = 0x4, offset = 0, fixed_abs, tag = 'sflag constant byte address 0x0 - dummy sync flag']
  #allocation24 [shape = 's32[]', space=sflag, size = 0x4, offset = 0, fixed_abs, tag = 'sflag constant byte address 0x0 - dummy sync flag']
  #allocation25 [shape = 's32[]', space=sflag, size = 0x4, offset = 0, fixed_abs, tag = 'sflag constant byte address 0x0 - dummy sync flag']
  #allocation26 [shape = 's32[]', space=sflag, size = 0x4, offset = 0, fixed_abs, tag = 'sflag constant byte address 0x0 - dummy sync flag']
  #allocation27 [shape = 's32[]', space=sflag, size = 0x4, offset = 0, fixed_abs, tag = 'sflag constant byte address 0x0 - dummy sync flag']
  #allocation28 [shape = 's32[]', space=sflag, size = 0x4, offset = 0, fixed_abs, tag = 'sflag constant byte address 0x0 - dummy sync flag']
  #allocation29 [shape = 's32[]', space=sflag, size = 0x4, offset = 0, fixed_abs, tag = 'sflag constant byte address 0x0 - dummy sync flag']
  #allocation30 [shape = 's32[]', space=sflag, size = 0x4, offset = 0, fixed_abs, tag = 'sflag constant byte address 0x0 - dummy sync flag']
  #allocation31 [shape = 's32[]', space=sflag, size = 0x4, offset = 0, fixed_abs, tag = 'sflag constant byte address 0x0 - dummy sync flag']
  #allocation32 [shape = 's32[]', space=sflag, size = 0x4, offset = 0, fixed_abs, tag = 'sflag constant byte address 0x0 - dummy sync flag']
  #allocation33 [shape = 's32[]', space=sflag, size = 0x4, offset = 0, fixed_abs, tag = 'sflag constant byte address 0x0 - dummy sync flag']
  #allocation34 [shape = 's32[]', space=sflag, size = 0x4, offset = 0, fixed_abs, tag = 'sflag constant byte address 0x0 - dummy sync flag']
  #allocation35 [shape = 's32[]', space=sflag, size = 0x4, offset = 0, fixed_abs, tag = 'sflag constant byte address 0x0 - dummy sync flag']
  #allocation36 [shape = 's32[]', space=sflag, size = 0x4, offset = 0, fixed_abs, tag = 'sflag constant byte address 0x0 - dummy sync flag']
  #allocation37 [shape = 's32[]', space=sflag, size = 0x4, offset = 0, fixed_abs, tag = 'sflag constant byte address 0x0 - dummy sync flag']
  #allocation38 [shape = 's32[]', space=sflag, size = 0x4, offset = 0, fixed_abs, tag = 'sflag constant byte address 0x0 - dummy sync flag']
  #allocation39 [shape = 's32[]', space=sflag, size = 0x4, offset = 0, fixed_abs, tag = 'sflag constant byte address 0x0 - dummy sync flag']
  #allocation40 [shape = 's32[]', space=sflag, size = 0x4, offset = 0, fixed_abs, tag = 'sflag constant byte address 0x0 - dummy sync flag']
  #allocation41 [shape = 's32[]', space=sflag, size = 0x4, offset = 0, fixed_abs, tag = 'sflag constant byte address 0x0 - dummy sync flag']
  #allocation42 [shape = 's32[]', space=sflag, size = 0x4, offset = 0, fixed_abs, tag = 'sflag constant byte address 0x0 - dummy sync flag']
  #allocation43 [shape = 's32[]', space=sflag, size = 0x4, offset = 0, fixed_abs, tag = 'sflag constant byte address 0x0 - dummy sync flag']
  #allocation44 [shape = 's32[]', space=sflag, size = 0x4, offset = 0, fixed_abs, tag = 'sflag constant byte address 0x0 - dummy sync flag']
  #allocation45 [shape = 's32[]', space=sflag, size = 0x4, offset = 0, fixed_abs, tag = 'sflag constant byte address 0x0 - dummy sync flag']
  #allocation46 [shape = 's32[]', space=sflag, size = 0x4, offset = 0, fixed_abs, tag = 'sflag constant byte address 0x0 - dummy sync flag']
  #allocation47 [shape = 's32[]', space=sflag, size = 0x4, offset = 0, fixed_abs, tag = 'sflag constant byte address 0x0 - dummy sync flag']
  #allocation48 [shape = 's32[]', space=sflag, size = 0x4, offset = 0, fixed_abs, tag = 'sflag constant byte address 0x0 - dummy sync flag']
  #allocation49 [shape = 's32[]', space=sflag, size = 0x4, offset = 0, fixed_abs, tag = 'sflag constant byte address 0x0 - dummy sync flag']
  #allocation50 [shape = 's32[]', space=sflag, size = 0x4, offset = 0, fixed_abs, tag = 'sflag constant byte address 0x0 - dummy sync flag']
  #allocation51 [shape = 's32[]', space=sflag, size = 0x4, offset = 0, fixed_abs, tag = 'sflag constant byte address 0x0 - dummy sync flag']
  #allocation52 [shape = 's32[]', space=sflag, size = 0x4, offset = 0, fixed_abs, tag = 'sflag constant byte address 0x0 - dummy sync flag']
  #allocation53 [shape = 's32[]', space=sflag, size = 0x4, offset = 0, fixed_abs, tag = 'sflag constant byte address 0x0 - dummy sync flag']
  #allocation54 [shape = 's32[]', space=sflag, size = 0x4, offset = 0, fixed_abs, tag = 'sflag constant byte address 0x0 - dummy sync flag']
  #allocation55 [shape = 's32[]', space=sflag, size = 0x4, offset = 0, fixed_abs, tag = 'sflag constant byte address 0x0 - dummy sync flag']
  #allocation56 [shape = 's32[]', space=sflag, size = 0x4, offset = 0, fixed_abs, tag = 'sflag constant byte address 0x0 - dummy sync flag']
  #allocation57 [shape = 's32[]', space=sflag, size = 0x4, offset = 0, fixed_abs, tag = 'sflag constant byte address 0x0 - dummy sync flag']
  #allocation58 [shape = 's32[]', space=sflag, size = 0x4, offset = 0, fixed_abs, tag = 'sflag constant byte address 0x0 - dummy sync flag']
  #allocation59 [shape = 's32[]', space=sflag, size = 0x4, offset = 0, fixed_abs, tag = 'sflag constant byte address 0x0 - dummy sync flag']
  #allocation60 [shape = 's32[]', space=sflag, size = 0x4, offset = 0, fixed_abs, tag = 'sflag constant byte address 0x0 - dummy sync flag']
  #allocation61 [shape = 's32[]', space=sflag, size = 0x4, offset = 0, fixed_abs, tag = 'sflag constant byte address 0x0 - dummy sync flag']
  #allocation62 [shape = 's32[]', space=sflag, size = 0x4, offset = 0, fixed_abs, tag = 'sflag constant byte address 0x0 - dummy sync flag']
  #allocation63 [shape = 's32[]', space=sflag, size = 0x4, offset = 0, fixed_abs, tag = 'sflag constant byte address 0x0 - dummy sync flag']
  #allocation64 [shape = 's32[]', space=sflag, size = 0x4, offset = 0, fixed_abs, tag = 'sflag constant byte address 0x0 - dummy sync flag']
  #allocation65 [shape = 's32[]', space=sflag, size = 0x4, offset = 0, fixed_abs, tag = 'sflag constant byte address 0x0 - dummy sync flag']
  #allocation66 [shape = 's32[]', space=sflag, size = 0x4, offset = 0, fixed_abs, tag = 'sflag constant byte address 0x0 - dummy sync flag']
  #allocation67 [shape = 's32[]', space=sflag, size = 0x4, offset = 0, fixed_abs, tag = 'sflag constant byte address 0x0 - dummy sync flag']
  #allocation68 [shape = 's32[]', space=sflag, size = 0x4, offset = 0, fixed_abs, tag = 'sflag constant byte address 0x0 - dummy sync flag']
  #allocation69 [shape = 's32[]', space=sflag, size = 0x4, offset = 0, fixed_abs, tag = 'sflag constant byte address 0x0 - dummy sync flag']
  %s0 = inlined_call_operand.vmem [shape: s32[64], index: 0, kind: input, shape index: {}]
  %s1 = inlined_call_operand.vmem [shape: f32[4411,64], index: 1, kind: input, shape index: {}]
  %s2 = inlined_call_operand.vmem [shape: bf16[64,128], index: 2, kind: input, shape index: {}]
  %s3 = inlined_call_operand.vmem [shape: bf16[128,128], index: 3, kind: input, shape index: {}]
  %s4 = inlined_call_operand.vmem [shape: f32[1,128], index: 4, kind: input, shape index: {}]
  %s5 = inlined_call_operand.vmem [shape: bf16[128,128], index: 5, kind: input, shape index: {}]
  %s6 = inlined_call_operand.vmem [shape: f32[1,128], index: 6, kind: input, shape index: {}]
  %s7 = inlined_call_operand.vmem [shape: f32[8,128], index: 7, kind: output, shape index: {}]
  %s8 = sld [smem:[#allocation0]]
  $region1958: #{rnn_forward.1} parent=0
    _
  %s10 = ssub.s32 1, %s8
  %s11 = scalar_select 0, %s10, %s8
  $region1: #{rnn_forward.1} parent=0
    #allocation4 [shape = 'u8[512]{0}', space=smem, size = 0x200, scoped, tag = 'input window, operand 0, single buffered']
    #allocation5 [shape = 's32[1]{0}', space=sflag, size = 0x4, scoped, tag = 'scoped memory for rnn_forward.1']
    %12 = vsyncpa [#allocation5], 0
    // Predicated region
    $region2: #{rnn_forward.1} parent=1 // pred_check
      _
    $region3: #{rnn_forward.1} parent=1 // pred_check_branch
      %14 = sbr.rel (0) target = $region5
    $region4: #{rnn_forward.1} parent=1 // pred_region
      %s16 = ssub.s32 16, 16
      %17 = vsyncadd [#allocation5], %s16
      %s19 = sshll.u32 %s0, 4
      %s20 = int_to_ptr.vmem [resolvable:$true] %s19
      %22 = dma.vmem_to_smem %s20, 16, [#allocation4], [#allocation5]
    $region5: #{rnn_forward.1} parent=1 // pred_fallthru
      _
    // Predicated region
    $region6: #{rnn_forward.1} parent=1 // pred_check
      _
    $region7: #{rnn_forward.1} parent=1 // pred_check_branch
      %24 = sbr.rel (0) target = $region9
    $region8: #{rnn_forward.1} parent=1 // pred_region
      _
    $region9: #{rnn_forward.1} parent=1 // pred_fallthru
      _
    // Predicated region
    $region10: #{rnn_forward.1} parent=1 // pred_check
      _
    $region11: #{rnn_forward.1} parent=1 // pred_check_branch
      %26 = sbr.rel (0) target = $region13
    $region12: #{rnn_forward.1} parent=1 // pred_region
      _
    $region13: #{rnn_forward.1} parent=1 // pred_fallthru
      _
    // Predicated region
    $region14: #{rnn_forward.1} parent=1 // pred_check
      _
    $region15: #{rnn_forward.1} parent=1 // pred_check_branch
      %28 = sbr.rel (0) target = $region17
    $region16: #{rnn_forward.1} parent=1 // pred_region
      _
    $region17: #{rnn_forward.1} parent=1 // pred_fallthru
      _
    // Predicated region
    $region18: #{rnn_forward.1} parent=1 // pred_check
      _
    $region19: #{rnn_forward.1} parent=1 // pred_check_branch
      %30 = sbr.rel (0) target = $region21
    $region20: #{rnn_forward.1} parent=1 // pred_region
      _
    $region21: #{rnn_forward.1} parent=1 // pred_fallthru
      _
    // Predicated region
    $region22: #{rnn_forward.1} parent=1 // pred_check
      _
    $region23: #{rnn_forward.1} parent=1 // pred_check_branch
      %32 = sbr.rel (0) target = $region25
    $region24: #{rnn_forward.1} parent=1 // pred_region
      _
    $region25: #{rnn_forward.1} parent=1 // pred_fallthru
      _
    // Predicated region
    $region26: #{rnn_forward.1} parent=1 // pred_check
      _
    $region27: #{rnn_forward.1} parent=1 // pred_check_branch
      %34 = sbr.rel (0) target = $region29
    $region28: #{rnn_forward.1} parent=1 // pred_region
      %35 = dma.done [#allocation5], 16
    $region29: #{rnn_forward.1} parent=1 // pred_fallthru
      _
    %36 = sfence
    %s38 = sld [smem:[#allocation4]]
    %s39 = scalar_lea.vmem %s1, %s38
    %p41 = scmp.lt.u32.totalorder 1, 8
    %p42 = pneg %p41
    // Predicated region
    $region30: #{rnn_forward.1} parent=1 // pred_check
      _
    $region31: #{rnn_forward.1} parent=1 // pred_check_branch
      %44 = sbr.rel (%p41) target = $region33
    $region32: #{rnn_forward.1} parent=1 // pred_region
      %s59 = sand.u32 1, 7
      %p60 = scmp.eq.s32.totalorder %s59, 0
      %p61 = pneg %p60
      // Predicated region
      $region45: #{rnn_forward.1} parent=32 // pred_check
        _
      $region46: #{rnn_forward.1} parent=32 // pred_check_branch
        %63 = sbr.rel (%p60) target = $region48
      $region47: #{rnn_forward.1} parent=32 // pred_region
        %s64 = sand.u32 1, 7
        %s65 = ssub.s32 1, %s64
        %s66 = scalar_lea.vmem %s39, %s65
        %s67 = ssub.s32 1, %s64
        %s68 = scalar_lea.vmem [#allocation2], %s67
        %s69 = sshllo.u32 0, %s64
        loop: start=0, step=1, limit=1
        $region49: #{rnn_forward.1} parent=47 // loop_pre_header
          _
        $region50: #{rnn_forward.1} parent=47 // loop_header
          %s71 = sphi 0, %s75
          %p72 = scmp.ge.s32.totalorder %s71, 1
          %s76 = sphi %s66, %s66
          %s77 = sphi %s68, %s68
        $region51: #{rnn_forward.1} parent=47 // loop_header_branch
          %74 = sbr.rel (%p72) target = $region55
        $region52: #{rnn_forward.1} parent=47 // loop_body
          %v78 = vld [vmem:[%s76] sm:%s69]
          %79 = vst [vmem:[%s77] sm:%s69] %v78
        $region53: #{rnn_forward.1} parent=47 // loop_footer
          %s75 = sadd.s32 1, %s71
        $region54: #{rnn_forward.1} parent=47 // loop_footer_branch
          %70 = sbr.rel target = $region50
        $region55: #{rnn_forward.1} parent=47 // loop_exit
          _
      $region48: #{rnn_forward.1} parent=32 // pred_fallthru
        _
    $region33: #{rnn_forward.1} parent=1 // pred_fallthru
      _
    // Predicated region
    $region34: #{rnn_forward.1} parent=1 // pred_check
      %p45 = pneg %p41
    $region35: #{rnn_forward.1} parent=1 // pred_check_branch
      %47 = sbr.rel (%p45) target = $region37
    $region36: #{rnn_forward.1} parent=1 // pred_region
      %s48 = sshllo.u32 0, 1
      loop: start=0, step=1, limit=1
      $region38: #{rnn_forward.1} parent=36 // loop_pre_header
        _
      $region39: #{rnn_forward.1} parent=36 // loop_header
        %s50 = sphi 0, %s54
        %p51 = scmp.ge.s32.totalorder %s50, 1
        %s55 = sphi %s39, %s39
        %s56 = sphi [#allocation2], [#allocation2]
      $region40: #{rnn_forward.1} parent=36 // loop_header_branch
        %53 = sbr.rel (%p51) target = $region44
      $region41: #{rnn_forward.1} parent=36 // loop_body
        %v57 = vld [vmem:[%s55] sm:%s48]
        %58 = vst [vmem:[%s56] sm:%s48] %v57
      $region42: #{rnn_forward.1} parent=36 // loop_footer
        %s54 = sadd.s32 1, %s50
      $region43: #{rnn_forward.1} parent=36 // loop_footer_branch
        %49 = sbr.rel target = $region39
      $region44: #{rnn_forward.1} parent=36 // loop_exit
        _
    $region37: #{rnn_forward.1} parent=1 // pred_fallthru
      _
    // Predicated region
    $region56: #{rnn_forward.1} parent=1 // pred_check
      _
    $region57: #{rnn_forward.1} parent=1 // pred_check_branch
      %82 = sbr.rel (0) target = $region59
    $region58: #{rnn_forward.1} parent=1 // pred_region
      %83 = vsyncadd [#allocation3], 16
    $region59: #{rnn_forward.1} parent=1 // pred_fallthru
      _
    %s84 = sld [smem:[#allocation4 + $0x8]]
    %s85 = scalar_lea.vmem %s1, %s84
    %s86 = scalar_lea.vmem [#allocation2], 1
    %s87 = scalar_lea.sflag [#allocation3], 1
    %p89 = scmp.lt.u32.totalorder 1, 8
    %p90 = pneg %p89
    // Predicated region
    $region60: #{rnn_forward.1} parent=1 // pred_check
      _
    $region61: #{rnn_forward.1} parent=1 // pred_check_branch
      %92 = sbr.rel (%p89) target = $region63
    $region62: #{rnn_forward.1} parent=1 // pred_region
      %s107 = sand.u32 1, 7
      %p108 = scmp.eq.s32.totalorder %s107, 0
      %p109 = pneg %p108
      // Predicated region
      $region75: #{rnn_forward.1} parent=62 // pred_check
        _
      $region76: #{rnn_forward.1} parent=62 // pred_check_branch
        %111 = sbr.rel (%p108) target = $region78
      $region77: #{rnn_forward.1} parent=62 // pred_region
        %s112 = sand.u32 1, 7
        %s113 = ssub.s32 1, %s112
        %s114 = scalar_lea.vmem %s85, %s113
        %s115 = ssub.s32 1, %s112
        %s116 = scalar_lea.vmem %s86, %s115 [#allocation2]
        %s117 = sshllo.u32 0, %s112
        loop: start=0, step=1, limit=1
        $region79: #{rnn_forward.1} parent=77 // loop_pre_header
          _
        $region80: #{rnn_forward.1} parent=77 // loop_header
          %s119 = sphi 0, %s123
          %p120 = scmp.ge.s32.totalorder %s119, 1
          %s124 = sphi %s114, %s114
          %s125 = sphi %s116, %s116
        $region81: #{rnn_forward.1} parent=77 // loop_header_branch
          %122 = sbr.rel (%p120) target = $region85
        $region82: #{rnn_forward.1} parent=77 // loop_body
          %v126 = vld [vmem:[%s124] sm:%s117]
          %127 = vst [vmem:[%s125] sm:%s117] %v126
        $region83: #{rnn_forward.1} parent=77 // loop_footer
          %s123 = sadd.s32 1, %s119
        $region84: #{rnn_forward.1} parent=77 // loop_footer_branch
          %118 = sbr.rel target = $region80
        $region85: #{rnn_forward.1} parent=77 // loop_exit
          _
      $region78: #{rnn_forward.1} parent=62 // pred_fallthru
        _
    $region63: #{rnn_forward.1} parent=1 // pred_fallthru
      _
    // Predicated region
    $region64: #{rnn_forward.1} parent=1 // pred_check
      %p93 = pneg %p89
    $region65: #{rnn_forward.1} parent=1 // pred_check_branch
      %95 = sbr.rel (%p93) target = $region67
    $region66: #{rnn_forward.1} parent=1 // pred_region
      %s96 = sshllo.u32 0, 1
      loop: start=0, step=1, limit=1
      $region68: #{rnn_forward.1} parent=66 // loop_pre_header
        _
      $region69: #{rnn_forward.1} parent=66 // loop_header
        %s98 = sphi 0, %s102
        %p99 = scmp.ge.s32.totalorder %s98, 1
        %s103 = sphi %s85, %s85
        %s104 = sphi %s86, %s86
      $region70: #{rnn_forward.1} parent=66 // loop_header_branch
        %101 = sbr.rel (%p99) target = $region74
      $region71: #{rnn_forward.1} parent=66 // loop_body
        %v105 = vld [vmem:[%s103] sm:%s96]
        %106 = vst [vmem:[%s104] sm:%s96] %v105
      $region72: #{rnn_forward.1} parent=66 // loop_footer
        %s102 = sadd.s32 1, %s98
      $region73: #{rnn_forward.1} parent=66 // loop_footer_branch
        %97 = sbr.rel target = $region69
      $region74: #{rnn_forward.1} parent=66 // loop_exit
        _
    $region67: #{rnn_forward.1} parent=1 // pred_fallthru
      _
    // Predicated region
    $region86: #{rnn_forward.1} parent=1 // pred_check
      _
    $region87: #{rnn_forward.1} parent=1 // pred_check_branch
      %130 = sbr.rel (0) target = $region89
    $region88: #{rnn_forward.1} parent=1 // pred_region
      %131 = vsyncadd %s87, 16
    $region89: #{rnn_forward.1} parent=1 // pred_fallthru
      _
    %s132 = sld [smem:[#allocation4 + $0x10]]
    %s133 = scalar_lea.vmem %s1, %s132
    %s134 = scalar_lea.vmem [#allocation2], 2
    %s135 = scalar_lea.sflag [#allocation3], 2
    %p137 = scmp.lt.u32.totalorder 1, 8
    %p138 = pneg %p137
    // Predicated region
    $region90: #{rnn_forward.1} parent=1 // pred_check
      _
    $region91: #{rnn_forward.1} parent=1 // pred_check_branch
      %140 = sbr.rel (%p137) target = $region93
    $region92: #{rnn_forward.1} parent=1 // pred_region
      %s155 = sand.u32 1, 7
      %p156 = scmp.eq.s32.totalorder %s155, 0
      %p157 = pneg %p156
      // Predicated region
      $region105: #{rnn_forward.1} parent=92 // pred_check
        _
      $region106: #{rnn_forward.1} parent=92 // pred_check_branch
        %159 = sbr.rel (%p156) target = $region108
      $region107: #{rnn_forward.1} parent=92 // pred_region
        %s160 = sand.u32 1, 7
        %s161 = ssub.s32 1, %s160
        %s162 = scalar_lea.vmem %s133, %s161
        %s163 = ssub.s32 1, %s160
        %s164 = scalar_lea.vmem %s134, %s163 [#allocation2]
        %s165 = sshllo.u32 0, %s160
        loop: start=0, step=1, limit=1
        $region109: #{rnn_forward.1} parent=107 // loop_pre_header
          _
        $region110: #{rnn_forward.1} parent=107 // loop_header
          %s167 = sphi 0, %s171
          %p168 = scmp.ge.s32.totalorder %s167, 1
          %s172 = sphi %s162, %s162
          %s173 = sphi %s164, %s164
        $region111: #{rnn_forward.1} parent=107 // loop_header_branch
          %170 = sbr.rel (%p168) target = $region115
        $region112: #{rnn_forward.1} parent=107 // loop_body
          %v174 = vld [vmem:[%s172] sm:%s165]
          %175 = vst [vmem:[%s173] sm:%s165] %v174
        $region113: #{rnn_forward.1} parent=107 // loop_footer
          %s171 = sadd.s32 1, %s167
        $region114: #{rnn_forward.1} parent=107 // loop_footer_branch
          %166 = sbr.rel target = $region110
        $region115: #{rnn_forward.1} parent=107 // loop_exit
          _
      $region108: #{rnn_forward.1} parent=92 // pred_fallthru
        _
    $region93: #{rnn_forward.1} parent=1 // pred_fallthru
      _
    // Predicated region
    $region94: #{rnn_forward.1} parent=1 // pred_check
      %p141 = pneg %p137
    $region95: #{rnn_forward.1} parent=1 // pred_check_branch
      %143 = sbr.rel (%p141) target = $region97
    $region96: #{rnn_forward.1} parent=1 // pred_region
      %s144 = sshllo.u32 0, 1
      loop: start=0, step=1, limit=1
      $region98: #{rnn_forward.1} parent=96 // loop_pre_header
        _
      $region99: #{rnn_forward.1} parent=96 // loop_header
        %s146 = sphi 0, %s150
        %p147 = scmp.ge.s32.totalorder %s146, 1
        %s151 = sphi %s133, %s133
        %s152 = sphi %s134, %s134
      $region100: #{rnn_forward.1} parent=96 // loop_header_branch
        %149 = sbr.rel (%p147) target = $region104
      $region101: #{rnn_forward.1} parent=96 // loop_body
        %v153 = vld [vmem:[%s151] sm:%s144]
        %154 = vst [vmem:[%s152] sm:%s144] %v153
      $region102: #{rnn_forward.1} parent=96 // loop_footer
        %s150 = sadd.s32 1, %s146
      $region103: #{rnn_forward.1} parent=96 // loop_footer_branch
        %145 = sbr.rel target = $region99
      $region104: #{rnn_forward.1} parent=96 // loop_exit
        _
    $region97: #{rnn_forward.1} parent=1 // pred_fallthru
      _
    // Predicated region
    $region116: #{rnn_forward.1} parent=1 // pred_check
      _
    $region117: #{rnn_forward.1} parent=1 // pred_check_branch
      %178 = sbr.rel (0) target = $region119
    $region118: #{rnn_forward.1} parent=1 // pred_region
      %179 = vsyncadd %s135, 16
    $region119: #{rnn_forward.1} parent=1 // pred_fallthru
      _
    %s180 = sld [smem:[#allocation4 + $0x18]]
    %s181 = scalar_lea.vmem %s1, %s180
    %s182 = scalar_lea.vmem [#allocation2], 3
    %s183 = scalar_lea.sflag [#allocation3], 3
    %p185 = scmp.lt.u32.totalorder 1, 8
    %p186 = pneg %p185
    // Predicated region
    $region120: #{rnn_forward.1} parent=1 // pred_check
      _
    $region121: #{rnn_forward.1} parent=1 // pred_check_branch
      %188 = sbr.rel (%p185) target = $region123
    $region122: #{rnn_forward.1} parent=1 // pred_region
      %s203 = sand.u32 1, 7
      %p204 = scmp.eq.s32.totalorder %s203, 0
      %p205 = pneg %p204
      // Predicated region
      $region135: #{rnn_forward.1} parent=122 // pred_check
        _
      $region136: #{rnn_forward.1} parent=122 // pred_check_branch
        %207 = sbr.rel (%p204) target = $region138
      $region137: #{rnn_forward.1} parent=122 // pred_region
        %s208 = sand.u32 1, 7
        %s209 = ssub.s32 1, %s208
        %s210 = scalar_lea.vmem %s181, %s209
        %s211 = ssub.s32 1, %s208
        %s212 = scalar_lea.vmem %s182, %s211 [#allocation2]
        %s213 = sshllo.u32 0, %s208
        loop: start=0, step=1, limit=1
        $region139: #{rnn_forward.1} parent=137 // loop_pre_header
          _
        $region140: #{rnn_forward.1} parent=137 // loop_header
          %s215 = sphi 0, %s219
          %p216 = scmp.ge.s32.totalorder %s215, 1
          %s220 = sphi %s210, %s210
          %s221 = sphi %s212, %s212
        $region141: #{rnn_forward.1} parent=137 // loop_header_branch
          %218 = sbr.rel (%p216) target = $region145
        $region142: #{rnn_forward.1} parent=137 // loop_body
          %v222 = vld [vmem:[%s220] sm:%s213]
          %223 = vst [vmem:[%s221] sm:%s213] %v222
        $region143: #{rnn_forward.1} parent=137 // loop_footer
          %s219 = sadd.s32 1, %s215
        $region144: #{rnn_forward.1} parent=137 // loop_footer_branch
          %214 = sbr.rel target = $region140
        $region145: #{rnn_forward.1} parent=137 // loop_exit
          _
      $region138: #{rnn_forward.1} parent=122 // pred_fallthru
        _
    $region123: #{rnn_forward.1} parent=1 // pred_fallthru
      _
    // Predicated region
    $region124: #{rnn_forward.1} parent=1 // pred_check
      %p189 = pneg %p185
    $region125: #{rnn_forward.1} parent=1 // pred_check_branch
      %191 = sbr.rel (%p189) target = $region127
    $region126: #{rnn_forward.1} parent=1 // pred_region
      %s192 = sshllo.u32 0, 1
      loop: start=0, step=1, limit=1
      $region128: #{rnn_forward.1} parent=126 // loop_pre_header
        _
      $region129: #{rnn_forward.1} parent=126 // loop_header
        %s194 = sphi 0, %s198
        %p195 = scmp.ge.s32.totalorder %s194, 1
        %s199 = sphi %s181, %s181
        %s200 = sphi %s182, %s182
      $region130: #{rnn_forward.1} parent=126 // loop_header_branch
        %197 = sbr.rel (%p195) target = $region134
      $region131: #{rnn_forward.1} parent=126 // loop_body
        %v201 = vld [vmem:[%s199] sm:%s192]
        %202 = vst [vmem:[%s200] sm:%s192] %v201
      $region132: #{rnn_forward.1} parent=126 // loop_footer
        %s198 = sadd.s32 1, %s194
      $region133: #{rnn_forward.1} parent=126 // loop_footer_branch
        %193 = sbr.rel target = $region129
      $region134: #{rnn_forward.1} parent=126 // loop_exit
        _
    $region127: #{rnn_forward.1} parent=1 // pred_fallthru
      _
    // Predicated region
    $region146: #{rnn_forward.1} parent=1 // pred_check
      _
    $region147: #{rnn_forward.1} parent=1 // pred_check_branch
      %226 = sbr.rel (0) target = $region149
    $region148: #{rnn_forward.1} parent=1 // pred_region
      %227 = vsyncadd %s183, 16
    $region149: #{rnn_forward.1} parent=1 // pred_fallthru
      _
    %s228 = sld [smem:[#allocation4 + $0x20]]
    %s229 = scalar_lea.vmem %s1, %s228
    %s230 = scalar_lea.vmem [#allocation2], 4
    %s231 = scalar_lea.sflag [#allocation3], 4
    %p233 = scmp.lt.u32.totalorder 1, 8
    %p234 = pneg %p233
    // Predicated region
    $region150: #{rnn_forward.1} parent=1 // pred_check
      _
    $region151: #{rnn_forward.1} parent=1 // pred_check_branch
      %236 = sbr.rel (%p233) target = $region153
    $region152: #{rnn_forward.1} parent=1 // pred_region
      %s251 = sand.u32 1, 7
      %p252 = scmp.eq.s32.totalorder %s251, 0
      %p253 = pneg %p252
      // Predicated region
      $region165: #{rnn_forward.1} parent=152 // pred_check
        _
      $region166: #{rnn_forward.1} parent=152 // pred_check_branch
        %255 = sbr.rel (%p252) target = $region168
      $region167: #{rnn_forward.1} parent=152 // pred_region
        %s256 = sand.u32 1, 7
        %s257 = ssub.s32 1, %s256
        %s258 = scalar_lea.vmem %s229, %s257
        %s259 = ssub.s32 1, %s256
        %s260 = scalar_lea.vmem %s230, %s259 [#allocation2]
        %s261 = sshllo.u32 0, %s256
        loop: start=0, step=1, limit=1
        $region169: #{rnn_forward.1} parent=167 // loop_pre_header
          _
        $region170: #{rnn_forward.1} parent=167 // loop_header
          %s263 = sphi 0, %s267
          %p264 = scmp.ge.s32.totalorder %s263, 1
          %s268 = sphi %s258, %s258
          %s269 = sphi %s260, %s260
        $region171: #{rnn_forward.1} parent=167 // loop_header_branch
          %266 = sbr.rel (%p264) target = $region175
        $region172: #{rnn_forward.1} parent=167 // loop_body
          %v270 = vld [vmem:[%s268] sm:%s261]
          %271 = vst [vmem:[%s269] sm:%s261] %v270
        $region173: #{rnn_forward.1} parent=167 // loop_footer
          %s267 = sadd.s32 1, %s263
        $region174: #{rnn_forward.1} parent=167 // loop_footer_branch
          %262 = sbr.rel target = $region170
        $region175: #{rnn_forward.1} parent=167 // loop_exit
          _
      $region168: #{rnn_forward.1} parent=152 // pred_fallthru
        _
    $region153: #{rnn_forward.1} parent=1 // pred_fallthru
      _
    // Predicated region
    $region154: #{rnn_forward.1} parent=1 // pred_check
      %p237 = pneg %p233
    $region155: #{rnn_forward.1} parent=1 // pred_check_branch
      %239 = sbr.rel (%p237) target = $region157
    $region156: #{rnn_forward.1} parent=1 // pred_region
      %s240 = sshllo.u32 0, 1
      loop: start=0, step=1, limit=1
      $region158: #{rnn_forward.1} parent=156 // loop_pre_header
        _
      $region159: #{rnn_forward.1} parent=156 // loop_header
        %s242 = sphi 0, %s246
        %p243 = scmp.ge.s32.totalorder %s242, 1
        %s247 = sphi %s229, %s229
        %s248 = sphi %s230, %s230
      $region160: #{rnn_forward.1} parent=156 // loop_header_branch
        %245 = sbr.rel (%p243) target = $region164
      $region161: #{rnn_forward.1} parent=156 // loop_body
        %v249 = vld [vmem:[%s247] sm:%s240]
        %250 = vst [vmem:[%s248] sm:%s240] %v249
      $region162: #{rnn_forward.1} parent=156 // loop_footer
        %s246 = sadd.s32 1, %s242
      $region163: #{rnn_forward.1} parent=156 // loop_footer_branch
        %241 = sbr.rel target = $region159
      $region164: #{rnn_forward.1} parent=156 // loop_exit
        _
    $region157: #{rnn_forward.1} parent=1 // pred_fallthru
      _
    // Predicated region
    $region176: #{rnn_forward.1} parent=1 // pred_check
      _
    $region177: #{rnn_forward.1} parent=1 // pred_check_branch
      %274 = sbr.rel (0) target = $region179
    $region178: #{rnn_forward.1} parent=1 // pred_region
      %275 = vsyncadd %s231, 16
    $region179: #{rnn_forward.1} parent=1 // pred_fallthru
      _
    %s276 = sld [smem:[#allocation4 + $0x28]]
    %s277 = scalar_lea.vmem %s1, %s276
    %s278 = scalar_lea.vmem [#allocation2], 5
    %s279 = scalar_lea.sflag [#allocation3], 5
    %p281 = scmp.lt.u32.totalorder 1, 8
    %p282 = pneg %p281
    // Predicated region
    $region180: #{rnn_forward.1} parent=1 // pred_check
      _
    $region181: #{rnn_forward.1} parent=1 // pred_check_branch
      %284 = sbr.rel (%p281) target = $region183
    $region182: #{rnn_forward.1} parent=1 // pred_region
      %s299 = sand.u32 1, 7
      %p300 = scmp.eq.s32.totalorder %s299, 0
      %p301 = pneg %p300
      // Predicated region
      $region195: #{rnn_forward.1} parent=182 // pred_check
        _
      $region196: #{rnn_forward.1} parent=182 // pred_check_branch
        %303 = sbr.rel (%p300) target = $region198
      $region197: #{rnn_forward.1} parent=182 // pred_region
        %s304 = sand.u32 1, 7
        %s305 = ssub.s32 1, %s304
        %s306 = scalar_lea.vmem %s277, %s305
        %s307 = ssub.s32 1, %s304
        %s308 = scalar_lea.vmem %s278, %s307 [#allocation2]
        %s309 = sshllo.u32 0, %s304
        loop: start=0, step=1, limit=1
        $region199: #{rnn_forward.1} parent=197 // loop_pre_header
          _
        $region200: #{rnn_forward.1} parent=197 // loop_header
          %s311 = sphi 0, %s315
          %p312 = scmp.ge.s32.totalorder %s311, 1
          %s316 = sphi %s306, %s306
          %s317 = sphi %s308, %s308
        $region201: #{rnn_forward.1} parent=197 // loop_header_branch
          %314 = sbr.rel (%p312) target = $region205
        $region202: #{rnn_forward.1} parent=197 // loop_body
          %v318 = vld [vmem:[%s316] sm:%s309]
          %319 = vst [vmem:[%s317] sm:%s309] %v318
        $region203: #{rnn_forward.1} parent=197 // loop_footer
          %s315 = sadd.s32 1, %s311
        $region204: #{rnn_forward.1} parent=197 // loop_footer_branch
          %310 = sbr.rel target = $region200
        $region205: #{rnn_forward.1} parent=197 // loop_exit
          _
      $region198: #{rnn_forward.1} parent=182 // pred_fallthru
        _
    $region183: #{rnn_forward.1} parent=1 // pred_fallthru
      _
    // Predicated region
    $region184: #{rnn_forward.1} parent=1 // pred_check
      %p285 = pneg %p281
    $region185: #{rnn_forward.1} parent=1 // pred_check_branch
      %287 = sbr.rel (%p285) target = $region187
    $region186: #{rnn_forward.1} parent=1 // pred_region
      %s288 = sshllo.u32 0, 1
      loop: start=0, step=1, limit=1
      $region188: #{rnn_forward.1} parent=186 // loop_pre_header
        _
      $region189: #{rnn_forward.1} parent=186 // loop_header
        %s290 = sphi 0, %s294
        %p291 = scmp.ge.s32.totalorder %s290, 1
        %s295 = sphi %s277, %s277
        %s296 = sphi %s278, %s278
      $region190: #{rnn_forward.1} parent=186 // loop_header_branch
        %293 = sbr.rel (%p291) target = $region194
      $region191: #{rnn_forward.1} parent=186 // loop_body
        %v297 = vld [vmem:[%s295] sm:%s288]
        %298 = vst [vmem:[%s296] sm:%s288] %v297
      $region192: #{rnn_forward.1} parent=186 // loop_footer
        %s294 = sadd.s32 1, %s290
      $region193: #{rnn_forward.1} parent=186 // loop_footer_branch
        %289 = sbr.rel target = $region189
      $region194: #{rnn_forward.1} parent=186 // loop_exit
        _
    $region187: #{rnn_forward.1} parent=1 // pred_fallthru
      _
    // Predicated region
    $region206: #{rnn_forward.1} parent=1 // pred_check
      _
    $region207: #{rnn_forward.1} parent=1 // pred_check_branch
      %322 = sbr.rel (0) target = $region209
    $region208: #{rnn_forward.1} parent=1 // pred_region
      %323 = vsyncadd %s279, 16
    $region209: #{rnn_forward.1} parent=1 // pred_fallthru
      _
    %s324 = sld [smem:[#allocation4 + $0x30]]
    %s325 = scalar_lea.vmem %s1, %s324
    %s326 = scalar_lea.vmem [#allocation2], 6
    %s327 = scalar_lea.sflag [#allocation3], 6
    %p329 = scmp.lt.u32.totalorder 1, 8
    %p330 = pneg %p329
    // Predicated region
    $region210: #{rnn_forward.1} parent=1 // pred_check
      _
    $region211: #{rnn_forward.1} parent=1 // pred_check_branch
      %332 = sbr.rel (%p329) target = $region213
    $region212: #{rnn_forward.1} parent=1 // pred_region
      %s347 = sand.u32 1, 7
      %p348 = scmp.eq.s32.totalorder %s347, 0
      %p349 = pneg %p348
      // Predicated region
      $region225: #{rnn_forward.1} parent=212 // pred_check
        _
      $region226: #{rnn_forward.1} parent=212 // pred_check_branch
        %351 = sbr.rel (%p348) target = $region228
      $region227: #{rnn_forward.1} parent=212 // pred_region
        %s352 = sand.u32 1, 7
        %s353 = ssub.s32 1, %s352
        %s354 = scalar_lea.vmem %s325, %s353
        %s355 = ssub.s32 1, %s352
        %s356 = scalar_lea.vmem %s326, %s355 [#allocation2]
        %s357 = sshllo.u32 0, %s352
        loop: start=0, step=1, limit=1
        $region229: #{rnn_forward.1} parent=227 // loop_pre_header
          _
        $region230: #{rnn_forward.1} parent=227 // loop_header
          %s359 = sphi 0, %s363
          %p360 = scmp.ge.s32.totalorder %s359, 1
          %s364 = sphi %s354, %s354
          %s365 = sphi %s356, %s356
        $region231: #{rnn_forward.1} parent=227 // loop_header_branch
          %362 = sbr.rel (%p360) target = $region235
        $region232: #{rnn_forward.1} parent=227 // loop_body
          %v366 = vld [vmem:[%s364] sm:%s357]
          %367 = vst [vmem:[%s365] sm:%s357] %v366
        $region233: #{rnn_forward.1} parent=227 // loop_footer
          %s363 = sadd.s32 1, %s359
        $region234: #{rnn_forward.1} parent=227 // loop_footer_branch
          %358 = sbr.rel target = $region230
        $region235: #{rnn_forward.1} parent=227 // loop_exit
          _
      $region228: #{rnn_forward.1} parent=212 // pred_fallthru
        _
    $region213: #{rnn_forward.1} parent=1 // pred_fallthru
      _
    // Predicated region
    $region214: #{rnn_forward.1} parent=1 // pred_check
      %p333 = pneg %p329
    $region215: #{rnn_forward.1} parent=1 // pred_check_branch
      %335 = sbr.rel (%p333) target = $region217
    $region216: #{rnn_forward.1} parent=1 // pred_region
      %s336 = sshllo.u32 0, 1
      loop: start=0, step=1, limit=1
      $region218: #{rnn_forward.1} parent=216 // loop_pre_header
        _
      $region219: #{rnn_forward.1} parent=216 // loop_header
        %s338 = sphi 0, %s342
        %p339 = scmp.ge.s32.totalorder %s338, 1
        %s343 = sphi %s325, %s325
        %s344 = sphi %s326, %s326
      $region220: #{rnn_forward.1} parent=216 // loop_header_branch
        %341 = sbr.rel (%p339) target = $region224
      $region221: #{rnn_forward.1} parent=216 // loop_body
        %v345 = vld [vmem:[%s343] sm:%s336]
        %346 = vst [vmem:[%s344] sm:%s336] %v345
      $region222: #{rnn_forward.1} parent=216 // loop_footer
        %s342 = sadd.s32 1, %s338
      $region223: #{rnn_forward.1} parent=216 // loop_footer_branch
        %337 = sbr.rel target = $region219
      $region224: #{rnn_forward.1} parent=216 // loop_exit
        _
    $region217: #{rnn_forward.1} parent=1 // pred_fallthru
      _
    // Predicated region
    $region236: #{rnn_forward.1} parent=1 // pred_check
      _
    $region237: #{rnn_forward.1} parent=1 // pred_check_branch
      %370 = sbr.rel (0) target = $region239
    $region238: #{rnn_forward.1} parent=1 // pred_region
      %371 = vsyncadd %s327, 16
    $region239: #{rnn_forward.1} parent=1 // pred_fallthru
      _
    %s372 = sld [smem:[#allocation4 + $0x38]]
    %s373 = scalar_lea.vmem %s1, %s372
    %s374 = scalar_lea.vmem [#allocation2], 7
    %s375 = scalar_lea.sflag [#allocation3], 7
    %p377 = scmp.lt.u32.totalorder 1, 8
    %p378 = pneg %p377
    // Predicated region
    $region240: #{rnn_forward.1} parent=1 // pred_check
      _
    $region241: #{rnn_forward.1} parent=1 // pred_check_branch
      %380 = sbr.rel (%p377) target = $region243
    $region242: #{rnn_forward.1} parent=1 // pred_region
      %s395 = sand.u32 1, 7
      %p396 = scmp.eq.s32.totalorder %s395, 0
      %p397 = pneg %p396
      // Predicated region
      $region255: #{rnn_forward.1} parent=242 // pred_check
        _
      $region256: #{rnn_forward.1} parent=242 // pred_check_branch
        %399 = sbr.rel (%p396) target = $region258
      $region257: #{rnn_forward.1} parent=242 // pred_region
        %s400 = sand.u32 1, 7
        %s401 = ssub.s32 1, %s400
        %s402 = scalar_lea.vmem %s373, %s401
        %s403 = ssub.s32 1, %s400
        %s404 = scalar_lea.vmem %s374, %s403 [#allocation2]
        %s405 = sshllo.u32 0, %s400
        loop: start=0, step=1, limit=1
        $region259: #{rnn_forward.1} parent=257 // loop_pre_header
          _
        $region260: #{rnn_forward.1} parent=257 // loop_header
          %s407 = sphi 0, %s411
          %p408 = scmp.ge.s32.totalorder %s407, 1
          %s412 = sphi %s402, %s402
          %s413 = sphi %s404, %s404
        $region261: #{rnn_forward.1} parent=257 // loop_header_branch
          %410 = sbr.rel (%p408) target = $region265
        $region262: #{rnn_forward.1} parent=257 // loop_body
          %v414 = vld [vmem:[%s412] sm:%s405]
          %415 = vst [vmem:[%s413] sm:%s405] %v414
        $region263: #{rnn_forward.1} parent=257 // loop_footer
          %s411 = sadd.s32 1, %s407
        $region264: #{rnn_forward.1} parent=257 // loop_footer_branch
          %406 = sbr.rel target = $region260
        $region265: #{rnn_forward.1} parent=257 // loop_exit
          _
      $region258: #{rnn_forward.1} parent=242 // pred_fallthru
        _
    $region243: #{rnn_forward.1} parent=1 // pred_fallthru
      _
    // Predicated region
    $region244: #{rnn_forward.1} parent=1 // pred_check
      %p381 = pneg %p377
    $region245: #{rnn_forward.1} parent=1 // pred_check_branch
      %383 = sbr.rel (%p381) target = $region247
    $region246: #{rnn_forward.1} parent=1 // pred_region
      %s384 = sshllo.u32 0, 1
      loop: start=0, step=1, limit=1
      $region248: #{rnn_forward.1} parent=246 // loop_pre_header
        _
      $region249: #{rnn_forward.1} parent=246 // loop_header
        %s386 = sphi 0, %s390
        %p387 = scmp.ge.s32.totalorder %s386, 1
        %s391 = sphi %s373, %s373
        %s392 = sphi %s374, %s374
      $region250: #{rnn_forward.1} parent=246 // loop_header_branch
        %389 = sbr.rel (%p387) target = $region254
      $region251: #{rnn_forward.1} parent=246 // loop_body
        %v393 = vld [vmem:[%s391] sm:%s384]
        %394 = vst [vmem:[%s392] sm:%s384] %v393
      $region252: #{rnn_forward.1} parent=246 // loop_footer
        %s390 = sadd.s32 1, %s386
      $region253: #{rnn_forward.1} parent=246 // loop_footer_branch
        %385 = sbr.rel target = $region249
      $region254: #{rnn_forward.1} parent=246 // loop_exit
        _
    $region247: #{rnn_forward.1} parent=1 // pred_fallthru
      _
    // Predicated region
    $region266: #{rnn_forward.1} parent=1 // pred_check
      _
    $region267: #{rnn_forward.1} parent=1 // pred_check_branch
      %418 = sbr.rel (0) target = $region269
    $region268: #{rnn_forward.1} parent=1 // pred_region
      %419 = vsyncadd %s375, 16
    $region269: #{rnn_forward.1} parent=1 // pred_fallthru
      _
    %s420 = smul.u32 1, 1
    %s421 = sshll.u32 %s420, 4
    %422 = dma.done [#allocation3], %s421
    %s423 = sld [smem:[#allocation4 + $0x1]]
    %s424 = scalar_lea.vmem %s1, %s423
    %s425 = scalar_lea.vmem [#allocation2], 8
    %p427 = scmp.lt.u32.totalorder 1, 8
    %p428 = pneg %p427
    // Predicated region
    $region270: #{rnn_forward.1} parent=1 // pred_check
      _
    $region271: #{rnn_forward.1} parent=1 // pred_check_branch
      %430 = sbr.rel (%p427) target = $region273
    $region272: #{rnn_forward.1} parent=1 // pred_region
      %s445 = sand.u32 1, 7
      %p446 = scmp.eq.s32.totalorder %s445, 0
      %p447 = pneg %p446
      // Predicated region
      $region285: #{rnn_forward.1} parent=272 // pred_check
        _
      $region286: #{rnn_forward.1} parent=272 // pred_check_branch
        %449 = sbr.rel (%p446) target = $region288
      $region287: #{rnn_forward.1} parent=272 // pred_region
        %s450 = sand.u32 1, 7
        %s451 = ssub.s32 1, %s450
        %s452 = scalar_lea.vmem %s424, %s451
        %s453 = ssub.s32 1, %s450
        %s454 = scalar_lea.vmem %s425, %s453 [#allocation2]
        %s455 = sshllo.u32 0, %s450
        loop: start=0, step=1, limit=1
        $region289: #{rnn_forward.1} parent=287 // loop_pre_header
          _
        $region290: #{rnn_forward.1} parent=287 // loop_header
          %s457 = sphi 0, %s461
          %p458 = scmp.ge.s32.totalorder %s457, 1
          %s462 = sphi %s452, %s452
          %s463 = sphi %s454, %s454
        $region291: #{rnn_forward.1} parent=287 // loop_header_branch
          %460 = sbr.rel (%p458) target = $region295
        $region292: #{rnn_forward.1} parent=287 // loop_body
          %v464 = vld [vmem:[%s462] sm:%s455]
          %465 = vst [vmem:[%s463] sm:%s455] %v464
        $region293: #{rnn_forward.1} parent=287 // loop_footer
          %s461 = sadd.s32 1, %s457
        $region294: #{rnn_forward.1} parent=287 // loop_footer_branch
          %456 = sbr.rel target = $region290
        $region295: #{rnn_forward.1} parent=287 // loop_exit
          _
      $region288: #{rnn_forward.1} parent=272 // pred_fallthru
        _
    $region273: #{rnn_forward.1} parent=1 // pred_fallthru
      _
    // Predicated region
    $region274: #{rnn_forward.1} parent=1 // pred_check
      %p431 = pneg %p427
    $region275: #{rnn_forward.1} parent=1 // pred_check_branch
      %433 = sbr.rel (%p431) target = $region277
    $region276: #{rnn_forward.1} parent=1 // pred_region
      %s434 = sshllo.u32 0, 1
      loop: start=0, step=1, limit=1
      $region278: #{rnn_forward.1} parent=276 // loop_pre_header
        _
      $region279: #{rnn_forward.1} parent=276 // loop_header
        %s436 = sphi 0, %s440
        %p437 = scmp.ge.s32.totalorder %s436, 1
        %s441 = sphi %s424, %s424
        %s442 = sphi %s425, %s425
      $region280: #{rnn_forward.1} parent=276 // loop_header_branch
        %439 = sbr.rel (%p437) target = $region284
      $region281: #{rnn_forward.1} parent=276 // loop_body
        %v443 = vld [vmem:[%s441] sm:%s434]
        %444 = vst [vmem:[%s442] sm:%s434] %v443
      $region282: #{rnn_forward.1} parent=276 // loop_footer
        %s440 = sadd.s32 1, %s436
      $region283: #{rnn_forward.1} parent=276 // loop_footer_branch
        %435 = sbr.rel target = $region279
      $region284: #{rnn_forward.1} parent=276 // loop_exit
        _
    $region277: #{rnn_forward.1} parent=1 // pred_fallthru
      _
    // Predicated region
    $region296: #{rnn_forward.1} parent=1 // pred_check
      _
    $region297: #{rnn_forward.1} parent=1 // pred_check_branch
      %468 = sbr.rel (0) target = $region299
    $region298: #{rnn_forward.1} parent=1 // pred_region
      %469 = vsyncadd [#allocation3], 16
    $region299: #{rnn_forward.1} parent=1 // pred_fallthru
      _
    %s470 = sshll.u32 %s420, 4
    %471 = dma.done %s87, %s470
    %s472 = sld [smem:[#allocation4 + $0x9]]
    %s473 = scalar_lea.vmem %s1, %s472
    %s474 = scalar_lea.vmem [#allocation2], 9
    %p476 = scmp.lt.u32.totalorder 1, 8
    %p477 = pneg %p476
    // Predicated region
    $region300: #{rnn_forward.1} parent=1 // pred_check
      _
    $region301: #{rnn_forward.1} parent=1 // pred_check_branch
      %479 = sbr.rel (%p476) target = $region303
    $region302: #{rnn_forward.1} parent=1 // pred_region
      %s494 = sand.u32 1, 7
      %p495 = scmp.eq.s32.totalorder %s494, 0
      %p496 = pneg %p495
      // Predicated region
      $region315: #{rnn_forward.1} parent=302 // pred_check
        _
      $region316: #{rnn_forward.1} parent=302 // pred_check_branch
        %498 = sbr.rel (%p495) target = $region318
      $region317: #{rnn_forward.1} parent=302 // pred_region
        %s499 = sand.u32 1, 7
        %s500 = ssub.s32 1, %s499
        %s501 = scalar_lea.vmem %s473, %s500
        %s502 = ssub.s32 1, %s499
        %s503 = scalar_lea.vmem %s474, %s502 [#allocation2]
        %s504 = sshllo.u32 0, %s499
        loop: start=0, step=1, limit=1
        $region319: #{rnn_forward.1} parent=317 // loop_pre_header
          _
        $region320: #{rnn_forward.1} parent=317 // loop_header
          %s506 = sphi 0, %s510
          %p507 = scmp.ge.s32.totalorder %s506, 1
          %s511 = sphi %s501, %s501
          %s512 = sphi %s503, %s503
        $region321: #{rnn_forward.1} parent=317 // loop_header_branch
          %509 = sbr.rel (%p507) target = $region325
        $region322: #{rnn_forward.1} parent=317 // loop_body
          %v513 = vld [vmem:[%s511] sm:%s504]
          %514 = vst [vmem:[%s512] sm:%s504] %v513
        $region323: #{rnn_forward.1} parent=317 // loop_footer
          %s510 = sadd.s32 1, %s506
        $region324: #{rnn_forward.1} parent=317 // loop_footer_branch
          %505 = sbr.rel target = $region320
        $region325: #{rnn_forward.1} parent=317 // loop_exit
          _
      $region318: #{rnn_forward.1} parent=302 // pred_fallthru
        _
    $region303: #{rnn_forward.1} parent=1 // pred_fallthru
      _
    // Predicated region
    $region304: #{rnn_forward.1} parent=1 // pred_check
      %p480 = pneg %p476
    $region305: #{rnn_forward.1} parent=1 // pred_check_branch
      %482 = sbr.rel (%p480) target = $region307
    $region306: #{rnn_forward.1} parent=1 // pred_region
      %s483 = sshllo.u32 0, 1
      loop: start=0, step=1, limit=1
      $region308: #{rnn_forward.1} parent=306 // loop_pre_header
        _
      $region309: #{rnn_forward.1} parent=306 // loop_header
        %s485 = sphi 0, %s489
        %p486 = scmp.ge.s32.totalorder %s485, 1
        %s490 = sphi %s473, %s473
        %s491 = sphi %s474, %s474
      $region310: #{rnn_forward.1} parent=306 // loop_header_branch
        %488 = sbr.rel (%p486) target = $region314
      $region311: #{rnn_forward.1} parent=306 // loop_body
        %v492 = vld [vmem:[%s490] sm:%s483]
        %493 = vst [vmem:[%s491] sm:%s483] %v492
      $region312: #{rnn_forward.1} parent=306 // loop_footer
        %s489 = sadd.s32 1, %s485
      $region313: #{rnn_forward.1} parent=306 // loop_footer_branch
        %484 = sbr.rel target = $region309
      $region314: #{rnn_forward.1} parent=306 // loop_exit
        _
    $region307: #{rnn_forward.1} parent=1 // pred_fallthru
      _
    // Predicated region
    $region326: #{rnn_forward.1} parent=1 // pred_check
      _
    $region327: #{rnn_forward.1} parent=1 // pred_check_branch
      %517 = sbr.rel (0) target = $region329
    $region328: #{rnn_forward.1} parent=1 // pred_region
      %518 = vsyncadd %s87, 16
    $region329: #{rnn_forward.1} parent=1 // pred_fallthru
      _
    %s519 = sshll.u32 %s420, 4
    %520 = dma.done %s135, %s519
    %s521 = sld [smem:[#allocation4 + $0x11]]
    %s522 = scalar_lea.vmem %s1, %s521
    %s523 = scalar_lea.vmem [#allocation2], 10
    %p525 = scmp.lt.u32.totalorder 1, 8
    %p526 = pneg %p525
    // Predicated region
    $region330: #{rnn_forward.1} parent=1 // pred_check
      _
    $region331: #{rnn_forward.1} parent=1 // pred_check_branch
      %528 = sbr.rel (%p525) target = $region333
    $region332: #{rnn_forward.1} parent=1 // pred_region
      %s543 = sand.u32 1, 7
      %p544 = scmp.eq.s32.totalorder %s543, 0
      %p545 = pneg %p544
      // Predicated region
      $region345: #{rnn_forward.1} parent=332 // pred_check
        _
      $region346: #{rnn_forward.1} parent=332 // pred_check_branch
        %547 = sbr.rel (%p544) target = $region348
      $region347: #{rnn_forward.1} parent=332 // pred_region
        %s548 = sand.u32 1, 7
        %s549 = ssub.s32 1, %s548
        %s550 = scalar_lea.vmem %s522, %s549
        %s551 = ssub.s32 1, %s548
        %s552 = scalar_lea.vmem %s523, %s551 [#allocation2]
        %s553 = sshllo.u32 0, %s548
        loop: start=0, step=1, limit=1
        $region349: #{rnn_forward.1} parent=347 // loop_pre_header
          _
        $region350: #{rnn_forward.1} parent=347 // loop_header
          %s555 = sphi 0, %s559
          %p556 = scmp.ge.s32.totalorder %s555, 1
          %s560 = sphi %s550, %s550
          %s561 = sphi %s552, %s552
        $region351: #{rnn_forward.1} parent=347 // loop_header_branch
          %558 = sbr.rel (%p556) target = $region355
        $region352: #{rnn_forward.1} parent=347 // loop_body
          %v562 = vld [vmem:[%s560] sm:%s553]
          %563 = vst [vmem:[%s561] sm:%s553] %v562
        $region353: #{rnn_forward.1} parent=347 // loop_footer
          %s559 = sadd.s32 1, %s555
        $region354: #{rnn_forward.1} parent=347 // loop_footer_branch
          %554 = sbr.rel target = $region350
        $region355: #{rnn_forward.1} parent=347 // loop_exit
          _
      $region348: #{rnn_forward.1} parent=332 // pred_fallthru
        _
    $region333: #{rnn_forward.1} parent=1 // pred_fallthru
      _
    // Predicated region
    $region334: #{rnn_forward.1} parent=1 // pred_check
      %p529 = pneg %p525
    $region335: #{rnn_forward.1} parent=1 // pred_check_branch
      %531 = sbr.rel (%p529) target = $region337
    $region336: #{rnn_forward.1} parent=1 // pred_region
      %s532 = sshllo.u32 0, 1
      loop: start=0, step=1, limit=1
      $region338: #{rnn_forward.1} parent=336 // loop_pre_header
        _
      $region339: #{rnn_forward.1} parent=336 // loop_header
        %s534 = sphi 0, %s538
        %p535 = scmp.ge.s32.totalorder %s534, 1
        %s539 = sphi %s522, %s522
        %s540 = sphi %s523, %s523
      $region340: #{rnn_forward.1} parent=336 // loop_header_branch
        %537 = sbr.rel (%p535) target = $region344
      $region341: #{rnn_forward.1} parent=336 // loop_body
        %v541 = vld [vmem:[%s539] sm:%s532]
        %542 = vst [vmem:[%s540] sm:%s532] %v541
      $region342: #{rnn_forward.1} parent=336 // loop_footer
        %s538 = sadd.s32 1, %s534
      $region343: #{rnn_forward.1} parent=336 // loop_footer_branch
        %533 = sbr.rel target = $region339
      $region344: #{rnn_forward.1} parent=336 // loop_exit
        _
    $region337: #{rnn_forward.1} parent=1 // pred_fallthru
      _
    // Predicated region
    $region356: #{rnn_forward.1} parent=1 // pred_check
      _
    $region357: #{rnn_forward.1} parent=1 // pred_check_branch
      %566 = sbr.rel (0) target = $region359
    $region358: #{rnn_forward.1} parent=1 // pred_region
      %567 = vsyncadd %s135, 16
    $region359: #{rnn_forward.1} parent=1 // pred_fallthru
      _
    %s568 = sshll.u32 %s420, 4
    %569 = dma.done %s183, %s568
    %s570 = sld [smem:[#allocation4 + $0x19]]
    %s571 = scalar_lea.vmem %s1, %s570
    %s572 = scalar_lea.vmem [#allocation2], 11
    %p574 = scmp.lt.u32.totalorder 1, 8
    %p575 = pneg %p574
    // Predicated region
    $region360: #{rnn_forward.1} parent=1 // pred_check
      _
    $region361: #{rnn_forward.1} parent=1 // pred_check_branch
      %577 = sbr.rel (%p574) target = $region363
    $region362: #{rnn_forward.1} parent=1 // pred_region
      %s592 = sand.u32 1, 7
      %p593 = scmp.eq.s32.totalorder %s592, 0
      %p594 = pneg %p593
      // Predicated region
      $region375: #{rnn_forward.1} parent=362 // pred_check
        _
      $region376: #{rnn_forward.1} parent=362 // pred_check_branch
        %596 = sbr.rel (%p593) target = $region378
      $region377: #{rnn_forward.1} parent=362 // pred_region
        %s597 = sand.u32 1, 7
        %s598 = ssub.s32 1, %s597
        %s599 = scalar_lea.vmem %s571, %s598
        %s600 = ssub.s32 1, %s597
        %s601 = scalar_lea.vmem %s572, %s600 [#allocation2]
        %s602 = sshllo.u32 0, %s597
        loop: start=0, step=1, limit=1
        $region379: #{rnn_forward.1} parent=377 // loop_pre_header
          _
        $region380: #{rnn_forward.1} parent=377 // loop_header
          %s604 = sphi 0, %s608
          %p605 = scmp.ge.s32.totalorder %s604, 1
          %s609 = sphi %s599, %s599
          %s610 = sphi %s601, %s601
        $region381: #{rnn_forward.1} parent=377 // loop_header_branch
          %607 = sbr.rel (%p605) target = $region385
        $region382: #{rnn_forward.1} parent=377 // loop_body
          %v611 = vld [vmem:[%s609] sm:%s602]
          %612 = vst [vmem:[%s610] sm:%s602] %v611
        $region383: #{rnn_forward.1} parent=377 // loop_footer
          %s608 = sadd.s32 1, %s604
        $region384: #{rnn_forward.1} parent=377 // loop_footer_branch
          %603 = sbr.rel target = $region380
        $region385: #{rnn_forward.1} parent=377 // loop_exit
          _
      $region378: #{rnn_forward.1} parent=362 // pred_fallthru
        _
    $region363: #{rnn_forward.1} parent=1 // pred_fallthru
      _
    // Predicated region
    $region364: #{rnn_forward.1} parent=1 // pred_check
      %p578 = pneg %p574
    $region365: #{rnn_forward.1} parent=1 // pred_check_branch
      %580 = sbr.rel (%p578) target = $region367
    $region366: #{rnn_forward.1} parent=1 // pred_region
      %s581 = sshllo.u32 0, 1
      loop: start=0, step=1, limit=1
      $region368: #{rnn_forward.1} parent=366 // loop_pre_header
        _
      $region369: #{rnn_forward.1} parent=366 // loop_header
        %s583 = sphi 0, %s587
        %p584 = scmp.ge.s32.totalorder %s583, 1
        %s588 = sphi %s571, %s571
        %s589 = sphi %s572, %s572
      $region370: #{rnn_forward.1} parent=366 // loop_header_branch
        %586 = sbr.rel (%p584) target = $region374
      $region371: #{rnn_forward.1} parent=366 // loop_body
        %v590 = vld [vmem:[%s588] sm:%s581]
        %591 = vst [vmem:[%s589] sm:%s581] %v590
      $region372: #{rnn_forward.1} parent=366 // loop_footer
        %s587 = sadd.s32 1, %s583
      $region373: #{rnn_forward.1} parent=366 // loop_footer_branch
        %582 = sbr.rel target = $region369
      $region374: #{rnn_forward.1} parent=366 // loop_exit
        _
    $region367: #{rnn_forward.1} parent=1 // pred_fallthru
      _
    // Predicated region
    $region386: #{rnn_forward.1} parent=1 // pred_check
      _
    $region387: #{rnn_forward.1} parent=1 // pred_check_branch
      %615 = sbr.rel (0) target = $region389
    $region388: #{rnn_forward.1} parent=1 // pred_region
      %616 = vsyncadd %s183, 16
    $region389: #{rnn_forward.1} parent=1 // pred_fallthru
      _
    %s617 = sshll.u32 %s420, 4
    %618 = dma.done %s231, %s617
    %s619 = sld [smem:[#allocation4 + $0x21]]
    %s620 = scalar_lea.vmem %s1, %s619
    %s621 = scalar_lea.vmem [#allocation2], 12
    %p623 = scmp.lt.u32.totalorder 1, 8
    %p624 = pneg %p623
    // Predicated region
    $region390: #{rnn_forward.1} parent=1 // pred_check
      _
    $region391: #{rnn_forward.1} parent=1 // pred_check_branch
      %626 = sbr.rel (%p623) target = $region393
    $region392: #{rnn_forward.1} parent=1 // pred_region
      %s641 = sand.u32 1, 7
      %p642 = scmp.eq.s32.totalorder %s641, 0
      %p643 = pneg %p642
      // Predicated region
      $region405: #{rnn_forward.1} parent=392 // pred_check
        _
      $region406: #{rnn_forward.1} parent=392 // pred_check_branch
        %645 = sbr.rel (%p642) target = $region408
      $region407: #{rnn_forward.1} parent=392 // pred_region
        %s646 = sand.u32 1, 7
        %s647 = ssub.s32 1, %s646
        %s648 = scalar_lea.vmem %s620, %s647
        %s649 = ssub.s32 1, %s646
        %s650 = scalar_lea.vmem %s621, %s649 [#allocation2]
        %s651 = sshllo.u32 0, %s646
        loop: start=0, step=1, limit=1
        $region409: #{rnn_forward.1} parent=407 // loop_pre_header
          _
        $region410: #{rnn_forward.1} parent=407 // loop_header
          %s653 = sphi 0, %s657
          %p654 = scmp.ge.s32.totalorder %s653, 1
          %s658 = sphi %s648, %s648
          %s659 = sphi %s650, %s650
        $region411: #{rnn_forward.1} parent=407 // loop_header_branch
          %656 = sbr.rel (%p654) target = $region415
        $region412: #{rnn_forward.1} parent=407 // loop_body
          %v660 = vld [vmem:[%s658] sm:%s651]
          %661 = vst [vmem:[%s659] sm:%s651] %v660
        $region413: #{rnn_forward.1} parent=407 // loop_footer
          %s657 = sadd.s32 1, %s653
        $region414: #{rnn_forward.1} parent=407 // loop_footer_branch
          %652 = sbr.rel target = $region410
        $region415: #{rnn_forward.1} parent=407 // loop_exit
          _
      $region408: #{rnn_forward.1} parent=392 // pred_fallthru
        _
    $region393: #{rnn_forward.1} parent=1 // pred_fallthru
      _
    // Predicated region
    $region394: #{rnn_forward.1} parent=1 // pred_check
      %p627 = pneg %p623
    $region395: #{rnn_forward.1} parent=1 // pred_check_branch
      %629 = sbr.rel (%p627) target = $region397
    $region396: #{rnn_forward.1} parent=1 // pred_region
      %s630 = sshllo.u32 0, 1
      loop: start=0, step=1, limit=1
      $region398: #{rnn_forward.1} parent=396 // loop_pre_header
        _
      $region399: #{rnn_forward.1} parent=396 // loop_header
        %s632 = sphi 0, %s636
        %p633 = scmp.ge.s32.totalorder %s632, 1
        %s637 = sphi %s620, %s620
        %s638 = sphi %s621, %s621
      $region400: #{rnn_forward.1} parent=396 // loop_header_branch
        %635 = sbr.rel (%p633) target = $region404
      $region401: #{rnn_forward.1} parent=396 // loop_body
        %v639 = vld [vmem:[%s637] sm:%s630]
        %640 = vst [vmem:[%s638] sm:%s630] %v639
      $region402: #{rnn_forward.1} parent=396 // loop_footer
        %s636 = sadd.s32 1, %s632
      $region403: #{rnn_forward.1} parent=396 // loop_footer_branch
        %631 = sbr.rel target = $region399
      $region404: #{rnn_forward.1} parent=396 // loop_exit
        _
    $region397: #{rnn_forward.1} parent=1 // pred_fallthru
      _
    // Predicated region
    $region416: #{rnn_forward.1} parent=1 // pred_check
      _
    $region417: #{rnn_forward.1} parent=1 // pred_check_branch
      %664 = sbr.rel (0) target = $region419
    $region418: #{rnn_forward.1} parent=1 // pred_region
      %665 = vsyncadd %s231, 16
    $region419: #{rnn_forward.1} parent=1 // pred_fallthru
      _
    %s666 = sshll.u32 %s420, 4
    %667 = dma.done %s279, %s666
    %s668 = sld [smem:[#allocation4 + $0x29]]
    %s669 = scalar_lea.vmem %s1, %s668
    %s670 = scalar_lea.vmem [#allocation2], 13
    %p672 = scmp.lt.u32.totalorder 1, 8
    %p673 = pneg %p672
    // Predicated region
    $region420: #{rnn_forward.1} parent=1 // pred_check
      _
    $region421: #{rnn_forward.1} parent=1 // pred_check_branch
      %675 = sbr.rel (%p672) target = $region423
    $region422: #{rnn_forward.1} parent=1 // pred_region
      %s690 = sand.u32 1, 7
      %p691 = scmp.eq.s32.totalorder %s690, 0
      %p692 = pneg %p691
      // Predicated region
      $region435: #{rnn_forward.1} parent=422 // pred_check
        _
      $region436: #{rnn_forward.1} parent=422 // pred_check_branch
        %694 = sbr.rel (%p691) target = $region438
      $region437: #{rnn_forward.1} parent=422 // pred_region
        %s695 = sand.u32 1, 7
        %s696 = ssub.s32 1, %s695
        %s697 = scalar_lea.vmem %s669, %s696
        %s698 = ssub.s32 1, %s695
        %s699 = scalar_lea.vmem %s670, %s698 [#allocation2]
        %s700 = sshllo.u32 0, %s695
        loop: start=0, step=1, limit=1
        $region439: #{rnn_forward.1} parent=437 // loop_pre_header
          _
        $region440: #{rnn_forward.1} parent=437 // loop_header
          %s702 = sphi 0, %s706
          %p703 = scmp.ge.s32.totalorder %s702, 1
          %s707 = sphi %s697, %s697
          %s708 = sphi %s699, %s699
        $region441: #{rnn_forward.1} parent=437 // loop_header_branch
          %705 = sbr.rel (%p703) target = $region445
        $region442: #{rnn_forward.1} parent=437 // loop_body
          %v709 = vld [vmem:[%s707] sm:%s700]
          %710 = vst [vmem:[%s708] sm:%s700] %v709
        $region443: #{rnn_forward.1} parent=437 // loop_footer
          %s706 = sadd.s32 1, %s702
        $region444: #{rnn_forward.1} parent=437 // loop_footer_branch
          %701 = sbr.rel target = $region440
        $region445: #{rnn_forward.1} parent=437 // loop_exit
          _
      $region438: #{rnn_forward.1} parent=422 // pred_fallthru
        _
    $region423: #{rnn_forward.1} parent=1 // pred_fallthru
      _
    // Predicated region
    $region424: #{rnn_forward.1} parent=1 // pred_check
      %p676 = pneg %p672
    $region425: #{rnn_forward.1} parent=1 // pred_check_branch
      %678 = sbr.rel (%p676) target = $region427
    $region426: #{rnn_forward.1} parent=1 // pred_region
      %s679 = sshllo.u32 0, 1
      loop: start=0, step=1, limit=1
      $region428: #{rnn_forward.1} parent=426 // loop_pre_header
        _
      $region429: #{rnn_forward.1} parent=426 // loop_header
        %s681 = sphi 0, %s685
        %p682 = scmp.ge.s32.totalorder %s681, 1
        %s686 = sphi %s669, %s669
        %s687 = sphi %s670, %s670
      $region430: #{rnn_forward.1} parent=426 // loop_header_branch
        %684 = sbr.rel (%p682) target = $region434
      $region431: #{rnn_forward.1} parent=426 // loop_body
        %v688 = vld [vmem:[%s686] sm:%s679]
        %689 = vst [vmem:[%s687] sm:%s679] %v688
      $region432: #{rnn_forward.1} parent=426 // loop_footer
        %s685 = sadd.s32 1, %s681
      $region433: #{rnn_forward.1} parent=426 // loop_footer_branch
        %680 = sbr.rel target = $region429
      $region434: #{rnn_forward.1} parent=426 // loop_exit
        _
    $region427: #{rnn_forward.1} parent=1 // pred_fallthru
      _
    // Predicated region
    $region446: #{rnn_forward.1} parent=1 // pred_check
      _
    $region447: #{rnn_forward.1} parent=1 // pred_check_branch
      %713 = sbr.rel (0) target = $region449
    $region448: #{rnn_forward.1} parent=1 // pred_region
      %714 = vsyncadd %s279, 16
    $region449: #{rnn_forward.1} parent=1 // pred_fallthru
      _
    %s715 = sshll.u32 %s420, 4
    %716 = dma.done %s327, %s715
    %s717 = sld [smem:[#allocation4 + $0x31]]
    %s718 = scalar_lea.vmem %s1, %s717
    %s719 = scalar_lea.vmem [#allocation2], 14
    %p721 = scmp.lt.u32.totalorder 1, 8
    %p722 = pneg %p721
    // Predicated region
    $region450: #{rnn_forward.1} parent=1 // pred_check
      _
    $region451: #{rnn_forward.1} parent=1 // pred_check_branch
      %724 = sbr.rel (%p721) target = $region453
    $region452: #{rnn_forward.1} parent=1 // pred_region
      %s739 = sand.u32 1, 7
      %p740 = scmp.eq.s32.totalorder %s739, 0
      %p741 = pneg %p740
      // Predicated region
      $region465: #{rnn_forward.1} parent=452 // pred_check
        _
      $region466: #{rnn_forward.1} parent=452 // pred_check_branch
        %743 = sbr.rel (%p740) target = $region468
      $region467: #{rnn_forward.1} parent=452 // pred_region
        %s744 = sand.u32 1, 7
        %s745 = ssub.s32 1, %s744
        %s746 = scalar_lea.vmem %s718, %s745
        %s747 = ssub.s32 1, %s744
        %s748 = scalar_lea.vmem %s719, %s747 [#allocation2]
        %s749 = sshllo.u32 0, %s744
        loop: start=0, step=1, limit=1
        $region469: #{rnn_forward.1} parent=467 // loop_pre_header
          _
        $region470: #{rnn_forward.1} parent=467 // loop_header
          %s751 = sphi 0, %s755
          %p752 = scmp.ge.s32.totalorder %s751, 1
          %s756 = sphi %s746, %s746
          %s757 = sphi %s748, %s748
        $region471: #{rnn_forward.1} parent=467 // loop_header_branch
          %754 = sbr.rel (%p752) target = $region475
        $region472: #{rnn_forward.1} parent=467 // loop_body
          %v758 = vld [vmem:[%s756] sm:%s749]
          %759 = vst [vmem:[%s757] sm:%s749] %v758
        $region473: #{rnn_forward.1} parent=467 // loop_footer
          %s755 = sadd.s32 1, %s751
        $region474: #{rnn_forward.1} parent=467 // loop_footer_branch
          %750 = sbr.rel target = $region470
        $region475: #{rnn_forward.1} parent=467 // loop_exit
          _
      $region468: #{rnn_forward.1} parent=452 // pred_fallthru
        _
    $region453: #{rnn_forward.1} parent=1 // pred_fallthru
      _
    // Predicated region
    $region454: #{rnn_forward.1} parent=1 // pred_check
      %p725 = pneg %p721
    $region455: #{rnn_forward.1} parent=1 // pred_check_branch
      %727 = sbr.rel (%p725) target = $region457
    $region456: #{rnn_forward.1} parent=1 // pred_region
      %s728 = sshllo.u32 0, 1
      loop: start=0, step=1, limit=1
      $region458: #{rnn_forward.1} parent=456 // loop_pre_header
        _
      $region459: #{rnn_forward.1} parent=456 // loop_header
        %s730 = sphi 0, %s734
        %p731 = scmp.ge.s32.totalorder %s730, 1
        %s735 = sphi %s718, %s718
        %s736 = sphi %s719, %s719
      $region460: #{rnn_forward.1} parent=456 // loop_header_branch
        %733 = sbr.rel (%p731) target = $region464
      $region461: #{rnn_forward.1} parent=456 // loop_body
        %v737 = vld [vmem:[%s735] sm:%s728]
        %738 = vst [vmem:[%s736] sm:%s728] %v737
      $region462: #{rnn_forward.1} parent=456 // loop_footer
        %s734 = sadd.s32 1, %s730
      $region463: #{rnn_forward.1} parent=456 // loop_footer_branch
        %729 = sbr.rel target = $region459
      $region464: #{rnn_forward.1} parent=456 // loop_exit
        _
    $region457: #{rnn_forward.1} parent=1 // pred_fallthru
      _
    // Predicated region
    $region476: #{rnn_forward.1} parent=1 // pred_check
      _
    $region477: #{rnn_forward.1} parent=1 // pred_check_branch
      %762 = sbr.rel (0) target = $region479
    $region478: #{rnn_forward.1} parent=1 // pred_region
      %763 = vsyncadd %s327, 16
    $region479: #{rnn_forward.1} parent=1 // pred_fallthru
      _
    %s764 = sshll.u32 %s420, 4
    %765 = dma.done %s375, %s764
    %s766 = sld [smem:[#allocation4 + $0x39]]
    %s767 = scalar_lea.vmem %s1, %s766
    %s768 = scalar_lea.vmem [#allocation2], 15
    %p770 = scmp.lt.u32.totalorder 1, 8
    %p771 = pneg %p770
    // Predicated region
    $region480: #{rnn_forward.1} parent=1 // pred_check
      _
    $region481: #{rnn_forward.1} parent=1 // pred_check_branch
      %773 = sbr.rel (%p770) target = $region483
    $region482: #{rnn_forward.1} parent=1 // pred_region
      %s788 = sand.u32 1, 7
      %p789 = scmp.eq.s32.totalorder %s788, 0
      %p790 = pneg %p789
      // Predicated region
      $region495: #{rnn_forward.1} parent=482 // pred_check
        _
      $region496: #{rnn_forward.1} parent=482 // pred_check_branch
        %792 = sbr.rel (%p789) target = $region498
      $region497: #{rnn_forward.1} parent=482 // pred_region
        %s793 = sand.u32 1, 7
        %s794 = ssub.s32 1, %s793
        %s795 = scalar_lea.vmem %s767, %s794
        %s796 = ssub.s32 1, %s793
        %s797 = scalar_lea.vmem %s768, %s796 [#allocation2]
        %s798 = sshllo.u32 0, %s793
        loop: start=0, step=1, limit=1
        $region499: #{rnn_forward.1} parent=497 // loop_pre_header
          _
        $region500: #{rnn_forward.1} parent=497 // loop_header
          %s800 = sphi 0, %s804
          %p801 = scmp.ge.s32.totalorder %s800, 1
          %s805 = sphi %s795, %s795
          %s806 = sphi %s797, %s797
        $region501: #{rnn_forward.1} parent=497 // loop_header_branch
          %803 = sbr.rel (%p801) target = $region505
        $region502: #{rnn_forward.1} parent=497 // loop_body
          %v807 = vld [vmem:[%s805] sm:%s798]
          %808 = vst [vmem:[%s806] sm:%s798] %v807
        $region503: #{rnn_forward.1} parent=497 // loop_footer
          %s804 = sadd.s32 1, %s800
        $region504: #{rnn_forward.1} parent=497 // loop_footer_branch
          %799 = sbr.rel target = $region500
        $region505: #{rnn_forward.1} parent=497 // loop_exit
          _
      $region498: #{rnn_forward.1} parent=482 // pred_fallthru
        _
    $region483: #{rnn_forward.1} parent=1 // pred_fallthru
      _
    // Predicated region
    $region484: #{rnn_forward.1} parent=1 // pred_check
      %p774 = pneg %p770
    $region485: #{rnn_forward.1} parent=1 // pred_check_branch
      %776 = sbr.rel (%p774) target = $region487
    $region486: #{rnn_forward.1} parent=1 // pred_region
      %s777 = sshllo.u32 0, 1
      loop: start=0, step=1, limit=1
      $region488: #{rnn_forward.1} parent=486 // loop_pre_header
        _
      $region489: #{rnn_forward.1} parent=486 // loop_header
        %s779 = sphi 0, %s783
        %p780 = scmp.ge.s32.totalorder %s779, 1
        %s784 = sphi %s767, %s767
        %s785 = sphi %s768, %s768
      $region490: #{rnn_forward.1} parent=486 // loop_header_branch
        %782 = sbr.rel (%p780) target = $region494
      $region491: #{rnn_forward.1} parent=486 // loop_body
        %v786 = vld [vmem:[%s784] sm:%s777]
        %787 = vst [vmem:[%s785] sm:%s777] %v786
      $region492: #{rnn_forward.1} parent=486 // loop_footer
        %s783 = sadd.s32 1, %s779
      $region493: #{rnn_forward.1} parent=486 // loop_footer_branch
        %778 = sbr.rel target = $region489
      $region494: #{rnn_forward.1} parent=486 // loop_exit
        _
    $region487: #{rnn_forward.1} parent=1 // pred_fallthru
      _
    // Predicated region
    $region506: #{rnn_forward.1} parent=1 // pred_check
      _
    $region507: #{rnn_forward.1} parent=1 // pred_check_branch
      %811 = sbr.rel (0) target = $region509
    $region508: #{rnn_forward.1} parent=1 // pred_region
      %812 = vsyncadd %s375, 16
    $region509: #{rnn_forward.1} parent=1 // pred_fallthru
      _
    %s813 = sshll.u32 %s420, 4
    %814 = dma.done [#allocation3], %s813
    %s815 = sld [smem:[#allocation4 + $0x2]]
    %s816 = scalar_lea.vmem %s1, %s815
    %s817 = scalar_lea.vmem [#allocation2], 16
    %p819 = scmp.lt.u32.totalorder 1, 8
    %p820 = pneg %p819
    // Predicated region
    $region510: #{rnn_forward.1} parent=1 // pred_check
      _
    $region511: #{rnn_forward.1} parent=1 // pred_check_branch
      %822 = sbr.rel (%p819) target = $region513
    $region512: #{rnn_forward.1} parent=1 // pred_region
      %s837 = sand.u32 1, 7
      %p838 = scmp.eq.s32.totalorder %s837, 0
      %p839 = pneg %p838
      // Predicated region
      $region525: #{rnn_forward.1} parent=512 // pred_check
        _
      $region526: #{rnn_forward.1} parent=512 // pred_check_branch
        %841 = sbr.rel (%p838) target = $region528
      $region527: #{rnn_forward.1} parent=512 // pred_region
        %s842 = sand.u32 1, 7
        %s843 = ssub.s32 1, %s842
        %s844 = scalar_lea.vmem %s816, %s843
        %s845 = ssub.s32 1, %s842
        %s846 = scalar_lea.vmem %s817, %s845 [#allocation2]
        %s847 = sshllo.u32 0, %s842
        loop: start=0, step=1, limit=1
        $region529: #{rnn_forward.1} parent=527 // loop_pre_header
          _
        $region530: #{rnn_forward.1} parent=527 // loop_header
          %s849 = sphi 0, %s853
          %p850 = scmp.ge.s32.totalorder %s849, 1
          %s854 = sphi %s844, %s844
          %s855 = sphi %s846, %s846
        $region531: #{rnn_forward.1} parent=527 // loop_header_branch
          %852 = sbr.rel (%p850) target = $region535
        $region532: #{rnn_forward.1} parent=527 // loop_body
          %v856 = vld [vmem:[%s854] sm:%s847]
          %857 = vst [vmem:[%s855] sm:%s847] %v856
        $region533: #{rnn_forward.1} parent=527 // loop_footer
          %s853 = sadd.s32 1, %s849
        $region534: #{rnn_forward.1} parent=527 // loop_footer_branch
          %848 = sbr.rel target = $region530
        $region535: #{rnn_forward.1} parent=527 // loop_exit
          _
      $region528: #{rnn_forward.1} parent=512 // pred_fallthru
        _
    $region513: #{rnn_forward.1} parent=1 // pred_fallthru
      _
    // Predicated region
    $region514: #{rnn_forward.1} parent=1 // pred_check
      %p823 = pneg %p819
    $region515: #{rnn_forward.1} parent=1 // pred_check_branch
      %825 = sbr.rel (%p823) target = $region517
    $region516: #{rnn_forward.1} parent=1 // pred_region
      %s826 = sshllo.u32 0, 1
      loop: start=0, step=1, limit=1
      $region518: #{rnn_forward.1} parent=516 // loop_pre_header
        _
      $region519: #{rnn_forward.1} parent=516 // loop_header
        %s828 = sphi 0, %s832
        %p829 = scmp.ge.s32.totalorder %s828, 1
        %s833 = sphi %s816, %s816
        %s834 = sphi %s817, %s817
      $region520: #{rnn_forward.1} parent=516 // loop_header_branch
        %831 = sbr.rel (%p829) target = $region524
      $region521: #{rnn_forward.1} parent=516 // loop_body
        %v835 = vld [vmem:[%s833] sm:%s826]
        %836 = vst [vmem:[%s834] sm:%s826] %v835
      $region522: #{rnn_forward.1} parent=516 // loop_footer
        %s832 = sadd.s32 1, %s828
      $region523: #{rnn_forward.1} parent=516 // loop_footer_branch
        %827 = sbr.rel target = $region519
      $region524: #{rnn_forward.1} parent=516 // loop_exit
        _
    $region517: #{rnn_forward.1} parent=1 // pred_fallthru
      _
    // Predicated region
    $region536: #{rnn_forward.1} parent=1 // pred_check
      _
    $region537: #{rnn_forward.1} parent=1 // pred_check_branch
      %860 = sbr.rel (0) target = $region539
    $region538: #{rnn_forward.1} parent=1 // pred_region
      %861 = vsyncadd [#allocation3], 16
    $region539: #{rnn_forward.1} parent=1 // pred_fallthru
      _
    %s862 = sshll.u32 %s420, 4
    %863 = dma.done %s87, %s862
    %s864 = sld [smem:[#allocation4 + $0xa]]
    %s865 = scalar_lea.vmem %s1, %s864
    %s866 = scalar_lea.vmem [#allocation2], 17
    %p868 = scmp.lt.u32.totalorder 1, 8
    %p869 = pneg %p868
    // Predicated region
    $region540: #{rnn_forward.1} parent=1 // pred_check
      _
    $region541: #{rnn_forward.1} parent=1 // pred_check_branch
      %871 = sbr.rel (%p868) target = $region543
    $region542: #{rnn_forward.1} parent=1 // pred_region
      %s886 = sand.u32 1, 7
      %p887 = scmp.eq.s32.totalorder %s886, 0
      %p888 = pneg %p887
      // Predicated region
      $region555: #{rnn_forward.1} parent=542 // pred_check
        _
      $region556: #{rnn_forward.1} parent=542 // pred_check_branch
        %890 = sbr.rel (%p887) target = $region558
      $region557: #{rnn_forward.1} parent=542 // pred_region
        %s891 = sand.u32 1, 7
        %s892 = ssub.s32 1, %s891
        %s893 = scalar_lea.vmem %s865, %s892
        %s894 = ssub.s32 1, %s891
        %s895 = scalar_lea.vmem %s866, %s894 [#allocation2]
        %s896 = sshllo.u32 0, %s891
        loop: start=0, step=1, limit=1
        $region559: #{rnn_forward.1} parent=557 // loop_pre_header
          _
        $region560: #{rnn_forward.1} parent=557 // loop_header
          %s898 = sphi 0, %s902
          %p899 = scmp.ge.s32.totalorder %s898, 1
          %s903 = sphi %s893, %s893
          %s904 = sphi %s895, %s895
        $region561: #{rnn_forward.1} parent=557 // loop_header_branch
          %901 = sbr.rel (%p899) target = $region565
        $region562: #{rnn_forward.1} parent=557 // loop_body
          %v905 = vld [vmem:[%s903] sm:%s896]
          %906 = vst [vmem:[%s904] sm:%s896] %v905
        $region563: #{rnn_forward.1} parent=557 // loop_footer
          %s902 = sadd.s32 1, %s898
        $region564: #{rnn_forward.1} parent=557 // loop_footer_branch
          %897 = sbr.rel target = $region560
        $region565: #{rnn_forward.1} parent=557 // loop_exit
          _
      $region558: #{rnn_forward.1} parent=542 // pred_fallthru
        _
    $region543: #{rnn_forward.1} parent=1 // pred_fallthru
      _
    // Predicated region
    $region544: #{rnn_forward.1} parent=1 // pred_check
      %p872 = pneg %p868
    $region545: #{rnn_forward.1} parent=1 // pred_check_branch
      %874 = sbr.rel (%p872) target = $region547
    $region546: #{rnn_forward.1} parent=1 // pred_region
      %s875 = sshllo.u32 0, 1
      loop: start=0, step=1, limit=1
      $region548: #{rnn_forward.1} parent=546 // loop_pre_header
        _
      $region549: #{rnn_forward.1} parent=546 // loop_header
        %s877 = sphi 0, %s881
        %p878 = scmp.ge.s32.totalorder %s877, 1
        %s882 = sphi %s865, %s865
        %s883 = sphi %s866, %s866
      $region550: #{rnn_forward.1} parent=546 // loop_header_branch
        %880 = sbr.rel (%p878) target = $region554
      $region551: #{rnn_forward.1} parent=546 // loop_body
        %v884 = vld [vmem:[%s882] sm:%s875]
        %885 = vst [vmem:[%s883] sm:%s875] %v884
      $region552: #{rnn_forward.1} parent=546 // loop_footer
        %s881 = sadd.s32 1, %s877
      $region553: #{rnn_forward.1} parent=546 // loop_footer_branch
        %876 = sbr.rel target = $region549
      $region554: #{rnn_forward.1} parent=546 // loop_exit
        _
    $region547: #{rnn_forward.1} parent=1 // pred_fallthru
      _
    // Predicated region
    $region566: #{rnn_forward.1} parent=1 // pred_check
      _
    $region567: #{rnn_forward.1} parent=1 // pred_check_branch
      %909 = sbr.rel (0) target = $region569
    $region568: #{rnn_forward.1} parent=1 // pred_region
      %910 = vsyncadd %s87, 16
    $region569: #{rnn_forward.1} parent=1 // pred_fallthru
      _
    %s911 = sshll.u32 %s420, 4
    %912 = dma.done %s135, %s911
    %s913 = sld [smem:[#allocation4 + $0x12]]
    %s914 = scalar_lea.vmem %s1, %s913
    %s915 = scalar_lea.vmem [#allocation2], 18
    %p917 = scmp.lt.u32.totalorder 1, 8
    %p918 = pneg %p917
    // Predicated region
    $region570: #{rnn_forward.1} parent=1 // pred_check
      _
    $region571: #{rnn_forward.1} parent=1 // pred_check_branch
      %920 = sbr.rel (%p917) target = $region573
    $region572: #{rnn_forward.1} parent=1 // pred_region
      %s935 = sand.u32 1, 7
      %p936 = scmp.eq.s32.totalorder %s935, 0
      %p937 = pneg %p936
      // Predicated region
      $region585: #{rnn_forward.1} parent=572 // pred_check
        _
      $region586: #{rnn_forward.1} parent=572 // pred_check_branch
        %939 = sbr.rel (%p936) target = $region588
      $region587: #{rnn_forward.1} parent=572 // pred_region
        %s940 = sand.u32 1, 7
        %s941 = ssub.s32 1, %s940
        %s942 = scalar_lea.vmem %s914, %s941
        %s943 = ssub.s32 1, %s940
        %s944 = scalar_lea.vmem %s915, %s943 [#allocation2]
        %s945 = sshllo.u32 0, %s940
        loop: start=0, step=1, limit=1
        $region589: #{rnn_forward.1} parent=587 // loop_pre_header
          _
        $region590: #{rnn_forward.1} parent=587 // loop_header
          %s947 = sphi 0, %s951
          %p948 = scmp.ge.s32.totalorder %s947, 1
          %s952 = sphi %s942, %s942
          %s953 = sphi %s944, %s944
        $region591: #{rnn_forward.1} parent=587 // loop_header_branch
          %950 = sbr.rel (%p948) target = $region595
        $region592: #{rnn_forward.1} parent=587 // loop_body
          %v954 = vld [vmem:[%s952] sm:%s945]
          %955 = vst [vmem:[%s953] sm:%s945] %v954
        $region593: #{rnn_forward.1} parent=587 // loop_footer
          %s951 = sadd.s32 1, %s947
        $region594: #{rnn_forward.1} parent=587 // loop_footer_branch
          %946 = sbr.rel target = $region590
        $region595: #{rnn_forward.1} parent=587 // loop_exit
          _
      $region588: #{rnn_forward.1} parent=572 // pred_fallthru
        _
    $region573: #{rnn_forward.1} parent=1 // pred_fallthru
      _
    // Predicated region
    $region574: #{rnn_forward.1} parent=1 // pred_check
      %p921 = pneg %p917
    $region575: #{rnn_forward.1} parent=1 // pred_check_branch
      %923 = sbr.rel (%p921) target = $region577
    $region576: #{rnn_forward.1} parent=1 // pred_region
      %s924 = sshllo.u32 0, 1
      loop: start=0, step=1, limit=1
      $region578: #{rnn_forward.1} parent=576 // loop_pre_header
        _
      $region579: #{rnn_forward.1} parent=576 // loop_header
        %s926 = sphi 0, %s930
        %p927 = scmp.ge.s32.totalorder %s926, 1
        %s931 = sphi %s914, %s914
        %s932 = sphi %s915, %s915
      $region580: #{rnn_forward.1} parent=576 // loop_header_branch
        %929 = sbr.rel (%p927) target = $region584
      $region581: #{rnn_forward.1} parent=576 // loop_body
        %v933 = vld [vmem:[%s931] sm:%s924]
        %934 = vst [vmem:[%s932] sm:%s924] %v933
      $region582: #{rnn_forward.1} parent=576 // loop_footer
        %s930 = sadd.s32 1, %s926
      $region583: #{rnn_forward.1} parent=576 // loop_footer_branch
        %925 = sbr.rel target = $region579
      $region584: #{rnn_forward.1} parent=576 // loop_exit
        _
    $region577: #{rnn_forward.1} parent=1 // pred_fallthru
      _
    // Predicated region
    $region596: #{rnn_forward.1} parent=1 // pred_check
      _
    $region597: #{rnn_forward.1} parent=1 // pred_check_branch
      %958 = sbr.rel (0) target = $region599
    $region598: #{rnn_forward.1} parent=1 // pred_region
      %959 = vsyncadd %s135, 16
    $region599: #{rnn_forward.1} parent=1 // pred_fallthru
      _
    %s960 = sshll.u32 %s420, 4
    %961 = dma.done %s183, %s960
    %s962 = sld [smem:[#allocation4 + $0x1a]]
    %s963 = scalar_lea.vmem %s1, %s962
    %s964 = scalar_lea.vmem [#allocation2], 19
    %p966 = scmp.lt.u32.totalorder 1, 8
    %p967 = pneg %p966
    // Predicated region
    $region600: #{rnn_forward.1} parent=1 // pred_check
      _
    $region601: #{rnn_forward.1} parent=1 // pred_check_branch
      %969 = sbr.rel (%p966) target = $region603
    $region602: #{rnn_forward.1} parent=1 // pred_region
      %s984 = sand.u32 1, 7
      %p985 = scmp.eq.s32.totalorder %s984, 0
      %p986 = pneg %p985
      // Predicated region
      $region615: #{rnn_forward.1} parent=602 // pred_check
        _
      $region616: #{rnn_forward.1} parent=602 // pred_check_branch
        %988 = sbr.rel (%p985) target = $region618
      $region617: #{rnn_forward.1} parent=602 // pred_region
        %s989 = sand.u32 1, 7
        %s990 = ssub.s32 1, %s989
        %s991 = scalar_lea.vmem %s963, %s990
        %s992 = ssub.s32 1, %s989
        %s993 = scalar_lea.vmem %s964, %s992 [#allocation2]
        %s994 = sshllo.u32 0, %s989
        loop: start=0, step=1, limit=1
        $region619: #{rnn_forward.1} parent=617 // loop_pre_header
          _
        $region620: #{rnn_forward.1} parent=617 // loop_header
          %s996 = sphi 0, %s1000
          %p997 = scmp.ge.s32.totalorder %s996, 1
          %s1001 = sphi %s991, %s991
          %s1002 = sphi %s993, %s993
        $region621: #{rnn_forward.1} parent=617 // loop_header_branch
          %999 = sbr.rel (%p997) target = $region625
        $region622: #{rnn_forward.1} parent=617 // loop_body
          %v1003 = vld [vmem:[%s1001] sm:%s994]
          %1004 = vst [vmem:[%s1002] sm:%s994] %v1003
        $region623: #{rnn_forward.1} parent=617 // loop_footer
          %s1000 = sadd.s32 1, %s996
        $region624: #{rnn_forward.1} parent=617 // loop_footer_branch
          %995 = sbr.rel target = $region620
        $region625: #{rnn_forward.1} parent=617 // loop_exit
          _
      $region618: #{rnn_forward.1} parent=602 // pred_fallthru
        _
    $region603: #{rnn_forward.1} parent=1 // pred_fallthru
      _
    // Predicated region
    $region604: #{rnn_forward.1} parent=1 // pred_check
      %p970 = pneg %p966
    $region605: #{rnn_forward.1} parent=1 // pred_check_branch
      %972 = sbr.rel (%p970) target = $region607
    $region606: #{rnn_forward.1} parent=1 // pred_region
      %s973 = sshllo.u32 0, 1
      loop: start=0, step=1, limit=1
      $region608: #{rnn_forward.1} parent=606 // loop_pre_header
        _
      $region609: #{rnn_forward.1} parent=606 // loop_header
        %s975 = sphi 0, %s979
        %p976 = scmp.ge.s32.totalorder %s975, 1
        %s980 = sphi %s963, %s963
        %s981 = sphi %s964, %s964
      $region610: #{rnn_forward.1} parent=606 // loop_header_branch
        %978 = sbr.rel (%p976) target = $region614
      $region611: #{rnn_forward.1} parent=606 // loop_body
        %v982 = vld [vmem:[%s980] sm:%s973]
        %983 = vst [vmem:[%s981] sm:%s973] %v982
      $region612: #{rnn_forward.1} parent=606 // loop_footer
        %s979 = sadd.s32 1, %s975
      $region613: #{rnn_forward.1} parent=606 // loop_footer_branch
        %974 = sbr.rel target = $region609
      $region614: #{rnn_forward.1} parent=606 // loop_exit
        _
    $region607: #{rnn_forward.1} parent=1 // pred_fallthru
      _
    // Predicated region
    $region626: #{rnn_forward.1} parent=1 // pred_check
      _
    $region627: #{rnn_forward.1} parent=1 // pred_check_branch
      %1007 = sbr.rel (0) target = $region629
    $region628: #{rnn_forward.1} parent=1 // pred_region
      %1008 = vsyncadd %s183, 16
    $region629: #{rnn_forward.1} parent=1 // pred_fallthru
      _
    %s1009 = sshll.u32 %s420, 4
    %1010 = dma.done %s231, %s1009
    %s1011 = sld [smem:[#allocation4 + $0x22]]
    %s1012 = scalar_lea.vmem %s1, %s1011
    %s1013 = scalar_lea.vmem [#allocation2], 20
    %p1015 = scmp.lt.u32.totalorder 1, 8
    %p1016 = pneg %p1015
    // Predicated region
    $region630: #{rnn_forward.1} parent=1 // pred_check
      _
    $region631: #{rnn_forward.1} parent=1 // pred_check_branch
      %1018 = sbr.rel (%p1015) target = $region633
    $region632: #{rnn_forward.1} parent=1 // pred_region
      %s1033 = sand.u32 1, 7
      %p1034 = scmp.eq.s32.totalorder %s1033, 0
      %p1035 = pneg %p1034
      // Predicated region
      $region645: #{rnn_forward.1} parent=632 // pred_check
        _
      $region646: #{rnn_forward.1} parent=632 // pred_check_branch
        %1037 = sbr.rel (%p1034) target = $region648
      $region647: #{rnn_forward.1} parent=632 // pred_region
        %s1038 = sand.u32 1, 7
        %s1039 = ssub.s32 1, %s1038
        %s1040 = scalar_lea.vmem %s1012, %s1039
        %s1041 = ssub.s32 1, %s1038
        %s1042 = scalar_lea.vmem %s1013, %s1041 [#allocation2]
        %s1043 = sshllo.u32 0, %s1038
        loop: start=0, step=1, limit=1
        $region649: #{rnn_forward.1} parent=647 // loop_pre_header
          _
        $region650: #{rnn_forward.1} parent=647 // loop_header
          %s1045 = sphi 0, %s1049
          %p1046 = scmp.ge.s32.totalorder %s1045, 1
          %s1050 = sphi %s1040, %s1040
          %s1051 = sphi %s1042, %s1042
        $region651: #{rnn_forward.1} parent=647 // loop_header_branch
          %1048 = sbr.rel (%p1046) target = $region655
        $region652: #{rnn_forward.1} parent=647 // loop_body
          %v1052 = vld [vmem:[%s1050] sm:%s1043]
          %1053 = vst [vmem:[%s1051] sm:%s1043] %v1052
        $region653: #{rnn_forward.1} parent=647 // loop_footer
          %s1049 = sadd.s32 1, %s1045
        $region654: #{rnn_forward.1} parent=647 // loop_footer_branch
          %1044 = sbr.rel target = $region650
        $region655: #{rnn_forward.1} parent=647 // loop_exit
          _
      $region648: #{rnn_forward.1} parent=632 // pred_fallthru
        _
    $region633: #{rnn_forward.1} parent=1 // pred_fallthru
      _
    // Predicated region
    $region634: #{rnn_forward.1} parent=1 // pred_check
      %p1019 = pneg %p1015
    $region635: #{rnn_forward.1} parent=1 // pred_check_branch
      %1021 = sbr.rel (%p1019) target = $region637
    $region636: #{rnn_forward.1} parent=1 // pred_region
      %s1022 = sshllo.u32 0, 1
      loop: start=0, step=1, limit=1
      $region638: #{rnn_forward.1} parent=636 // loop_pre_header
        _
      $region639: #{rnn_forward.1} parent=636 // loop_header
        %s1024 = sphi 0, %s1028
        %p1025 = scmp.ge.s32.totalorder %s1024, 1
        %s1029 = sphi %s1012, %s1012
        %s1030 = sphi %s1013, %s1013
      $region640: #{rnn_forward.1} parent=636 // loop_header_branch
        %1027 = sbr.rel (%p1025) target = $region644
      $region641: #{rnn_forward.1} parent=636 // loop_body
        %v1031 = vld [vmem:[%s1029] sm:%s1022]
        %1032 = vst [vmem:[%s1030] sm:%s1022] %v1031
      $region642: #{rnn_forward.1} parent=636 // loop_footer
        %s1028 = sadd.s32 1, %s1024
      $region643: #{rnn_forward.1} parent=636 // loop_footer_branch
        %1023 = sbr.rel target = $region639
      $region644: #{rnn_forward.1} parent=636 // loop_exit
        _
    $region637: #{rnn_forward.1} parent=1 // pred_fallthru
      _
    // Predicated region
    $region656: #{rnn_forward.1} parent=1 // pred_check
      _
    $region657: #{rnn_forward.1} parent=1 // pred_check_branch
      %1056 = sbr.rel (0) target = $region659
    $region658: #{rnn_forward.1} parent=1 // pred_region
      %1057 = vsyncadd %s231, 16
    $region659: #{rnn_forward.1} parent=1 // pred_fallthru
      _
    %s1058 = sshll.u32 %s420, 4
    %1059 = dma.done %s279, %s1058
    %s1060 = sld [smem:[#allocation4 + $0x2a]]
    %s1061 = scalar_lea.vmem %s1, %s1060
    %s1062 = scalar_lea.vmem [#allocation2], 21
    %p1064 = scmp.lt.u32.totalorder 1, 8
    %p1065 = pneg %p1064
    // Predicated region
    $region660: #{rnn_forward.1} parent=1 // pred_check
      _
    $region661: #{rnn_forward.1} parent=1 // pred_check_branch
      %1067 = sbr.rel (%p1064) target = $region663
    $region662: #{rnn_forward.1} parent=1 // pred_region
      %s1082 = sand.u32 1, 7
      %p1083 = scmp.eq.s32.totalorder %s1082, 0
      %p1084 = pneg %p1083
      // Predicated region
      $region675: #{rnn_forward.1} parent=662 // pred_check
        _
      $region676: #{rnn_forward.1} parent=662 // pred_check_branch
        %1086 = sbr.rel (%p1083) target = $region678
      $region677: #{rnn_forward.1} parent=662 // pred_region
        %s1087 = sand.u32 1, 7
        %s1088 = ssub.s32 1, %s1087
        %s1089 = scalar_lea.vmem %s1061, %s1088
        %s1090 = ssub.s32 1, %s1087
        %s1091 = scalar_lea.vmem %s1062, %s1090 [#allocation2]
        %s1092 = sshllo.u32 0, %s1087
        loop: start=0, step=1, limit=1
        $region679: #{rnn_forward.1} parent=677 // loop_pre_header
          _
        $region680: #{rnn_forward.1} parent=677 // loop_header
          %s1094 = sphi 0, %s1098
          %p1095 = scmp.ge.s32.totalorder %s1094, 1
          %s1099 = sphi %s1089, %s1089
          %s1100 = sphi %s1091, %s1091
        $region681: #{rnn_forward.1} parent=677 // loop_header_branch
          %1097 = sbr.rel (%p1095) target = $region685
        $region682: #{rnn_forward.1} parent=677 // loop_body
          %v1101 = vld [vmem:[%s1099] sm:%s1092]
          %1102 = vst [vmem:[%s1100] sm:%s1092] %v1101
        $region683: #{rnn_forward.1} parent=677 // loop_footer
          %s1098 = sadd.s32 1, %s1094
        $region684: #{rnn_forward.1} parent=677 // loop_footer_branch
          %1093 = sbr.rel target = $region680
        $region685: #{rnn_forward.1} parent=677 // loop_exit
          _
      $region678: #{rnn_forward.1} parent=662 // pred_fallthru
        _
    $region663: #{rnn_forward.1} parent=1 // pred_fallthru
      _
    // Predicated region
    $region664: #{rnn_forward.1} parent=1 // pred_check
      %p1068 = pneg %p1064
    $region665: #{rnn_forward.1} parent=1 // pred_check_branch
      %1070 = sbr.rel (%p1068) target = $region667
    $region666: #{rnn_forward.1} parent=1 // pred_region
      %s1071 = sshllo.u32 0, 1
      loop: start=0, step=1, limit=1
      $region668: #{rnn_forward.1} parent=666 // loop_pre_header
        _
      $region669: #{rnn_forward.1} parent=666 // loop_header
        %s1073 = sphi 0, %s1077
        %p1074 = scmp.ge.s32.totalorder %s1073, 1
        %s1078 = sphi %s1061, %s1061
        %s1079 = sphi %s1062, %s1062
      $region670: #{rnn_forward.1} parent=666 // loop_header_branch
        %1076 = sbr.rel (%p1074) target = $region674
      $region671: #{rnn_forward.1} parent=666 // loop_body
        %v1080 = vld [vmem:[%s1078] sm:%s1071]
        %1081 = vst [vmem:[%s1079] sm:%s1071] %v1080
      $region672: #{rnn_forward.1} parent=666 // loop_footer
        %s1077 = sadd.s32 1, %s1073
      $region673: #{rnn_forward.1} parent=666 // loop_footer_branch
        %1072 = sbr.rel target = $region669
      $region674: #{rnn_forward.1} parent=666 // loop_exit
        _
    $region667: #{rnn_forward.1} parent=1 // pred_fallthru
      _
    // Predicated region
    $region686: #{rnn_forward.1} parent=1 // pred_check
      _
    $region687: #{rnn_forward.1} parent=1 // pred_check_branch
      %1105 = sbr.rel (0) target = $region689
    $region688: #{rnn_forward.1} parent=1 // pred_region
      %1106 = vsyncadd %s279, 16
    $region689: #{rnn_forward.1} parent=1 // pred_fallthru
      _
    %s1107 = sshll.u32 %s420, 4
    %1108 = dma.done %s327, %s1107
    %s1109 = sld [smem:[#allocation4 + $0x32]]
    %s1110 = scalar_lea.vmem %s1, %s1109
    %s1111 = scalar_lea.vmem [#allocation2], 22
    %p1113 = scmp.lt.u32.totalorder 1, 8
    %p1114 = pneg %p1113
    // Predicated region
    $region690: #{rnn_forward.1} parent=1 // pred_check
      _
    $region691: #{rnn_forward.1} parent=1 // pred_check_branch
      %1116 = sbr.rel (%p1113) target = $region693
    $region692: #{rnn_forward.1} parent=1 // pred_region
      %s1131 = sand.u32 1, 7
      %p1132 = scmp.eq.s32.totalorder %s1131, 0
      %p1133 = pneg %p1132
      // Predicated region
      $region705: #{rnn_forward.1} parent=692 // pred_check
        _
      $region706: #{rnn_forward.1} parent=692 // pred_check_branch
        %1135 = sbr.rel (%p1132) target = $region708
      $region707: #{rnn_forward.1} parent=692 // pred_region
        %s1136 = sand.u32 1, 7
        %s1137 = ssub.s32 1, %s1136
        %s1138 = scalar_lea.vmem %s1110, %s1137
        %s1139 = ssub.s32 1, %s1136
        %s1140 = scalar_lea.vmem %s1111, %s1139 [#allocation2]
        %s1141 = sshllo.u32 0, %s1136
        loop: start=0, step=1, limit=1
        $region709: #{rnn_forward.1} parent=707 // loop_pre_header
          _
        $region710: #{rnn_forward.1} parent=707 // loop_header
          %s1143 = sphi 0, %s1147
          %p1144 = scmp.ge.s32.totalorder %s1143, 1
          %s1148 = sphi %s1138, %s1138
          %s1149 = sphi %s1140, %s1140
        $region711: #{rnn_forward.1} parent=707 // loop_header_branch
          %1146 = sbr.rel (%p1144) target = $region715
        $region712: #{rnn_forward.1} parent=707 // loop_body
          %v1150 = vld [vmem:[%s1148] sm:%s1141]
          %1151 = vst [vmem:[%s1149] sm:%s1141] %v1150
        $region713: #{rnn_forward.1} parent=707 // loop_footer
          %s1147 = sadd.s32 1, %s1143
        $region714: #{rnn_forward.1} parent=707 // loop_footer_branch
          %1142 = sbr.rel target = $region710
        $region715: #{rnn_forward.1} parent=707 // loop_exit
          _
      $region708: #{rnn_forward.1} parent=692 // pred_fallthru
        _
    $region693: #{rnn_forward.1} parent=1 // pred_fallthru
      _
    // Predicated region
    $region694: #{rnn_forward.1} parent=1 // pred_check
      %p1117 = pneg %p1113
    $region695: #{rnn_forward.1} parent=1 // pred_check_branch
      %1119 = sbr.rel (%p1117) target = $region697
    $region696: #{rnn_forward.1} parent=1 // pred_region
      %s1120 = sshllo.u32 0, 1
      loop: start=0, step=1, limit=1
      $region698: #{rnn_forward.1} parent=696 // loop_pre_header
        _
      $region699: #{rnn_forward.1} parent=696 // loop_header
        %s1122 = sphi 0, %s1126
        %p1123 = scmp.ge.s32.totalorder %s1122, 1
        %s1127 = sphi %s1110, %s1110
        %s1128 = sphi %s1111, %s1111
      $region700: #{rnn_forward.1} parent=696 // loop_header_branch
        %1125 = sbr.rel (%p1123) target = $region704
      $region701: #{rnn_forward.1} parent=696 // loop_body
        %v1129 = vld [vmem:[%s1127] sm:%s1120]
        %1130 = vst [vmem:[%s1128] sm:%s1120] %v1129
      $region702: #{rnn_forward.1} parent=696 // loop_footer
        %s1126 = sadd.s32 1, %s1122
      $region703: #{rnn_forward.1} parent=696 // loop_footer_branch
        %1121 = sbr.rel target = $region699
      $region704: #{rnn_forward.1} parent=696 // loop_exit
        _
    $region697: #{rnn_forward.1} parent=1 // pred_fallthru
      _
    // Predicated region
    $region716: #{rnn_forward.1} parent=1 // pred_check
      _
    $region717: #{rnn_forward.1} parent=1 // pred_check_branch
      %1154 = sbr.rel (0) target = $region719
    $region718: #{rnn_forward.1} parent=1 // pred_region
      %1155 = vsyncadd %s327, 16
    $region719: #{rnn_forward.1} parent=1 // pred_fallthru
      _
    %s1156 = sshll.u32 %s420, 4
    %1157 = dma.done %s375, %s1156
    %s1158 = sld [smem:[#allocation4 + $0x3a]]
    %s1159 = scalar_lea.vmem %s1, %s1158
    %s1160 = scalar_lea.vmem [#allocation2], 23
    %p1162 = scmp.lt.u32.totalorder 1, 8
    %p1163 = pneg %p1162
    // Predicated region
    $region720: #{rnn_forward.1} parent=1 // pred_check
      _
    $region721: #{rnn_forward.1} parent=1 // pred_check_branch
      %1165 = sbr.rel (%p1162) target = $region723
    $region722: #{rnn_forward.1} parent=1 // pred_region
      %s1180 = sand.u32 1, 7
      %p1181 = scmp.eq.s32.totalorder %s1180, 0
      %p1182 = pneg %p1181
      // Predicated region
      $region735: #{rnn_forward.1} parent=722 // pred_check
        _
      $region736: #{rnn_forward.1} parent=722 // pred_check_branch
        %1184 = sbr.rel (%p1181) target = $region738
      $region737: #{rnn_forward.1} parent=722 // pred_region
        %s1185 = sand.u32 1, 7
        %s1186 = ssub.s32 1, %s1185
        %s1187 = scalar_lea.vmem %s1159, %s1186
        %s1188 = ssub.s32 1, %s1185
        %s1189 = scalar_lea.vmem %s1160, %s1188 [#allocation2]
        %s1190 = sshllo.u32 0, %s1185
        loop: start=0, step=1, limit=1
        $region739: #{rnn_forward.1} parent=737 // loop_pre_header
          _
        $region740: #{rnn_forward.1} parent=737 // loop_header
          %s1192 = sphi 0, %s1196
          %p1193 = scmp.ge.s32.totalorder %s1192, 1
          %s1197 = sphi %s1187, %s1187
          %s1198 = sphi %s1189, %s1189
        $region741: #{rnn_forward.1} parent=737 // loop_header_branch
          %1195 = sbr.rel (%p1193) target = $region745
        $region742: #{rnn_forward.1} parent=737 // loop_body
          %v1199 = vld [vmem:[%s1197] sm:%s1190]
          %1200 = vst [vmem:[%s1198] sm:%s1190] %v1199
        $region743: #{rnn_forward.1} parent=737 // loop_footer
          %s1196 = sadd.s32 1, %s1192
        $region744: #{rnn_forward.1} parent=737 // loop_footer_branch
          %1191 = sbr.rel target = $region740
        $region745: #{rnn_forward.1} parent=737 // loop_exit
          _
      $region738: #{rnn_forward.1} parent=722 // pred_fallthru
        _
    $region723: #{rnn_forward.1} parent=1 // pred_fallthru
      _
    // Predicated region
    $region724: #{rnn_forward.1} parent=1 // pred_check
      %p1166 = pneg %p1162
    $region725: #{rnn_forward.1} parent=1 // pred_check_branch
      %1168 = sbr.rel (%p1166) target = $region727
    $region726: #{rnn_forward.1} parent=1 // pred_region
      %s1169 = sshllo.u32 0, 1
      loop: start=0, step=1, limit=1
      $region728: #{rnn_forward.1} parent=726 // loop_pre_header
        _
      $region729: #{rnn_forward.1} parent=726 // loop_header
        %s1171 = sphi 0, %s1175
        %p1172 = scmp.ge.s32.totalorder %s1171, 1
        %s1176 = sphi %s1159, %s1159
        %s1177 = sphi %s1160, %s1160
      $region730: #{rnn_forward.1} parent=726 // loop_header_branch
        %1174 = sbr.rel (%p1172) target = $region734
      $region731: #{rnn_forward.1} parent=726 // loop_body
        %v1178 = vld [vmem:[%s1176] sm:%s1169]
        %1179 = vst [vmem:[%s1177] sm:%s1169] %v1178
      $region732: #{rnn_forward.1} parent=726 // loop_footer
        %s1175 = sadd.s32 1, %s1171
      $region733: #{rnn_forward.1} parent=726 // loop_footer_branch
        %1170 = sbr.rel target = $region729
      $region734: #{rnn_forward.1} parent=726 // loop_exit
        _
    $region727: #{rnn_forward.1} parent=1 // pred_fallthru
      _
    // Predicated region
    $region746: #{rnn_forward.1} parent=1 // pred_check
      _
    $region747: #{rnn_forward.1} parent=1 // pred_check_branch
      %1203 = sbr.rel (0) target = $region749
    $region748: #{rnn_forward.1} parent=1 // pred_region
      %1204 = vsyncadd %s375, 16
    $region749: #{rnn_forward.1} parent=1 // pred_fallthru
      _
    %s1205 = sshll.u32 %s420, 4
    %1206 = dma.done [#allocation3], %s1205
    %s1207 = sld [smem:[#allocation4 + $0x3]]
    %s1208 = scalar_lea.vmem %s1, %s1207
    %s1209 = scalar_lea.vmem [#allocation2], 24
    %p1211 = scmp.lt.u32.totalorder 1, 8
    %p1212 = pneg %p1211
    // Predicated region
    $region750: #{rnn_forward.1} parent=1 // pred_check
      _
    $region751: #{rnn_forward.1} parent=1 // pred_check_branch
      %1214 = sbr.rel (%p1211) target = $region753
    $region752: #{rnn_forward.1} parent=1 // pred_region
      %s1229 = sand.u32 1, 7
      %p1230 = scmp.eq.s32.totalorder %s1229, 0
      %p1231 = pneg %p1230
      // Predicated region
      $region765: #{rnn_forward.1} parent=752 // pred_check
        _
      $region766: #{rnn_forward.1} parent=752 // pred_check_branch
        %1233 = sbr.rel (%p1230) target = $region768
      $region767: #{rnn_forward.1} parent=752 // pred_region
        %s1234 = sand.u32 1, 7
        %s1235 = ssub.s32 1, %s1234
        %s1236 = scalar_lea.vmem %s1208, %s1235
        %s1237 = ssub.s32 1, %s1234
        %s1238 = scalar_lea.vmem %s1209, %s1237 [#allocation2]
        %s1239 = sshllo.u32 0, %s1234
        loop: start=0, step=1, limit=1
        $region769: #{rnn_forward.1} parent=767 // loop_pre_header
          _
        $region770: #{rnn_forward.1} parent=767 // loop_header
          %s1241 = sphi 0, %s1245
          %p1242 = scmp.ge.s32.totalorder %s1241, 1
          %s1246 = sphi %s1236, %s1236
          %s1247 = sphi %s1238, %s1238
        $region771: #{rnn_forward.1} parent=767 // loop_header_branch
          %1244 = sbr.rel (%p1242) target = $region775
        $region772: #{rnn_forward.1} parent=767 // loop_body
          %v1248 = vld [vmem:[%s1246] sm:%s1239]
          %1249 = vst [vmem:[%s1247] sm:%s1239] %v1248
        $region773: #{rnn_forward.1} parent=767 // loop_footer
          %s1245 = sadd.s32 1, %s1241
        $region774: #{rnn_forward.1} parent=767 // loop_footer_branch
          %1240 = sbr.rel target = $region770
        $region775: #{rnn_forward.1} parent=767 // loop_exit
          _
      $region768: #{rnn_forward.1} parent=752 // pred_fallthru
        _
    $region753: #{rnn_forward.1} parent=1 // pred_fallthru
      _
    // Predicated region
    $region754: #{rnn_forward.1} parent=1 // pred_check
      %p1215 = pneg %p1211
    $region755: #{rnn_forward.1} parent=1 // pred_check_branch
      %1217 = sbr.rel (%p1215) target = $region757
    $region756: #{rnn_forward.1} parent=1 // pred_region
      %s1218 = sshllo.u32 0, 1
      loop: start=0, step=1, limit=1
      $region758: #{rnn_forward.1} parent=756 // loop_pre_header
        _
      $region759: #{rnn_forward.1} parent=756 // loop_header
        %s1220 = sphi 0, %s1224
        %p1221 = scmp.ge.s32.totalorder %s1220, 1
        %s1225 = sphi %s1208, %s1208
        %s1226 = sphi %s1209, %s1209
      $region760: #{rnn_forward.1} parent=756 // loop_header_branch
        %1223 = sbr.rel (%p1221) target = $region764
      $region761: #{rnn_forward.1} parent=756 // loop_body
        %v1227 = vld [vmem:[%s1225] sm:%s1218]
        %1228 = vst [vmem:[%s1226] sm:%s1218] %v1227
      $region762: #{rnn_forward.1} parent=756 // loop_footer
        %s1224 = sadd.s32 1, %s1220
      $region763: #{rnn_forward.1} parent=756 // loop_footer_branch
        %1219 = sbr.rel target = $region759
      $region764: #{rnn_forward.1} parent=756 // loop_exit
        _
    $region757: #{rnn_forward.1} parent=1 // pred_fallthru
      _
    // Predicated region
    $region776: #{rnn_forward.1} parent=1 // pred_check
      _
    $region777: #{rnn_forward.1} parent=1 // pred_check_branch
      %1252 = sbr.rel (0) target = $region779
    $region778: #{rnn_forward.1} parent=1 // pred_region
      %1253 = vsyncadd [#allocation3], 16
    $region779: #{rnn_forward.1} parent=1 // pred_fallthru
      _
    %s1254 = sshll.u32 %s420, 4
    %1255 = dma.done %s87, %s1254
    %s1256 = sld [smem:[#allocation4 + $0xb]]
    %s1257 = scalar_lea.vmem %s1, %s1256
    %s1258 = scalar_lea.vmem [#allocation2], 25
    %p1260 = scmp.lt.u32.totalorder 1, 8
    %p1261 = pneg %p1260
    // Predicated region
    $region780: #{rnn_forward.1} parent=1 // pred_check
      _
    $region781: #{rnn_forward.1} parent=1 // pred_check_branch
      %1263 = sbr.rel (%p1260) target = $region783
    $region782: #{rnn_forward.1} parent=1 // pred_region
      %s1278 = sand.u32 1, 7
      %p1279 = scmp.eq.s32.totalorder %s1278, 0
      %p1280 = pneg %p1279
      // Predicated region
      $region795: #{rnn_forward.1} parent=782 // pred_check
        _
      $region796: #{rnn_forward.1} parent=782 // pred_check_branch
        %1282 = sbr.rel (%p1279) target = $region798
      $region797: #{rnn_forward.1} parent=782 // pred_region
        %s1283 = sand.u32 1, 7
        %s1284 = ssub.s32 1, %s1283
        %s1285 = scalar_lea.vmem %s1257, %s1284
        %s1286 = ssub.s32 1, %s1283
        %s1287 = scalar_lea.vmem %s1258, %s1286 [#allocation2]
        %s1288 = sshllo.u32 0, %s1283
        loop: start=0, step=1, limit=1
        $region799: #{rnn_forward.1} parent=797 // loop_pre_header
          _
        $region800: #{rnn_forward.1} parent=797 // loop_header
          %s1290 = sphi 0, %s1294
          %p1291 = scmp.ge.s32.totalorder %s1290, 1
          %s1295 = sphi %s1285, %s1285
          %s1296 = sphi %s1287, %s1287
        $region801: #{rnn_forward.1} parent=797 // loop_header_branch
          %1293 = sbr.rel (%p1291) target = $region805
        $region802: #{rnn_forward.1} parent=797 // loop_body
          %v1297 = vld [vmem:[%s1295] sm:%s1288]
          %1298 = vst [vmem:[%s1296] sm:%s1288] %v1297
        $region803: #{rnn_forward.1} parent=797 // loop_footer
          %s1294 = sadd.s32 1, %s1290
        $region804: #{rnn_forward.1} parent=797 // loop_footer_branch
          %1289 = sbr.rel target = $region800
        $region805: #{rnn_forward.1} parent=797 // loop_exit
          _
      $region798: #{rnn_forward.1} parent=782 // pred_fallthru
        _
    $region783: #{rnn_forward.1} parent=1 // pred_fallthru
      _
    // Predicated region
    $region784: #{rnn_forward.1} parent=1 // pred_check
      %p1264 = pneg %p1260
    $region785: #{rnn_forward.1} parent=1 // pred_check_branch
      %1266 = sbr.rel (%p1264) target = $region787
    $region786: #{rnn_forward.1} parent=1 // pred_region
      %s1267 = sshllo.u32 0, 1
      loop: start=0, step=1, limit=1
      $region788: #{rnn_forward.1} parent=786 // loop_pre_header
        _
      $region789: #{rnn_forward.1} parent=786 // loop_header
        %s1269 = sphi 0, %s1273
        %p1270 = scmp.ge.s32.totalorder %s1269, 1
        %s1274 = sphi %s1257, %s1257
        %s1275 = sphi %s1258, %s1258
      $region790: #{rnn_forward.1} parent=786 // loop_header_branch
        %1272 = sbr.rel (%p1270) target = $region794
      $region791: #{rnn_forward.1} parent=786 // loop_body
        %v1276 = vld [vmem:[%s1274] sm:%s1267]
        %1277 = vst [vmem:[%s1275] sm:%s1267] %v1276
      $region792: #{rnn_forward.1} parent=786 // loop_footer
        %s1273 = sadd.s32 1, %s1269
      $region793: #{rnn_forward.1} parent=786 // loop_footer_branch
        %1268 = sbr.rel target = $region789
      $region794: #{rnn_forward.1} parent=786 // loop_exit
        _
    $region787: #{rnn_forward.1} parent=1 // pred_fallthru
      _
    // Predicated region
    $region806: #{rnn_forward.1} parent=1 // pred_check
      _
    $region807: #{rnn_forward.1} parent=1 // pred_check_branch
      %1301 = sbr.rel (0) target = $region809
    $region808: #{rnn_forward.1} parent=1 // pred_region
      %1302 = vsyncadd %s87, 16
    $region809: #{rnn_forward.1} parent=1 // pred_fallthru
      _
    %s1303 = sshll.u32 %s420, 4
    %1304 = dma.done %s135, %s1303
    %s1305 = sld [smem:[#allocation4 + $0x13]]
    %s1306 = scalar_lea.vmem %s1, %s1305
    %s1307 = scalar_lea.vmem [#allocation2], 26
    %p1309 = scmp.lt.u32.totalorder 1, 8
    %p1310 = pneg %p1309
    // Predicated region
    $region810: #{rnn_forward.1} parent=1 // pred_check
      _
    $region811: #{rnn_forward.1} parent=1 // pred_check_branch
      %1312 = sbr.rel (%p1309) target = $region813
    $region812: #{rnn_forward.1} parent=1 // pred_region
      %s1327 = sand.u32 1, 7
      %p1328 = scmp.eq.s32.totalorder %s1327, 0
      %p1329 = pneg %p1328
      // Predicated region
      $region825: #{rnn_forward.1} parent=812 // pred_check
        _
      $region826: #{rnn_forward.1} parent=812 // pred_check_branch
        %1331 = sbr.rel (%p1328) target = $region828
      $region827: #{rnn_forward.1} parent=812 // pred_region
        %s1332 = sand.u32 1, 7
        %s1333 = ssub.s32 1, %s1332
        %s1334 = scalar_lea.vmem %s1306, %s1333
        %s1335 = ssub.s32 1, %s1332
        %s1336 = scalar_lea.vmem %s1307, %s1335 [#allocation2]
        %s1337 = sshllo.u32 0, %s1332
        loop: start=0, step=1, limit=1
        $region829: #{rnn_forward.1} parent=827 // loop_pre_header
          _
        $region830: #{rnn_forward.1} parent=827 // loop_header
          %s1339 = sphi 0, %s1343
          %p1340 = scmp.ge.s32.totalorder %s1339, 1
          %s1344 = sphi %s1334, %s1334
          %s1345 = sphi %s1336, %s1336
        $region831: #{rnn_forward.1} parent=827 // loop_header_branch
          %1342 = sbr.rel (%p1340) target = $region835
        $region832: #{rnn_forward.1} parent=827 // loop_body
          %v1346 = vld [vmem:[%s1344] sm:%s1337]
          %1347 = vst [vmem:[%s1345] sm:%s1337] %v1346
        $region833: #{rnn_forward.1} parent=827 // loop_footer
          %s1343 = sadd.s32 1, %s1339
        $region834: #{rnn_forward.1} parent=827 // loop_footer_branch
          %1338 = sbr.rel target = $region830
        $region835: #{rnn_forward.1} parent=827 // loop_exit
          _
      $region828: #{rnn_forward.1} parent=812 // pred_fallthru
        _
    $region813: #{rnn_forward.1} parent=1 // pred_fallthru
      _
    // Predicated region
    $region814: #{rnn_forward.1} parent=1 // pred_check
      %p1313 = pneg %p1309
    $region815: #{rnn_forward.1} parent=1 // pred_check_branch
      %1315 = sbr.rel (%p1313) target = $region817
    $region816: #{rnn_forward.1} parent=1 // pred_region
      %s1316 = sshllo.u32 0, 1
      loop: start=0, step=1, limit=1
      $region818: #{rnn_forward.1} parent=816 // loop_pre_header
        _
      $region819: #{rnn_forward.1} parent=816 // loop_header
        %s1318 = sphi 0, %s1322
        %p1319 = scmp.ge.s32.totalorder %s1318, 1
        %s1323 = sphi %s1306, %s1306
        %s1324 = sphi %s1307, %s1307
      $region820: #{rnn_forward.1} parent=816 // loop_header_branch
        %1321 = sbr.rel (%p1319) target = $region824
      $region821: #{rnn_forward.1} parent=816 // loop_body
        %v1325 = vld [vmem:[%s1323] sm:%s1316]
        %1326 = vst [vmem:[%s1324] sm:%s1316] %v1325
      $region822: #{rnn_forward.1} parent=816 // loop_footer
        %s1322 = sadd.s32 1, %s1318
      $region823: #{rnn_forward.1} parent=816 // loop_footer_branch
        %1317 = sbr.rel target = $region819
      $region824: #{rnn_forward.1} parent=816 // loop_exit
        _
    $region817: #{rnn_forward.1} parent=1 // pred_fallthru
      _
    // Predicated region
    $region836: #{rnn_forward.1} parent=1 // pred_check
      _
    $region837: #{rnn_forward.1} parent=1 // pred_check_branch
      %1350 = sbr.rel (0) target = $region839
    $region838: #{rnn_forward.1} parent=1 // pred_region
      %1351 = vsyncadd %s135, 16
    $region839: #{rnn_forward.1} parent=1 // pred_fallthru
      _
    %s1352 = sshll.u32 %s420, 4
    %1353 = dma.done %s183, %s1352
    %s1354 = sld [smem:[#allocation4 + $0x1b]]
    %s1355 = scalar_lea.vmem %s1, %s1354
    %s1356 = scalar_lea.vmem [#allocation2], 27
    %p1358 = scmp.lt.u32.totalorder 1, 8
    %p1359 = pneg %p1358
    // Predicated region
    $region840: #{rnn_forward.1} parent=1 // pred_check
      _
    $region841: #{rnn_forward.1} parent=1 // pred_check_branch
      %1361 = sbr.rel (%p1358) target = $region843
    $region842: #{rnn_forward.1} parent=1 // pred_region
      %s1376 = sand.u32 1, 7
      %p1377 = scmp.eq.s32.totalorder %s1376, 0
      %p1378 = pneg %p1377
      // Predicated region
      $region855: #{rnn_forward.1} parent=842 // pred_check
        _
      $region856: #{rnn_forward.1} parent=842 // pred_check_branch
        %1380 = sbr.rel (%p1377) target = $region858
      $region857: #{rnn_forward.1} parent=842 // pred_region
        %s1381 = sand.u32 1, 7
        %s1382 = ssub.s32 1, %s1381
        %s1383 = scalar_lea.vmem %s1355, %s1382
        %s1384 = ssub.s32 1, %s1381
        %s1385 = scalar_lea.vmem %s1356, %s1384 [#allocation2]
        %s1386 = sshllo.u32 0, %s1381
        loop: start=0, step=1, limit=1
        $region859: #{rnn_forward.1} parent=857 // loop_pre_header
          _
        $region860: #{rnn_forward.1} parent=857 // loop_header
          %s1388 = sphi 0, %s1392
          %p1389 = scmp.ge.s32.totalorder %s1388, 1
          %s1393 = sphi %s1383, %s1383
          %s1394 = sphi %s1385, %s1385
        $region861: #{rnn_forward.1} parent=857 // loop_header_branch
          %1391 = sbr.rel (%p1389) target = $region865
        $region862: #{rnn_forward.1} parent=857 // loop_body
          %v1395 = vld [vmem:[%s1393] sm:%s1386]
          %1396 = vst [vmem:[%s1394] sm:%s1386] %v1395
        $region863: #{rnn_forward.1} parent=857 // loop_footer
          %s1392 = sadd.s32 1, %s1388
        $region864: #{rnn_forward.1} parent=857 // loop_footer_branch
          %1387 = sbr.rel target = $region860
        $region865: #{rnn_forward.1} parent=857 // loop_exit
          _
      $region858: #{rnn_forward.1} parent=842 // pred_fallthru
        _
    $region843: #{rnn_forward.1} parent=1 // pred_fallthru
      _
    // Predicated region
    $region844: #{rnn_forward.1} parent=1 // pred_check
      %p1362 = pneg %p1358
    $region845: #{rnn_forward.1} parent=1 // pred_check_branch
      %1364 = sbr.rel (%p1362) target = $region847
    $region846: #{rnn_forward.1} parent=1 // pred_region
      %s1365 = sshllo.u32 0, 1
      loop: start=0, step=1, limit=1
      $region848: #{rnn_forward.1} parent=846 // loop_pre_header
        _
      $region849: #{rnn_forward.1} parent=846 // loop_header
        %s1367 = sphi 0, %s1371
        %p1368 = scmp.ge.s32.totalorder %s1367, 1
        %s1372 = sphi %s1355, %s1355
        %s1373 = sphi %s1356, %s1356
      $region850: #{rnn_forward.1} parent=846 // loop_header_branch
        %1370 = sbr.rel (%p1368) target = $region854
      $region851: #{rnn_forward.1} parent=846 // loop_body
        %v1374 = vld [vmem:[%s1372] sm:%s1365]
        %1375 = vst [vmem:[%s1373] sm:%s1365] %v1374
      $region852: #{rnn_forward.1} parent=846 // loop_footer
        %s1371 = sadd.s32 1, %s1367
      $region853: #{rnn_forward.1} parent=846 // loop_footer_branch
        %1366 = sbr.rel target = $region849
      $region854: #{rnn_forward.1} parent=846 // loop_exit
        _
    $region847: #{rnn_forward.1} parent=1 // pred_fallthru
      _
    // Predicated region
    $region866: #{rnn_forward.1} parent=1 // pred_check
      _
    $region867: #{rnn_forward.1} parent=1 // pred_check_branch
      %1399 = sbr.rel (0) target = $region869
    $region868: #{rnn_forward.1} parent=1 // pred_region
      %1400 = vsyncadd %s183, 16
    $region869: #{rnn_forward.1} parent=1 // pred_fallthru
      _
    %s1401 = sshll.u32 %s420, 4
    %1402 = dma.done %s231, %s1401
    %s1403 = sld [smem:[#allocation4 + $0x23]]
    %s1404 = scalar_lea.vmem %s1, %s1403
    %s1405 = scalar_lea.vmem [#allocation2], 28
    %p1407 = scmp.lt.u32.totalorder 1, 8
    %p1408 = pneg %p1407
    // Predicated region
    $region870: #{rnn_forward.1} parent=1 // pred_check
      _
    $region871: #{rnn_forward.1} parent=1 // pred_check_branch
      %1410 = sbr.rel (%p1407) target = $region873
    $region872: #{rnn_forward.1} parent=1 // pred_region
      %s1425 = sand.u32 1, 7
      %p1426 = scmp.eq.s32.totalorder %s1425, 0
      %p1427 = pneg %p1426
      // Predicated region
      $region885: #{rnn_forward.1} parent=872 // pred_check
        _
      $region886: #{rnn_forward.1} parent=872 // pred_check_branch
        %1429 = sbr.rel (%p1426) target = $region888
      $region887: #{rnn_forward.1} parent=872 // pred_region
        %s1430 = sand.u32 1, 7
        %s1431 = ssub.s32 1, %s1430
        %s1432 = scalar_lea.vmem %s1404, %s1431
        %s1433 = ssub.s32 1, %s1430
        %s1434 = scalar_lea.vmem %s1405, %s1433 [#allocation2]
        %s1435 = sshllo.u32 0, %s1430
        loop: start=0, step=1, limit=1
        $region889: #{rnn_forward.1} parent=887 // loop_pre_header
          _
        $region890: #{rnn_forward.1} parent=887 // loop_header
          %s1437 = sphi 0, %s1441
          %p1438 = scmp.ge.s32.totalorder %s1437, 1
          %s1442 = sphi %s1432, %s1432
          %s1443 = sphi %s1434, %s1434
        $region891: #{rnn_forward.1} parent=887 // loop_header_branch
          %1440 = sbr.rel (%p1438) target = $region895
        $region892: #{rnn_forward.1} parent=887 // loop_body
          %v1444 = vld [vmem:[%s1442] sm:%s1435]
          %1445 = vst [vmem:[%s1443] sm:%s1435] %v1444
        $region893: #{rnn_forward.1} parent=887 // loop_footer
          %s1441 = sadd.s32 1, %s1437
        $region894: #{rnn_forward.1} parent=887 // loop_footer_branch
          %1436 = sbr.rel target = $region890
        $region895: #{rnn_forward.1} parent=887 // loop_exit
          _
      $region888: #{rnn_forward.1} parent=872 // pred_fallthru
        _
    $region873: #{rnn_forward.1} parent=1 // pred_fallthru
      _
    // Predicated region
    $region874: #{rnn_forward.1} parent=1 // pred_check
      %p1411 = pneg %p1407
    $region875: #{rnn_forward.1} parent=1 // pred_check_branch
      %1413 = sbr.rel (%p1411) target = $region877
    $region876: #{rnn_forward.1} parent=1 // pred_region
      %s1414 = sshllo.u32 0, 1
      loop: start=0, step=1, limit=1
      $region878: #{rnn_forward.1} parent=876 // loop_pre_header
        _
      $region879: #{rnn_forward.1} parent=876 // loop_header
        %s1416 = sphi 0, %s1420
        %p1417 = scmp.ge.s32.totalorder %s1416, 1
        %s1421 = sphi %s1404, %s1404
        %s1422 = sphi %s1405, %s1405
      $region880: #{rnn_forward.1} parent=876 // loop_header_branch
        %1419 = sbr.rel (%p1417) target = $region884
      $region881: #{rnn_forward.1} parent=876 // loop_body
        %v1423 = vld [vmem:[%s1421] sm:%s1414]
        %1424 = vst [vmem:[%s1422] sm:%s1414] %v1423
      $region882: #{rnn_forward.1} parent=876 // loop_footer
        %s1420 = sadd.s32 1, %s1416
      $region883: #{rnn_forward.1} parent=876 // loop_footer_branch
        %1415 = sbr.rel target = $region879
      $region884: #{rnn_forward.1} parent=876 // loop_exit
        _
    $region877: #{rnn_forward.1} parent=1 // pred_fallthru
      _
    // Predicated region
    $region896: #{rnn_forward.1} parent=1 // pred_check
      _
    $region897: #{rnn_forward.1} parent=1 // pred_check_branch
      %1448 = sbr.rel (0) target = $region899
    $region898: #{rnn_forward.1} parent=1 // pred_region
      %1449 = vsyncadd %s231, 16
    $region899: #{rnn_forward.1} parent=1 // pred_fallthru
      _
    %s1450 = sshll.u32 %s420, 4
    %1451 = dma.done %s279, %s1450
    %s1452 = sld [smem:[#allocation4 + $0x2b]]
    %s1453 = scalar_lea.vmem %s1, %s1452
    %s1454 = scalar_lea.vmem [#allocation2], 29
    %p1456 = scmp.lt.u32.totalorder 1, 8
    %p1457 = pneg %p1456
    // Predicated region
    $region900: #{rnn_forward.1} parent=1 // pred_check
      _
    $region901: #{rnn_forward.1} parent=1 // pred_check_branch
      %1459 = sbr.rel (%p1456) target = $region903
    $region902: #{rnn_forward.1} parent=1 // pred_region
      %s1474 = sand.u32 1, 7
      %p1475 = scmp.eq.s32.totalorder %s1474, 0
      %p1476 = pneg %p1475
      // Predicated region
      $region915: #{rnn_forward.1} parent=902 // pred_check
        _
      $region916: #{rnn_forward.1} parent=902 // pred_check_branch
        %1478 = sbr.rel (%p1475) target = $region918
      $region917: #{rnn_forward.1} parent=902 // pred_region
        %s1479 = sand.u32 1, 7
        %s1480 = ssub.s32 1, %s1479
        %s1481 = scalar_lea.vmem %s1453, %s1480
        %s1482 = ssub.s32 1, %s1479
        %s1483 = scalar_lea.vmem %s1454, %s1482 [#allocation2]
        %s1484 = sshllo.u32 0, %s1479
        loop: start=0, step=1, limit=1
        $region919: #{rnn_forward.1} parent=917 // loop_pre_header
          _
        $region920: #{rnn_forward.1} parent=917 // loop_header
          %s1486 = sphi 0, %s1490
          %p1487 = scmp.ge.s32.totalorder %s1486, 1
          %s1491 = sphi %s1481, %s1481
          %s1492 = sphi %s1483, %s1483
        $region921: #{rnn_forward.1} parent=917 // loop_header_branch
          %1489 = sbr.rel (%p1487) target = $region925
        $region922: #{rnn_forward.1} parent=917 // loop_body
          %v1493 = vld [vmem:[%s1491] sm:%s1484]
          %1494 = vst [vmem:[%s1492] sm:%s1484] %v1493
        $region923: #{rnn_forward.1} parent=917 // loop_footer
          %s1490 = sadd.s32 1, %s1486
        $region924: #{rnn_forward.1} parent=917 // loop_footer_branch
          %1485 = sbr.rel target = $region920
        $region925: #{rnn_forward.1} parent=917 // loop_exit
          _
      $region918: #{rnn_forward.1} parent=902 // pred_fallthru
        _
    $region903: #{rnn_forward.1} parent=1 // pred_fallthru
      _
    // Predicated region
    $region904: #{rnn_forward.1} parent=1 // pred_check
      %p1460 = pneg %p1456
    $region905: #{rnn_forward.1} parent=1 // pred_check_branch
      %1462 = sbr.rel (%p1460) target = $region907
    $region906: #{rnn_forward.1} parent=1 // pred_region
      %s1463 = sshllo.u32 0, 1
      loop: start=0, step=1, limit=1
      $region908: #{rnn_forward.1} parent=906 // loop_pre_header
        _
      $region909: #{rnn_forward.1} parent=906 // loop_header
        %s1465 = sphi 0, %s1469
        %p1466 = scmp.ge.s32.totalorder %s1465, 1
        %s1470 = sphi %s1453, %s1453
        %s1471 = sphi %s1454, %s1454
      $region910: #{rnn_forward.1} parent=906 // loop_header_branch
        %1468 = sbr.rel (%p1466) target = $region914
      $region911: #{rnn_forward.1} parent=906 // loop_body
        %v1472 = vld [vmem:[%s1470] sm:%s1463]
        %1473 = vst [vmem:[%s1471] sm:%s1463] %v1472
      $region912: #{rnn_forward.1} parent=906 // loop_footer
        %s1469 = sadd.s32 1, %s1465
      $region913: #{rnn_forward.1} parent=906 // loop_footer_branch
        %1464 = sbr.rel target = $region909
      $region914: #{rnn_forward.1} parent=906 // loop_exit
        _
    $region907: #{rnn_forward.1} parent=1 // pred_fallthru
      _
    // Predicated region
    $region926: #{rnn_forward.1} parent=1 // pred_check
      _
    $region927: #{rnn_forward.1} parent=1 // pred_check_branch
      %1497 = sbr.rel (0) target = $region929
    $region928: #{rnn_forward.1} parent=1 // pred_region
      %1498 = vsyncadd %s279, 16
    $region929: #{rnn_forward.1} parent=1 // pred_fallthru
      _
    %s1499 = sshll.u32 %s420, 4
    %1500 = dma.done %s327, %s1499
    %s1501 = sld [smem:[#allocation4 + $0x33]]
    %s1502 = scalar_lea.vmem %s1, %s1501
    %s1503 = scalar_lea.vmem [#allocation2], 30
    %p1505 = scmp.lt.u32.totalorder 1, 8
    %p1506 = pneg %p1505
    // Predicated region
    $region930: #{rnn_forward.1} parent=1 // pred_check
      _
    $region931: #{rnn_forward.1} parent=1 // pred_check_branch
      %1508 = sbr.rel (%p1505) target = $region933
    $region932: #{rnn_forward.1} parent=1 // pred_region
      %s1523 = sand.u32 1, 7
      %p1524 = scmp.eq.s32.totalorder %s1523, 0
      %p1525 = pneg %p1524
      // Predicated region
      $region945: #{rnn_forward.1} parent=932 // pred_check
        _
      $region946: #{rnn_forward.1} parent=932 // pred_check_branch
        %1527 = sbr.rel (%p1524) target = $region948
      $region947: #{rnn_forward.1} parent=932 // pred_region
        %s1528 = sand.u32 1, 7
        %s1529 = ssub.s32 1, %s1528
        %s1530 = scalar_lea.vmem %s1502, %s1529
        %s1531 = ssub.s32 1, %s1528
        %s1532 = scalar_lea.vmem %s1503, %s1531 [#allocation2]
        %s1533 = sshllo.u32 0, %s1528
        loop: start=0, step=1, limit=1
        $region949: #{rnn_forward.1} parent=947 // loop_pre_header
          _
        $region950: #{rnn_forward.1} parent=947 // loop_header
          %s1535 = sphi 0, %s1539
          %p1536 = scmp.ge.s32.totalorder %s1535, 1
          %s1540 = sphi %s1530, %s1530
          %s1541 = sphi %s1532, %s1532
        $region951: #{rnn_forward.1} parent=947 // loop_header_branch
          %1538 = sbr.rel (%p1536) target = $region955
        $region952: #{rnn_forward.1} parent=947 // loop_body
          %v1542 = vld [vmem:[%s1540] sm:%s1533]
          %1543 = vst [vmem:[%s1541] sm:%s1533] %v1542
        $region953: #{rnn_forward.1} parent=947 // loop_footer
          %s1539 = sadd.s32 1, %s1535
        $region954: #{rnn_forward.1} parent=947 // loop_footer_branch
          %1534 = sbr.rel target = $region950
        $region955: #{rnn_forward.1} parent=947 // loop_exit
          _
      $region948: #{rnn_forward.1} parent=932 // pred_fallthru
        _
    $region933: #{rnn_forward.1} parent=1 // pred_fallthru
      _
    // Predicated region
    $region934: #{rnn_forward.1} parent=1 // pred_check
      %p1509 = pneg %p1505
    $region935: #{rnn_forward.1} parent=1 // pred_check_branch
      %1511 = sbr.rel (%p1509) target = $region937
    $region936: #{rnn_forward.1} parent=1 // pred_region
      %s1512 = sshllo.u32 0, 1
      loop: start=0, step=1, limit=1
      $region938: #{rnn_forward.1} parent=936 // loop_pre_header
        _
      $region939: #{rnn_forward.1} parent=936 // loop_header
        %s1514 = sphi 0, %s1518
        %p1515 = scmp.ge.s32.totalorder %s1514, 1
        %s1519 = sphi %s1502, %s1502
        %s1520 = sphi %s1503, %s1503
      $region940: #{rnn_forward.1} parent=936 // loop_header_branch
        %1517 = sbr.rel (%p1515) target = $region944
      $region941: #{rnn_forward.1} parent=936 // loop_body
        %v1521 = vld [vmem:[%s1519] sm:%s1512]
        %1522 = vst [vmem:[%s1520] sm:%s1512] %v1521
      $region942: #{rnn_forward.1} parent=936 // loop_footer
        %s1518 = sadd.s32 1, %s1514
      $region943: #{rnn_forward.1} parent=936 // loop_footer_branch
        %1513 = sbr.rel target = $region939
      $region944: #{rnn_forward.1} parent=936 // loop_exit
        _
    $region937: #{rnn_forward.1} parent=1 // pred_fallthru
      _
    // Predicated region
    $region956: #{rnn_forward.1} parent=1 // pred_check
      _
    $region957: #{rnn_forward.1} parent=1 // pred_check_branch
      %1546 = sbr.rel (0) target = $region959
    $region958: #{rnn_forward.1} parent=1 // pred_region
      %1547 = vsyncadd %s327, 16
    $region959: #{rnn_forward.1} parent=1 // pred_fallthru
      _
    %s1548 = sshll.u32 %s420, 4
    %1549 = dma.done %s375, %s1548
    %s1550 = sld [smem:[#allocation4 + $0x3b]]
    %s1551 = scalar_lea.vmem %s1, %s1550
    %s1552 = scalar_lea.vmem [#allocation2], 31
    %p1554 = scmp.lt.u32.totalorder 1, 8
    %p1555 = pneg %p1554
    // Predicated region
    $region960: #{rnn_forward.1} parent=1 // pred_check
      _
    $region961: #{rnn_forward.1} parent=1 // pred_check_branch
      %1557 = sbr.rel (%p1554) target = $region963
    $region962: #{rnn_forward.1} parent=1 // pred_region
      %s1572 = sand.u32 1, 7
      %p1573 = scmp.eq.s32.totalorder %s1572, 0
      %p1574 = pneg %p1573
      // Predicated region
      $region975: #{rnn_forward.1} parent=962 // pred_check
        _
      $region976: #{rnn_forward.1} parent=962 // pred_check_branch
        %1576 = sbr.rel (%p1573) target = $region978
      $region977: #{rnn_forward.1} parent=962 // pred_region
        %s1577 = sand.u32 1, 7
        %s1578 = ssub.s32 1, %s1577
        %s1579 = scalar_lea.vmem %s1551, %s1578
        %s1580 = ssub.s32 1, %s1577
        %s1581 = scalar_lea.vmem %s1552, %s1580 [#allocation2]
        %s1582 = sshllo.u32 0, %s1577
        loop: start=0, step=1, limit=1
        $region979: #{rnn_forward.1} parent=977 // loop_pre_header
          _
        $region980: #{rnn_forward.1} parent=977 // loop_header
          %s1584 = sphi 0, %s1588
          %p1585 = scmp.ge.s32.totalorder %s1584, 1
          %s1589 = sphi %s1579, %s1579
          %s1590 = sphi %s1581, %s1581
        $region981: #{rnn_forward.1} parent=977 // loop_header_branch
          %1587 = sbr.rel (%p1585) target = $region985
        $region982: #{rnn_forward.1} parent=977 // loop_body
          %v1591 = vld [vmem:[%s1589] sm:%s1582]
          %1592 = vst [vmem:[%s1590] sm:%s1582] %v1591
        $region983: #{rnn_forward.1} parent=977 // loop_footer
          %s1588 = sadd.s32 1, %s1584
        $region984: #{rnn_forward.1} parent=977 // loop_footer_branch
          %1583 = sbr.rel target = $region980
        $region985: #{rnn_forward.1} parent=977 // loop_exit
          _
      $region978: #{rnn_forward.1} parent=962 // pred_fallthru
        _
    $region963: #{rnn_forward.1} parent=1 // pred_fallthru
      _
    // Predicated region
    $region964: #{rnn_forward.1} parent=1 // pred_check
      %p1558 = pneg %p1554
    $region965: #{rnn_forward.1} parent=1 // pred_check_branch
      %1560 = sbr.rel (%p1558) target = $region967
    $region966: #{rnn_forward.1} parent=1 // pred_region
      %s1561 = sshllo.u32 0, 1
      loop: start=0, step=1, limit=1
      $region968: #{rnn_forward.1} parent=966 // loop_pre_header
        _
      $region969: #{rnn_forward.1} parent=966 // loop_header
        %s1563 = sphi 0, %s1567
        %p1564 = scmp.ge.s32.totalorder %s1563, 1
        %s1568 = sphi %s1551, %s1551
        %s1569 = sphi %s1552, %s1552
      $region970: #{rnn_forward.1} parent=966 // loop_header_branch
        %1566 = sbr.rel (%p1564) target = $region974
      $region971: #{rnn_forward.1} parent=966 // loop_body
        %v1570 = vld [vmem:[%s1568] sm:%s1561]
        %1571 = vst [vmem:[%s1569] sm:%s1561] %v1570
      $region972: #{rnn_forward.1} parent=966 // loop_footer
        %s1567 = sadd.s32 1, %s1563
      $region973: #{rnn_forward.1} parent=966 // loop_footer_branch
        %1562 = sbr.rel target = $region969
      $region974: #{rnn_forward.1} parent=966 // loop_exit
        _
    $region967: #{rnn_forward.1} parent=1 // pred_fallthru
      _
    // Predicated region
    $region986: #{rnn_forward.1} parent=1 // pred_check
      _
    $region987: #{rnn_forward.1} parent=1 // pred_check_branch
      %1595 = sbr.rel (0) target = $region989
    $region988: #{rnn_forward.1} parent=1 // pred_region
      %1596 = vsyncadd %s375, 16
    $region989: #{rnn_forward.1} parent=1 // pred_fallthru
      _
    %s1597 = sshll.u32 %s420, 4
    %1598 = dma.done [#allocation3], %s1597
    %s1599 = sld [smem:[#allocation4 + $0x4]]
    %s1600 = scalar_lea.vmem %s1, %s1599
    %s1601 = scalar_lea.vmem [#allocation2], 32
    %p1603 = scmp.lt.u32.totalorder 1, 8
    %p1604 = pneg %p1603
    // Predicated region
    $region990: #{rnn_forward.1} parent=1 // pred_check
      _
    $region991: #{rnn_forward.1} parent=1 // pred_check_branch
      %1606 = sbr.rel (%p1603) target = $region993
    $region992: #{rnn_forward.1} parent=1 // pred_region
      %s1621 = sand.u32 1, 7
      %p1622 = scmp.eq.s32.totalorder %s1621, 0
      %p1623 = pneg %p1622
      // Predicated region
      $region1005: #{rnn_forward.1} parent=992 // pred_check
        _
      $region1006: #{rnn_forward.1} parent=992 // pred_check_branch
        %1625 = sbr.rel (%p1622) target = $region1008
      $region1007: #{rnn_forward.1} parent=992 // pred_region
        %s1626 = sand.u32 1, 7
        %s1627 = ssub.s32 1, %s1626
        %s1628 = scalar_lea.vmem %s1600, %s1627
        %s1629 = ssub.s32 1, %s1626
        %s1630 = scalar_lea.vmem %s1601, %s1629 [#allocation2]
        %s1631 = sshllo.u32 0, %s1626
        loop: start=0, step=1, limit=1
        $region1009: #{rnn_forward.1} parent=1007 // loop_pre_header
          _
        $region1010: #{rnn_forward.1} parent=1007 // loop_header
          %s1633 = sphi 0, %s1637
          %p1634 = scmp.ge.s32.totalorder %s1633, 1
          %s1638 = sphi %s1628, %s1628
          %s1639 = sphi %s1630, %s1630
        $region1011: #{rnn_forward.1} parent=1007 // loop_header_branch
          %1636 = sbr.rel (%p1634) target = $region1015
        $region1012: #{rnn_forward.1} parent=1007 // loop_body
          %v1640 = vld [vmem:[%s1638] sm:%s1631]
          %1641 = vst [vmem:[%s1639] sm:%s1631] %v1640
        $region1013: #{rnn_forward.1} parent=1007 // loop_footer
          %s1637 = sadd.s32 1, %s1633
        $region1014: #{rnn_forward.1} parent=1007 // loop_footer_branch
          %1632 = sbr.rel target = $region1010
        $region1015: #{rnn_forward.1} parent=1007 // loop_exit
          _
      $region1008: #{rnn_forward.1} parent=992 // pred_fallthru
        _
    $region993: #{rnn_forward.1} parent=1 // pred_fallthru
      _
    // Predicated region
    $region994: #{rnn_forward.1} parent=1 // pred_check
      %p1607 = pneg %p1603
    $region995: #{rnn_forward.1} parent=1 // pred_check_branch
      %1609 = sbr.rel (%p1607) target = $region997
    $region996: #{rnn_forward.1} parent=1 // pred_region
      %s1610 = sshllo.u32 0, 1
      loop: start=0, step=1, limit=1
      $region998: #{rnn_forward.1} parent=996 // loop_pre_header
        _
      $region999: #{rnn_forward.1} parent=996 // loop_header
        %s1612 = sphi 0, %s1616
        %p1613 = scmp.ge.s32.totalorder %s1612, 1
        %s1617 = sphi %s1600, %s1600
        %s1618 = sphi %s1601, %s1601
      $region1000: #{rnn_forward.1} parent=996 // loop_header_branch
        %1615 = sbr.rel (%p1613) target = $region1004
      $region1001: #{rnn_forward.1} parent=996 // loop_body
        %v1619 = vld [vmem:[%s1617] sm:%s1610]
        %1620 = vst [vmem:[%s1618] sm:%s1610] %v1619
      $region1002: #{rnn_forward.1} parent=996 // loop_footer
        %s1616 = sadd.s32 1, %s1612
      $region1003: #{rnn_forward.1} parent=996 // loop_footer_branch
        %1611 = sbr.rel target = $region999
      $region1004: #{rnn_forward.1} parent=996 // loop_exit
        _
    $region997: #{rnn_forward.1} parent=1 // pred_fallthru
      _
    // Predicated region
    $region1016: #{rnn_forward.1} parent=1 // pred_check
      _
    $region1017: #{rnn_forward.1} parent=1 // pred_check_branch
      %1644 = sbr.rel (0) target = $region1019
    $region1018: #{rnn_forward.1} parent=1 // pred_region
      %1645 = vsyncadd [#allocation3], 16
    $region1019: #{rnn_forward.1} parent=1 // pred_fallthru
      _
    %s1646 = sshll.u32 %s420, 4
    %1647 = dma.done %s87, %s1646
    %s1648 = sld [smem:[#allocation4 + $0xc]]
    %s1649 = scalar_lea.vmem %s1, %s1648
    %s1650 = scalar_lea.vmem [#allocation2], 33
    %p1652 = scmp.lt.u32.totalorder 1, 8
    %p1653 = pneg %p1652
    // Predicated region
    $region1020: #{rnn_forward.1} parent=1 // pred_check
      _
    $region1021: #{rnn_forward.1} parent=1 // pred_check_branch
      %1655 = sbr.rel (%p1652) target = $region1023
    $region1022: #{rnn_forward.1} parent=1 // pred_region
      %s1670 = sand.u32 1, 7
      %p1671 = scmp.eq.s32.totalorder %s1670, 0
      %p1672 = pneg %p1671
      // Predicated region
      $region1035: #{rnn_forward.1} parent=1022 // pred_check
        _
      $region1036: #{rnn_forward.1} parent=1022 // pred_check_branch
        %1674 = sbr.rel (%p1671) target = $region1038
      $region1037: #{rnn_forward.1} parent=1022 // pred_region
        %s1675 = sand.u32 1, 7
        %s1676 = ssub.s32 1, %s1675
        %s1677 = scalar_lea.vmem %s1649, %s1676
        %s1678 = ssub.s32 1, %s1675
        %s1679 = scalar_lea.vmem %s1650, %s1678 [#allocation2]
        %s1680 = sshllo.u32 0, %s1675
        loop: start=0, step=1, limit=1
        $region1039: #{rnn_forward.1} parent=1037 // loop_pre_header
          _
        $region1040: #{rnn_forward.1} parent=1037 // loop_header
          %s1682 = sphi 0, %s1686
          %p1683 = scmp.ge.s32.totalorder %s1682, 1
          %s1687 = sphi %s1677, %s1677
          %s1688 = sphi %s1679, %s1679
        $region1041: #{rnn_forward.1} parent=1037 // loop_header_branch
          %1685 = sbr.rel (%p1683) target = $region1045
        $region1042: #{rnn_forward.1} parent=1037 // loop_body
          %v1689 = vld [vmem:[%s1687] sm:%s1680]
          %1690 = vst [vmem:[%s1688] sm:%s1680] %v1689
        $region1043: #{rnn_forward.1} parent=1037 // loop_footer
          %s1686 = sadd.s32 1, %s1682
        $region1044: #{rnn_forward.1} parent=1037 // loop_footer_branch
          %1681 = sbr.rel target = $region1040
        $region1045: #{rnn_forward.1} parent=1037 // loop_exit
          _
      $region1038: #{rnn_forward.1} parent=1022 // pred_fallthru
        _
    $region1023: #{rnn_forward.1} parent=1 // pred_fallthru
      _
    // Predicated region
    $region1024: #{rnn_forward.1} parent=1 // pred_check
      %p1656 = pneg %p1652
    $region1025: #{rnn_forward.1} parent=1 // pred_check_branch
      %1658 = sbr.rel (%p1656) target = $region1027
    $region1026: #{rnn_forward.1} parent=1 // pred_region
      %s1659 = sshllo.u32 0, 1
      loop: start=0, step=1, limit=1
      $region1028: #{rnn_forward.1} parent=1026 // loop_pre_header
        _
      $region1029: #{rnn_forward.1} parent=1026 // loop_header
        %s1661 = sphi 0, %s1665
        %p1662 = scmp.ge.s32.totalorder %s1661, 1
        %s1666 = sphi %s1649, %s1649
        %s1667 = sphi %s1650, %s1650
      $region1030: #{rnn_forward.1} parent=1026 // loop_header_branch
        %1664 = sbr.rel (%p1662) target = $region1034
      $region1031: #{rnn_forward.1} parent=1026 // loop_body
        %v1668 = vld [vmem:[%s1666] sm:%s1659]
        %1669 = vst [vmem:[%s1667] sm:%s1659] %v1668
      $region1032: #{rnn_forward.1} parent=1026 // loop_footer
        %s1665 = sadd.s32 1, %s1661
      $region1033: #{rnn_forward.1} parent=1026 // loop_footer_branch
        %1660 = sbr.rel target = $region1029
      $region1034: #{rnn_forward.1} parent=1026 // loop_exit
        _
    $region1027: #{rnn_forward.1} parent=1 // pred_fallthru
      _
    // Predicated region
    $region1046: #{rnn_forward.1} parent=1 // pred_check
      _
    $region1047: #{rnn_forward.1} parent=1 // pred_check_branch
      %1693 = sbr.rel (0) target = $region1049
    $region1048: #{rnn_forward.1} parent=1 // pred_region
      %1694 = vsyncadd %s87, 16
    $region1049: #{rnn_forward.1} parent=1 // pred_fallthru
      _
    %s1695 = sshll.u32 %s420, 4
    %1696 = dma.done %s135, %s1695
    %s1697 = sld [smem:[#allocation4 + $0x14]]
    %s1698 = scalar_lea.vmem %s1, %s1697
    %s1699 = scalar_lea.vmem [#allocation2], 34
    %p1701 = scmp.lt.u32.totalorder 1, 8
    %p1702 = pneg %p1701
    // Predicated region
    $region1050: #{rnn_forward.1} parent=1 // pred_check
      _
    $region1051: #{rnn_forward.1} parent=1 // pred_check_branch
      %1704 = sbr.rel (%p1701) target = $region1053
    $region1052: #{rnn_forward.1} parent=1 // pred_region
      %s1719 = sand.u32 1, 7
      %p1720 = scmp.eq.s32.totalorder %s1719, 0
      %p1721 = pneg %p1720
      // Predicated region
      $region1065: #{rnn_forward.1} parent=1052 // pred_check
        _
      $region1066: #{rnn_forward.1} parent=1052 // pred_check_branch
        %1723 = sbr.rel (%p1720) target = $region1068
      $region1067: #{rnn_forward.1} parent=1052 // pred_region
        %s1724 = sand.u32 1, 7
        %s1725 = ssub.s32 1, %s1724
        %s1726 = scalar_lea.vmem %s1698, %s1725
        %s1727 = ssub.s32 1, %s1724
        %s1728 = scalar_lea.vmem %s1699, %s1727 [#allocation2]
        %s1729 = sshllo.u32 0, %s1724
        loop: start=0, step=1, limit=1
        $region1069: #{rnn_forward.1} parent=1067 // loop_pre_header
          _
        $region1070: #{rnn_forward.1} parent=1067 // loop_header
          %s1731 = sphi 0, %s1735
          %p1732 = scmp.ge.s32.totalorder %s1731, 1
          %s1736 = sphi %s1726, %s1726
          %s1737 = sphi %s1728, %s1728
        $region1071: #{rnn_forward.1} parent=1067 // loop_header_branch
          %1734 = sbr.rel (%p1732) target = $region1075
        $region1072: #{rnn_forward.1} parent=1067 // loop_body
          %v1738 = vld [vmem:[%s1736] sm:%s1729]
          %1739 = vst [vmem:[%s1737] sm:%s1729] %v1738
        $region1073: #{rnn_forward.1} parent=1067 // loop_footer
          %s1735 = sadd.s32 1, %s1731
        $region1074: #{rnn_forward.1} parent=1067 // loop_footer_branch
          %1730 = sbr.rel target = $region1070
        $region1075: #{rnn_forward.1} parent=1067 // loop_exit
          _
      $region1068: #{rnn_forward.1} parent=1052 // pred_fallthru
        _
    $region1053: #{rnn_forward.1} parent=1 // pred_fallthru
      _
    // Predicated region
    $region1054: #{rnn_forward.1} parent=1 // pred_check
      %p1705 = pneg %p1701
    $region1055: #{rnn_forward.1} parent=1 // pred_check_branch
      %1707 = sbr.rel (%p1705) target = $region1057
    $region1056: #{rnn_forward.1} parent=1 // pred_region
      %s1708 = sshllo.u32 0, 1
      loop: start=0, step=1, limit=1
      $region1058: #{rnn_forward.1} parent=1056 // loop_pre_header
        _
      $region1059: #{rnn_forward.1} parent=1056 // loop_header
        %s1710 = sphi 0, %s1714
        %p1711 = scmp.ge.s32.totalorder %s1710, 1
        %s1715 = sphi %s1698, %s1698
        %s1716 = sphi %s1699, %s1699
      $region1060: #{rnn_forward.1} parent=1056 // loop_header_branch
        %1713 = sbr.rel (%p1711) target = $region1064
      $region1061: #{rnn_forward.1} parent=1056 // loop_body
        %v1717 = vld [vmem:[%s1715] sm:%s1708]
        %1718 = vst [vmem:[%s1716] sm:%s1708] %v1717
      $region1062: #{rnn_forward.1} parent=1056 // loop_footer
        %s1714 = sadd.s32 1, %s1710
      $region1063: #{rnn_forward.1} parent=1056 // loop_footer_branch
        %1709 = sbr.rel target = $region1059
      $region1064: #{rnn_forward.1} parent=1056 // loop_exit
        _
    $region1057: #{rnn_forward.1} parent=1 // pred_fallthru
      _
    // Predicated region
    $region1076: #{rnn_forward.1} parent=1 // pred_check
      _
    $region1077: #{rnn_forward.1} parent=1 // pred_check_branch
      %1742 = sbr.rel (0) target = $region1079
    $region1078: #{rnn_forward.1} parent=1 // pred_region
      %1743 = vsyncadd %s135, 16
    $region1079: #{rnn_forward.1} parent=1 // pred_fallthru
      _
    %s1744 = sshll.u32 %s420, 4
    %1745 = dma.done %s183, %s1744
    %s1746 = sld [smem:[#allocation4 + $0x1c]]
    %s1747 = scalar_lea.vmem %s1, %s1746
    %s1748 = scalar_lea.vmem [#allocation2], 35
    %p1750 = scmp.lt.u32.totalorder 1, 8
    %p1751 = pneg %p1750
    // Predicated region
    $region1080: #{rnn_forward.1} parent=1 // pred_check
      _
    $region1081: #{rnn_forward.1} parent=1 // pred_check_branch
      %1753 = sbr.rel (%p1750) target = $region1083
    $region1082: #{rnn_forward.1} parent=1 // pred_region
      %s1768 = sand.u32 1, 7
      %p1769 = scmp.eq.s32.totalorder %s1768, 0
      %p1770 = pneg %p1769
      // Predicated region
      $region1095: #{rnn_forward.1} parent=1082 // pred_check
        _
      $region1096: #{rnn_forward.1} parent=1082 // pred_check_branch
        %1772 = sbr.rel (%p1769) target = $region1098
      $region1097: #{rnn_forward.1} parent=1082 // pred_region
        %s1773 = sand.u32 1, 7
        %s1774 = ssub.s32 1, %s1773
        %s1775 = scalar_lea.vmem %s1747, %s1774
        %s1776 = ssub.s32 1, %s1773
        %s1777 = scalar_lea.vmem %s1748, %s1776 [#allocation2]
        %s1778 = sshllo.u32 0, %s1773
        loop: start=0, step=1, limit=1
        $region1099: #{rnn_forward.1} parent=1097 // loop_pre_header
          _
        $region1100: #{rnn_forward.1} parent=1097 // loop_header
          %s1780 = sphi 0, %s1784
          %p1781 = scmp.ge.s32.totalorder %s1780, 1
          %s1785 = sphi %s1775, %s1775
          %s1786 = sphi %s1777, %s1777
        $region1101: #{rnn_forward.1} parent=1097 // loop_header_branch
          %1783 = sbr.rel (%p1781) target = $region1105
        $region1102: #{rnn_forward.1} parent=1097 // loop_body
          %v1787 = vld [vmem:[%s1785] sm:%s1778]
          %1788 = vst [vmem:[%s1786] sm:%s1778] %v1787
        $region1103: #{rnn_forward.1} parent=1097 // loop_footer
          %s1784 = sadd.s32 1, %s1780
        $region1104: #{rnn_forward.1} parent=1097 // loop_footer_branch
          %1779 = sbr.rel target = $region1100
        $region1105: #{rnn_forward.1} parent=1097 // loop_exit
          _
      $region1098: #{rnn_forward.1} parent=1082 // pred_fallthru
        _
    $region1083: #{rnn_forward.1} parent=1 // pred_fallthru
      _
    // Predicated region
    $region1084: #{rnn_forward.1} parent=1 // pred_check
      %p1754 = pneg %p1750
    $region1085: #{rnn_forward.1} parent=1 // pred_check_branch
      %1756 = sbr.rel (%p1754) target = $region1087
    $region1086: #{rnn_forward.1} parent=1 // pred_region
      %s1757 = sshllo.u32 0, 1
      loop: start=0, step=1, limit=1
      $region1088: #{rnn_forward.1} parent=1086 // loop_pre_header
        _
      $region1089: #{rnn_forward.1} parent=1086 // loop_header
        %s1759 = sphi 0, %s1763
        %p1760 = scmp.ge.s32.totalorder %s1759, 1
        %s1764 = sphi %s1747, %s1747
        %s1765 = sphi %s1748, %s1748
      $region1090: #{rnn_forward.1} parent=1086 // loop_header_branch
        %1762 = sbr.rel (%p1760) target = $region1094
      $region1091: #{rnn_forward.1} parent=1086 // loop_body
        %v1766 = vld [vmem:[%s1764] sm:%s1757]
        %1767 = vst [vmem:[%s1765] sm:%s1757] %v1766
      $region1092: #{rnn_forward.1} parent=1086 // loop_footer
        %s1763 = sadd.s32 1, %s1759
      $region1093: #{rnn_forward.1} parent=1086 // loop_footer_branch
        %1758 = sbr.rel target = $region1089
      $region1094: #{rnn_forward.1} parent=1086 // loop_exit
        _
    $region1087: #{rnn_forward.1} parent=1 // pred_fallthru
      _
    // Predicated region
    $region1106: #{rnn_forward.1} parent=1 // pred_check
      _
    $region1107: #{rnn_forward.1} parent=1 // pred_check_branch
      %1791 = sbr.rel (0) target = $region1109
    $region1108: #{rnn_forward.1} parent=1 // pred_region
      %1792 = vsyncadd %s183, 16
    $region1109: #{rnn_forward.1} parent=1 // pred_fallthru
      _
    %s1793 = sshll.u32 %s420, 4
    %1794 = dma.done %s231, %s1793
    %s1795 = sld [smem:[#allocation4 + $0x24]]
    %s1796 = scalar_lea.vmem %s1, %s1795
    %s1797 = scalar_lea.vmem [#allocation2], 36
    %p1799 = scmp.lt.u32.totalorder 1, 8
    %p1800 = pneg %p1799
    // Predicated region
    $region1110: #{rnn_forward.1} parent=1 // pred_check
      _
    $region1111: #{rnn_forward.1} parent=1 // pred_check_branch
      %1802 = sbr.rel (%p1799) target = $region1113
    $region1112: #{rnn_forward.1} parent=1 // pred_region
      %s1817 = sand.u32 1, 7
      %p1818 = scmp.eq.s32.totalorder %s1817, 0
      %p1819 = pneg %p1818
      // Predicated region
      $region1125: #{rnn_forward.1} parent=1112 // pred_check
        _
      $region1126: #{rnn_forward.1} parent=1112 // pred_check_branch
        %1821 = sbr.rel (%p1818) target = $region1128
      $region1127: #{rnn_forward.1} parent=1112 // pred_region
        %s1822 = sand.u32 1, 7
        %s1823 = ssub.s32 1, %s1822
        %s1824 = scalar_lea.vmem %s1796, %s1823
        %s1825 = ssub.s32 1, %s1822
        %s1826 = scalar_lea.vmem %s1797, %s1825 [#allocation2]
        %s1827 = sshllo.u32 0, %s1822
        loop: start=0, step=1, limit=1
        $region1129: #{rnn_forward.1} parent=1127 // loop_pre_header
          _
        $region1130: #{rnn_forward.1} parent=1127 // loop_header
          %s1829 = sphi 0, %s1833
          %p1830 = scmp.ge.s32.totalorder %s1829, 1
          %s1834 = sphi %s1824, %s1824
          %s1835 = sphi %s1826, %s1826
        $region1131: #{rnn_forward.1} parent=1127 // loop_header_branch
          %1832 = sbr.rel (%p1830) target = $region1135
        $region1132: #{rnn_forward.1} parent=1127 // loop_body
          %v1836 = vld [vmem:[%s1834] sm:%s1827]
          %1837 = vst [vmem:[%s1835] sm:%s1827] %v1836
        $region1133: #{rnn_forward.1} parent=1127 // loop_footer
          %s1833 = sadd.s32 1, %s1829
        $region1134: #{rnn_forward.1} parent=1127 // loop_footer_branch
          %1828 = sbr.rel target = $region1130
        $region1135: #{rnn_forward.1} parent=1127 // loop_exit
          _
      $region1128: #{rnn_forward.1} parent=1112 // pred_fallthru
        _
    $region1113: #{rnn_forward.1} parent=1 // pred_fallthru
      _
    // Predicated region
    $region1114: #{rnn_forward.1} parent=1 // pred_check
      %p1803 = pneg %p1799
    $region1115: #{rnn_forward.1} parent=1 // pred_check_branch
      %1805 = sbr.rel (%p1803) target = $region1117
    $region1116: #{rnn_forward.1} parent=1 // pred_region
      %s1806 = sshllo.u32 0, 1
      loop: start=0, step=1, limit=1
      $region1118: #{rnn_forward.1} parent=1116 // loop_pre_header
        _
      $region1119: #{rnn_forward.1} parent=1116 // loop_header
        %s1808 = sphi 0, %s1812
        %p1809 = scmp.ge.s32.totalorder %s1808, 1
        %s1813 = sphi %s1796, %s1796
        %s1814 = sphi %s1797, %s1797
      $region1120: #{rnn_forward.1} parent=1116 // loop_header_branch
        %1811 = sbr.rel (%p1809) target = $region1124
      $region1121: #{rnn_forward.1} parent=1116 // loop_body
        %v1815 = vld [vmem:[%s1813] sm:%s1806]
        %1816 = vst [vmem:[%s1814] sm:%s1806] %v1815
      $region1122: #{rnn_forward.1} parent=1116 // loop_footer
        %s1812 = sadd.s32 1, %s1808
      $region1123: #{rnn_forward.1} parent=1116 // loop_footer_branch
        %1807 = sbr.rel target = $region1119
      $region1124: #{rnn_forward.1} parent=1116 // loop_exit
        _
    $region1117: #{rnn_forward.1} parent=1 // pred_fallthru
      _
    // Predicated region
    $region1136: #{rnn_forward.1} parent=1 // pred_check
      _
    $region1137: #{rnn_forward.1} parent=1 // pred_check_branch
      %1840 = sbr.rel (0) target = $region1139
    $region1138: #{rnn_forward.1} parent=1 // pred_region
      %1841 = vsyncadd %s231, 16
    $region1139: #{rnn_forward.1} parent=1 // pred_fallthru
      _
    %s1842 = sshll.u32 %s420, 4
    %1843 = dma.done %s279, %s1842
    %s1844 = sld [smem:[#allocation4 + $0x2c]]
    %s1845 = scalar_lea.vmem %s1, %s1844
    %s1846 = scalar_lea.vmem [#allocation2], 37
    %p1848 = scmp.lt.u32.totalorder 1, 8
    %p1849 = pneg %p1848
    // Predicated region
    $region1140: #{rnn_forward.1} parent=1 // pred_check
      _
    $region1141: #{rnn_forward.1} parent=1 // pred_check_branch
      %1851 = sbr.rel (%p1848) target = $region1143
    $region1142: #{rnn_forward.1} parent=1 // pred_region
      %s1866 = sand.u32 1, 7
      %p1867 = scmp.eq.s32.totalorder %s1866, 0
      %p1868 = pneg %p1867
      // Predicated region
      $region1155: #{rnn_forward.1} parent=1142 // pred_check
        _
      $region1156: #{rnn_forward.1} parent=1142 // pred_check_branch
        %1870 = sbr.rel (%p1867) target = $region1158
      $region1157: #{rnn_forward.1} parent=1142 // pred_region
        %s1871 = sand.u32 1, 7
        %s1872 = ssub.s32 1, %s1871
        %s1873 = scalar_lea.vmem %s1845, %s1872
        %s1874 = ssub.s32 1, %s1871
        %s1875 = scalar_lea.vmem %s1846, %s1874 [#allocation2]
        %s1876 = sshllo.u32 0, %s1871
        loop: start=0, step=1, limit=1
        $region1159: #{rnn_forward.1} parent=1157 // loop_pre_header
          _
        $region1160: #{rnn_forward.1} parent=1157 // loop_header
          %s1878 = sphi 0, %s1882
          %p1879 = scmp.ge.s32.totalorder %s1878, 1
          %s1883 = sphi %s1873, %s1873
          %s1884 = sphi %s1875, %s1875
        $region1161: #{rnn_forward.1} parent=1157 // loop_header_branch
          %1881 = sbr.rel (%p1879) target = $region1165
        $region1162: #{rnn_forward.1} parent=1157 // loop_body
          %v1885 = vld [vmem:[%s1883] sm:%s1876]
          %1886 = vst [vmem:[%s1884] sm:%s1876] %v1885
        $region1163: #{rnn_forward.1} parent=1157 // loop_footer
          %s1882 = sadd.s32 1, %s1878
        $region1164: #{rnn_forward.1} parent=1157 // loop_footer_branch
          %1877 = sbr.rel target = $region1160
        $region1165: #{rnn_forward.1} parent=1157 // loop_exit
          _
      $region1158: #{rnn_forward.1} parent=1142 // pred_fallthru
        _
    $region1143: #{rnn_forward.1} parent=1 // pred_fallthru
      _
    // Predicated region
    $region1144: #{rnn_forward.1} parent=1 // pred_check
      %p1852 = pneg %p1848
    $region1145: #{rnn_forward.1} parent=1 // pred_check_branch
      %1854 = sbr.rel (%p1852) target = $region1147
    $region1146: #{rnn_forward.1} parent=1 // pred_region
      %s1855 = sshllo.u32 0, 1
      loop: start=0, step=1, limit=1
      $region1148: #{rnn_forward.1} parent=1146 // loop_pre_header
        _
      $region1149: #{rnn_forward.1} parent=1146 // loop_header
        %s1857 = sphi 0, %s1861
        %p1858 = scmp.ge.s32.totalorder %s1857, 1
        %s1862 = sphi %s1845, %s1845
        %s1863 = sphi %s1846, %s1846
      $region1150: #{rnn_forward.1} parent=1146 // loop_header_branch
        %1860 = sbr.rel (%p1858) target = $region1154
      $region1151: #{rnn_forward.1} parent=1146 // loop_body
        %v1864 = vld [vmem:[%s1862] sm:%s1855]
        %1865 = vst [vmem:[%s1863] sm:%s1855] %v1864
      $region1152: #{rnn_forward.1} parent=1146 // loop_footer
        %s1861 = sadd.s32 1, %s1857
      $region1153: #{rnn_forward.1} parent=1146 // loop_footer_branch
        %1856 = sbr.rel target = $region1149
      $region1154: #{rnn_forward.1} parent=1146 // loop_exit
        _
    $region1147: #{rnn_forward.1} parent=1 // pred_fallthru
      _
    // Predicated region
    $region1166: #{rnn_forward.1} parent=1 // pred_check
      _
    $region1167: #{rnn_forward.1} parent=1 // pred_check_branch
      %1889 = sbr.rel (0) target = $region1169
    $region1168: #{rnn_forward.1} parent=1 // pred_region
      %1890 = vsyncadd %s279, 16
    $region1169: #{rnn_forward.1} parent=1 // pred_fallthru
      _
    %s1891 = sshll.u32 %s420, 4
    %1892 = dma.done %s327, %s1891
    %s1893 = sld [smem:[#allocation4 + $0x34]]
    %s1894 = scalar_lea.vmem %s1, %s1893
    %s1895 = scalar_lea.vmem [#allocation2], 38
    %p1897 = scmp.lt.u32.totalorder 1, 8
    %p1898 = pneg %p1897
    // Predicated region
    $region1170: #{rnn_forward.1} parent=1 // pred_check
      _
    $region1171: #{rnn_forward.1} parent=1 // pred_check_branch
      %1900 = sbr.rel (%p1897) target = $region1173
    $region1172: #{rnn_forward.1} parent=1 // pred_region
      %s1915 = sand.u32 1, 7
      %p1916 = scmp.eq.s32.totalorder %s1915, 0
      %p1917 = pneg %p1916
      // Predicated region
      $region1185: #{rnn_forward.1} parent=1172 // pred_check
        _
      $region1186: #{rnn_forward.1} parent=1172 // pred_check_branch
        %1919 = sbr.rel (%p1916) target = $region1188
      $region1187: #{rnn_forward.1} parent=1172 // pred_region
        %s1920 = sand.u32 1, 7
        %s1921 = ssub.s32 1, %s1920
        %s1922 = scalar_lea.vmem %s1894, %s1921
        %s1923 = ssub.s32 1, %s1920
        %s1924 = scalar_lea.vmem %s1895, %s1923 [#allocation2]
        %s1925 = sshllo.u32 0, %s1920
        loop: start=0, step=1, limit=1
        $region1189: #{rnn_forward.1} parent=1187 // loop_pre_header
          _
        $region1190: #{rnn_forward.1} parent=1187 // loop_header
          %s1927 = sphi 0, %s1931
          %p1928 = scmp.ge.s32.totalorder %s1927, 1
          %s1932 = sphi %s1922, %s1922
          %s1933 = sphi %s1924, %s1924
        $region1191: #{rnn_forward.1} parent=1187 // loop_header_branch
          %1930 = sbr.rel (%p1928) target = $region1195
        $region1192: #{rnn_forward.1} parent=1187 // loop_body
          %v1934 = vld [vmem:[%s1932] sm:%s1925]
          %1935 = vst [vmem:[%s1933] sm:%s1925] %v1934
        $region1193: #{rnn_forward.1} parent=1187 // loop_footer
          %s1931 = sadd.s32 1, %s1927
        $region1194: #{rnn_forward.1} parent=1187 // loop_footer_branch
          %1926 = sbr.rel target = $region1190
        $region1195: #{rnn_forward.1} parent=1187 // loop_exit
          _
      $region1188: #{rnn_forward.1} parent=1172 // pred_fallthru
        _
    $region1173: #{rnn_forward.1} parent=1 // pred_fallthru
      _
    // Predicated region
    $region1174: #{rnn_forward.1} parent=1 // pred_check
      %p1901 = pneg %p1897
    $region1175: #{rnn_forward.1} parent=1 // pred_check_branch
      %1903 = sbr.rel (%p1901) target = $region1177
    $region1176: #{rnn_forward.1} parent=1 // pred_region
      %s1904 = sshllo.u32 0, 1
      loop: start=0, step=1, limit=1
      $region1178: #{rnn_forward.1} parent=1176 // loop_pre_header
        _
      $region1179: #{rnn_forward.1} parent=1176 // loop_header
        %s1906 = sphi 0, %s1910
        %p1907 = scmp.ge.s32.totalorder %s1906, 1
        %s1911 = sphi %s1894, %s1894
        %s1912 = sphi %s1895, %s1895
      $region1180: #{rnn_forward.1} parent=1176 // loop_header_branch
        %1909 = sbr.rel (%p1907) target = $region1184
      $region1181: #{rnn_forward.1} parent=1176 // loop_body
        %v1913 = vld [vmem:[%s1911] sm:%s1904]
        %1914 = vst [vmem:[%s1912] sm:%s1904] %v1913
      $region1182: #{rnn_forward.1} parent=1176 // loop_footer
        %s1910 = sadd.s32 1, %s1906
      $region1183: #{rnn_forward.1} parent=1176 // loop_footer_branch
        %1905 = sbr.rel target = $region1179
      $region1184: #{rnn_forward.1} parent=1176 // loop_exit
        _
    $region1177: #{rnn_forward.1} parent=1 // pred_fallthru
      _
    // Predicated region
    $region1196: #{rnn_forward.1} parent=1 // pred_check
      _
    $region1197: #{rnn_forward.1} parent=1 // pred_check_branch
      %1938 = sbr.rel (0) target = $region1199
    $region1198: #{rnn_forward.1} parent=1 // pred_region
      %1939 = vsyncadd %s327, 16
    $region1199: #{rnn_forward.1} parent=1 // pred_fallthru
      _
    %s1940 = sshll.u32 %s420, 4
    %1941 = dma.done %s375, %s1940
    %s1942 = sld [smem:[#allocation4 + $0x3c]]
    %s1943 = scalar_lea.vmem %s1, %s1942
    %s1944 = scalar_lea.vmem [#allocation2], 39
    %p1946 = scmp.lt.u32.totalorder 1, 8
    %p1947 = pneg %p1946
    // Predicated region
    $region1200: #{rnn_forward.1} parent=1 // pred_check
      _
    $region1201: #{rnn_forward.1} parent=1 // pred_check_branch
      %1949 = sbr.rel (%p1946) target = $region1203
    $region1202: #{rnn_forward.1} parent=1 // pred_region
      %s1964 = sand.u32 1, 7
      %p1965 = scmp.eq.s32.totalorder %s1964, 0
      %p1966 = pneg %p1965
      // Predicated region
      $region1215: #{rnn_forward.1} parent=1202 // pred_check
        _
      $region1216: #{rnn_forward.1} parent=1202 // pred_check_branch
        %1968 = sbr.rel (%p1965) target = $region1218
      $region1217: #{rnn_forward.1} parent=1202 // pred_region
        %s1969 = sand.u32 1, 7
        %s1970 = ssub.s32 1, %s1969
        %s1971 = scalar_lea.vmem %s1943, %s1970
        %s1972 = ssub.s32 1, %s1969
        %s1973 = scalar_lea.vmem %s1944, %s1972 [#allocation2]
        %s1974 = sshllo.u32 0, %s1969
        loop: start=0, step=1, limit=1
        $region1219: #{rnn_forward.1} parent=1217 // loop_pre_header
          _
        $region1220: #{rnn_forward.1} parent=1217 // loop_header
          %s1976 = sphi 0, %s1980
          %p1977 = scmp.ge.s32.totalorder %s1976, 1
          %s1981 = sphi %s1971, %s1971
          %s1982 = sphi %s1973, %s1973
        $region1221: #{rnn_forward.1} parent=1217 // loop_header_branch
          %1979 = sbr.rel (%p1977) target = $region1225
        $region1222: #{rnn_forward.1} parent=1217 // loop_body
          %v1983 = vld [vmem:[%s1981] sm:%s1974]
          %1984 = vst [vmem:[%s1982] sm:%s1974] %v1983
        $region1223: #{rnn_forward.1} parent=1217 // loop_footer
          %s1980 = sadd.s32 1, %s1976
        $region1224: #{rnn_forward.1} parent=1217 // loop_footer_branch
          %1975 = sbr.rel target = $region1220
        $region1225: #{rnn_forward.1} parent=1217 // loop_exit
          _
      $region1218: #{rnn_forward.1} parent=1202 // pred_fallthru
        _
    $region1203: #{rnn_forward.1} parent=1 // pred_fallthru
      _
    // Predicated region
    $region1204: #{rnn_forward.1} parent=1 // pred_check
      %p1950 = pneg %p1946
    $region1205: #{rnn_forward.1} parent=1 // pred_check_branch
      %1952 = sbr.rel (%p1950) target = $region1207
    $region1206: #{rnn_forward.1} parent=1 // pred_region
      %s1953 = sshllo.u32 0, 1
      loop: start=0, step=1, limit=1
      $region1208: #{rnn_forward.1} parent=1206 // loop_pre_header
        _
      $region1209: #{rnn_forward.1} parent=1206 // loop_header
        %s1955 = sphi 0, %s1959
        %p1956 = scmp.ge.s32.totalorder %s1955, 1
        %s1960 = sphi %s1943, %s1943
        %s1961 = sphi %s1944, %s1944
      $region1210: #{rnn_forward.1} parent=1206 // loop_header_branch
        %1958 = sbr.rel (%p1956) target = $region1214
      $region1211: #{rnn_forward.1} parent=1206 // loop_body
        %v1962 = vld [vmem:[%s1960] sm:%s1953]
        %1963 = vst [vmem:[%s1961] sm:%s1953] %v1962
      $region1212: #{rnn_forward.1} parent=1206 // loop_footer
        %s1959 = sadd.s32 1, %s1955
      $region1213: #{rnn_forward.1} parent=1206 // loop_footer_branch
        %1954 = sbr.rel target = $region1209
      $region1214: #{rnn_forward.1} parent=1206 // loop_exit
        _
    $region1207: #{rnn_forward.1} parent=1 // pred_fallthru
      _
    // Predicated region
    $region1226: #{rnn_forward.1} parent=1 // pred_check
      _
    $region1227: #{rnn_forward.1} parent=1 // pred_check_branch
      %1987 = sbr.rel (0) target = $region1229
    $region1228: #{rnn_forward.1} parent=1 // pred_region
      %1988 = vsyncadd %s375, 16
    $region1229: #{rnn_forward.1} parent=1 // pred_fallthru
      _
    %s1989 = sshll.u32 %s420, 4
    %1990 = dma.done [#allocation3], %s1989
    %s1991 = sld [smem:[#allocation4 + $0x5]]
    %s1992 = scalar_lea.vmem %s1, %s1991
    %s1993 = scalar_lea.vmem [#allocation2], 40
    %p1995 = scmp.lt.u32.totalorder 1, 8
    %p1996 = pneg %p1995
    // Predicated region
    $region1230: #{rnn_forward.1} parent=1 // pred_check
      _
    $region1231: #{rnn_forward.1} parent=1 // pred_check_branch
      %1998 = sbr.rel (%p1995) target = $region1233
    $region1232: #{rnn_forward.1} parent=1 // pred_region
      %s2013 = sand.u32 1, 7
      %p2014 = scmp.eq.s32.totalorder %s2013, 0
      %p2015 = pneg %p2014
      // Predicated region
      $region1245: #{rnn_forward.1} parent=1232 // pred_check
        _
      $region1246: #{rnn_forward.1} parent=1232 // pred_check_branch
        %2017 = sbr.rel (%p2014) target = $region1248
      $region1247: #{rnn_forward.1} parent=1232 // pred_region
        %s2018 = sand.u32 1, 7
        %s2019 = ssub.s32 1, %s2018
        %s2020 = scalar_lea.vmem %s1992, %s2019
        %s2021 = ssub.s32 1, %s2018
        %s2022 = scalar_lea.vmem %s1993, %s2021 [#allocation2]
        %s2023 = sshllo.u32 0, %s2018
        loop: start=0, step=1, limit=1
        $region1249: #{rnn_forward.1} parent=1247 // loop_pre_header
          _
        $region1250: #{rnn_forward.1} parent=1247 // loop_header
          %s2025 = sphi 0, %s2029
          %p2026 = scmp.ge.s32.totalorder %s2025, 1
          %s2030 = sphi %s2020, %s2020
          %s2031 = sphi %s2022, %s2022
        $region1251: #{rnn_forward.1} parent=1247 // loop_header_branch
          %2028 = sbr.rel (%p2026) target = $region1255
        $region1252: #{rnn_forward.1} parent=1247 // loop_body
          %v2032 = vld [vmem:[%s2030] sm:%s2023]
          %2033 = vst [vmem:[%s2031] sm:%s2023] %v2032
        $region1253: #{rnn_forward.1} parent=1247 // loop_footer
          %s2029 = sadd.s32 1, %s2025
        $region1254: #{rnn_forward.1} parent=1247 // loop_footer_branch
          %2024 = sbr.rel target = $region1250
        $region1255: #{rnn_forward.1} parent=1247 // loop_exit
          _
      $region1248: #{rnn_forward.1} parent=1232 // pred_fallthru
        _
    $region1233: #{rnn_forward.1} parent=1 // pred_fallthru
      _
    // Predicated region
    $region1234: #{rnn_forward.1} parent=1 // pred_check
      %p1999 = pneg %p1995
    $region1235: #{rnn_forward.1} parent=1 // pred_check_branch
      %2001 = sbr.rel (%p1999) target = $region1237
    $region1236: #{rnn_forward.1} parent=1 // pred_region
      %s2002 = sshllo.u32 0, 1
      loop: start=0, step=1, limit=1
      $region1238: #{rnn_forward.1} parent=1236 // loop_pre_header
        _
      $region1239: #{rnn_forward.1} parent=1236 // loop_header
        %s2004 = sphi 0, %s2008
        %p2005 = scmp.ge.s32.totalorder %s2004, 1
        %s2009 = sphi %s1992, %s1992
        %s2010 = sphi %s1993, %s1993
      $region1240: #{rnn_forward.1} parent=1236 // loop_header_branch
        %2007 = sbr.rel (%p2005) target = $region1244
      $region1241: #{rnn_forward.1} parent=1236 // loop_body
        %v2011 = vld [vmem:[%s2009] sm:%s2002]
        %2012 = vst [vmem:[%s2010] sm:%s2002] %v2011
      $region1242: #{rnn_forward.1} parent=1236 // loop_footer
        %s2008 = sadd.s32 1, %s2004
      $region1243: #{rnn_forward.1} parent=1236 // loop_footer_branch
        %2003 = sbr.rel target = $region1239
      $region1244: #{rnn_forward.1} parent=1236 // loop_exit
        _
    $region1237: #{rnn_forward.1} parent=1 // pred_fallthru
      _
    // Predicated region
    $region1256: #{rnn_forward.1} parent=1 // pred_check
      _
    $region1257: #{rnn_forward.1} parent=1 // pred_check_branch
      %2036 = sbr.rel (0) target = $region1259
    $region1258: #{rnn_forward.1} parent=1 // pred_region
      %2037 = vsyncadd [#allocation3], 16
    $region1259: #{rnn_forward.1} parent=1 // pred_fallthru
      _
    %s2038 = sshll.u32 %s420, 4
    %2039 = dma.done %s87, %s2038
    %s2040 = sld [smem:[#allocation4 + $0xd]]
    %s2041 = scalar_lea.vmem %s1, %s2040
    %s2042 = scalar_lea.vmem [#allocation2], 41
    %p2044 = scmp.lt.u32.totalorder 1, 8
    %p2045 = pneg %p2044
    // Predicated region
    $region1260: #{rnn_forward.1} parent=1 // pred_check
      _
    $region1261: #{rnn_forward.1} parent=1 // pred_check_branch
      %2047 = sbr.rel (%p2044) target = $region1263
    $region1262: #{rnn_forward.1} parent=1 // pred_region
      %s2062 = sand.u32 1, 7
      %p2063 = scmp.eq.s32.totalorder %s2062, 0
      %p2064 = pneg %p2063
      // Predicated region
      $region1275: #{rnn_forward.1} parent=1262 // pred_check
        _
      $region1276: #{rnn_forward.1} parent=1262 // pred_check_branch
        %2066 = sbr.rel (%p2063) target = $region1278
      $region1277: #{rnn_forward.1} parent=1262 // pred_region
        %s2067 = sand.u32 1, 7
        %s2068 = ssub.s32 1, %s2067
        %s2069 = scalar_lea.vmem %s2041, %s2068
        %s2070 = ssub.s32 1, %s2067
        %s2071 = scalar_lea.vmem %s2042, %s2070 [#allocation2]
        %s2072 = sshllo.u32 0, %s2067
        loop: start=0, step=1, limit=1
        $region1279: #{rnn_forward.1} parent=1277 // loop_pre_header
          _
        $region1280: #{rnn_forward.1} parent=1277 // loop_header
          %s2074 = sphi 0, %s2078
          %p2075 = scmp.ge.s32.totalorder %s2074, 1
          %s2079 = sphi %s2069, %s2069
          %s2080 = sphi %s2071, %s2071
        $region1281: #{rnn_forward.1} parent=1277 // loop_header_branch
          %2077 = sbr.rel (%p2075) target = $region1285
        $region1282: #{rnn_forward.1} parent=1277 // loop_body
          %v2081 = vld [vmem:[%s2079] sm:%s2072]
          %2082 = vst [vmem:[%s2080] sm:%s2072] %v2081
        $region1283: #{rnn_forward.1} parent=1277 // loop_footer
          %s2078 = sadd.s32 1, %s2074
        $region1284: #{rnn_forward.1} parent=1277 // loop_footer_branch
          %2073 = sbr.rel target = $region1280
        $region1285: #{rnn_forward.1} parent=1277 // loop_exit
          _
      $region1278: #{rnn_forward.1} parent=1262 // pred_fallthru
        _
    $region1263: #{rnn_forward.1} parent=1 // pred_fallthru
      _
    // Predicated region
    $region1264: #{rnn_forward.1} parent=1 // pred_check
      %p2048 = pneg %p2044
    $region1265: #{rnn_forward.1} parent=1 // pred_check_branch
      %2050 = sbr.rel (%p2048) target = $region1267
    $region1266: #{rnn_forward.1} parent=1 // pred_region
      %s2051 = sshllo.u32 0, 1
      loop: start=0, step=1, limit=1
      $region1268: #{rnn_forward.1} parent=1266 // loop_pre_header
        _
      $region1269: #{rnn_forward.1} parent=1266 // loop_header
        %s2053 = sphi 0, %s2057
        %p2054 = scmp.ge.s32.totalorder %s2053, 1
        %s2058 = sphi %s2041, %s2041
        %s2059 = sphi %s2042, %s2042
      $region1270: #{rnn_forward.1} parent=1266 // loop_header_branch
        %2056 = sbr.rel (%p2054) target = $region1274
      $region1271: #{rnn_forward.1} parent=1266 // loop_body
        %v2060 = vld [vmem:[%s2058] sm:%s2051]
        %2061 = vst [vmem:[%s2059] sm:%s2051] %v2060
      $region1272: #{rnn_forward.1} parent=1266 // loop_footer
        %s2057 = sadd.s32 1, %s2053
      $region1273: #{rnn_forward.1} parent=1266 // loop_footer_branch
        %2052 = sbr.rel target = $region1269
      $region1274: #{rnn_forward.1} parent=1266 // loop_exit
        _
    $region1267: #{rnn_forward.1} parent=1 // pred_fallthru
      _
    // Predicated region
    $region1286: #{rnn_forward.1} parent=1 // pred_check
      _
    $region1287: #{rnn_forward.1} parent=1 // pred_check_branch
      %2085 = sbr.rel (0) target = $region1289
    $region1288: #{rnn_forward.1} parent=1 // pred_region
      %2086 = vsyncadd %s87, 16
    $region1289: #{rnn_forward.1} parent=1 // pred_fallthru
      _
    %s2087 = sshll.u32 %s420, 4
    %2088 = dma.done %s135, %s2087
    %s2089 = sld [smem:[#allocation4 + $0x15]]
    %s2090 = scalar_lea.vmem %s1, %s2089
    %s2091 = scalar_lea.vmem [#allocation2], 42
    %p2093 = scmp.lt.u32.totalorder 1, 8
    %p2094 = pneg %p2093
    // Predicated region
    $region1290: #{rnn_forward.1} parent=1 // pred_check
      _
    $region1291: #{rnn_forward.1} parent=1 // pred_check_branch
      %2096 = sbr.rel (%p2093) target = $region1293
    $region1292: #{rnn_forward.1} parent=1 // pred_region
      %s2111 = sand.u32 1, 7
      %p2112 = scmp.eq.s32.totalorder %s2111, 0
      %p2113 = pneg %p2112
      // Predicated region
      $region1305: #{rnn_forward.1} parent=1292 // pred_check
        _
      $region1306: #{rnn_forward.1} parent=1292 // pred_check_branch
        %2115 = sbr.rel (%p2112) target = $region1308
      $region1307: #{rnn_forward.1} parent=1292 // pred_region
        %s2116 = sand.u32 1, 7
        %s2117 = ssub.s32 1, %s2116
        %s2118 = scalar_lea.vmem %s2090, %s2117
        %s2119 = ssub.s32 1, %s2116
        %s2120 = scalar_lea.vmem %s2091, %s2119 [#allocation2]
        %s2121 = sshllo.u32 0, %s2116
        loop: start=0, step=1, limit=1
        $region1309: #{rnn_forward.1} parent=1307 // loop_pre_header
          _
        $region1310: #{rnn_forward.1} parent=1307 // loop_header
          %s2123 = sphi 0, %s2127
          %p2124 = scmp.ge.s32.totalorder %s2123, 1
          %s2128 = sphi %s2118, %s2118
          %s2129 = sphi %s2120, %s2120
        $region1311: #{rnn_forward.1} parent=1307 // loop_header_branch
          %2126 = sbr.rel (%p2124) target = $region1315
        $region1312: #{rnn_forward.1} parent=1307 // loop_body
          %v2130 = vld [vmem:[%s2128] sm:%s2121]
          %2131 = vst [vmem:[%s2129] sm:%s2121] %v2130
        $region1313: #{rnn_forward.1} parent=1307 // loop_footer
          %s2127 = sadd.s32 1, %s2123
        $region1314: #{rnn_forward.1} parent=1307 // loop_footer_branch
          %2122 = sbr.rel target = $region1310
        $region1315: #{rnn_forward.1} parent=1307 // loop_exit
          _
      $region1308: #{rnn_forward.1} parent=1292 // pred_fallthru
        _
    $region1293: #{rnn_forward.1} parent=1 // pred_fallthru
      _
    // Predicated region
    $region1294: #{rnn_forward.1} parent=1 // pred_check
      %p2097 = pneg %p2093
    $region1295: #{rnn_forward.1} parent=1 // pred_check_branch
      %2099 = sbr.rel (%p2097) target = $region1297
    $region1296: #{rnn_forward.1} parent=1 // pred_region
      %s2100 = sshllo.u32 0, 1
      loop: start=0, step=1, limit=1
      $region1298: #{rnn_forward.1} parent=1296 // loop_pre_header
        _
      $region1299: #{rnn_forward.1} parent=1296 // loop_header
        %s2102 = sphi 0, %s2106
        %p2103 = scmp.ge.s32.totalorder %s2102, 1
        %s2107 = sphi %s2090, %s2090
        %s2108 = sphi %s2091, %s2091
      $region1300: #{rnn_forward.1} parent=1296 // loop_header_branch
        %2105 = sbr.rel (%p2103) target = $region1304
      $region1301: #{rnn_forward.1} parent=1296 // loop_body
        %v2109 = vld [vmem:[%s2107] sm:%s2100]
        %2110 = vst [vmem:[%s2108] sm:%s2100] %v2109
      $region1302: #{rnn_forward.1} parent=1296 // loop_footer
        %s2106 = sadd.s32 1, %s2102
      $region1303: #{rnn_forward.1} parent=1296 // loop_footer_branch
        %2101 = sbr.rel target = $region1299
      $region1304: #{rnn_forward.1} parent=1296 // loop_exit
        _
    $region1297: #{rnn_forward.1} parent=1 // pred_fallthru
      _
    // Predicated region
    $region1316: #{rnn_forward.1} parent=1 // pred_check
      _
    $region1317: #{rnn_forward.1} parent=1 // pred_check_branch
      %2134 = sbr.rel (0) target = $region1319
    $region1318: #{rnn_forward.1} parent=1 // pred_region
      %2135 = vsyncadd %s135, 16
    $region1319: #{rnn_forward.1} parent=1 // pred_fallthru
      _
    %s2136 = sshll.u32 %s420, 4
    %2137 = dma.done %s183, %s2136
    %s2138 = sld [smem:[#allocation4 + $0x1d]]
    %s2139 = scalar_lea.vmem %s1, %s2138
    %s2140 = scalar_lea.vmem [#allocation2], 43
    %p2142 = scmp.lt.u32.totalorder 1, 8
    %p2143 = pneg %p2142
    // Predicated region
    $region1320: #{rnn_forward.1} parent=1 // pred_check
      _
    $region1321: #{rnn_forward.1} parent=1 // pred_check_branch
      %2145 = sbr.rel (%p2142) target = $region1323
    $region1322: #{rnn_forward.1} parent=1 // pred_region
      %s2160 = sand.u32 1, 7
      %p2161 = scmp.eq.s32.totalorder %s2160, 0
      %p2162 = pneg %p2161
      // Predicated region
      $region1335: #{rnn_forward.1} parent=1322 // pred_check
        _
      $region1336: #{rnn_forward.1} parent=1322 // pred_check_branch
        %2164 = sbr.rel (%p2161) target = $region1338
      $region1337: #{rnn_forward.1} parent=1322 // pred_region
        %s2165 = sand.u32 1, 7
        %s2166 = ssub.s32 1, %s2165
        %s2167 = scalar_lea.vmem %s2139, %s2166
        %s2168 = ssub.s32 1, %s2165
        %s2169 = scalar_lea.vmem %s2140, %s2168 [#allocation2]
        %s2170 = sshllo.u32 0, %s2165
        loop: start=0, step=1, limit=1
        $region1339: #{rnn_forward.1} parent=1337 // loop_pre_header
          _
        $region1340: #{rnn_forward.1} parent=1337 // loop_header
          %s2172 = sphi 0, %s2176
          %p2173 = scmp.ge.s32.totalorder %s2172, 1
          %s2177 = sphi %s2167, %s2167
          %s2178 = sphi %s2169, %s2169
        $region1341: #{rnn_forward.1} parent=1337 // loop_header_branch
          %2175 = sbr.rel (%p2173) target = $region1345
        $region1342: #{rnn_forward.1} parent=1337 // loop_body
          %v2179 = vld [vmem:[%s2177] sm:%s2170]
          %2180 = vst [vmem:[%s2178] sm:%s2170] %v2179
        $region1343: #{rnn_forward.1} parent=1337 // loop_footer
          %s2176 = sadd.s32 1, %s2172
        $region1344: #{rnn_forward.1} parent=1337 // loop_footer_branch
          %2171 = sbr.rel target = $region1340
        $region1345: #{rnn_forward.1} parent=1337 // loop_exit
          _
      $region1338: #{rnn_forward.1} parent=1322 // pred_fallthru
        _
    $region1323: #{rnn_forward.1} parent=1 // pred_fallthru
      _
    // Predicated region
    $region1324: #{rnn_forward.1} parent=1 // pred_check
      %p2146 = pneg %p2142
    $region1325: #{rnn_forward.1} parent=1 // pred_check_branch
      %2148 = sbr.rel (%p2146) target = $region1327
    $region1326: #{rnn_forward.1} parent=1 // pred_region
      %s2149 = sshllo.u32 0, 1
      loop: start=0, step=1, limit=1
      $region1328: #{rnn_forward.1} parent=1326 // loop_pre_header
        _
      $region1329: #{rnn_forward.1} parent=1326 // loop_header
        %s2151 = sphi 0, %s2155
        %p2152 = scmp.ge.s32.totalorder %s2151, 1
        %s2156 = sphi %s2139, %s2139
        %s2157 = sphi %s2140, %s2140
      $region1330: #{rnn_forward.1} parent=1326 // loop_header_branch
        %2154 = sbr.rel (%p2152) target = $region1334
      $region1331: #{rnn_forward.1} parent=1326 // loop_body
        %v2158 = vld [vmem:[%s2156] sm:%s2149]
        %2159 = vst [vmem:[%s2157] sm:%s2149] %v2158
      $region1332: #{rnn_forward.1} parent=1326 // loop_footer
        %s2155 = sadd.s32 1, %s2151
      $region1333: #{rnn_forward.1} parent=1326 // loop_footer_branch
        %2150 = sbr.rel target = $region1329
      $region1334: #{rnn_forward.1} parent=1326 // loop_exit
        _
    $region1327: #{rnn_forward.1} parent=1 // pred_fallthru
      _
    // Predicated region
    $region1346: #{rnn_forward.1} parent=1 // pred_check
      _
    $region1347: #{rnn_forward.1} parent=1 // pred_check_branch
      %2183 = sbr.rel (0) target = $region1349
    $region1348: #{rnn_forward.1} parent=1 // pred_region
      %2184 = vsyncadd %s183, 16
    $region1349: #{rnn_forward.1} parent=1 // pred_fallthru
      _
    %s2185 = sshll.u32 %s420, 4
    %2186 = dma.done %s231, %s2185
    %s2187 = sld [smem:[#allocation4 + $0x25]]
    %s2188 = scalar_lea.vmem %s1, %s2187
    %s2189 = scalar_lea.vmem [#allocation2], 44
    %p2191 = scmp.lt.u32.totalorder 1, 8
    %p2192 = pneg %p2191
    // Predicated region
    $region1350: #{rnn_forward.1} parent=1 // pred_check
      _
    $region1351: #{rnn_forward.1} parent=1 // pred_check_branch
      %2194 = sbr.rel (%p2191) target = $region1353
    $region1352: #{rnn_forward.1} parent=1 // pred_region
      %s2209 = sand.u32 1, 7
      %p2210 = scmp.eq.s32.totalorder %s2209, 0
      %p2211 = pneg %p2210
      // Predicated region
      $region1365: #{rnn_forward.1} parent=1352 // pred_check
        _
      $region1366: #{rnn_forward.1} parent=1352 // pred_check_branch
        %2213 = sbr.rel (%p2210) target = $region1368
      $region1367: #{rnn_forward.1} parent=1352 // pred_region
        %s2214 = sand.u32 1, 7
        %s2215 = ssub.s32 1, %s2214
        %s2216 = scalar_lea.vmem %s2188, %s2215
        %s2217 = ssub.s32 1, %s2214
        %s2218 = scalar_lea.vmem %s2189, %s2217 [#allocation2]
        %s2219 = sshllo.u32 0, %s2214
        loop: start=0, step=1, limit=1
        $region1369: #{rnn_forward.1} parent=1367 // loop_pre_header
          _
        $region1370: #{rnn_forward.1} parent=1367 // loop_header
          %s2221 = sphi 0, %s2225
          %p2222 = scmp.ge.s32.totalorder %s2221, 1
          %s2226 = sphi %s2216, %s2216
          %s2227 = sphi %s2218, %s2218
        $region1371: #{rnn_forward.1} parent=1367 // loop_header_branch
          %2224 = sbr.rel (%p2222) target = $region1375
        $region1372: #{rnn_forward.1} parent=1367 // loop_body
          %v2228 = vld [vmem:[%s2226] sm:%s2219]
          %2229 = vst [vmem:[%s2227] sm:%s2219] %v2228
        $region1373: #{rnn_forward.1} parent=1367 // loop_footer
          %s2225 = sadd.s32 1, %s2221
        $region1374: #{rnn_forward.1} parent=1367 // loop_footer_branch
          %2220 = sbr.rel target = $region1370
        $region1375: #{rnn_forward.1} parent=1367 // loop_exit
          _
      $region1368: #{rnn_forward.1} parent=1352 // pred_fallthru
        _
    $region1353: #{rnn_forward.1} parent=1 // pred_fallthru
      _
    // Predicated region
    $region1354: #{rnn_forward.1} parent=1 // pred_check
      %p2195 = pneg %p2191
    $region1355: #{rnn_forward.1} parent=1 // pred_check_branch
      %2197 = sbr.rel (%p2195) target = $region1357
    $region1356: #{rnn_forward.1} parent=1 // pred_region
      %s2198 = sshllo.u32 0, 1
      loop: start=0, step=1, limit=1
      $region1358: #{rnn_forward.1} parent=1356 // loop_pre_header
        _
      $region1359: #{rnn_forward.1} parent=1356 // loop_header
        %s2200 = sphi 0, %s2204
        %p2201 = scmp.ge.s32.totalorder %s2200, 1
        %s2205 = sphi %s2188, %s2188
        %s2206 = sphi %s2189, %s2189
      $region1360: #{rnn_forward.1} parent=1356 // loop_header_branch
        %2203 = sbr.rel (%p2201) target = $region1364
      $region1361: #{rnn_forward.1} parent=1356 // loop_body
        %v2207 = vld [vmem:[%s2205] sm:%s2198]
        %2208 = vst [vmem:[%s2206] sm:%s2198] %v2207
      $region1362: #{rnn_forward.1} parent=1356 // loop_footer
        %s2204 = sadd.s32 1, %s2200
      $region1363: #{rnn_forward.1} parent=1356 // loop_footer_branch
        %2199 = sbr.rel target = $region1359
      $region1364: #{rnn_forward.1} parent=1356 // loop_exit
        _
    $region1357: #{rnn_forward.1} parent=1 // pred_fallthru
      _
    // Predicated region
    $region1376: #{rnn_forward.1} parent=1 // pred_check
      _
    $region1377: #{rnn_forward.1} parent=1 // pred_check_branch
      %2232 = sbr.rel (0) target = $region1379
    $region1378: #{rnn_forward.1} parent=1 // pred_region
      %2233 = vsyncadd %s231, 16
    $region1379: #{rnn_forward.1} parent=1 // pred_fallthru
      _
    %s2234 = sshll.u32 %s420, 4
    %2235 = dma.done %s279, %s2234
    %s2236 = sld [smem:[#allocation4 + $0x2d]]
    %s2237 = scalar_lea.vmem %s1, %s2236
    %s2238 = scalar_lea.vmem [#allocation2], 45
    %p2240 = scmp.lt.u32.totalorder 1, 8
    %p2241 = pneg %p2240
    // Predicated region
    $region1380: #{rnn_forward.1} parent=1 // pred_check
      _
    $region1381: #{rnn_forward.1} parent=1 // pred_check_branch
      %2243 = sbr.rel (%p2240) target = $region1383
    $region1382: #{rnn_forward.1} parent=1 // pred_region
      %s2258 = sand.u32 1, 7
      %p2259 = scmp.eq.s32.totalorder %s2258, 0
      %p2260 = pneg %p2259
      // Predicated region
      $region1395: #{rnn_forward.1} parent=1382 // pred_check
        _
      $region1396: #{rnn_forward.1} parent=1382 // pred_check_branch
        %2262 = sbr.rel (%p2259) target = $region1398
      $region1397: #{rnn_forward.1} parent=1382 // pred_region
        %s2263 = sand.u32 1, 7
        %s2264 = ssub.s32 1, %s2263
        %s2265 = scalar_lea.vmem %s2237, %s2264
        %s2266 = ssub.s32 1, %s2263
        %s2267 = scalar_lea.vmem %s2238, %s2266 [#allocation2]
        %s2268 = sshllo.u32 0, %s2263
        loop: start=0, step=1, limit=1
        $region1399: #{rnn_forward.1} parent=1397 // loop_pre_header
          _
        $region1400: #{rnn_forward.1} parent=1397 // loop_header
          %s2270 = sphi 0, %s2274
          %p2271 = scmp.ge.s32.totalorder %s2270, 1
          %s2275 = sphi %s2265, %s2265
          %s2276 = sphi %s2267, %s2267
        $region1401: #{rnn_forward.1} parent=1397 // loop_header_branch
          %2273 = sbr.rel (%p2271) target = $region1405
        $region1402: #{rnn_forward.1} parent=1397 // loop_body
          %v2277 = vld [vmem:[%s2275] sm:%s2268]
          %2278 = vst [vmem:[%s2276] sm:%s2268] %v2277
        $region1403: #{rnn_forward.1} parent=1397 // loop_footer
          %s2274 = sadd.s32 1, %s2270
        $region1404: #{rnn_forward.1} parent=1397 // loop_footer_branch
          %2269 = sbr.rel target = $region1400
        $region1405: #{rnn_forward.1} parent=1397 // loop_exit
          _
      $region1398: #{rnn_forward.1} parent=1382 // pred_fallthru
        _
    $region1383: #{rnn_forward.1} parent=1 // pred_fallthru
      _
    // Predicated region
    $region1384: #{rnn_forward.1} parent=1 // pred_check
      %p2244 = pneg %p2240
    $region1385: #{rnn_forward.1} parent=1 // pred_check_branch
      %2246 = sbr.rel (%p2244) target = $region1387
    $region1386: #{rnn_forward.1} parent=1 // pred_region
      %s2247 = sshllo.u32 0, 1
      loop: start=0, step=1, limit=1
      $region1388: #{rnn_forward.1} parent=1386 // loop_pre_header
        _
      $region1389: #{rnn_forward.1} parent=1386 // loop_header
        %s2249 = sphi 0, %s2253
        %p2250 = scmp.ge.s32.totalorder %s2249, 1
        %s2254 = sphi %s2237, %s2237
        %s2255 = sphi %s2238, %s2238
      $region1390: #{rnn_forward.1} parent=1386 // loop_header_branch
        %2252 = sbr.rel (%p2250) target = $region1394
      $region1391: #{rnn_forward.1} parent=1386 // loop_body
        %v2256 = vld [vmem:[%s2254] sm:%s2247]
        %2257 = vst [vmem:[%s2255] sm:%s2247] %v2256
      $region1392: #{rnn_forward.1} parent=1386 // loop_footer
        %s2253 = sadd.s32 1, %s2249
      $region1393: #{rnn_forward.1} parent=1386 // loop_footer_branch
        %2248 = sbr.rel target = $region1389
      $region1394: #{rnn_forward.1} parent=1386 // loop_exit
        _
    $region1387: #{rnn_forward.1} parent=1 // pred_fallthru
      _
    // Predicated region
    $region1406: #{rnn_forward.1} parent=1 // pred_check
      _
    $region1407: #{rnn_forward.1} parent=1 // pred_check_branch
      %2281 = sbr.rel (0) target = $region1409
    $region1408: #{rnn_forward.1} parent=1 // pred_region
      %2282 = vsyncadd %s279, 16
    $region1409: #{rnn_forward.1} parent=1 // pred_fallthru
      _
    %s2283 = sshll.u32 %s420, 4
    %2284 = dma.done %s327, %s2283
    %s2285 = sld [smem:[#allocation4 + $0x35]]
    %s2286 = scalar_lea.vmem %s1, %s2285
    %s2287 = scalar_lea.vmem [#allocation2], 46
    %p2289 = scmp.lt.u32.totalorder 1, 8
    %p2290 = pneg %p2289
    // Predicated region
    $region1410: #{rnn_forward.1} parent=1 // pred_check
      _
    $region1411: #{rnn_forward.1} parent=1 // pred_check_branch
      %2292 = sbr.rel (%p2289) target = $region1413
    $region1412: #{rnn_forward.1} parent=1 // pred_region
      %s2307 = sand.u32 1, 7
      %p2308 = scmp.eq.s32.totalorder %s2307, 0
      %p2309 = pneg %p2308
      // Predicated region
      $region1425: #{rnn_forward.1} parent=1412 // pred_check
        _
      $region1426: #{rnn_forward.1} parent=1412 // pred_check_branch
        %2311 = sbr.rel (%p2308) target = $region1428
      $region1427: #{rnn_forward.1} parent=1412 // pred_region
        %s2312 = sand.u32 1, 7
        %s2313 = ssub.s32 1, %s2312
        %s2314 = scalar_lea.vmem %s2286, %s2313
        %s2315 = ssub.s32 1, %s2312
        %s2316 = scalar_lea.vmem %s2287, %s2315 [#allocation2]
        %s2317 = sshllo.u32 0, %s2312
        loop: start=0, step=1, limit=1
        $region1429: #{rnn_forward.1} parent=1427 // loop_pre_header
          _
        $region1430: #{rnn_forward.1} parent=1427 // loop_header
          %s2319 = sphi 0, %s2323
          %p2320 = scmp.ge.s32.totalorder %s2319, 1
          %s2324 = sphi %s2314, %s2314
          %s2325 = sphi %s2316, %s2316
        $region1431: #{rnn_forward.1} parent=1427 // loop_header_branch
          %2322 = sbr.rel (%p2320) target = $region1435
        $region1432: #{rnn_forward.1} parent=1427 // loop_body
          %v2326 = vld [vmem:[%s2324] sm:%s2317]
          %2327 = vst [vmem:[%s2325] sm:%s2317] %v2326
        $region1433: #{rnn_forward.1} parent=1427 // loop_footer
          %s2323 = sadd.s32 1, %s2319
        $region1434: #{rnn_forward.1} parent=1427 // loop_footer_branch
          %2318 = sbr.rel target = $region1430
        $region1435: #{rnn_forward.1} parent=1427 // loop_exit
          _
      $region1428: #{rnn_forward.1} parent=1412 // pred_fallthru
        _
    $region1413: #{rnn_forward.1} parent=1 // pred_fallthru
      _
    // Predicated region
    $region1414: #{rnn_forward.1} parent=1 // pred_check
      %p2293 = pneg %p2289
    $region1415: #{rnn_forward.1} parent=1 // pred_check_branch
      %2295 = sbr.rel (%p2293) target = $region1417
    $region1416: #{rnn_forward.1} parent=1 // pred_region
      %s2296 = sshllo.u32 0, 1
      loop: start=0, step=1, limit=1
      $region1418: #{rnn_forward.1} parent=1416 // loop_pre_header
        _
      $region1419: #{rnn_forward.1} parent=1416 // loop_header
        %s2298 = sphi 0, %s2302
        %p2299 = scmp.ge.s32.totalorder %s2298, 1
        %s2303 = sphi %s2286, %s2286
        %s2304 = sphi %s2287, %s2287
      $region1420: #{rnn_forward.1} parent=1416 // loop_header_branch
        %2301 = sbr.rel (%p2299) target = $region1424
      $region1421: #{rnn_forward.1} parent=1416 // loop_body
        %v2305 = vld [vmem:[%s2303] sm:%s2296]
        %2306 = vst [vmem:[%s2304] sm:%s2296] %v2305
      $region1422: #{rnn_forward.1} parent=1416 // loop_footer
        %s2302 = sadd.s32 1, %s2298
      $region1423: #{rnn_forward.1} parent=1416 // loop_footer_branch
        %2297 = sbr.rel target = $region1419
      $region1424: #{rnn_forward.1} parent=1416 // loop_exit
        _
    $region1417: #{rnn_forward.1} parent=1 // pred_fallthru
      _
    // Predicated region
    $region1436: #{rnn_forward.1} parent=1 // pred_check
      _
    $region1437: #{rnn_forward.1} parent=1 // pred_check_branch
      %2330 = sbr.rel (0) target = $region1439
    $region1438: #{rnn_forward.1} parent=1 // pred_region
      %2331 = vsyncadd %s327, 16
    $region1439: #{rnn_forward.1} parent=1 // pred_fallthru
      _
    %s2332 = sshll.u32 %s420, 4
    %2333 = dma.done %s375, %s2332
    %s2334 = sld [smem:[#allocation4 + $0x3d]]
    %s2335 = scalar_lea.vmem %s1, %s2334
    %s2336 = scalar_lea.vmem [#allocation2], 47
    %p2338 = scmp.lt.u32.totalorder 1, 8
    %p2339 = pneg %p2338
    // Predicated region
    $region1440: #{rnn_forward.1} parent=1 // pred_check
      _
    $region1441: #{rnn_forward.1} parent=1 // pred_check_branch
      %2341 = sbr.rel (%p2338) target = $region1443
    $region1442: #{rnn_forward.1} parent=1 // pred_region
      %s2356 = sand.u32 1, 7
      %p2357 = scmp.eq.s32.totalorder %s2356, 0
      %p2358 = pneg %p2357
      // Predicated region
      $region1455: #{rnn_forward.1} parent=1442 // pred_check
        _
      $region1456: #{rnn_forward.1} parent=1442 // pred_check_branch
        %2360 = sbr.rel (%p2357) target = $region1458
      $region1457: #{rnn_forward.1} parent=1442 // pred_region
        %s2361 = sand.u32 1, 7
        %s2362 = ssub.s32 1, %s2361
        %s2363 = scalar_lea.vmem %s2335, %s2362
        %s2364 = ssub.s32 1, %s2361
        %s2365 = scalar_lea.vmem %s2336, %s2364 [#allocation2]
        %s2366 = sshllo.u32 0, %s2361
        loop: start=0, step=1, limit=1
        $region1459: #{rnn_forward.1} parent=1457 // loop_pre_header
          _
        $region1460: #{rnn_forward.1} parent=1457 // loop_header
          %s2368 = sphi 0, %s2372
          %p2369 = scmp.ge.s32.totalorder %s2368, 1
          %s2373 = sphi %s2363, %s2363
          %s2374 = sphi %s2365, %s2365
        $region1461: #{rnn_forward.1} parent=1457 // loop_header_branch
          %2371 = sbr.rel (%p2369) target = $region1465
        $region1462: #{rnn_forward.1} parent=1457 // loop_body
          %v2375 = vld [vmem:[%s2373] sm:%s2366]
          %2376 = vst [vmem:[%s2374] sm:%s2366] %v2375
        $region1463: #{rnn_forward.1} parent=1457 // loop_footer
          %s2372 = sadd.s32 1, %s2368
        $region1464: #{rnn_forward.1} parent=1457 // loop_footer_branch
          %2367 = sbr.rel target = $region1460
        $region1465: #{rnn_forward.1} parent=1457 // loop_exit
          _
      $region1458: #{rnn_forward.1} parent=1442 // pred_fallthru
        _
    $region1443: #{rnn_forward.1} parent=1 // pred_fallthru
      _
    // Predicated region
    $region1444: #{rnn_forward.1} parent=1 // pred_check
      %p2342 = pneg %p2338
    $region1445: #{rnn_forward.1} parent=1 // pred_check_branch
      %2344 = sbr.rel (%p2342) target = $region1447
    $region1446: #{rnn_forward.1} parent=1 // pred_region
      %s2345 = sshllo.u32 0, 1
      loop: start=0, step=1, limit=1
      $region1448: #{rnn_forward.1} parent=1446 // loop_pre_header
        _
      $region1449: #{rnn_forward.1} parent=1446 // loop_header
        %s2347 = sphi 0, %s2351
        %p2348 = scmp.ge.s32.totalorder %s2347, 1
        %s2352 = sphi %s2335, %s2335
        %s2353 = sphi %s2336, %s2336
      $region1450: #{rnn_forward.1} parent=1446 // loop_header_branch
        %2350 = sbr.rel (%p2348) target = $region1454
      $region1451: #{rnn_forward.1} parent=1446 // loop_body
        %v2354 = vld [vmem:[%s2352] sm:%s2345]
        %2355 = vst [vmem:[%s2353] sm:%s2345] %v2354
      $region1452: #{rnn_forward.1} parent=1446 // loop_footer
        %s2351 = sadd.s32 1, %s2347
      $region1453: #{rnn_forward.1} parent=1446 // loop_footer_branch
        %2346 = sbr.rel target = $region1449
      $region1454: #{rnn_forward.1} parent=1446 // loop_exit
        _
    $region1447: #{rnn_forward.1} parent=1 // pred_fallthru
      _
    // Predicated region
    $region1466: #{rnn_forward.1} parent=1 // pred_check
      _
    $region1467: #{rnn_forward.1} parent=1 // pred_check_branch
      %2379 = sbr.rel (0) target = $region1469
    $region1468: #{rnn_forward.1} parent=1 // pred_region
      %2380 = vsyncadd %s375, 16
    $region1469: #{rnn_forward.1} parent=1 // pred_fallthru
      _
    %s2381 = sshll.u32 %s420, 4
    %2382 = dma.done [#allocation3], %s2381
    %s2383 = sld [smem:[#allocation4 + $0x6]]
    %s2384 = scalar_lea.vmem %s1, %s2383
    %s2385 = scalar_lea.vmem [#allocation2], 48
    %p2387 = scmp.lt.u32.totalorder 1, 8
    %p2388 = pneg %p2387
    // Predicated region
    $region1470: #{rnn_forward.1} parent=1 // pred_check
      _
    $region1471: #{rnn_forward.1} parent=1 // pred_check_branch
      %2390 = sbr.rel (%p2387) target = $region1473
    $region1472: #{rnn_forward.1} parent=1 // pred_region
      %s2405 = sand.u32 1, 7
      %p2406 = scmp.eq.s32.totalorder %s2405, 0
      %p2407 = pneg %p2406
      // Predicated region
      $region1485: #{rnn_forward.1} parent=1472 // pred_check
        _
      $region1486: #{rnn_forward.1} parent=1472 // pred_check_branch
        %2409 = sbr.rel (%p2406) target = $region1488
      $region1487: #{rnn_forward.1} parent=1472 // pred_region
        %s2410 = sand.u32 1, 7
        %s2411 = ssub.s32 1, %s2410
        %s2412 = scalar_lea.vmem %s2384, %s2411
        %s2413 = ssub.s32 1, %s2410
        %s2414 = scalar_lea.vmem %s2385, %s2413 [#allocation2]
        %s2415 = sshllo.u32 0, %s2410
        loop: start=0, step=1, limit=1
        $region1489: #{rnn_forward.1} parent=1487 // loop_pre_header
          _
        $region1490: #{rnn_forward.1} parent=1487 // loop_header
          %s2417 = sphi 0, %s2421
          %p2418 = scmp.ge.s32.totalorder %s2417, 1
          %s2422 = sphi %s2412, %s2412
          %s2423 = sphi %s2414, %s2414
        $region1491: #{rnn_forward.1} parent=1487 // loop_header_branch
          %2420 = sbr.rel (%p2418) target = $region1495
        $region1492: #{rnn_forward.1} parent=1487 // loop_body
          %v2424 = vld [vmem:[%s2422] sm:%s2415]
          %2425 = vst [vmem:[%s2423] sm:%s2415] %v2424
        $region1493: #{rnn_forward.1} parent=1487 // loop_footer
          %s2421 = sadd.s32 1, %s2417
        $region1494: #{rnn_forward.1} parent=1487 // loop_footer_branch
          %2416 = sbr.rel target = $region1490
        $region1495: #{rnn_forward.1} parent=1487 // loop_exit
          _
      $region1488: #{rnn_forward.1} parent=1472 // pred_fallthru
        _
    $region1473: #{rnn_forward.1} parent=1 // pred_fallthru
      _
    // Predicated region
    $region1474: #{rnn_forward.1} parent=1 // pred_check
      %p2391 = pneg %p2387
    $region1475: #{rnn_forward.1} parent=1 // pred_check_branch
      %2393 = sbr.rel (%p2391) target = $region1477
    $region1476: #{rnn_forward.1} parent=1 // pred_region
      %s2394 = sshllo.u32 0, 1
      loop: start=0, step=1, limit=1
      $region1478: #{rnn_forward.1} parent=1476 // loop_pre_header
        _
      $region1479: #{rnn_forward.1} parent=1476 // loop_header
        %s2396 = sphi 0, %s2400
        %p2397 = scmp.ge.s32.totalorder %s2396, 1
        %s2401 = sphi %s2384, %s2384
        %s2402 = sphi %s2385, %s2385
      $region1480: #{rnn_forward.1} parent=1476 // loop_header_branch
        %2399 = sbr.rel (%p2397) target = $region1484
      $region1481: #{rnn_forward.1} parent=1476 // loop_body
        %v2403 = vld [vmem:[%s2401] sm:%s2394]
        %2404 = vst [vmem:[%s2402] sm:%s2394] %v2403
      $region1482: #{rnn_forward.1} parent=1476 // loop_footer
        %s2400 = sadd.s32 1, %s2396
      $region1483: #{rnn_forward.1} parent=1476 // loop_footer_branch
        %2395 = sbr.rel target = $region1479
      $region1484: #{rnn_forward.1} parent=1476 // loop_exit
        _
    $region1477: #{rnn_forward.1} parent=1 // pred_fallthru
      _
    // Predicated region
    $region1496: #{rnn_forward.1} parent=1 // pred_check
      _
    $region1497: #{rnn_forward.1} parent=1 // pred_check_branch
      %2428 = sbr.rel (0) target = $region1499
    $region1498: #{rnn_forward.1} parent=1 // pred_region
      %2429 = vsyncadd [#allocation3], 16
    $region1499: #{rnn_forward.1} parent=1 // pred_fallthru
      _
    %s2430 = sshll.u32 %s420, 4
    %2431 = dma.done %s87, %s2430
    %s2432 = sld [smem:[#allocation4 + $0xe]]
    %s2433 = scalar_lea.vmem %s1, %s2432
    %s2434 = scalar_lea.vmem [#allocation2], 49
    %p2436 = scmp.lt.u32.totalorder 1, 8
    %p2437 = pneg %p2436
    // Predicated region
    $region1500: #{rnn_forward.1} parent=1 // pred_check
      _
    $region1501: #{rnn_forward.1} parent=1 // pred_check_branch
      %2439 = sbr.rel (%p2436) target = $region1503
    $region1502: #{rnn_forward.1} parent=1 // pred_region
      %s2454 = sand.u32 1, 7
      %p2455 = scmp.eq.s32.totalorder %s2454, 0
      %p2456 = pneg %p2455
      // Predicated region
      $region1515: #{rnn_forward.1} parent=1502 // pred_check
        _
      $region1516: #{rnn_forward.1} parent=1502 // pred_check_branch
        %2458 = sbr.rel (%p2455) target = $region1518
      $region1517: #{rnn_forward.1} parent=1502 // pred_region
        %s2459 = sand.u32 1, 7
        %s2460 = ssub.s32 1, %s2459
        %s2461 = scalar_lea.vmem %s2433, %s2460
        %s2462 = ssub.s32 1, %s2459
        %s2463 = scalar_lea.vmem %s2434, %s2462 [#allocation2]
        %s2464 = sshllo.u32 0, %s2459
        loop: start=0, step=1, limit=1
        $region1519: #{rnn_forward.1} parent=1517 // loop_pre_header
          _
        $region1520: #{rnn_forward.1} parent=1517 // loop_header
          %s2466 = sphi 0, %s2470
          %p2467 = scmp.ge.s32.totalorder %s2466, 1
          %s2471 = sphi %s2461, %s2461
          %s2472 = sphi %s2463, %s2463
        $region1521: #{rnn_forward.1} parent=1517 // loop_header_branch
          %2469 = sbr.rel (%p2467) target = $region1525
        $region1522: #{rnn_forward.1} parent=1517 // loop_body
          %v2473 = vld [vmem:[%s2471] sm:%s2464]
          %2474 = vst [vmem:[%s2472] sm:%s2464] %v2473
        $region1523: #{rnn_forward.1} parent=1517 // loop_footer
          %s2470 = sadd.s32 1, %s2466
        $region1524: #{rnn_forward.1} parent=1517 // loop_footer_branch
          %2465 = sbr.rel target = $region1520
        $region1525: #{rnn_forward.1} parent=1517 // loop_exit
          _
      $region1518: #{rnn_forward.1} parent=1502 // pred_fallthru
        _
    $region1503: #{rnn_forward.1} parent=1 // pred_fallthru
      _
    // Predicated region
    $region1504: #{rnn_forward.1} parent=1 // pred_check
      %p2440 = pneg %p2436
    $region1505: #{rnn_forward.1} parent=1 // pred_check_branch
      %2442 = sbr.rel (%p2440) target = $region1507
    $region1506: #{rnn_forward.1} parent=1 // pred_region
      %s2443 = sshllo.u32 0, 1
      loop: start=0, step=1, limit=1
      $region1508: #{rnn_forward.1} parent=1506 // loop_pre_header
        _
      $region1509: #{rnn_forward.1} parent=1506 // loop_header
        %s2445 = sphi 0, %s2449
        %p2446 = scmp.ge.s32.totalorder %s2445, 1
        %s2450 = sphi %s2433, %s2433
        %s2451 = sphi %s2434, %s2434
      $region1510: #{rnn_forward.1} parent=1506 // loop_header_branch
        %2448 = sbr.rel (%p2446) target = $region1514
      $region1511: #{rnn_forward.1} parent=1506 // loop_body
        %v2452 = vld [vmem:[%s2450] sm:%s2443]
        %2453 = vst [vmem:[%s2451] sm:%s2443] %v2452
      $region1512: #{rnn_forward.1} parent=1506 // loop_footer
        %s2449 = sadd.s32 1, %s2445
      $region1513: #{rnn_forward.1} parent=1506 // loop_footer_branch
        %2444 = sbr.rel target = $region1509
      $region1514: #{rnn_forward.1} parent=1506 // loop_exit
        _
    $region1507: #{rnn_forward.1} parent=1 // pred_fallthru
      _
    // Predicated region
    $region1526: #{rnn_forward.1} parent=1 // pred_check
      _
    $region1527: #{rnn_forward.1} parent=1 // pred_check_branch
      %2477 = sbr.rel (0) target = $region1529
    $region1528: #{rnn_forward.1} parent=1 // pred_region
      %2478 = vsyncadd %s87, 16
    $region1529: #{rnn_forward.1} parent=1 // pred_fallthru
      _
    %s2479 = sshll.u32 %s420, 4
    %2480 = dma.done %s135, %s2479
    %s2481 = sld [smem:[#allocation4 + $0x16]]
    %s2482 = scalar_lea.vmem %s1, %s2481
    %s2483 = scalar_lea.vmem [#allocation2], 50
    %p2485 = scmp.lt.u32.totalorder 1, 8
    %p2486 = pneg %p2485
    // Predicated region
    $region1530: #{rnn_forward.1} parent=1 // pred_check
      _
    $region1531: #{rnn_forward.1} parent=1 // pred_check_branch
      %2488 = sbr.rel (%p2485) target = $region1533
    $region1532: #{rnn_forward.1} parent=1 // pred_region
      %s2503 = sand.u32 1, 7
      %p2504 = scmp.eq.s32.totalorder %s2503, 0
      %p2505 = pneg %p2504
      // Predicated region
      $region1545: #{rnn_forward.1} parent=1532 // pred_check
        _
      $region1546: #{rnn_forward.1} parent=1532 // pred_check_branch
        %2507 = sbr.rel (%p2504) target = $region1548
      $region1547: #{rnn_forward.1} parent=1532 // pred_region
        %s2508 = sand.u32 1, 7
        %s2509 = ssub.s32 1, %s2508
        %s2510 = scalar_lea.vmem %s2482, %s2509
        %s2511 = ssub.s32 1, %s2508
        %s2512 = scalar_lea.vmem %s2483, %s2511 [#allocation2]
        %s2513 = sshllo.u32 0, %s2508
        loop: start=0, step=1, limit=1
        $region1549: #{rnn_forward.1} parent=1547 // loop_pre_header
          _
        $region1550: #{rnn_forward.1} parent=1547 // loop_header
          %s2515 = sphi 0, %s2519
          %p2516 = scmp.ge.s32.totalorder %s2515, 1
          %s2520 = sphi %s2510, %s2510
          %s2521 = sphi %s2512, %s2512
        $region1551: #{rnn_forward.1} parent=1547 // loop_header_branch
          %2518 = sbr.rel (%p2516) target = $region1555
        $region1552: #{rnn_forward.1} parent=1547 // loop_body
          %v2522 = vld [vmem:[%s2520] sm:%s2513]
          %2523 = vst [vmem:[%s2521] sm:%s2513] %v2522
        $region1553: #{rnn_forward.1} parent=1547 // loop_footer
          %s2519 = sadd.s32 1, %s2515
        $region1554: #{rnn_forward.1} parent=1547 // loop_footer_branch
          %2514 = sbr.rel target = $region1550
        $region1555: #{rnn_forward.1} parent=1547 // loop_exit
          _
      $region1548: #{rnn_forward.1} parent=1532 // pred_fallthru
        _
    $region1533: #{rnn_forward.1} parent=1 // pred_fallthru
      _
    // Predicated region
    $region1534: #{rnn_forward.1} parent=1 // pred_check
      %p2489 = pneg %p2485
    $region1535: #{rnn_forward.1} parent=1 // pred_check_branch
      %2491 = sbr.rel (%p2489) target = $region1537
    $region1536: #{rnn_forward.1} parent=1 // pred_region
      %s2492 = sshllo.u32 0, 1
      loop: start=0, step=1, limit=1
      $region1538: #{rnn_forward.1} parent=1536 // loop_pre_header
        _
      $region1539: #{rnn_forward.1} parent=1536 // loop_header
        %s2494 = sphi 0, %s2498
        %p2495 = scmp.ge.s32.totalorder %s2494, 1
        %s2499 = sphi %s2482, %s2482
        %s2500 = sphi %s2483, %s2483
      $region1540: #{rnn_forward.1} parent=1536 // loop_header_branch
        %2497 = sbr.rel (%p2495) target = $region1544
      $region1541: #{rnn_forward.1} parent=1536 // loop_body
        %v2501 = vld [vmem:[%s2499] sm:%s2492]
        %2502 = vst [vmem:[%s2500] sm:%s2492] %v2501
      $region1542: #{rnn_forward.1} parent=1536 // loop_footer
        %s2498 = sadd.s32 1, %s2494
      $region1543: #{rnn_forward.1} parent=1536 // loop_footer_branch
        %2493 = sbr.rel target = $region1539
      $region1544: #{rnn_forward.1} parent=1536 // loop_exit
        _
    $region1537: #{rnn_forward.1} parent=1 // pred_fallthru
      _
    // Predicated region
    $region1556: #{rnn_forward.1} parent=1 // pred_check
      _
    $region1557: #{rnn_forward.1} parent=1 // pred_check_branch
      %2526 = sbr.rel (0) target = $region1559
    $region1558: #{rnn_forward.1} parent=1 // pred_region
      %2527 = vsyncadd %s135, 16
    $region1559: #{rnn_forward.1} parent=1 // pred_fallthru
      _
    %s2528 = sshll.u32 %s420, 4
    %2529 = dma.done %s183, %s2528
    %s2530 = sld [smem:[#allocation4 + $0x1e]]
    %s2531 = scalar_lea.vmem %s1, %s2530
    %s2532 = scalar_lea.vmem [#allocation2], 51
    %p2534 = scmp.lt.u32.totalorder 1, 8
    %p2535 = pneg %p2534
    // Predicated region
    $region1560: #{rnn_forward.1} parent=1 // pred_check
      _
    $region1561: #{rnn_forward.1} parent=1 // pred_check_branch
      %2537 = sbr.rel (%p2534) target = $region1563
    $region1562: #{rnn_forward.1} parent=1 // pred_region
      %s2552 = sand.u32 1, 7
      %p2553 = scmp.eq.s32.totalorder %s2552, 0
      %p2554 = pneg %p2553
      // Predicated region
      $region1575: #{rnn_forward.1} parent=1562 // pred_check
        _
      $region1576: #{rnn_forward.1} parent=1562 // pred_check_branch
        %2556 = sbr.rel (%p2553) target = $region1578
      $region1577: #{rnn_forward.1} parent=1562 // pred_region
        %s2557 = sand.u32 1, 7
        %s2558 = ssub.s32 1, %s2557
        %s2559 = scalar_lea.vmem %s2531, %s2558
        %s2560 = ssub.s32 1, %s2557
        %s2561 = scalar_lea.vmem %s2532, %s2560 [#allocation2]
        %s2562 = sshllo.u32 0, %s2557
        loop: start=0, step=1, limit=1
        $region1579: #{rnn_forward.1} parent=1577 // loop_pre_header
          _
        $region1580: #{rnn_forward.1} parent=1577 // loop_header
          %s2564 = sphi 0, %s2568
          %p2565 = scmp.ge.s32.totalorder %s2564, 1
          %s2569 = sphi %s2559, %s2559
          %s2570 = sphi %s2561, %s2561
        $region1581: #{rnn_forward.1} parent=1577 // loop_header_branch
          %2567 = sbr.rel (%p2565) target = $region1585
        $region1582: #{rnn_forward.1} parent=1577 // loop_body
          %v2571 = vld [vmem:[%s2569] sm:%s2562]
          %2572 = vst [vmem:[%s2570] sm:%s2562] %v2571
        $region1583: #{rnn_forward.1} parent=1577 // loop_footer
          %s2568 = sadd.s32 1, %s2564
        $region1584: #{rnn_forward.1} parent=1577 // loop_footer_branch
          %2563 = sbr.rel target = $region1580
        $region1585: #{rnn_forward.1} parent=1577 // loop_exit
          _
      $region1578: #{rnn_forward.1} parent=1562 // pred_fallthru
        _
    $region1563: #{rnn_forward.1} parent=1 // pred_fallthru
      _
    // Predicated region
    $region1564: #{rnn_forward.1} parent=1 // pred_check
      %p2538 = pneg %p2534
    $region1565: #{rnn_forward.1} parent=1 // pred_check_branch
      %2540 = sbr.rel (%p2538) target = $region1567
    $region1566: #{rnn_forward.1} parent=1 // pred_region
      %s2541 = sshllo.u32 0, 1
      loop: start=0, step=1, limit=1
      $region1568: #{rnn_forward.1} parent=1566 // loop_pre_header
        _
      $region1569: #{rnn_forward.1} parent=1566 // loop_header
        %s2543 = sphi 0, %s2547
        %p2544 = scmp.ge.s32.totalorder %s2543, 1
        %s2548 = sphi %s2531, %s2531
        %s2549 = sphi %s2532, %s2532
      $region1570: #{rnn_forward.1} parent=1566 // loop_header_branch
        %2546 = sbr.rel (%p2544) target = $region1574
      $region1571: #{rnn_forward.1} parent=1566 // loop_body
        %v2550 = vld [vmem:[%s2548] sm:%s2541]
        %2551 = vst [vmem:[%s2549] sm:%s2541] %v2550
      $region1572: #{rnn_forward.1} parent=1566 // loop_footer
        %s2547 = sadd.s32 1, %s2543
      $region1573: #{rnn_forward.1} parent=1566 // loop_footer_branch
        %2542 = sbr.rel target = $region1569
      $region1574: #{rnn_forward.1} parent=1566 // loop_exit
        _
    $region1567: #{rnn_forward.1} parent=1 // pred_fallthru
      _
    // Predicated region
    $region1586: #{rnn_forward.1} parent=1 // pred_check
      _
    $region1587: #{rnn_forward.1} parent=1 // pred_check_branch
      %2575 = sbr.rel (0) target = $region1589
    $region1588: #{rnn_forward.1} parent=1 // pred_region
      %2576 = vsyncadd %s183, 16
    $region1589: #{rnn_forward.1} parent=1 // pred_fallthru
      _
    %s2577 = sshll.u32 %s420, 4
    %2578 = dma.done %s231, %s2577
    %s2579 = sld [smem:[#allocation4 + $0x26]]
    %s2580 = scalar_lea.vmem %s1, %s2579
    %s2581 = scalar_lea.vmem [#allocation2], 52
    %p2583 = scmp.lt.u32.totalorder 1, 8
    %p2584 = pneg %p2583
    // Predicated region
    $region1590: #{rnn_forward.1} parent=1 // pred_check
      _
    $region1591: #{rnn_forward.1} parent=1 // pred_check_branch
      %2586 = sbr.rel (%p2583) target = $region1593
    $region1592: #{rnn_forward.1} parent=1 // pred_region
      %s2601 = sand.u32 1, 7
      %p2602 = scmp.eq.s32.totalorder %s2601, 0
      %p2603 = pneg %p2602
      // Predicated region
      $region1605: #{rnn_forward.1} parent=1592 // pred_check
        _
      $region1606: #{rnn_forward.1} parent=1592 // pred_check_branch
        %2605 = sbr.rel (%p2602) target = $region1608
      $region1607: #{rnn_forward.1} parent=1592 // pred_region
        %s2606 = sand.u32 1, 7
        %s2607 = ssub.s32 1, %s2606
        %s2608 = scalar_lea.vmem %s2580, %s2607
        %s2609 = ssub.s32 1, %s2606
        %s2610 = scalar_lea.vmem %s2581, %s2609 [#allocation2]
        %s2611 = sshllo.u32 0, %s2606
        loop: start=0, step=1, limit=1
        $region1609: #{rnn_forward.1} parent=1607 // loop_pre_header
          _
        $region1610: #{rnn_forward.1} parent=1607 // loop_header
          %s2613 = sphi 0, %s2617
          %p2614 = scmp.ge.s32.totalorder %s2613, 1
          %s2618 = sphi %s2608, %s2608
          %s2619 = sphi %s2610, %s2610
        $region1611: #{rnn_forward.1} parent=1607 // loop_header_branch
          %2616 = sbr.rel (%p2614) target = $region1615
        $region1612: #{rnn_forward.1} parent=1607 // loop_body
          %v2620 = vld [vmem:[%s2618] sm:%s2611]
          %2621 = vst [vmem:[%s2619] sm:%s2611] %v2620
        $region1613: #{rnn_forward.1} parent=1607 // loop_footer
          %s2617 = sadd.s32 1, %s2613
        $region1614: #{rnn_forward.1} parent=1607 // loop_footer_branch
          %2612 = sbr.rel target = $region1610
        $region1615: #{rnn_forward.1} parent=1607 // loop_exit
          _
      $region1608: #{rnn_forward.1} parent=1592 // pred_fallthru
        _
    $region1593: #{rnn_forward.1} parent=1 // pred_fallthru
      _
    // Predicated region
    $region1594: #{rnn_forward.1} parent=1 // pred_check
      %p2587 = pneg %p2583
    $region1595: #{rnn_forward.1} parent=1 // pred_check_branch
      %2589 = sbr.rel (%p2587) target = $region1597
    $region1596: #{rnn_forward.1} parent=1 // pred_region
      %s2590 = sshllo.u32 0, 1
      loop: start=0, step=1, limit=1
      $region1598: #{rnn_forward.1} parent=1596 // loop_pre_header
        _
      $region1599: #{rnn_forward.1} parent=1596 // loop_header
        %s2592 = sphi 0, %s2596
        %p2593 = scmp.ge.s32.totalorder %s2592, 1
        %s2597 = sphi %s2580, %s2580
        %s2598 = sphi %s2581, %s2581
      $region1600: #{rnn_forward.1} parent=1596 // loop_header_branch
        %2595 = sbr.rel (%p2593) target = $region1604
      $region1601: #{rnn_forward.1} parent=1596 // loop_body
        %v2599 = vld [vmem:[%s2597] sm:%s2590]
        %2600 = vst [vmem:[%s2598] sm:%s2590] %v2599
      $region1602: #{rnn_forward.1} parent=1596 // loop_footer
        %s2596 = sadd.s32 1, %s2592
      $region1603: #{rnn_forward.1} parent=1596 // loop_footer_branch
        %2591 = sbr.rel target = $region1599
      $region1604: #{rnn_forward.1} parent=1596 // loop_exit
        _
    $region1597: #{rnn_forward.1} parent=1 // pred_fallthru
      _
    // Predicated region
    $region1616: #{rnn_forward.1} parent=1 // pred_check
      _
    $region1617: #{rnn_forward.1} parent=1 // pred_check_branch
      %2624 = sbr.rel (0) target = $region1619
    $region1618: #{rnn_forward.1} parent=1 // pred_region
      %2625 = vsyncadd %s231, 16
    $region1619: #{rnn_forward.1} parent=1 // pred_fallthru
      _
    %s2626 = sshll.u32 %s420, 4
    %2627 = dma.done %s279, %s2626
    %s2628 = sld [smem:[#allocation4 + $0x2e]]
    %s2629 = scalar_lea.vmem %s1, %s2628
    %s2630 = scalar_lea.vmem [#allocation2], 53
    %p2632 = scmp.lt.u32.totalorder 1, 8
    %p2633 = pneg %p2632
    // Predicated region
    $region1620: #{rnn_forward.1} parent=1 // pred_check
      _
    $region1621: #{rnn_forward.1} parent=1 // pred_check_branch
      %2635 = sbr.rel (%p2632) target = $region1623
    $region1622: #{rnn_forward.1} parent=1 // pred_region
      %s2650 = sand.u32 1, 7
      %p2651 = scmp.eq.s32.totalorder %s2650, 0
      %p2652 = pneg %p2651
      // Predicated region
      $region1635: #{rnn_forward.1} parent=1622 // pred_check
        _
      $region1636: #{rnn_forward.1} parent=1622 // pred_check_branch
        %2654 = sbr.rel (%p2651) target = $region1638
      $region1637: #{rnn_forward.1} parent=1622 // pred_region
        %s2655 = sand.u32 1, 7
        %s2656 = ssub.s32 1, %s2655
        %s2657 = scalar_lea.vmem %s2629, %s2656
        %s2658 = ssub.s32 1, %s2655
        %s2659 = scalar_lea.vmem %s2630, %s2658 [#allocation2]
        %s2660 = sshllo.u32 0, %s2655
        loop: start=0, step=1, limit=1
        $region1639: #{rnn_forward.1} parent=1637 // loop_pre_header
          _
        $region1640: #{rnn_forward.1} parent=1637 // loop_header
          %s2662 = sphi 0, %s2666
          %p2663 = scmp.ge.s32.totalorder %s2662, 1
          %s2667 = sphi %s2657, %s2657
          %s2668 = sphi %s2659, %s2659
        $region1641: #{rnn_forward.1} parent=1637 // loop_header_branch
          %2665 = sbr.rel (%p2663) target = $region1645
        $region1642: #{rnn_forward.1} parent=1637 // loop_body
          %v2669 = vld [vmem:[%s2667] sm:%s2660]
          %2670 = vst [vmem:[%s2668] sm:%s2660] %v2669
        $region1643: #{rnn_forward.1} parent=1637 // loop_footer
          %s2666 = sadd.s32 1, %s2662
        $region1644: #{rnn_forward.1} parent=1637 // loop_footer_branch
          %2661 = sbr.rel target = $region1640
        $region1645: #{rnn_forward.1} parent=1637 // loop_exit
          _
      $region1638: #{rnn_forward.1} parent=1622 // pred_fallthru
        _
    $region1623: #{rnn_forward.1} parent=1 // pred_fallthru
      _
    // Predicated region
    $region1624: #{rnn_forward.1} parent=1 // pred_check
      %p2636 = pneg %p2632
    $region1625: #{rnn_forward.1} parent=1 // pred_check_branch
      %2638 = sbr.rel (%p2636) target = $region1627
    $region1626: #{rnn_forward.1} parent=1 // pred_region
      %s2639 = sshllo.u32 0, 1
      loop: start=0, step=1, limit=1
      $region1628: #{rnn_forward.1} parent=1626 // loop_pre_header
        _
      $region1629: #{rnn_forward.1} parent=1626 // loop_header
        %s2641 = sphi 0, %s2645
        %p2642 = scmp.ge.s32.totalorder %s2641, 1
        %s2646 = sphi %s2629, %s2629
        %s2647 = sphi %s2630, %s2630
      $region1630: #{rnn_forward.1} parent=1626 // loop_header_branch
        %2644 = sbr.rel (%p2642) target = $region1634
      $region1631: #{rnn_forward.1} parent=1626 // loop_body
        %v2648 = vld [vmem:[%s2646] sm:%s2639]
        %2649 = vst [vmem:[%s2647] sm:%s2639] %v2648
      $region1632: #{rnn_forward.1} parent=1626 // loop_footer
        %s2645 = sadd.s32 1, %s2641
      $region1633: #{rnn_forward.1} parent=1626 // loop_footer_branch
        %2640 = sbr.rel target = $region1629
      $region1634: #{rnn_forward.1} parent=1626 // loop_exit
        _
    $region1627: #{rnn_forward.1} parent=1 // pred_fallthru
      _
    // Predicated region
    $region1646: #{rnn_forward.1} parent=1 // pred_check
      _
    $region1647: #{rnn_forward.1} parent=1 // pred_check_branch
      %2673 = sbr.rel (0) target = $region1649
    $region1648: #{rnn_forward.1} parent=1 // pred_region
      %2674 = vsyncadd %s279, 16
    $region1649: #{rnn_forward.1} parent=1 // pred_fallthru
      _
    %s2675 = sshll.u32 %s420, 4
    %2676 = dma.done %s327, %s2675
    %s2677 = sld [smem:[#allocation4 + $0x36]]
    %s2678 = scalar_lea.vmem %s1, %s2677
    %s2679 = scalar_lea.vmem [#allocation2], 54
    %p2681 = scmp.lt.u32.totalorder 1, 8
    %p2682 = pneg %p2681
    // Predicated region
    $region1650: #{rnn_forward.1} parent=1 // pred_check
      _
    $region1651: #{rnn_forward.1} parent=1 // pred_check_branch
      %2684 = sbr.rel (%p2681) target = $region1653
    $region1652: #{rnn_forward.1} parent=1 // pred_region
      %s2699 = sand.u32 1, 7
      %p2700 = scmp.eq.s32.totalorder %s2699, 0
      %p2701 = pneg %p2700
      // Predicated region
      $region1665: #{rnn_forward.1} parent=1652 // pred_check
        _
      $region1666: #{rnn_forward.1} parent=1652 // pred_check_branch
        %2703 = sbr.rel (%p2700) target = $region1668
      $region1667: #{rnn_forward.1} parent=1652 // pred_region
        %s2704 = sand.u32 1, 7
        %s2705 = ssub.s32 1, %s2704
        %s2706 = scalar_lea.vmem %s2678, %s2705
        %s2707 = ssub.s32 1, %s2704
        %s2708 = scalar_lea.vmem %s2679, %s2707 [#allocation2]
        %s2709 = sshllo.u32 0, %s2704
        loop: start=0, step=1, limit=1
        $region1669: #{rnn_forward.1} parent=1667 // loop_pre_header
          _
        $region1670: #{rnn_forward.1} parent=1667 // loop_header
          %s2711 = sphi 0, %s2715
          %p2712 = scmp.ge.s32.totalorder %s2711, 1
          %s2716 = sphi %s2706, %s2706
          %s2717 = sphi %s2708, %s2708
        $region1671: #{rnn_forward.1} parent=1667 // loop_header_branch
          %2714 = sbr.rel (%p2712) target = $region1675
        $region1672: #{rnn_forward.1} parent=1667 // loop_body
          %v2718 = vld [vmem:[%s2716] sm:%s2709]
          %2719 = vst [vmem:[%s2717] sm:%s2709] %v2718
        $region1673: #{rnn_forward.1} parent=1667 // loop_footer
          %s2715 = sadd.s32 1, %s2711
        $region1674: #{rnn_forward.1} parent=1667 // loop_footer_branch
          %2710 = sbr.rel target = $region1670
        $region1675: #{rnn_forward.1} parent=1667 // loop_exit
          _
      $region1668: #{rnn_forward.1} parent=1652 // pred_fallthru
        _
    $region1653: #{rnn_forward.1} parent=1 // pred_fallthru
      _
    // Predicated region
    $region1654: #{rnn_forward.1} parent=1 // pred_check
      %p2685 = pneg %p2681
    $region1655: #{rnn_forward.1} parent=1 // pred_check_branch
      %2687 = sbr.rel (%p2685) target = $region1657
    $region1656: #{rnn_forward.1} parent=1 // pred_region
      %s2688 = sshllo.u32 0, 1
      loop: start=0, step=1, limit=1
      $region1658: #{rnn_forward.1} parent=1656 // loop_pre_header
        _
      $region1659: #{rnn_forward.1} parent=1656 // loop_header
        %s2690 = sphi 0, %s2694
        %p2691 = scmp.ge.s32.totalorder %s2690, 1
        %s2695 = sphi %s2678, %s2678
        %s2696 = sphi %s2679, %s2679
      $region1660: #{rnn_forward.1} parent=1656 // loop_header_branch
        %2693 = sbr.rel (%p2691) target = $region1664
      $region1661: #{rnn_forward.1} parent=1656 // loop_body
        %v2697 = vld [vmem:[%s2695] sm:%s2688]
        %2698 = vst [vmem:[%s2696] sm:%s2688] %v2697
      $region1662: #{rnn_forward.1} parent=1656 // loop_footer
        %s2694 = sadd.s32 1, %s2690
      $region1663: #{rnn_forward.1} parent=1656 // loop_footer_branch
        %2689 = sbr.rel target = $region1659
      $region1664: #{rnn_forward.1} parent=1656 // loop_exit
        _
    $region1657: #{rnn_forward.1} parent=1 // pred_fallthru
      _
    // Predicated region
    $region1676: #{rnn_forward.1} parent=1 // pred_check
      _
    $region1677: #{rnn_forward.1} parent=1 // pred_check_branch
      %2722 = sbr.rel (0) target = $region1679
    $region1678: #{rnn_forward.1} parent=1 // pred_region
      %2723 = vsyncadd %s327, 16
    $region1679: #{rnn_forward.1} parent=1 // pred_fallthru
      _
    %s2724 = sshll.u32 %s420, 4
    %2725 = dma.done %s375, %s2724
    %s2726 = sld [smem:[#allocation4 + $0x3e]]
    %s2727 = scalar_lea.vmem %s1, %s2726
    %s2728 = scalar_lea.vmem [#allocation2], 55
    %p2730 = scmp.lt.u32.totalorder 1, 8
    %p2731 = pneg %p2730
    // Predicated region
    $region1680: #{rnn_forward.1} parent=1 // pred_check
      _
    $region1681: #{rnn_forward.1} parent=1 // pred_check_branch
      %2733 = sbr.rel (%p2730) target = $region1683
    $region1682: #{rnn_forward.1} parent=1 // pred_region
      %s2748 = sand.u32 1, 7
      %p2749 = scmp.eq.s32.totalorder %s2748, 0
      %p2750 = pneg %p2749
      // Predicated region
      $region1695: #{rnn_forward.1} parent=1682 // pred_check
        _
      $region1696: #{rnn_forward.1} parent=1682 // pred_check_branch
        %2752 = sbr.rel (%p2749) target = $region1698
      $region1697: #{rnn_forward.1} parent=1682 // pred_region
        %s2753 = sand.u32 1, 7
        %s2754 = ssub.s32 1, %s2753
        %s2755 = scalar_lea.vmem %s2727, %s2754
        %s2756 = ssub.s32 1, %s2753
        %s2757 = scalar_lea.vmem %s2728, %s2756 [#allocation2]
        %s2758 = sshllo.u32 0, %s2753
        loop: start=0, step=1, limit=1
        $region1699: #{rnn_forward.1} parent=1697 // loop_pre_header
          _
        $region1700: #{rnn_forward.1} parent=1697 // loop_header
          %s2760 = sphi 0, %s2764
          %p2761 = scmp.ge.s32.totalorder %s2760, 1
          %s2765 = sphi %s2755, %s2755
          %s2766 = sphi %s2757, %s2757
        $region1701: #{rnn_forward.1} parent=1697 // loop_header_branch
          %2763 = sbr.rel (%p2761) target = $region1705
        $region1702: #{rnn_forward.1} parent=1697 // loop_body
          %v2767 = vld [vmem:[%s2765] sm:%s2758]
          %2768 = vst [vmem:[%s2766] sm:%s2758] %v2767
        $region1703: #{rnn_forward.1} parent=1697 // loop_footer
          %s2764 = sadd.s32 1, %s2760
        $region1704: #{rnn_forward.1} parent=1697 // loop_footer_branch
          %2759 = sbr.rel target = $region1700
        $region1705: #{rnn_forward.1} parent=1697 // loop_exit
          _
      $region1698: #{rnn_forward.1} parent=1682 // pred_fallthru
        _
    $region1683: #{rnn_forward.1} parent=1 // pred_fallthru
      _
    // Predicated region
    $region1684: #{rnn_forward.1} parent=1 // pred_check
      %p2734 = pneg %p2730
    $region1685: #{rnn_forward.1} parent=1 // pred_check_branch
      %2736 = sbr.rel (%p2734) target = $region1687
    $region1686: #{rnn_forward.1} parent=1 // pred_region
      %s2737 = sshllo.u32 0, 1
      loop: start=0, step=1, limit=1
      $region1688: #{rnn_forward.1} parent=1686 // loop_pre_header
        _
      $region1689: #{rnn_forward.1} parent=1686 // loop_header
        %s2739 = sphi 0, %s2743
        %p2740 = scmp.ge.s32.totalorder %s2739, 1
        %s2744 = sphi %s2727, %s2727
        %s2745 = sphi %s2728, %s2728
      $region1690: #{rnn_forward.1} parent=1686 // loop_header_branch
        %2742 = sbr.rel (%p2740) target = $region1694
      $region1691: #{rnn_forward.1} parent=1686 // loop_body
        %v2746 = vld [vmem:[%s2744] sm:%s2737]
        %2747 = vst [vmem:[%s2745] sm:%s2737] %v2746
      $region1692: #{rnn_forward.1} parent=1686 // loop_footer
        %s2743 = sadd.s32 1, %s2739
      $region1693: #{rnn_forward.1} parent=1686 // loop_footer_branch
        %2738 = sbr.rel target = $region1689
      $region1694: #{rnn_forward.1} parent=1686 // loop_exit
        _
    $region1687: #{rnn_forward.1} parent=1 // pred_fallthru
      _
    // Predicated region
    $region1706: #{rnn_forward.1} parent=1 // pred_check
      _
    $region1707: #{rnn_forward.1} parent=1 // pred_check_branch
      %2771 = sbr.rel (0) target = $region1709
    $region1708: #{rnn_forward.1} parent=1 // pred_region
      %2772 = vsyncadd %s375, 16
    $region1709: #{rnn_forward.1} parent=1 // pred_fallthru
      _
    %s2773 = sshll.u32 %s420, 4
    %2774 = dma.done [#allocation3], %s2773
    %s2775 = sld [smem:[#allocation4 + $0x7]]
    %s2776 = scalar_lea.vmem %s1, %s2775
    %s2777 = scalar_lea.vmem [#allocation2], 56
    %p2779 = scmp.lt.u32.totalorder 1, 8
    %p2780 = pneg %p2779
    // Predicated region
    $region1710: #{rnn_forward.1} parent=1 // pred_check
      _
    $region1711: #{rnn_forward.1} parent=1 // pred_check_branch
      %2782 = sbr.rel (%p2779) target = $region1713
    $region1712: #{rnn_forward.1} parent=1 // pred_region
      %s2797 = sand.u32 1, 7
      %p2798 = scmp.eq.s32.totalorder %s2797, 0
      %p2799 = pneg %p2798
      // Predicated region
      $region1725: #{rnn_forward.1} parent=1712 // pred_check
        _
      $region1726: #{rnn_forward.1} parent=1712 // pred_check_branch
        %2801 = sbr.rel (%p2798) target = $region1728
      $region1727: #{rnn_forward.1} parent=1712 // pred_region
        %s2802 = sand.u32 1, 7
        %s2803 = ssub.s32 1, %s2802
        %s2804 = scalar_lea.vmem %s2776, %s2803
        %s2805 = ssub.s32 1, %s2802
        %s2806 = scalar_lea.vmem %s2777, %s2805 [#allocation2]
        %s2807 = sshllo.u32 0, %s2802
        loop: start=0, step=1, limit=1
        $region1729: #{rnn_forward.1} parent=1727 // loop_pre_header
          _
        $region1730: #{rnn_forward.1} parent=1727 // loop_header
          %s2809 = sphi 0, %s2813
          %p2810 = scmp.ge.s32.totalorder %s2809, 1
          %s2814 = sphi %s2804, %s2804
          %s2815 = sphi %s2806, %s2806
        $region1731: #{rnn_forward.1} parent=1727 // loop_header_branch
          %2812 = sbr.rel (%p2810) target = $region1735
        $region1732: #{rnn_forward.1} parent=1727 // loop_body
          %v2816 = vld [vmem:[%s2814] sm:%s2807]
          %2817 = vst [vmem:[%s2815] sm:%s2807] %v2816
        $region1733: #{rnn_forward.1} parent=1727 // loop_footer
          %s2813 = sadd.s32 1, %s2809
        $region1734: #{rnn_forward.1} parent=1727 // loop_footer_branch
          %2808 = sbr.rel target = $region1730
        $region1735: #{rnn_forward.1} parent=1727 // loop_exit
          _
      $region1728: #{rnn_forward.1} parent=1712 // pred_fallthru
        _
    $region1713: #{rnn_forward.1} parent=1 // pred_fallthru
      _
    // Predicated region
    $region1714: #{rnn_forward.1} parent=1 // pred_check
      %p2783 = pneg %p2779
    $region1715: #{rnn_forward.1} parent=1 // pred_check_branch
      %2785 = sbr.rel (%p2783) target = $region1717
    $region1716: #{rnn_forward.1} parent=1 // pred_region
      %s2786 = sshllo.u32 0, 1
      loop: start=0, step=1, limit=1
      $region1718: #{rnn_forward.1} parent=1716 // loop_pre_header
        _
      $region1719: #{rnn_forward.1} parent=1716 // loop_header
        %s2788 = sphi 0, %s2792
        %p2789 = scmp.ge.s32.totalorder %s2788, 1
        %s2793 = sphi %s2776, %s2776
        %s2794 = sphi %s2777, %s2777
      $region1720: #{rnn_forward.1} parent=1716 // loop_header_branch
        %2791 = sbr.rel (%p2789) target = $region1724
      $region1721: #{rnn_forward.1} parent=1716 // loop_body
        %v2795 = vld [vmem:[%s2793] sm:%s2786]
        %2796 = vst [vmem:[%s2794] sm:%s2786] %v2795
      $region1722: #{rnn_forward.1} parent=1716 // loop_footer
        %s2792 = sadd.s32 1, %s2788
      $region1723: #{rnn_forward.1} parent=1716 // loop_footer_branch
        %2787 = sbr.rel target = $region1719
      $region1724: #{rnn_forward.1} parent=1716 // loop_exit
        _
    $region1717: #{rnn_forward.1} parent=1 // pred_fallthru
      _
    // Predicated region
    $region1736: #{rnn_forward.1} parent=1 // pred_check
      _
    $region1737: #{rnn_forward.1} parent=1 // pred_check_branch
      %2820 = sbr.rel (0) target = $region1739
    $region1738: #{rnn_forward.1} parent=1 // pred_region
      %2821 = vsyncadd [#allocation3], 16
    $region1739: #{rnn_forward.1} parent=1 // pred_fallthru
      _
    %s2822 = sshll.u32 %s420, 4
    %2823 = dma.done %s87, %s2822
    %s2824 = sld [smem:[#allocation4 + $0xf]]
    %s2825 = scalar_lea.vmem %s1, %s2824
    %s2826 = scalar_lea.vmem [#allocation2], 57
    %p2828 = scmp.lt.u32.totalorder 1, 8
    %p2829 = pneg %p2828
    // Predicated region
    $region1740: #{rnn_forward.1} parent=1 // pred_check
      _
    $region1741: #{rnn_forward.1} parent=1 // pred_check_branch
      %2831 = sbr.rel (%p2828) target = $region1743
    $region1742: #{rnn_forward.1} parent=1 // pred_region
      %s2846 = sand.u32 1, 7
      %p2847 = scmp.eq.s32.totalorder %s2846, 0
      %p2848 = pneg %p2847
      // Predicated region
      $region1755: #{rnn_forward.1} parent=1742 // pred_check
        _
      $region1756: #{rnn_forward.1} parent=1742 // pred_check_branch
        %2850 = sbr.rel (%p2847) target = $region1758
      $region1757: #{rnn_forward.1} parent=1742 // pred_region
        %s2851 = sand.u32 1, 7
        %s2852 = ssub.s32 1, %s2851
        %s2853 = scalar_lea.vmem %s2825, %s2852
        %s2854 = ssub.s32 1, %s2851
        %s2855 = scalar_lea.vmem %s2826, %s2854 [#allocation2]
        %s2856 = sshllo.u32 0, %s2851
        loop: start=0, step=1, limit=1
        $region1759: #{rnn_forward.1} parent=1757 // loop_pre_header
          _
        $region1760: #{rnn_forward.1} parent=1757 // loop_header
          %s2858 = sphi 0, %s2862
          %p2859 = scmp.ge.s32.totalorder %s2858, 1
          %s2863 = sphi %s2853, %s2853
          %s2864 = sphi %s2855, %s2855
        $region1761: #{rnn_forward.1} parent=1757 // loop_header_branch
          %2861 = sbr.rel (%p2859) target = $region1765
        $region1762: #{rnn_forward.1} parent=1757 // loop_body
          %v2865 = vld [vmem:[%s2863] sm:%s2856]
          %2866 = vst [vmem:[%s2864] sm:%s2856] %v2865
        $region1763: #{rnn_forward.1} parent=1757 // loop_footer
          %s2862 = sadd.s32 1, %s2858
        $region1764: #{rnn_forward.1} parent=1757 // loop_footer_branch
          %2857 = sbr.rel target = $region1760
        $region1765: #{rnn_forward.1} parent=1757 // loop_exit
          _
      $region1758: #{rnn_forward.1} parent=1742 // pred_fallthru
        _
    $region1743: #{rnn_forward.1} parent=1 // pred_fallthru
      _
    // Predicated region
    $region1744: #{rnn_forward.1} parent=1 // pred_check
      %p2832 = pneg %p2828
    $region1745: #{rnn_forward.1} parent=1 // pred_check_branch
      %2834 = sbr.rel (%p2832) target = $region1747
    $region1746: #{rnn_forward.1} parent=1 // pred_region
      %s2835 = sshllo.u32 0, 1
      loop: start=0, step=1, limit=1
      $region1748: #{rnn_forward.1} parent=1746 // loop_pre_header
        _
      $region1749: #{rnn_forward.1} parent=1746 // loop_header
        %s2837 = sphi 0, %s2841
        %p2838 = scmp.ge.s32.totalorder %s2837, 1
        %s2842 = sphi %s2825, %s2825
        %s2843 = sphi %s2826, %s2826
      $region1750: #{rnn_forward.1} parent=1746 // loop_header_branch
        %2840 = sbr.rel (%p2838) target = $region1754
      $region1751: #{rnn_forward.1} parent=1746 // loop_body
        %v2844 = vld [vmem:[%s2842] sm:%s2835]
        %2845 = vst [vmem:[%s2843] sm:%s2835] %v2844
      $region1752: #{rnn_forward.1} parent=1746 // loop_footer
        %s2841 = sadd.s32 1, %s2837
      $region1753: #{rnn_forward.1} parent=1746 // loop_footer_branch
        %2836 = sbr.rel target = $region1749
      $region1754: #{rnn_forward.1} parent=1746 // loop_exit
        _
    $region1747: #{rnn_forward.1} parent=1 // pred_fallthru
      _
    // Predicated region
    $region1766: #{rnn_forward.1} parent=1 // pred_check
      _
    $region1767: #{rnn_forward.1} parent=1 // pred_check_branch
      %2869 = sbr.rel (0) target = $region1769
    $region1768: #{rnn_forward.1} parent=1 // pred_region
      %2870 = vsyncadd %s87, 16
    $region1769: #{rnn_forward.1} parent=1 // pred_fallthru
      _
    %s2871 = sshll.u32 %s420, 4
    %2872 = dma.done %s135, %s2871
    %s2873 = sld [smem:[#allocation4 + $0x17]]
    %s2874 = scalar_lea.vmem %s1, %s2873
    %s2875 = scalar_lea.vmem [#allocation2], 58
    %p2877 = scmp.lt.u32.totalorder 1, 8
    %p2878 = pneg %p2877
    // Predicated region
    $region1770: #{rnn_forward.1} parent=1 // pred_check
      _
    $region1771: #{rnn_forward.1} parent=1 // pred_check_branch
      %2880 = sbr.rel (%p2877) target = $region1773
    $region1772: #{rnn_forward.1} parent=1 // pred_region
      %s2895 = sand.u32 1, 7
      %p2896 = scmp.eq.s32.totalorder %s2895, 0
      %p2897 = pneg %p2896
      // Predicated region
      $region1785: #{rnn_forward.1} parent=1772 // pred_check
        _
      $region1786: #{rnn_forward.1} parent=1772 // pred_check_branch
        %2899 = sbr.rel (%p2896) target = $region1788
      $region1787: #{rnn_forward.1} parent=1772 // pred_region
        %s2900 = sand.u32 1, 7
        %s2901 = ssub.s32 1, %s2900
        %s2902 = scalar_lea.vmem %s2874, %s2901
        %s2903 = ssub.s32 1, %s2900
        %s2904 = scalar_lea.vmem %s2875, %s2903 [#allocation2]
        %s2905 = sshllo.u32 0, %s2900
        loop: start=0, step=1, limit=1
        $region1789: #{rnn_forward.1} parent=1787 // loop_pre_header
          _
        $region1790: #{rnn_forward.1} parent=1787 // loop_header
          %s2907 = sphi 0, %s2911
          %p2908 = scmp.ge.s32.totalorder %s2907, 1
          %s2912 = sphi %s2902, %s2902
          %s2913 = sphi %s2904, %s2904
        $region1791: #{rnn_forward.1} parent=1787 // loop_header_branch
          %2910 = sbr.rel (%p2908) target = $region1795
        $region1792: #{rnn_forward.1} parent=1787 // loop_body
          %v2914 = vld [vmem:[%s2912] sm:%s2905]
          %2915 = vst [vmem:[%s2913] sm:%s2905] %v2914
        $region1793: #{rnn_forward.1} parent=1787 // loop_footer
          %s2911 = sadd.s32 1, %s2907
        $region1794: #{rnn_forward.1} parent=1787 // loop_footer_branch
          %2906 = sbr.rel target = $region1790
        $region1795: #{rnn_forward.1} parent=1787 // loop_exit
          _
      $region1788: #{rnn_forward.1} parent=1772 // pred_fallthru
        _
    $region1773: #{rnn_forward.1} parent=1 // pred_fallthru
      _
    // Predicated region
    $region1774: #{rnn_forward.1} parent=1 // pred_check
      %p2881 = pneg %p2877
    $region1775: #{rnn_forward.1} parent=1 // pred_check_branch
      %2883 = sbr.rel (%p2881) target = $region1777
    $region1776: #{rnn_forward.1} parent=1 // pred_region
      %s2884 = sshllo.u32 0, 1
      loop: start=0, step=1, limit=1
      $region1778: #{rnn_forward.1} parent=1776 // loop_pre_header
        _
      $region1779: #{rnn_forward.1} parent=1776 // loop_header
        %s2886 = sphi 0, %s2890
        %p2887 = scmp.ge.s32.totalorder %s2886, 1
        %s2891 = sphi %s2874, %s2874
        %s2892 = sphi %s2875, %s2875
      $region1780: #{rnn_forward.1} parent=1776 // loop_header_branch
        %2889 = sbr.rel (%p2887) target = $region1784
      $region1781: #{rnn_forward.1} parent=1776 // loop_body
        %v2893 = vld [vmem:[%s2891] sm:%s2884]
        %2894 = vst [vmem:[%s2892] sm:%s2884] %v2893
      $region1782: #{rnn_forward.1} parent=1776 // loop_footer
        %s2890 = sadd.s32 1, %s2886
      $region1783: #{rnn_forward.1} parent=1776 // loop_footer_branch
        %2885 = sbr.rel target = $region1779
      $region1784: #{rnn_forward.1} parent=1776 // loop_exit
        _
    $region1777: #{rnn_forward.1} parent=1 // pred_fallthru
      _
    // Predicated region
    $region1796: #{rnn_forward.1} parent=1 // pred_check
      _
    $region1797: #{rnn_forward.1} parent=1 // pred_check_branch
      %2918 = sbr.rel (0) target = $region1799
    $region1798: #{rnn_forward.1} parent=1 // pred_region
      %2919 = vsyncadd %s135, 16
    $region1799: #{rnn_forward.1} parent=1 // pred_fallthru
      _
    %s2920 = sshll.u32 %s420, 4
    %2921 = dma.done %s183, %s2920
    %s2922 = sld [smem:[#allocation4 + $0x1f]]
    %s2923 = scalar_lea.vmem %s1, %s2922
    %s2924 = scalar_lea.vmem [#allocation2], 59
    %p2926 = scmp.lt.u32.totalorder 1, 8
    %p2927 = pneg %p2926
    // Predicated region
    $region1800: #{rnn_forward.1} parent=1 // pred_check
      _
    $region1801: #{rnn_forward.1} parent=1 // pred_check_branch
      %2929 = sbr.rel (%p2926) target = $region1803
    $region1802: #{rnn_forward.1} parent=1 // pred_region
      %s2944 = sand.u32 1, 7
      %p2945 = scmp.eq.s32.totalorder %s2944, 0
      %p2946 = pneg %p2945
      // Predicated region
      $region1815: #{rnn_forward.1} parent=1802 // pred_check
        _
      $region1816: #{rnn_forward.1} parent=1802 // pred_check_branch
        %2948 = sbr.rel (%p2945) target = $region1818
      $region1817: #{rnn_forward.1} parent=1802 // pred_region
        %s2949 = sand.u32 1, 7
        %s2950 = ssub.s32 1, %s2949
        %s2951 = scalar_lea.vmem %s2923, %s2950
        %s2952 = ssub.s32 1, %s2949
        %s2953 = scalar_lea.vmem %s2924, %s2952 [#allocation2]
        %s2954 = sshllo.u32 0, %s2949
        loop: start=0, step=1, limit=1
        $region1819: #{rnn_forward.1} parent=1817 // loop_pre_header
          _
        $region1820: #{rnn_forward.1} parent=1817 // loop_header
          %s2956 = sphi 0, %s2960
          %p2957 = scmp.ge.s32.totalorder %s2956, 1
          %s2961 = sphi %s2951, %s2951
          %s2962 = sphi %s2953, %s2953
        $region1821: #{rnn_forward.1} parent=1817 // loop_header_branch
          %2959 = sbr.rel (%p2957) target = $region1825
        $region1822: #{rnn_forward.1} parent=1817 // loop_body
          %v2963 = vld [vmem:[%s2961] sm:%s2954]
          %2964 = vst [vmem:[%s2962] sm:%s2954] %v2963
        $region1823: #{rnn_forward.1} parent=1817 // loop_footer
          %s2960 = sadd.s32 1, %s2956
        $region1824: #{rnn_forward.1} parent=1817 // loop_footer_branch
          %2955 = sbr.rel target = $region1820
        $region1825: #{rnn_forward.1} parent=1817 // loop_exit
          _
      $region1818: #{rnn_forward.1} parent=1802 // pred_fallthru
        _
    $region1803: #{rnn_forward.1} parent=1 // pred_fallthru
      _
    // Predicated region
    $region1804: #{rnn_forward.1} parent=1 // pred_check
      %p2930 = pneg %p2926
    $region1805: #{rnn_forward.1} parent=1 // pred_check_branch
      %2932 = sbr.rel (%p2930) target = $region1807
    $region1806: #{rnn_forward.1} parent=1 // pred_region
      %s2933 = sshllo.u32 0, 1
      loop: start=0, step=1, limit=1
      $region1808: #{rnn_forward.1} parent=1806 // loop_pre_header
        _
      $region1809: #{rnn_forward.1} parent=1806 // loop_header
        %s2935 = sphi 0, %s2939
        %p2936 = scmp.ge.s32.totalorder %s2935, 1
        %s2940 = sphi %s2923, %s2923
        %s2941 = sphi %s2924, %s2924
      $region1810: #{rnn_forward.1} parent=1806 // loop_header_branch
        %2938 = sbr.rel (%p2936) target = $region1814
      $region1811: #{rnn_forward.1} parent=1806 // loop_body
        %v2942 = vld [vmem:[%s2940] sm:%s2933]
        %2943 = vst [vmem:[%s2941] sm:%s2933] %v2942
      $region1812: #{rnn_forward.1} parent=1806 // loop_footer
        %s2939 = sadd.s32 1, %s2935
      $region1813: #{rnn_forward.1} parent=1806 // loop_footer_branch
        %2934 = sbr.rel target = $region1809
      $region1814: #{rnn_forward.1} parent=1806 // loop_exit
        _
    $region1807: #{rnn_forward.1} parent=1 // pred_fallthru
      _
    // Predicated region
    $region1826: #{rnn_forward.1} parent=1 // pred_check
      _
    $region1827: #{rnn_forward.1} parent=1 // pred_check_branch
      %2967 = sbr.rel (0) target = $region1829
    $region1828: #{rnn_forward.1} parent=1 // pred_region
      %2968 = vsyncadd %s183, 16
    $region1829: #{rnn_forward.1} parent=1 // pred_fallthru
      _
    %s2969 = sshll.u32 %s420, 4
    %2970 = dma.done %s231, %s2969
    %s2971 = sld [smem:[#allocation4 + $0x27]]
    %s2972 = scalar_lea.vmem %s1, %s2971
    %s2973 = scalar_lea.vmem [#allocation2], 60
    %p2975 = scmp.lt.u32.totalorder 1, 8
    %p2976 = pneg %p2975
    // Predicated region
    $region1830: #{rnn_forward.1} parent=1 // pred_check
      _
    $region1831: #{rnn_forward.1} parent=1 // pred_check_branch
      %2978 = sbr.rel (%p2975) target = $region1833
    $region1832: #{rnn_forward.1} parent=1 // pred_region
      %s2993 = sand.u32 1, 7
      %p2994 = scmp.eq.s32.totalorder %s2993, 0
      %p2995 = pneg %p2994
      // Predicated region
      $region1845: #{rnn_forward.1} parent=1832 // pred_check
        _
      $region1846: #{rnn_forward.1} parent=1832 // pred_check_branch
        %2997 = sbr.rel (%p2994) target = $region1848
      $region1847: #{rnn_forward.1} parent=1832 // pred_region
        %s2998 = sand.u32 1, 7
        %s2999 = ssub.s32 1, %s2998
        %s3000 = scalar_lea.vmem %s2972, %s2999
        %s3001 = ssub.s32 1, %s2998
        %s3002 = scalar_lea.vmem %s2973, %s3001 [#allocation2]
        %s3003 = sshllo.u32 0, %s2998
        loop: start=0, step=1, limit=1
        $region1849: #{rnn_forward.1} parent=1847 // loop_pre_header
          _
        $region1850: #{rnn_forward.1} parent=1847 // loop_header
          %s3005 = sphi 0, %s3009
          %p3006 = scmp.ge.s32.totalorder %s3005, 1
          %s3010 = sphi %s3000, %s3000
          %s3011 = sphi %s3002, %s3002
        $region1851: #{rnn_forward.1} parent=1847 // loop_header_branch
          %3008 = sbr.rel (%p3006) target = $region1855
        $region1852: #{rnn_forward.1} parent=1847 // loop_body
          %v3012 = vld [vmem:[%s3010] sm:%s3003]
          %3013 = vst [vmem:[%s3011] sm:%s3003] %v3012
        $region1853: #{rnn_forward.1} parent=1847 // loop_footer
          %s3009 = sadd.s32 1, %s3005
        $region1854: #{rnn_forward.1} parent=1847 // loop_footer_branch
          %3004 = sbr.rel target = $region1850
        $region1855: #{rnn_forward.1} parent=1847 // loop_exit
          _
      $region1848: #{rnn_forward.1} parent=1832 // pred_fallthru
        _
    $region1833: #{rnn_forward.1} parent=1 // pred_fallthru
      _
    // Predicated region
    $region1834: #{rnn_forward.1} parent=1 // pred_check
      %p2979 = pneg %p2975
    $region1835: #{rnn_forward.1} parent=1 // pred_check_branch
      %2981 = sbr.rel (%p2979) target = $region1837
    $region1836: #{rnn_forward.1} parent=1 // pred_region
      %s2982 = sshllo.u32 0, 1
      loop: start=0, step=1, limit=1
      $region1838: #{rnn_forward.1} parent=1836 // loop_pre_header
        _
      $region1839: #{rnn_forward.1} parent=1836 // loop_header
        %s2984 = sphi 0, %s2988
        %p2985 = scmp.ge.s32.totalorder %s2984, 1
        %s2989 = sphi %s2972, %s2972
        %s2990 = sphi %s2973, %s2973
      $region1840: #{rnn_forward.1} parent=1836 // loop_header_branch
        %2987 = sbr.rel (%p2985) target = $region1844
      $region1841: #{rnn_forward.1} parent=1836 // loop_body
        %v2991 = vld [vmem:[%s2989] sm:%s2982]
        %2992 = vst [vmem:[%s2990] sm:%s2982] %v2991
      $region1842: #{rnn_forward.1} parent=1836 // loop_footer
        %s2988 = sadd.s32 1, %s2984
      $region1843: #{rnn_forward.1} parent=1836 // loop_footer_branch
        %2983 = sbr.rel target = $region1839
      $region1844: #{rnn_forward.1} parent=1836 // loop_exit
        _
    $region1837: #{rnn_forward.1} parent=1 // pred_fallthru
      _
    // Predicated region
    $region1856: #{rnn_forward.1} parent=1 // pred_check
      _
    $region1857: #{rnn_forward.1} parent=1 // pred_check_branch
      %3016 = sbr.rel (0) target = $region1859
    $region1858: #{rnn_forward.1} parent=1 // pred_region
      %3017 = vsyncadd %s231, 16
    $region1859: #{rnn_forward.1} parent=1 // pred_fallthru
      _
    %s3018 = sshll.u32 %s420, 4
    %3019 = dma.done %s279, %s3018
    %s3020 = sld [smem:[#allocation4 + $0x2f]]
    %s3021 = scalar_lea.vmem %s1, %s3020
    %s3022 = scalar_lea.vmem [#allocation2], 61
    %p3024 = scmp.lt.u32.totalorder 1, 8
    %p3025 = pneg %p3024
    // Predicated region
    $region1860: #{rnn_forward.1} parent=1 // pred_check
      _
    $region1861: #{rnn_forward.1} parent=1 // pred_check_branch
      %3027 = sbr.rel (%p3024) target = $region1863
    $region1862: #{rnn_forward.1} parent=1 // pred_region
      %s3042 = sand.u32 1, 7
      %p3043 = scmp.eq.s32.totalorder %s3042, 0
      %p3044 = pneg %p3043
      // Predicated region
      $region1875: #{rnn_forward.1} parent=1862 // pred_check
        _
      $region1876: #{rnn_forward.1} parent=1862 // pred_check_branch
        %3046 = sbr.rel (%p3043) target = $region1878
      $region1877: #{rnn_forward.1} parent=1862 // pred_region
        %s3047 = sand.u32 1, 7
        %s3048 = ssub.s32 1, %s3047
        %s3049 = scalar_lea.vmem %s3021, %s3048
        %s3050 = ssub.s32 1, %s3047
        %s3051 = scalar_lea.vmem %s3022, %s3050 [#allocation2]
        %s3052 = sshllo.u32 0, %s3047
        loop: start=0, step=1, limit=1
        $region1879: #{rnn_forward.1} parent=1877 // loop_pre_header
          _
        $region1880: #{rnn_forward.1} parent=1877 // loop_header
          %s3054 = sphi 0, %s3058
          %p3055 = scmp.ge.s32.totalorder %s3054, 1
          %s3059 = sphi %s3049, %s3049
          %s3060 = sphi %s3051, %s3051
        $region1881: #{rnn_forward.1} parent=1877 // loop_header_branch
          %3057 = sbr.rel (%p3055) target = $region1885
        $region1882: #{rnn_forward.1} parent=1877 // loop_body
          %v3061 = vld [vmem:[%s3059] sm:%s3052]
          %3062 = vst [vmem:[%s3060] sm:%s3052] %v3061
        $region1883: #{rnn_forward.1} parent=1877 // loop_footer
          %s3058 = sadd.s32 1, %s3054
        $region1884: #{rnn_forward.1} parent=1877 // loop_footer_branch
          %3053 = sbr.rel target = $region1880
        $region1885: #{rnn_forward.1} parent=1877 // loop_exit
          _
      $region1878: #{rnn_forward.1} parent=1862 // pred_fallthru
        _
    $region1863: #{rnn_forward.1} parent=1 // pred_fallthru
      _
    // Predicated region
    $region1864: #{rnn_forward.1} parent=1 // pred_check
      %p3028 = pneg %p3024
    $region1865: #{rnn_forward.1} parent=1 // pred_check_branch
      %3030 = sbr.rel (%p3028) target = $region1867
    $region1866: #{rnn_forward.1} parent=1 // pred_region
      %s3031 = sshllo.u32 0, 1
      loop: start=0, step=1, limit=1
      $region1868: #{rnn_forward.1} parent=1866 // loop_pre_header
        _
      $region1869: #{rnn_forward.1} parent=1866 // loop_header
        %s3033 = sphi 0, %s3037
        %p3034 = scmp.ge.s32.totalorder %s3033, 1
        %s3038 = sphi %s3021, %s3021
        %s3039 = sphi %s3022, %s3022
      $region1870: #{rnn_forward.1} parent=1866 // loop_header_branch
        %3036 = sbr.rel (%p3034) target = $region1874
      $region1871: #{rnn_forward.1} parent=1866 // loop_body
        %v3040 = vld [vmem:[%s3038] sm:%s3031]
        %3041 = vst [vmem:[%s3039] sm:%s3031] %v3040
      $region1872: #{rnn_forward.1} parent=1866 // loop_footer
        %s3037 = sadd.s32 1, %s3033
      $region1873: #{rnn_forward.1} parent=1866 // loop_footer_branch
        %3032 = sbr.rel target = $region1869
      $region1874: #{rnn_forward.1} parent=1866 // loop_exit
        _
    $region1867: #{rnn_forward.1} parent=1 // pred_fallthru
      _
    // Predicated region
    $region1886: #{rnn_forward.1} parent=1 // pred_check
      _
    $region1887: #{rnn_forward.1} parent=1 // pred_check_branch
      %3065 = sbr.rel (0) target = $region1889
    $region1888: #{rnn_forward.1} parent=1 // pred_region
      %3066 = vsyncadd %s279, 16
    $region1889: #{rnn_forward.1} parent=1 // pred_fallthru
      _
    %s3067 = sshll.u32 %s420, 4
    %3068 = dma.done %s327, %s3067
    %s3069 = sld [smem:[#allocation4 + $0x37]]
    %s3070 = scalar_lea.vmem %s1, %s3069
    %s3071 = scalar_lea.vmem [#allocation2], 62
    %p3073 = scmp.lt.u32.totalorder 1, 8
    %p3074 = pneg %p3073
    // Predicated region
    $region1890: #{rnn_forward.1} parent=1 // pred_check
      _
    $region1891: #{rnn_forward.1} parent=1 // pred_check_branch
      %3076 = sbr.rel (%p3073) target = $region1893
    $region1892: #{rnn_forward.1} parent=1 // pred_region
      %s3091 = sand.u32 1, 7
      %p3092 = scmp.eq.s32.totalorder %s3091, 0
      %p3093 = pneg %p3092
      // Predicated region
      $region1905: #{rnn_forward.1} parent=1892 // pred_check
        _
      $region1906: #{rnn_forward.1} parent=1892 // pred_check_branch
        %3095 = sbr.rel (%p3092) target = $region1908
      $region1907: #{rnn_forward.1} parent=1892 // pred_region
        %s3096 = sand.u32 1, 7
        %s3097 = ssub.s32 1, %s3096
        %s3098 = scalar_lea.vmem %s3070, %s3097
        %s3099 = ssub.s32 1, %s3096
        %s3100 = scalar_lea.vmem %s3071, %s3099 [#allocation2]
        %s3101 = sshllo.u32 0, %s3096
        loop: start=0, step=1, limit=1
        $region1909: #{rnn_forward.1} parent=1907 // loop_pre_header
          _
        $region1910: #{rnn_forward.1} parent=1907 // loop_header
          %s3103 = sphi 0, %s3107
          %p3104 = scmp.ge.s32.totalorder %s3103, 1
          %s3108 = sphi %s3098, %s3098
          %s3109 = sphi %s3100, %s3100
        $region1911: #{rnn_forward.1} parent=1907 // loop_header_branch
          %3106 = sbr.rel (%p3104) target = $region1915
        $region1912: #{rnn_forward.1} parent=1907 // loop_body
          %v3110 = vld [vmem:[%s3108] sm:%s3101]
          %3111 = vst [vmem:[%s3109] sm:%s3101] %v3110
        $region1913: #{rnn_forward.1} parent=1907 // loop_footer
          %s3107 = sadd.s32 1, %s3103
        $region1914: #{rnn_forward.1} parent=1907 // loop_footer_branch
          %3102 = sbr.rel target = $region1910
        $region1915: #{rnn_forward.1} parent=1907 // loop_exit
          _
      $region1908: #{rnn_forward.1} parent=1892 // pred_fallthru
        _
    $region1893: #{rnn_forward.1} parent=1 // pred_fallthru
      _
    // Predicated region
    $region1894: #{rnn_forward.1} parent=1 // pred_check
      %p3077 = pneg %p3073
    $region1895: #{rnn_forward.1} parent=1 // pred_check_branch
      %3079 = sbr.rel (%p3077) target = $region1897
    $region1896: #{rnn_forward.1} parent=1 // pred_region
      %s3080 = sshllo.u32 0, 1
      loop: start=0, step=1, limit=1
      $region1898: #{rnn_forward.1} parent=1896 // loop_pre_header
        _
      $region1899: #{rnn_forward.1} parent=1896 // loop_header
        %s3082 = sphi 0, %s3086
        %p3083 = scmp.ge.s32.totalorder %s3082, 1
        %s3087 = sphi %s3070, %s3070
        %s3088 = sphi %s3071, %s3071
      $region1900: #{rnn_forward.1} parent=1896 // loop_header_branch
        %3085 = sbr.rel (%p3083) target = $region1904
      $region1901: #{rnn_forward.1} parent=1896 // loop_body
        %v3089 = vld [vmem:[%s3087] sm:%s3080]
        %3090 = vst [vmem:[%s3088] sm:%s3080] %v3089
      $region1902: #{rnn_forward.1} parent=1896 // loop_footer
        %s3086 = sadd.s32 1, %s3082
      $region1903: #{rnn_forward.1} parent=1896 // loop_footer_branch
        %3081 = sbr.rel target = $region1899
      $region1904: #{rnn_forward.1} parent=1896 // loop_exit
        _
    $region1897: #{rnn_forward.1} parent=1 // pred_fallthru
      _
    // Predicated region
    $region1916: #{rnn_forward.1} parent=1 // pred_check
      _
    $region1917: #{rnn_forward.1} parent=1 // pred_check_branch
      %3114 = sbr.rel (0) target = $region1919
    $region1918: #{rnn_forward.1} parent=1 // pred_region
      %3115 = vsyncadd %s327, 16
    $region1919: #{rnn_forward.1} parent=1 // pred_fallthru
      _
    %s3116 = sshll.u32 %s420, 4
    %3117 = dma.done %s375, %s3116
    %s3118 = sld [smem:[#allocation4 + $0x3f]]
    %s3119 = scalar_lea.vmem %s1, %s3118
    %s3120 = scalar_lea.vmem [#allocation2], 63
    %p3122 = scmp.lt.u32.totalorder 1, 8
    %p3123 = pneg %p3122
    // Predicated region
    $region1920: #{rnn_forward.1} parent=1 // pred_check
      _
    $region1921: #{rnn_forward.1} parent=1 // pred_check_branch
      %3125 = sbr.rel (%p3122) target = $region1923
    $region1922: #{rnn_forward.1} parent=1 // pred_region
      %s3140 = sand.u32 1, 7
      %p3141 = scmp.eq.s32.totalorder %s3140, 0
      %p3142 = pneg %p3141
      // Predicated region
      $region1935: #{rnn_forward.1} parent=1922 // pred_check
        _
      $region1936: #{rnn_forward.1} parent=1922 // pred_check_branch
        %3144 = sbr.rel (%p3141) target = $region1938
      $region1937: #{rnn_forward.1} parent=1922 // pred_region
        %s3145 = sand.u32 1, 7
        %s3146 = ssub.s32 1, %s3145
        %s3147 = scalar_lea.vmem %s3119, %s3146
        %s3148 = ssub.s32 1, %s3145
        %s3149 = scalar_lea.vmem %s3120, %s3148 [#allocation2]
        %s3150 = sshllo.u32 0, %s3145
        loop: start=0, step=1, limit=1
        $region1939: #{rnn_forward.1} parent=1937 // loop_pre_header
          _
        $region1940: #{rnn_forward.1} parent=1937 // loop_header
          %s3152 = sphi 0, %s3156
          %p3153 = scmp.ge.s32.totalorder %s3152, 1
          %s3157 = sphi %s3147, %s3147
          %s3158 = sphi %s3149, %s3149
        $region1941: #{rnn_forward.1} parent=1937 // loop_header_branch
          %3155 = sbr.rel (%p3153) target = $region1945
        $region1942: #{rnn_forward.1} parent=1937 // loop_body
          %v3159 = vld [vmem:[%s3157] sm:%s3150]
          %3160 = vst [vmem:[%s3158] sm:%s3150] %v3159
        $region1943: #{rnn_forward.1} parent=1937 // loop_footer
          %s3156 = sadd.s32 1, %s3152
        $region1944: #{rnn_forward.1} parent=1937 // loop_footer_branch
          %3151 = sbr.rel target = $region1940
        $region1945: #{rnn_forward.1} parent=1937 // loop_exit
          _
      $region1938: #{rnn_forward.1} parent=1922 // pred_fallthru
        _
    $region1923: #{rnn_forward.1} parent=1 // pred_fallthru
      _
    // Predicated region
    $region1924: #{rnn_forward.1} parent=1 // pred_check
      %p3126 = pneg %p3122
    $region1925: #{rnn_forward.1} parent=1 // pred_check_branch
      %3128 = sbr.rel (%p3126) target = $region1927
    $region1926: #{rnn_forward.1} parent=1 // pred_region
      %s3129 = sshllo.u32 0, 1
      loop: start=0, step=1, limit=1
      $region1928: #{rnn_forward.1} parent=1926 // loop_pre_header
        _
      $region1929: #{rnn_forward.1} parent=1926 // loop_header
        %s3131 = sphi 0, %s3135
        %p3132 = scmp.ge.s32.totalorder %s3131, 1
        %s3136 = sphi %s3119, %s3119
        %s3137 = sphi %s3120, %s3120
      $region1930: #{rnn_forward.1} parent=1926 // loop_header_branch
        %3134 = sbr.rel (%p3132) target = $region1934
      $region1931: #{rnn_forward.1} parent=1926 // loop_body
        %v3138 = vld [vmem:[%s3136] sm:%s3129]
        %3139 = vst [vmem:[%s3137] sm:%s3129] %v3138
      $region1932: #{rnn_forward.1} parent=1926 // loop_footer
        %s3135 = sadd.s32 1, %s3131
      $region1933: #{rnn_forward.1} parent=1926 // loop_footer_branch
        %3130 = sbr.rel target = $region1929
      $region1934: #{rnn_forward.1} parent=1926 // loop_exit
        _
    $region1927: #{rnn_forward.1} parent=1 // pred_fallthru
      _
    // Predicated region
    $region1946: #{rnn_forward.1} parent=1 // pred_check
      _
    $region1947: #{rnn_forward.1} parent=1 // pred_check_branch
      %3163 = sbr.rel (0) target = $region1949
    $region1948: #{rnn_forward.1} parent=1 // pred_region
      %3164 = vsyncadd %s375, 16
    $region1949: #{rnn_forward.1} parent=1 // pred_fallthru
      _
    %s3165 = sshll.u32 %s420, 4
    %3166 = dma.done [#allocation3], %s3165
    %s3167 = sshll.u32 %s420, 4
    %3168 = dma.done %s87, %s3167
    %s3169 = sshll.u32 %s420, 4
    %3170 = dma.done %s135, %s3169
    %s3171 = sshll.u32 %s420, 4
    %3172 = dma.done %s183, %s3171
    %s3173 = sshll.u32 %s420, 4
    %3174 = dma.done %s231, %s3173
    %s3175 = sshll.u32 %s420, 4
    %3176 = dma.done %s279, %s3175
    %s3177 = sshll.u32 %s420, 4
    %3178 = dma.done %s327, %s3177
    %s3179 = sshll.u32 %s420, 4
    %3180 = dma.done %s375, %s3179
    %v3181 = vld [vmem:[#allocation2] sm:$0xff]
    %v3182 = vld [vmem:[#allocation2 + $0x8] sm:$0xff]
    %v3183 = vld [vmem:[#allocation2 + $0x10] sm:$0xff]
    %v3184 = vld [vmem:[#allocation2 + $0x18] sm:$0xff]
    %v3185 = vld [vmem:[#allocation2 + $0x20] sm:$0xff]
    %v3186 = vld [vmem:[#allocation2 + $0x28] sm:$0xff]
    %v3187 = vld [vmem:[#allocation2 + $0x30] sm:$0xff]
    %v3188 = vld [vmem:[#allocation2 + $0x38] sm:$0xff]
    %v3189 = vpack.c.bf16 %v3182, %v3181
    %v3190 = vpack.c.bf16 %v3184, %v3183
    %v3191 = vpack.c.bf16 %v3186, %v3185
    %v3192 = vpack.c.bf16 %v3188, %v3187
    %v3193 = vld [vmem:[%s2] sm:$0xf]
    %v3194 = vld [vmem:[%s2 + $0x4] sm:$0xf]
    %v3195 = vld [vmem:[%s2 + $0x8] sm:$0xf]
    %v3196 = vld [vmem:[%s2 + $0xc] sm:$0xf]
    %v3197 = vld [vmem:[%s2 + $0x10] sm:$0xf]
    %v3198 = vld [vmem:[%s2 + $0x14] sm:$0xf]
    %v3199 = vld [vmem:[%s2 + $0x18] sm:$0xf]
    %v3200 = vld [vmem:[%s2 + $0x1c] sm:$0xf]
    %v3201 = vld [vmem:[%s4] sm:$0x1]
    %v3203 = vlaneseq
    %v3204 = vshrl.u32 %v3203, 7
    %v3205 = vsub.s32 0, %v3204
    %v3206 = vrot.slane %v3201, %v3205
    %v3216 = vunpack.c.l.b16 %v3193
    %v3217 = vunpack.c.l.b16 %v3194
    %v3218 = vunpack.c.l.b16 %v3195
    %v3219 = vunpack.c.l.b16 %v3196
    %v3220 = vunpack.c.l.b16 %v3197
    %v3221 = vunpack.c.l.b16 %v3198
    %v3222 = vunpack.c.l.b16 %v3199
    %v3223 = vunpack.c.l.b16 %v3200
    %v3224 = vpack.c.b16 %v3217, %v3216
    %v3225 = vpack.c.b16 %v3219, %v3218
    %v3226 = vpack.c.b16 %v3221, %v3220
    %v3227 = vpack.c.b16 %v3223, %v3222
    %vm3232 = vcmask 523264
    %v3234 = vsel %vm3232, %v3189, 0
    %v3237 = vsel %vm3232, %v3190, 0
    %v3240 = vsel %vm3232, %v3191, 0
    %v3243 = vsel %vm3232, %v3192, 0
    %3245 = vmatprep.subr.bf16.mxu0 0
    %3246 = vmatpush1.bf16.msra.mxu0 %v3224
    %3247 = vmatprep.subr.bf16.mxu0 0
    %3248 = vmatpush1.bf16.msra.mxu0 %v3225
    %3249 = vmatprep.subr.bf16.mxu0 0
    %3250 = vmatpush1.bf16.msra.mxu0 %v3226
    %3251 = vmatprep.subr.bf16.mxu0 0
    %3252 = vmatpush1.bf16.msra.mxu0 %v3227
    %3253 = vmatprep.subr.bf16.mxu0 0
    %3254 = vmatpush1.bf16.msra.mxu0 0
    %3255 = vmatprep.subr.bf16.mxu0 0
    %3256 = vmatpush1.bf16.msra.mxu0 0
    %3257 = vmatprep.subr.bf16.mxu0 0
    %3258 = vmatpush1.bf16.msra.mxu0 0
    %3259 = vmatprep.subr.bf16.mxu0 0
    %3260 = vmatpush1.bf16.msra.mxu0 0
    %3261 = vmatprep.subr.bf16.mxu0 0
    %3262 = vmatpush1.bf16.msra.mxu0 0
    %3263 = vmatprep.subr.bf16.mxu0 0
    %3264 = vmatpush1.bf16.msra.mxu0 0
    %3265 = vmatprep.subr.bf16.mxu0 0
    %3266 = vmatpush1.bf16.msra.mxu0 0
    %3267 = vmatprep.subr.bf16.mxu0 0
    %3268 = vmatpush1.bf16.msra.mxu0 0
    %3269 = vmatprep.subr.bf16.mxu0 0
    %3270 = vmatpush1.bf16.msra.mxu0 0
    %3271 = vmatprep.subr.bf16.mxu0 0
    %3272 = vmatpush1.bf16.msra.mxu0 0
    %3273 = vmatprep.subr.bf16.mxu0 0
    %3274 = vmatpush1.bf16.msra.mxu0 0
    %3275 = vmatprep.subr.bf16.mxu0 0
    %3276 = vmatpush1.bf16.msra.mxu0 0
    %3277 = vmatprep.mubr.bf16.mxu0 0
    %3278 = vmatmul.mubr.bf16.gmra.mrb[0].mxu0 %v3234
    %v3279 = vpop.f32.mrb[0].mxu0
    %v3280 = vadd.f32 %v3206, %v3279
    %v3281 = vpop.f32.mrb[0].mxu0
    %v3282 = vpop.f32.mrb[0].mxu0
    %v3283 = vadd.f32 %v3206, %v3282
    %v3284 = vpop.f32.mrb[0].mxu0
    %3285 = vmatprep.mubr.bf16.mxu0 0
    %3286 = vmatmul.mubr.bf16.gmra.mrb[0].mxu0 %v3237
    %v3287 = vpop.f32.mrb[0].mxu0
    %v3288 = vadd.f32 %v3206, %v3287
    %v3289 = vpop.f32.mrb[0].mxu0
    %v3290 = vpop.f32.mrb[0].mxu0
    %v3291 = vadd.f32 %v3206, %v3290
    %v3292 = vpop.f32.mrb[0].mxu0
    %3293 = vmatprep.mubr.bf16.mxu0 0
    %3294 = vmatmul.mubr.bf16.gmra.mrb[0].mxu0 %v3240
    %v3295 = vpop.f32.mrb[0].mxu0
    %v3296 = vadd.f32 %v3206, %v3295
    %v3297 = vpop.f32.mrb[0].mxu0
    %v3298 = vpop.f32.mrb[0].mxu0
    %v3299 = vadd.f32 %v3206, %v3298
    %v3300 = vpop.f32.mrb[0].mxu0
    %3301 = vmatprep.mubr.bf16.mxu0 0
    %3302 = vmatmul.mubr.bf16.gmra.mrb[0].mxu0 %v3243
    %v3303 = vpop.f32.mrb[0].mxu0
    %v3304 = vadd.f32 %v3206, %v3303
    %v3305 = vpop.f32.mrb[0].mxu0
    %v3306 = vpop.f32.mrb[0].mxu0
    %v3307 = vadd.f32 %v3206, %v3306
    %v3308 = vpop.f32.mrb[0].mxu0
    %3309 = vdwg.mxu0
    %v3310 = vld [vmem:[%s3] sm:$0xf]
    %v3311 = vld [vmem:[%s3 + $0x4] sm:$0xf]
    %v3312 = vld [vmem:[%s3 + $0x8] sm:$0xf]
    %v3313 = vld [vmem:[%s3 + $0xc] sm:$0xf]
    %v3314 = vld [vmem:[%s3 + $0x10] sm:$0xf]
    %v3315 = vld [vmem:[%s3 + $0x14] sm:$0xf]
    %v3316 = vld [vmem:[%s3 + $0x18] sm:$0xf]
    %v3317 = vld [vmem:[%s3 + $0x1c] sm:$0xf]
    %v3318 = vld [vmem:[%s3 + $0x20] sm:$0xf]
    %v3319 = vld [vmem:[%s3 + $0x24] sm:$0xf]
    %v3320 = vld [vmem:[%s3 + $0x28] sm:$0xf]
    %v3321 = vld [vmem:[%s3 + $0x2c] sm:$0xf]
    %v3322 = vld [vmem:[%s3 + $0x30] sm:$0xf]
    %v3323 = vld [vmem:[%s3 + $0x34] sm:$0xf]
    %v3324 = vld [vmem:[%s3 + $0x38] sm:$0xf]
    %v3325 = vld [vmem:[%s3 + $0x3c] sm:$0xf]
    %v3326 = vtanh.pop %v3280
    %v3327 = vpack.c.bf16 %v3326, %v3326
    %v3344 = vunpack.c.l.b16 %v3310
    %v3345 = vunpack.c.l.b16 %v3311
    %v3346 = vunpack.c.l.b16 %v3312
    %v3347 = vunpack.c.l.b16 %v3313
    %v3348 = vunpack.c.l.b16 %v3314
    %v3349 = vunpack.c.l.b16 %v3315
    %v3350 = vunpack.c.l.b16 %v3316
    %v3351 = vunpack.c.l.b16 %v3317
    %v3352 = vunpack.c.l.b16 %v3318
    %v3353 = vunpack.c.l.b16 %v3319
    %v3354 = vunpack.c.l.b16 %v3320
    %v3355 = vunpack.c.l.b16 %v3321
    %v3356 = vunpack.c.l.b16 %v3322
    %v3357 = vunpack.c.l.b16 %v3323
    %v3358 = vunpack.c.l.b16 %v3324
    %v3359 = vunpack.c.l.b16 %v3325
    %v3360 = vpack.c.b16 %v3345, %v3344
    %v3361 = vpack.c.b16 %v3347, %v3346
    %v3362 = vpack.c.b16 %v3349, %v3348
    %v3363 = vpack.c.b16 %v3351, %v3350
    %v3364 = vpack.c.b16 %v3353, %v3352
    %v3365 = vpack.c.b16 %v3355, %v3354
    %v3366 = vpack.c.b16 %v3357, %v3356
    %v3367 = vpack.c.b16 %v3359, %v3358
    %3376 = vmatprep.subr.bf16.mxu0 0
    %3377 = vmatpush1.bf16.msra.mxu0 %v3360
    %3378 = vmatprep.subr.bf16.mxu0 0
    %3379 = vmatpush1.bf16.msra.mxu0 %v3361
    %3380 = vmatprep.subr.bf16.mxu0 0
    %3381 = vmatpush1.bf16.msra.mxu0 %v3362
    %3382 = vmatprep.subr.bf16.mxu0 0
    %3383 = vmatpush1.bf16.msra.mxu0 %v3363
    %3384 = vmatprep.subr.bf16.mxu0 0
    %3385 = vmatpush1.bf16.msra.mxu0 %v3364
    %3386 = vmatprep.subr.bf16.mxu0 0
    %3387 = vmatpush1.bf16.msra.mxu0 %v3365
    %3388 = vmatprep.subr.bf16.mxu0 0
    %3389 = vmatpush1.bf16.msra.mxu0 %v3366
    %3390 = vmatprep.subr.bf16.mxu0 0
    %3391 = vmatpush1.bf16.msra.mxu0 %v3367
    %3392 = vmatprep.subr.bf16.mxu0 0
    %3393 = vmatpush1.bf16.msra.mxu0 0
    %3394 = vmatprep.subr.bf16.mxu0 0
    %3395 = vmatpush1.bf16.msra.mxu0 0
    %3396 = vmatprep.subr.bf16.mxu0 0
    %3397 = vmatpush1.bf16.msra.mxu0 0
    %3398 = vmatprep.subr.bf16.mxu0 0
    %3399 = vmatpush1.bf16.msra.mxu0 0
    %3400 = vmatprep.subr.bf16.mxu0 0
    %3401 = vmatpush1.bf16.msra.mxu0 0
    %3402 = vmatprep.subr.bf16.mxu0 0
    %3403 = vmatpush1.bf16.msra.mxu0 0
    %3404 = vmatprep.subr.bf16.mxu0 0
    %3405 = vmatpush1.bf16.msra.mxu0 0
    %3406 = vmatprep.subr.bf16.mxu0 0
    %3407 = vmatpush1.bf16.msra.mxu0 0
    %3408 = vmatprep.mubr.bf16.mxu0 0
    %3409 = vmatmul.mubr.bf16.gmra.mrb[0].mxu0 %v3327
    %v3410 = vpop.f32.mrb[0].mxu0
    %v3411 = vadd.f32 0.0, %v3410
    %v3412 = vpop.f32.mrb[0].mxu0
    %v3413 = vpop.f32.mrb[0].mxu0
    %v3414 = vpop.f32.mrb[0].mxu0
    %3415 = vdwg.mxu0
    %v3416 = vadd.f32 %v3283, %v3411
    %v3417 = vtanh.pop %v3416
    %v3418 = vpack.c.bf16 %v3417, %v3417
    %3419 = vmatprep.subr.bf16.mxu0 0
    %3420 = vmatpush1.bf16.msra.mxu0 %v3360
    %3421 = vmatprep.subr.bf16.mxu0 0
    %3422 = vmatpush1.bf16.msra.mxu0 %v3361
    %3423 = vmatprep.subr.bf16.mxu0 0
    %3424 = vmatpush1.bf16.msra.mxu0 %v3362
    %3425 = vmatprep.subr.bf16.mxu0 0
    %3426 = vmatpush1.bf16.msra.mxu0 %v3363
    %3427 = vmatprep.subr.bf16.mxu0 0
    %3428 = vmatpush1.bf16.msra.mxu0 %v3364
    %3429 = vmatprep.subr.bf16.mxu0 0
    %3430 = vmatpush1.bf16.msra.mxu0 %v3365
    %3431 = vmatprep.subr.bf16.mxu0 0
    %3432 = vmatpush1.bf16.msra.mxu0 %v3366
    %3433 = vmatprep.subr.bf16.mxu0 0
    %3434 = vmatpush1.bf16.msra.mxu0 %v3367
    %3435 = vmatprep.subr.bf16.mxu0 0
    %3436 = vmatpush1.bf16.msra.mxu0 0
    %3437 = vmatprep.subr.bf16.mxu0 0
    %3438 = vmatpush1.bf16.msra.mxu0 0
    %3439 = vmatprep.subr.bf16.mxu0 0
    %3440 = vmatpush1.bf16.msra.mxu0 0
    %3441 = vmatprep.subr.bf16.mxu0 0
    %3442 = vmatpush1.bf16.msra.mxu0 0
    %3443 = vmatprep.subr.bf16.mxu0 0
    %3444 = vmatpush1.bf16.msra.mxu0 0
    %3445 = vmatprep.subr.bf16.mxu0 0
    %3446 = vmatpush1.bf16.msra.mxu0 0
    %3447 = vmatprep.subr.bf16.mxu0 0
    %3448 = vmatpush1.bf16.msra.mxu0 0
    %3449 = vmatprep.subr.bf16.mxu0 0
    %3450 = vmatpush1.bf16.msra.mxu0 0
    %3451 = vmatprep.mubr.bf16.mxu0 0
    %3452 = vmatmul.mubr.bf16.gmra.mrb[0].mxu0 %v3418
    %v3453 = vpop.f32.mrb[0].mxu0
    %v3454 = vadd.f32 0.0, %v3453
    %v3455 = vpop.f32.mrb[0].mxu0
    %v3456 = vpop.f32.mrb[0].mxu0
    %v3457 = vpop.f32.mrb[0].mxu0
    %3458 = vdwg.mxu0
    %v3459 = vadd.f32 %v3288, %v3454
    %v3460 = vtanh.pop %v3459
    %v3461 = vpack.c.bf16 %v3460, %v3460
    %3462 = vmatprep.subr.bf16.mxu0 0
    %3463 = vmatpush1.bf16.msra.mxu0 %v3360
    %3464 = vmatprep.subr.bf16.mxu0 0
    %3465 = vmatpush1.bf16.msra.mxu0 %v3361
    %3466 = vmatprep.subr.bf16.mxu0 0
    %3467 = vmatpush1.bf16.msra.mxu0 %v3362
    %3468 = vmatprep.subr.bf16.mxu0 0
    %3469 = vmatpush1.bf16.msra.mxu0 %v3363
    %3470 = vmatprep.subr.bf16.mxu0 0
    %3471 = vmatpush1.bf16.msra.mxu0 %v3364
    %3472 = vmatprep.subr.bf16.mxu0 0
    %3473 = vmatpush1.bf16.msra.mxu0 %v3365
    %3474 = vmatprep.subr.bf16.mxu0 0
    %3475 = vmatpush1.bf16.msra.mxu0 %v3366
    %3476 = vmatprep.subr.bf16.mxu0 0
    %3477 = vmatpush1.bf16.msra.mxu0 %v3367
    %3478 = vmatprep.subr.bf16.mxu0 0
    %3479 = vmatpush1.bf16.msra.mxu0 0
    %3480 = vmatprep.subr.bf16.mxu0 0
    %3481 = vmatpush1.bf16.msra.mxu0 0
    %3482 = vmatprep.subr.bf16.mxu0 0
    %3483 = vmatpush1.bf16.msra.mxu0 0
    %3484 = vmatprep.subr.bf16.mxu0 0
    %3485 = vmatpush1.bf16.msra.mxu0 0
    %3486 = vmatprep.subr.bf16.mxu0 0
    %3487 = vmatpush1.bf16.msra.mxu0 0
    %3488 = vmatprep.subr.bf16.mxu0 0
    %3489 = vmatpush1.bf16.msra.mxu0 0
    %3490 = vmatprep.subr.bf16.mxu0 0
    %3491 = vmatpush1.bf16.msra.mxu0 0
    %3492 = vmatprep.subr.bf16.mxu0 0
    %3493 = vmatpush1.bf16.msra.mxu0 0
    %3494 = vmatprep.mubr.bf16.mxu0 0
    %3495 = vmatmul.mubr.bf16.gmra.mrb[0].mxu0 %v3461
    %v3496 = vpop.f32.mrb[0].mxu0
    %v3497 = vadd.f32 0.0, %v3496
    %v3498 = vpop.f32.mrb[0].mxu0
    %v3499 = vpop.f32.mrb[0].mxu0
    %v3500 = vpop.f32.mrb[0].mxu0
    %3501 = vdwg.mxu0
    %v3502 = vadd.f32 %v3291, %v3497
    %v3503 = vtanh.pop %v3502
    %v3504 = vpack.c.bf16 %v3503, %v3503
    %3505 = vmatprep.subr.bf16.mxu0 0
    %3506 = vmatpush1.bf16.msra.mxu0 %v3360
    %3507 = vmatprep.subr.bf16.mxu0 0
    %3508 = vmatpush1.bf16.msra.mxu0 %v3361
    %3509 = vmatprep.subr.bf16.mxu0 0
    %3510 = vmatpush1.bf16.msra.mxu0 %v3362
    %3511 = vmatprep.subr.bf16.mxu0 0
    %3512 = vmatpush1.bf16.msra.mxu0 %v3363
    %3513 = vmatprep.subr.bf16.mxu0 0
    %3514 = vmatpush1.bf16.msra.mxu0 %v3364
    %3515 = vmatprep.subr.bf16.mxu0 0
    %3516 = vmatpush1.bf16.msra.mxu0 %v3365
    %3517 = vmatprep.subr.bf16.mxu0 0
    %3518 = vmatpush1.bf16.msra.mxu0 %v3366
    %3519 = vmatprep.subr.bf16.mxu0 0
    %3520 = vmatpush1.bf16.msra.mxu0 %v3367
    %3521 = vmatprep.subr.bf16.mxu0 0
    %3522 = vmatpush1.bf16.msra.mxu0 0
    %3523 = vmatprep.subr.bf16.mxu0 0
    %3524 = vmatpush1.bf16.msra.mxu0 0
    %3525 = vmatprep.subr.bf16.mxu0 0
    %3526 = vmatpush1.bf16.msra.mxu0 0
    %3527 = vmatprep.subr.bf16.mxu0 0
    %3528 = vmatpush1.bf16.msra.mxu0 0
    %3529 = vmatprep.subr.bf16.mxu0 0
    %3530 = vmatpush1.bf16.msra.mxu0 0
    %3531 = vmatprep.subr.bf16.mxu0 0
    %3532 = vmatpush1.bf16.msra.mxu0 0
    %3533 = vmatprep.subr.bf16.mxu0 0
    %3534 = vmatpush1.bf16.msra.mxu0 0
    %3535 = vmatprep.subr.bf16.mxu0 0
    %3536 = vmatpush1.bf16.msra.mxu0 0
    %3537 = vmatprep.mubr.bf16.mxu0 0
    %3538 = vmatmul.mubr.bf16.gmra.mrb[0].mxu0 %v3504
    %v3539 = vpop.f32.mrb[0].mxu0
    %v3540 = vadd.f32 0.0, %v3539
    %v3541 = vpop.f32.mrb[0].mxu0
    %v3542 = vpop.f32.mrb[0].mxu0
    %v3543 = vpop.f32.mrb[0].mxu0
    %3544 = vdwg.mxu0
    %v3545 = vadd.f32 %v3296, %v3540
    %v3546 = vtanh.pop %v3545
    %v3547 = vpack.c.bf16 %v3546, %v3546
    %3548 = vmatprep.subr.bf16.mxu0 0
    %3549 = vmatpush1.bf16.msra.mxu0 %v3360
    %3550 = vmatprep.subr.bf16.mxu0 0
    %3551 = vmatpush1.bf16.msra.mxu0 %v3361
    %3552 = vmatprep.subr.bf16.mxu0 0
    %3553 = vmatpush1.bf16.msra.mxu0 %v3362
    %3554 = vmatprep.subr.bf16.mxu0 0
    %3555 = vmatpush1.bf16.msra.mxu0 %v3363
    %3556 = vmatprep.subr.bf16.mxu0 0
    %3557 = vmatpush1.bf16.msra.mxu0 %v3364
    %3558 = vmatprep.subr.bf16.mxu0 0
    %3559 = vmatpush1.bf16.msra.mxu0 %v3365
    %3560 = vmatprep.subr.bf16.mxu0 0
    %3561 = vmatpush1.bf16.msra.mxu0 %v3366
    %3562 = vmatprep.subr.bf16.mxu0 0
    %3563 = vmatpush1.bf16.msra.mxu0 %v3367
    %3564 = vmatprep.subr.bf16.mxu0 0
    %3565 = vmatpush1.bf16.msra.mxu0 0
    %3566 = vmatprep.subr.bf16.mxu0 0
    %3567 = vmatpush1.bf16.msra.mxu0 0
    %3568 = vmatprep.subr.bf16.mxu0 0
    %3569 = vmatpush1.bf16.msra.mxu0 0
    %3570 = vmatprep.subr.bf16.mxu0 0
    %3571 = vmatpush1.bf16.msra.mxu0 0
    %3572 = vmatprep.subr.bf16.mxu0 0
    %3573 = vmatpush1.bf16.msra.mxu0 0
    %3574 = vmatprep.subr.bf16.mxu0 0
    %3575 = vmatpush1.bf16.msra.mxu0 0
    %3576 = vmatprep.subr.bf16.mxu0 0
    %3577 = vmatpush1.bf16.msra.mxu0 0
    %3578 = vmatprep.subr.bf16.mxu0 0
    %3579 = vmatpush1.bf16.msra.mxu0 0
    %3580 = vmatprep.mubr.bf16.mxu0 0
    %3581 = vmatmul.mubr.bf16.gmra.mrb[0].mxu0 %v3547
    %v3582 = vpop.f32.mrb[0].mxu0
    %v3583 = vadd.f32 0.0, %v3582
    %v3584 = vpop.f32.mrb[0].mxu0
    %v3585 = vpop.f32.mrb[0].mxu0
    %v3586 = vpop.f32.mrb[0].mxu0
    %3587 = vdwg.mxu0
    %v3588 = vadd.f32 %v3299, %v3583
    %v3589 = vtanh.pop %v3588
    %v3590 = vpack.c.bf16 %v3589, %v3589
    %3591 = vmatprep.subr.bf16.mxu0 0
    %3592 = vmatpush1.bf16.msra.mxu0 %v3360
    %3593 = vmatprep.subr.bf16.mxu0 0
    %3594 = vmatpush1.bf16.msra.mxu0 %v3361
    %3595 = vmatprep.subr.bf16.mxu0 0
    %3596 = vmatpush1.bf16.msra.mxu0 %v3362
    %3597 = vmatprep.subr.bf16.mxu0 0
    %3598 = vmatpush1.bf16.msra.mxu0 %v3363
    %3599 = vmatprep.subr.bf16.mxu0 0
    %3600 = vmatpush1.bf16.msra.mxu0 %v3364
    %3601 = vmatprep.subr.bf16.mxu0 0
    %3602 = vmatpush1.bf16.msra.mxu0 %v3365
    %3603 = vmatprep.subr.bf16.mxu0 0
    %3604 = vmatpush1.bf16.msra.mxu0 %v3366
    %3605 = vmatprep.subr.bf16.mxu0 0
    %3606 = vmatpush1.bf16.msra.mxu0 %v3367
    %3607 = vmatprep.subr.bf16.mxu0 0
    %3608 = vmatpush1.bf16.msra.mxu0 0
    %3609 = vmatprep.subr.bf16.mxu0 0
    %3610 = vmatpush1.bf16.msra.mxu0 0
    %3611 = vmatprep.subr.bf16.mxu0 0
    %3612 = vmatpush1.bf16.msra.mxu0 0
    %3613 = vmatprep.subr.bf16.mxu0 0
    %3614 = vmatpush1.bf16.msra.mxu0 0
    %3615 = vmatprep.subr.bf16.mxu0 0
    %3616 = vmatpush1.bf16.msra.mxu0 0
    %3617 = vmatprep.subr.bf16.mxu0 0
    %3618 = vmatpush1.bf16.msra.mxu0 0
    %3619 = vmatprep.subr.bf16.mxu0 0
    %3620 = vmatpush1.bf16.msra.mxu0 0
    %3621 = vmatprep.subr.bf16.mxu0 0
    %3622 = vmatpush1.bf16.msra.mxu0 0
    %3623 = vmatprep.mubr.bf16.mxu0 0
    %3624 = vmatmul.mubr.bf16.gmra.mrb[0].mxu0 %v3590
    %v3625 = vpop.f32.mrb[0].mxu0
    %v3626 = vadd.f32 0.0, %v3625
    %v3627 = vpop.f32.mrb[0].mxu0
    %v3628 = vpop.f32.mrb[0].mxu0
    %v3629 = vpop.f32.mrb[0].mxu0
    %3630 = vdwg.mxu0
    %v3631 = vadd.f32 %v3304, %v3626
    %v3632 = vtanh.pop %v3631
    %v3633 = vpack.c.bf16 %v3632, %v3632
    %3634 = vmatprep.subr.bf16.mxu0 0
    %3635 = vmatpush1.bf16.msra.mxu0 %v3360
    %3636 = vmatprep.subr.bf16.mxu0 0
    %3637 = vmatpush1.bf16.msra.mxu0 %v3361
    %3638 = vmatprep.subr.bf16.mxu0 0
    %3639 = vmatpush1.bf16.msra.mxu0 %v3362
    %3640 = vmatprep.subr.bf16.mxu0 0
    %3641 = vmatpush1.bf16.msra.mxu0 %v3363
    %3642 = vmatprep.subr.bf16.mxu0 0
    %3643 = vmatpush1.bf16.msra.mxu0 %v3364
    %3644 = vmatprep.subr.bf16.mxu0 0
    %3645 = vmatpush1.bf16.msra.mxu0 %v3365
    %3646 = vmatprep.subr.bf16.mxu0 0
    %3647 = vmatpush1.bf16.msra.mxu0 %v3366
    %3648 = vmatprep.subr.bf16.mxu0 0
    %3649 = vmatpush1.bf16.msra.mxu0 %v3367
    %3650 = vmatprep.subr.bf16.mxu0 0
    %3651 = vmatpush1.bf16.msra.mxu0 0
    %3652 = vmatprep.subr.bf16.mxu0 0
    %3653 = vmatpush1.bf16.msra.mxu0 0
    %3654 = vmatprep.subr.bf16.mxu0 0
    %3655 = vmatpush1.bf16.msra.mxu0 0
    %3656 = vmatprep.subr.bf16.mxu0 0
    %3657 = vmatpush1.bf16.msra.mxu0 0
    %3658 = vmatprep.subr.bf16.mxu0 0
    %3659 = vmatpush1.bf16.msra.mxu0 0
    %3660 = vmatprep.subr.bf16.mxu0 0
    %3661 = vmatpush1.bf16.msra.mxu0 0
    %3662 = vmatprep.subr.bf16.mxu0 0
    %3663 = vmatpush1.bf16.msra.mxu0 0
    %3664 = vmatprep.subr.bf16.mxu0 0
    %3665 = vmatpush1.bf16.msra.mxu0 0
    %3666 = vmatprep.mubr.bf16.mxu0 0
    %3667 = vmatmul.mubr.bf16.gmra.mrb[0].mxu0 %v3633
    %v3668 = vpop.f32.mrb[0].mxu0
    %v3669 = vadd.f32 0.0, %v3668
    %v3670 = vpop.f32.mrb[0].mxu0
    %v3671 = vpop.f32.mrb[0].mxu0
    %v3672 = vpop.f32.mrb[0].mxu0
    %3673 = vdwg.mxu0
    %v3674 = vadd.f32 %v3307, %v3669
    %v3675 = vtanh.pop %v3674
    %v3676 = vpack.c.bf16 %v3675, %v3675
    %v3677 = vld [vmem:[%s5] sm:$0xf]
    %v3678 = vld [vmem:[%s5 + $0x4] sm:$0xf]
    %v3679 = vld [vmem:[%s5 + $0x8] sm:$0xf]
    %v3680 = vld [vmem:[%s5 + $0xc] sm:$0xf]
    %v3681 = vld [vmem:[%s5 + $0x10] sm:$0xf]
    %v3682 = vld [vmem:[%s5 + $0x14] sm:$0xf]
    %v3683 = vld [vmem:[%s5 + $0x18] sm:$0xf]
    %v3684 = vld [vmem:[%s5 + $0x1c] sm:$0xf]
    %v3685 = vld [vmem:[%s5 + $0x20] sm:$0xf]
    %v3686 = vld [vmem:[%s5 + $0x24] sm:$0xf]
    %v3687 = vld [vmem:[%s5 + $0x28] sm:$0xf]
    %v3688 = vld [vmem:[%s5 + $0x2c] sm:$0xf]
    %v3689 = vld [vmem:[%s5 + $0x30] sm:$0xf]
    %v3690 = vld [vmem:[%s5 + $0x34] sm:$0xf]
    %v3691 = vld [vmem:[%s5 + $0x38] sm:$0xf]
    %v3692 = vld [vmem:[%s5 + $0x3c] sm:$0xf]
    %v3693 = vld [vmem:[%s6] sm:$0x1]
    %v3695 = vlaneseq
    %v3696 = vshrl.u32 %v3695, 7
    %v3697 = vsub.s32 0, %v3696
    %v3698 = vrot.slane %v3693, %v3697
    %v3716 = vunpack.c.l.b16 %v3677
    %v3717 = vunpack.c.l.b16 %v3678
    %v3718 = vunpack.c.l.b16 %v3679
    %v3719 = vunpack.c.l.b16 %v3680
    %v3720 = vunpack.c.l.b16 %v3681
    %v3721 = vunpack.c.l.b16 %v3682
    %v3722 = vunpack.c.l.b16 %v3683
    %v3723 = vunpack.c.l.b16 %v3684
    %v3724 = vunpack.c.l.b16 %v3685
    %v3725 = vunpack.c.l.b16 %v3686
    %v3726 = vunpack.c.l.b16 %v3687
    %v3727 = vunpack.c.l.b16 %v3688
    %v3728 = vunpack.c.l.b16 %v3689
    %v3729 = vunpack.c.l.b16 %v3690
    %v3730 = vunpack.c.l.b16 %v3691
    %v3731 = vunpack.c.l.b16 %v3692
    %v3732 = vpack.c.b16 %v3717, %v3716
    %v3733 = vpack.c.b16 %v3719, %v3718
    %v3734 = vpack.c.b16 %v3721, %v3720
    %v3735 = vpack.c.b16 %v3723, %v3722
    %v3736 = vpack.c.b16 %v3725, %v3724
    %v3737 = vpack.c.b16 %v3727, %v3726
    %v3738 = vpack.c.b16 %v3729, %v3728
    %v3739 = vpack.c.b16 %v3731, %v3730
    %3748 = vmatprep.subr.bf16.mxu0 0
    %3749 = vmatpush1.bf16.msra.mxu0 %v3732
    %3750 = vmatprep.subr.bf16.mxu0 0
    %3751 = vmatpush1.bf16.msra.mxu0 %v3733
    %3752 = vmatprep.subr.bf16.mxu0 0
    %3753 = vmatpush1.bf16.msra.mxu0 %v3734
    %3754 = vmatprep.subr.bf16.mxu0 0
    %3755 = vmatpush1.bf16.msra.mxu0 %v3735
    %3756 = vmatprep.subr.bf16.mxu0 0
    %3757 = vmatpush1.bf16.msra.mxu0 %v3736
    %3758 = vmatprep.subr.bf16.mxu0 0
    %3759 = vmatpush1.bf16.msra.mxu0 %v3737
    %3760 = vmatprep.subr.bf16.mxu0 0
    %3761 = vmatpush1.bf16.msra.mxu0 %v3738
    %3762 = vmatprep.subr.bf16.mxu0 0
    %3763 = vmatpush1.bf16.msra.mxu0 %v3739
    %3764 = vmatprep.subr.bf16.mxu0 0
    %3765 = vmatpush1.bf16.msra.mxu0 0
    %3766 = vmatprep.subr.bf16.mxu0 0
    %3767 = vmatpush1.bf16.msra.mxu0 0
    %3768 = vmatprep.subr.bf16.mxu0 0
    %3769 = vmatpush1.bf16.msra.mxu0 0
    %3770 = vmatprep.subr.bf16.mxu0 0
    %3771 = vmatpush1.bf16.msra.mxu0 0
    %3772 = vmatprep.subr.bf16.mxu0 0
    %3773 = vmatpush1.bf16.msra.mxu0 0
    %3774 = vmatprep.subr.bf16.mxu0 0
    %3775 = vmatpush1.bf16.msra.mxu0 0
    %3776 = vmatprep.subr.bf16.mxu0 0
    %3777 = vmatpush1.bf16.msra.mxu0 0
    %3778 = vmatprep.subr.bf16.mxu0 0
    %3779 = vmatpush1.bf16.msra.mxu0 0
    %3780 = vmatprep.mubr.bf16.mxu0 0
    %3781 = vmatmul.mubr.bf16.gmra.mrb[0].mxu0 %v3676
    %v3782 = vpop.f32.mrb[0].mxu0
    %v3783 = vadd.f32 %v3698, %v3782
    %v3784 = vpop.f32.mrb[0].mxu0
    %v3785 = vpop.f32.mrb[0].mxu0
    %v3786 = vpop.f32.mrb[0].mxu0
    %3787 = vdwg.mxu0
    %3788 = vst [vmem:[%s7] sm:$0xff] %v3783
    // Predicated region
    $region1950: #{rnn_forward.1} parent=1 // pred_check
      _
    $region1951: #{rnn_forward.1} parent=1 // pred_check_branch
      %3790 = sbr.rel (0) target = $region1953
    $region1952: #{rnn_forward.1} parent=1 // pred_region
      _
    $region1953: #{rnn_forward.1} parent=1 // pred_fallthru
      _
    // Predicated region
    $region1954: #{rnn_forward.1} parent=1 // pred_check
      _
    $region1955: #{rnn_forward.1} parent=1 // pred_check_branch
      %3792 = sbr.rel (0) target = $region1957
    $region1956: #{rnn_forward.1} parent=1 // pred_region
      _
    $region1957: #{rnn_forward.1} parent=1 // pred_fallthru
      _
    %3793 = vsyncpa [#allocation5], 1
  %3794 = vsyncmov [#allocation3]
  %s3795 = vpop.sfrf %3794
  %p3796 = scmp.eq.s32.totalorder %s3795, 0
  %p3797 = pneg %p3796
  %3799 = shalt.err (%p3797)
  %s3800 = scalar_lea.sflag [#allocation3], 1
  %3801 = vsyncmov %s3800
  %s3802 = vpop.sfrf %3801
  %p3803 = scmp.eq.s32.totalorder %s3802, 0
  %p3804 = pneg %p3803
  %3806 = shalt.err (%p3804)
  %s3807 = scalar_lea.sflag [#allocation3], 2
  %3808 = vsyncmov %s3807
  %s3809 = vpop.sfrf %3808
  %p3810 = scmp.eq.s32.totalorder %s3809, 0
  %p3811 = pneg %p3810
  %3813 = shalt.err (%p3811)
  %s3814 = scalar_lea.sflag [#allocation3], 3
  %3815 = vsyncmov %s3814
  %s3816 = vpop.sfrf %3815
  %p3817 = scmp.eq.s32.totalorder %s3816, 0
  %p3818 = pneg %p3817
  %3820 = shalt.err (%p3818)
  %s3821 = scalar_lea.sflag [#allocation3], 4
  %3822 = vsyncmov %s3821
  %s3823 = vpop.sfrf %3822
  %p3824 = scmp.eq.s32.totalorder %s3823, 0
  %p3825 = pneg %p3824
  %3827 = shalt.err (%p3825)
  %s3828 = scalar_lea.sflag [#allocation3], 5
  %3829 = vsyncmov %s3828
  %s3830 = vpop.sfrf %3829
  %p3831 = scmp.eq.s32.totalorder %s3830, 0
  %p3832 = pneg %p3831
  %3834 = shalt.err (%p3832)
  %s3835 = scalar_lea.sflag [#allocation3], 6
  %3836 = vsyncmov %s3835
  %s3837 = vpop.sfrf %3836
  %p3838 = scmp.eq.s32.totalorder %s3837, 0
  %p3839 = pneg %p3838
  %3841 = shalt.err (%p3839)
  %s3842 = scalar_lea.sflag [#allocation3], 7
  %3843 = vsyncmov %s3842
  %s3844 = vpop.sfrf %3843
  %p3845 = scmp.eq.s32.totalorder %s3844, 0
  %p3846 = pneg %p3845
  %3848 = shalt.err (%p3846)

</llo_original>
